<compile_context>
chip_gen: v7x
topology: tpu7x:2x2x1
jax: 0.10.0
libtpu: 0.0.40
codegen_flags: <defaults>
</compile_context>

<pallas_src>
import time

import numpy as np
import jax
import jax.numpy as jnp
from jax.experimental import pallas as pl
from jax.experimental.pallas import tpu as pltpu


# ----------------------------------------------------------------------------
# Problem dimensions (input 2x4x28x8 -> after two 2x2 pools: 128*7*2 = 1792,
# matching regression(input_dim=1792) and skunit2(dim1=28, dim2=8)).
# ----------------------------------------------------------------------------
B = 2                      # batch
C_IN, H1, W1 = 4, 28, 8    # encoder input (NCHW at the API, NHWC inside)
C_ENC = 16                 # encoder output channels
C1 = 64                    # SK unit 1 mid/out channels
H2, W2 = 14, 4             # spatial after first 2x2 avg-pool
W2P = 8                    # W2 padded to 8 so in-kernel reshapes stay (..., 8, C)
C2 = 128                   # SK unit 2 mid/out channels
HF, WF = 7, 2              # spatial after second 2x2 avg-pool
NSF = HF * WF              # 14 spatial positions feeding the regression head
FEAT = C2 * NSF            # 1792
HID, OUT = 32, 34

M1 = B * H1 * W1           # 448 rows for the encoder / SK1 stage
M2 = B * H2 * W2P          # 224 rows for the SK2 stage (w >= 4 rows are dummies)

_N_INPUTS = 26


# ----------------------------------------------------------------------------
# Constant 2x2 average-pool matrices (block-diagonal over batch).
# ----------------------------------------------------------------------------
def _pool1_matrix():
    """(M2, M1): pools the (B, 28, 8, C) map into (B, 14, 8, C) rows; output
    rows with w >= 4 are left all-zero (width padding rows for SK2)."""
    P = np.zeros((M2, M1), np.float32)
    for b in range(B):
        for h in range(H2):
            for w in range(W2):
                r = b * H2 * W2P + h * W2P + w
                for dh in range(2):
                    for dw in range(2):
                        P[r, b * H1 * W1 + (2 * h + dh) * W1 + (2 * w + dw)] = 0.25
    return P


def _pool2_matrix():
    """(NSF*B, M2): pools the (B, 14, 4(+4 pad), C) map; output rows ordered
    spatial-major (s*B + b) so fc1 can consume contiguous row blocks."""
    P = np.zeros((NSF * B, M2), np.float32)
    for b in range(B):
        for h in range(HF):
            for w in range(WF):
                r = (h * WF + w) * B + b
                for dh in range(2):
                    for dw in range(2):
                        P[r, b * H2 * W2P + (2 * h + dh) * W2P + (2 * w + dw)] = 0.25
    return P


# ----------------------------------------------------------------------------
# The fused Pallas kernel: whole forward pass, everything VMEM-resident.
# ----------------------------------------------------------------------------
def _fused_forward_kernel(
    xcol_ref,                                  # (448, 36) bf16  im2col of the input
    enc_w_ref, enc_b_ref,                      # (36, 16) bf16, (1, 16) f32
    s1_w1_ref, s1_b1_ref, s1_dw_ref, s1_b2_ref,
    s1_w3_ref, s1_b3_ref, s1_ws_ref, s1_bs_ref,
    pool1_ref,                                 # (224, 448) bf16
    s2_w1_ref, s2_b1_ref, s2_dwa_ref, s2_dwc_ref, s2_b2_ref,
    s2_w3_ref, s2_b3_ref, s2_ws_ref, s2_bs_ref,
    pool2_ref,                                 # (28, 224) bf16
    fc1_w_ref, fc1_b_ref, fc2_w_ref, fc2_b_ref,
    out_ref,                                   # (B, 34) f32
    pad1_ref,                                  # VMEM scratch (B, 30, 10, 64)  f32
    pad2_ref,                                  # VMEM scratch (B, 16, 10, 128) f32
):
    f32, bf16 = jnp.float32, jnp.bfloat16
    relu = lambda v: jnp.maximum(v, 0.0)

    def mm(a_bf16, w_ref):                     # bf16 MXU matmul, f32 accumulate
        return jnp.dot(a_bf16, w_ref[...], preferred_element_type=f32)

    def write_halo(pad_ref, interior, h, w_real):
        """Zero only the 1-wide halo frame and store the interior once
        (data occupies rows 1..h, columns 1..w_real; the remaining right
        columns stay zero so padded-width taps read zeros)."""
        wpad, c = pad_ref.shape[2], pad_ref.shape[3]
        zrow = jnp.zeros((B, 1, wpad, c), f32)
        pad_ref[:, 0:1, :, :] = zrow
        pad_ref[:, h + 1:h + 2, :, :] = zrow
        pad_ref[:, :, 0:1, :] = jnp.zeros((B, h + 2, 1, c), f32)
        pad_ref[:, :, w_real + 1:wpad, :] = jnp.zeros(
            (B, h + 2, wpad - w_real - 1, c), f32)
        pad_ref[:, 1:h + 1, 1:w_real + 1, :] = interior

    def depthwise(pad_ref, weights, h, w_out):
        """Per-channel 3x3 MAC on the VPU.  The halo tile is loaded once per
        dw-shift (3 loads total), the per-dh slices of that view are
        tile-aligned, accumulation happens in 4D and is reshaped once."""
        c = pad_ref.shape[3]
        accs = [None] * len(weights)
        for dw in range(3):
            xv = pad_ref[:, :, dw:dw + w_out, :]           # (B, h+2, w_out, c)
            for dh in range(3):
                t = 3 * dh + dw
                xt = xv[:, dh:dh + h, :, :]                # H slice: tile-aligned
                for i, wt in enumerate(weights):
                    term = xt * wt[t:t + 1, :]
                    accs[i] = term if accs[i] is None else accs[i] + term
        return [a.reshape(B * h * w_out, c) for a in accs]

    # -------- encoder: one (448,36)@(36,16) matmul over the im2col slab ------
    enc = relu(mm(xcol_ref[...], enc_w_ref) + enc_b_ref[...])         # (448, 16)
    enc_bf = enc.astype(bf16)                                         # cast once

    # -------- SK unit 1 (16 -> 64, pure depthwise) + fused 2x2 avg-pool ------
    h1 = relu(mm(enc_bf, s1_w1_ref) + s1_b1_ref[...])                 # (448, 64)
    write_halo(pad1_ref, h1.reshape(B, H1, W1, C1), H1, W1)
    (d1,) = depthwise(pad1_ref, [s1_dw_ref[...]], H1, W1)
    h2 = relu(d1 + s1_b2_ref[...])
    y1 = relu(mm(h2.astype(bf16), s1_w3_ref) + s1_b3_ref[...] +
              mm(enc_bf, s1_ws_ref) + s1_bs_ref[...])                 # (448, 64)
    p1 = jnp.dot(pool1_ref[...], y1.astype(bf16),
                 preferred_element_type=f32)                          # (224, 64)
    p1_bf = p1.astype(bf16)                                           # cast once

    # -------- SK unit 2 (64 -> 128, 2 channels/group) + fused 2x2 avg-pool ---
    g1 = relu(mm(p1_bf, s2_w1_ref) + s2_b1_ref[...])                  # (224, 128)
    # Only the first W2=4 (real) columns enter the halo tile; columns >= 5 of
    # the scratch are zero, so padded-width garbage never feeds real outputs.
    write_halo(pad2_ref, g1.reshape(B, H2, W2P, C2)[:, :, 0:W2, :], H2, W2)
    sa, sc = depthwise(pad2_ref, [s2_dwa_ref[...], s2_dwc_ref[...]], H2, W2P)
    # Even/odd partner swap of the cross-channel accumulator: two XLU lane
    # rotations + a parity select.  Wrapped lanes (0<->127) are never selected.
    lane = jax.lax.broadcasted_iota(jnp.int32, (M2, C2), 1)
    cross = jnp.where(lane % 2 == 0,
                      pltpu.roll(sc, C2 - 1, 1),    # even lane o gets sc[o+1]
                      pltpu.roll(sc, 1, 1))         # odd  lane o gets sc[o-1]
    g2 = relu(sa + cross + s2_b2_ref[...])                            # (224, 128)
    y2 = relu(mm(g2.astype(bf16), s2_w3_ref) + s2_b3_ref[...] +
              mm(p1_bf, s2_ws_ref) + s2_bs_ref[...])                  # (224, 128)
    p2 = jnp.dot(pool2_ref[...], y2.astype(bf16),
                 preferred_element_type=f32)                          # (28, 128)

    # -------- regression head: single fc1 matmul + diagonal-block reduce -----
    z = jnp.dot(p2.astype(bf16), fc1_w_ref[...],
                preferred_element_type=f32)                           # (28, 448)
    fc = z[0:B, 0:HID]
    for s in range(1, NSF):
        fc = fc + z[s * B:(s + 1) * B, s * HID:(s + 1) * HID]
    fc = relu(fc + fc1_b_ref[...])                                    # (B, 32)
    out_ref[...] = jnp.dot(fc.astype(bf16), fc2_w_ref[...],
                           preferred_element_type=f32) + fc2_b_ref[...]


# ----------------------------------------------------------------------------
# Parameter initialization + packing for the fused kernel (+ raw copies for
# the pure-JAX reference).
# ----------------------------------------------------------------------------
def init_params(key):
    kit = iter(jax.random.split(key, 32))

    def uniform(shape, fan_in):
        b = float(1.0 / np.sqrt(fan_in))
        return np.asarray(jax.random.uniform(next(kit), shape, jnp.float32, -b, b))

    def pack_1x1(w):                           # torch (co, ci, 1, 1) -> (ci, co) bf16
        return jnp.asarray(w[:, :, 0, 0].T, jnp.bfloat16)

    p, raw = {}, {}

    # encoder: Conv2d(4, 16, 3, padding=1) + ReLU
    ew = uniform((C_ENC, C_IN, 3, 3), C_IN * 9)
    eb = uniform((C_ENC,), C_IN * 9)
    raw["enc_w"], raw["enc_b"] = ew, eb
    # rows ordered (tap-major, channel-minor) to match the wrapper im2col
    p["enc_w"] = jnp.asarray(ew.transpose(2, 3, 1, 0).reshape(9 * C_IN, C_ENC),
                             jnp.bfloat16)
    p["enc_b"] = jnp.asarray(eb.reshape(1, C_ENC), jnp.float32)

    def sk_unit(prefix, cin, mid, cout, groups):
        cin_g = mid // groups
        w1 = uniform((mid, cin, 1, 1), cin)
        b1 = uniform((mid,), cin)
        w2 = uniform((mid, cin_g, 3, 3), cin_g * 9)
        b2 = uniform((mid,), cin_g * 9)
        w3 = uniform((cout, mid, 1, 1), mid)
        b3 = uniform((cout,), mid)
        ws = uniform((cout, cin, 1, 1), cin)
        bs = uniform((cout,), cin)
        rawd = dict(w1=w1, b1=b1, w2=w2, b2=b2, w3=w3, b3=b3, ws=ws, bs=bs)

        d = {
            prefix + "_w1": pack_1x1(w1),
            prefix + "_b1": jnp.asarray(b1.reshape(1, mid), jnp.float32),
            prefix + "_b2": jnp.asarray(b2.reshape(1, mid), jnp.float32),
            prefix + "_w3": pack_1x1(w3),
            prefix + "_b3": jnp.asarray(b3.reshape(1, cout), jnp.float32),
            prefix + "_ws": pack_1x1(ws),
            prefix + "_bs": jnp.asarray(bs.reshape(1, cout), jnp.float32),
        }

        # grouped 3x3 conv -> per-channel tap weights for the VPU depthwise path
        w2t = w2.reshape(mid, cin_g, 9)        # [out_ch, in_ch_within_group, tap]
        o = np.arange(mid)
        if cin_g == 1:                         # pure depthwise (SK unit 1)
            d[prefix + "_dwa"] = jnp.asarray(w2t[:, 0, :].T, jnp.float32)   # (9, mid)
        else:                                  # cin_g == 2 (SK unit 2)
            diag = w2t[o, o % 2, :].T                      # coeff of x[o] for out[o]
            partner = np.where(o % 2 == 0, o + 1, o - 1)
            # coeff with which x[c] contributes to its partner output channel
            cross = w2t[partner, o % 2, :].T               # (9, mid)
            d[prefix + "_dwa"] = jnp.asarray(diag, jnp.float32)
            d[prefix + "_dwc"] = jnp.asarray(cross, jnp.float32)
        return d, rawd

    d1, r1 = sk_unit("s1", C_ENC, C1, C1, 64)
    d2, r2 = sk_unit("s2", C1, C2, C2, 64)
    p.update(d1)
    p.update(d2)
    raw["sk1"], raw["sk2"] = r1, r2

    # constant 2x2 average-pool matrices, bf16 (0.25 is exact in bf16)
    p["pool1"] = jnp.asarray(_pool1_matrix(), jnp.bfloat16)
    p["pool2"] = jnp.asarray(_pool2_matrix(), jnp.bfloat16)

    # regression head: Linear(1792, 32) -> ReLU -> Linear(32, 34)
    fw1 = uniform((HID, FEAT), FEAT)
    fb1 = uniform((HID,), FEAT)
    fw2 = uniform((OUT, HID), HID)
    fb2 = uniform((OUT,), HID)
    raw["fc1_w"], raw["fc1_b"], raw["fc2_w"], raw["fc2_b"] = fw1, fb1, fw2, fb2
    # torch flattens NCHW: feature index = c*14 + s (s = h*2 + w).  Pack fc1 as
    # one (128, 14*32) matrix whose column s*32 + j holds fw1[j, c*14 + s]; the
    # kernel does one matmul and selects the 14 diagonal (2,32) blocks.
    p["fc1_w"] = jnp.asarray(
        fw1.reshape(HID, C2, NSF).transpose(1, 2, 0).reshape(C2, NSF * HID),
        jnp.bfloat16)
    p["fc1_b"] = jnp.asarray(fb1.reshape(1, HID), jnp.float32)
    p["fc2_w"] = jnp.asarray(fw2.T, jnp.bfloat16)
    p["fc2_b"] = jnp.asarray(fb2.reshape(1, OUT), jnp.float32)
    return p, raw


# ----------------------------------------------------------------------------
# Pure-JAX f32 reference forward (same reconstructed architecture).
# ----------------------------------------------------------------------------
def _reference_forward(raw, x_nchw):
    f32 = jnp.float32
    relu = lambda v: jnp.maximum(v, 0.0)
    hi = jax.lax.Precision.HIGHEST

    def conv(x, w, b, pad, groups=1):
        y = jax.lax.conv_general_dilated(
            x, jnp.asarray(w, f32), (1, 1), ((pad, pad), (pad, pad)),
            dimension_numbers=("NCHW", "OIHW", "NCHW"),
            feature_group_count=groups, precision=hi)
        return y + jnp.asarray(b, f32).reshape(1, -1, 1, 1)

    def skunit(x, r):
        h = relu(conv(x, r["w1"], r["b1"], 0))
        h = relu(conv(h, r["w2"], r["b2"], 1, groups=64))
        return relu(conv(h, r["w3"], r["b3"], 0) + conv(x, r["ws"], r["bs"], 0))

    def avgpool(x):
        b, c, h, w = x.shape
        return x.reshape(b, c, h // 2, 2, w // 2, 2).mean(axis=(3, 5))

    x = x_nchw.astype(f32)
    y = relu(conv(x, raw["enc_w"], raw["enc_b"], 1))
    y = avgpool(skunit(y, raw["sk1"]))
    y = avgpool(skunit(y, raw["sk2"]))
    feat = y.reshape(x.shape[0], -1)                       # NCHW flatten -> 1792
    fc = relu(jnp.dot(feat, jnp.asarray(raw["fc1_w"], f32).T, precision=hi)
              + jnp.asarray(raw["fc1_b"], f32))
    out = jnp.dot(fc, jnp.asarray(raw["fc2_w"], f32).T, precision=hi) \
        + jnp.asarray(raw["fc2_b"], f32)
    return out.reshape(x.shape[0], 17, 2)


# ----------------------------------------------------------------------------
# Forward wrapper.
# ----------------------------------------------------------------------------
@jax.jit
def _forward_jit(params, x_nchw):
    # NCHW -> NHWC, 'same' halo, and 3x3 im2col in ONE small XLA fusion; the
    # 64 KiB slab makes the in-kernel encoder a single matmul.
    x = jnp.transpose(x_nchw, (0, 2, 3, 1)).astype(jnp.float32)
    xpad = jnp.pad(x, ((0, 0), (1, 1), (1, 1), (0, 0)))
    cols = [xpad[:, dh:dh + H1, dw:dw + W1, :] for dh in range(3) for dw in range(3)]
    xcol = jnp.concatenate(cols, axis=-1).reshape(M1, 9 * C_IN).astype(jnp.bfloat16)

    vmem = pl.BlockSpec(memory_space=pltpu.MemorySpace.VMEM)
    pose = pl.pallas_call(
        _fused_forward_kernel,
        out_shape=jax.ShapeDtypeStruct((B, OUT), jnp.float32),
        in_specs=[vmem] * _N_INPUTS,
        out_specs=vmem,
        scratch_shapes=[
            pltpu.VMEM((B, H1 + 2, W1 + 2, C1), jnp.float32),       # SK1 halo tile
            pltpu.VMEM((B, H2 + 2, W2P + 2, C2), jnp.float32),      # SK2 halo tile
        ],
        # Single fused invocation (no grid): the whole working set is a few MiB
        # so it lives in VMEM on v5e/v6e/v7x.  At B=2 the model is
        # latency-bound; an optional v7x-only follow-up would split the batch
        # over the 2 TensorCores with grid=(B,) + dimension_semantics.
    )(
        xcol,
        params["enc_w"], params["enc_b"],
        params["s1_w1"], params["s1_b1"], params["s1_dwa"], params["s1_b2"],
        params["s1_w3"], params["s1_b3"], params["s1_ws"], params["s1_bs"],
        params["pool1"],
        params["s2_w1"], params["s2_b1"], params["s2_dwa"], params["s2_dwc"],
        params["s2_b2"],
        params["s2_w3"], params["s2_b3"], params["s2_ws"], params["s2_bs"],
        params["pool2"],
        params["fc1_w"], params["fc1_b"], params["fc2_w"], params["fc2_b"],
    )
    return pose.reshape(B, 17, 2)


def forward(params, x_nchw):
    """Pallas OneLayerDenoiserHPE.forward: returns (pose, time_sum) like torch.
    NOTE: the host timer is only for API parity; use an xprof trace for real
    kernel-time measurements."""
    t0 = time.perf_counter()
    pose = jax.block_until_ready(_forward_jit(params, x_nchw))
    return pose, time.perf_counter() - t0


if __name__ == "__main__":
    key = jax.random.PRNGKey(0)
    pkey, xkey = jax.random.split(key)
    params, raw = init_params(pkey)

    # Input chosen so the flattened feature after two 2x2 pools is 128*7*2 = 1792,
    # matching regression(input_dim=1792) / skunit2(dim1=28, dim2=8).
    x = jax.random.normal(xkey, (B, C_IN, H1, W1), jnp.float32)

    pose, _ = forward(params, x)                     # trace + compile + run

    # Pure-JAX f32 reference check (tolerance covers bf16 MXU rounding).
    ref = _reference_forward(raw, x)
    np.testing.assert_allclose(np.asarray(pose), np.asarray(ref),
                               rtol=0.1, atol=0.05)

    assert pose.shape == (B, 17, 2), pose.shape
    assert bool(jnp.all(jnp.isfinite(pose)))
    print("KERNEL_OK")
</pallas_src>

<mosaic_0001>
module attributes {stable_mosaic.version = 11 : i64} {
  func.func @_fused_forward_kernel(%arg0: memref<448x36xbf16, #tpu.memory_space<vmem>>, %arg1: memref<36x16xbf16, #tpu.memory_space<vmem>>, %arg2: memref<1x16xf32, #tpu.memory_space<vmem>>, %arg3: memref<16x64xbf16, #tpu.memory_space<vmem>>, %arg4: memref<1x64xf32, #tpu.memory_space<vmem>>, %arg5: memref<9x64xf32, #tpu.memory_space<vmem>>, %arg6: memref<1x64xf32, #tpu.memory_space<vmem>>, %arg7: memref<64x64xbf16, #tpu.memory_space<vmem>>, %arg8: memref<1x64xf32, #tpu.memory_space<vmem>>, %arg9: memref<16x64xbf16, #tpu.memory_space<vmem>>, %arg10: memref<1x64xf32, #tpu.memory_space<vmem>>, %arg11: memref<224x448xbf16, #tpu.memory_space<vmem>>, %arg12: memref<64x128xbf16, #tpu.memory_space<vmem>>, %arg13: memref<1x128xf32, #tpu.memory_space<vmem>>, %arg14: memref<9x128xf32, #tpu.memory_space<vmem>>, %arg15: memref<9x128xf32, #tpu.memory_space<vmem>>, %arg16: memref<1x128xf32, #tpu.memory_space<vmem>>, %arg17: memref<128x128xbf16, #tpu.memory_space<vmem>>, %arg18: memref<1x128xf32, #tpu.memory_space<vmem>>, %arg19: memref<64x128xbf16, #tpu.memory_space<vmem>>, %arg20: memref<1x128xf32, #tpu.memory_space<vmem>>, %arg21: memref<28x224xbf16, #tpu.memory_space<vmem>>, %arg22: memref<128x448xbf16, #tpu.memory_space<vmem>>, %arg23: memref<1x32xf32, #tpu.memory_space<vmem>>, %arg24: memref<32x34xbf16, #tpu.memory_space<vmem>>, %arg25: memref<1x34xf32, #tpu.memory_space<vmem>>, %arg26: memref<2x34xf32, #tpu.memory_space<vmem>>, %arg27: memref<2x30x10x64xf32, #tpu.memory_space<vmem>>, %arg28: memref<2x16x10x128xf32, #tpu.memory_space<vmem>>) attributes {dimension_semantics = [], scalar_prefetch = 0 : i64, scratch_operands = 2 : i64, tpu.core_type = #tpu.core_type<tc>} {
    %c0 = arith.constant 0 : index
    %c0_0 = arith.constant 0 : index
    %0 = vector.load %arg0[%c0, %c0_0] : memref<448x36xbf16, #tpu.memory_space<vmem>>, vector<448x36xbf16>
    %c0_1 = arith.constant 0 : index
    %c0_2 = arith.constant 0 : index
    %1 = vector.load %arg1[%c0_1, %c0_2] : memref<36x16xbf16, #tpu.memory_space<vmem>>, vector<36x16xbf16>
    %cst = arith.constant dense<0.000000e+00> : vector<448x16xf32>
    %2 = tpu.matmul %0, %1, %cst {dimension_numbers = #tpu.dot_dimension_numbers<[1], [0], [0], [1], [0, 0, 1, 1], [], []>} : vector<448x36xbf16>, vector<36x16xbf16>, vector<448x16xf32> -> vector<448x16xf32>
    %c0_3 = arith.constant 0 : index
    %c0_4 = arith.constant 0 : index
    %3 = vector.load %arg2[%c0_3, %c0_4] : memref<1x16xf32, #tpu.memory_space<vmem>>, vector<1x16xf32>
    %4 = vector.broadcast %3 : vector<1x16xf32> to vector<448x16xf32>
    %5 = arith.addf %2, %4 : vector<448x16xf32>
    %cst_5 = arith.constant 0.000000e+00 : f32
    %6 = vector.broadcast %cst_5 : f32 to vector<448x16xf32>
    %7 = arith.maximumf %5, %6 : vector<448x16xf32>
    %8 = arith.truncf %7 : vector<448x16xf32> to vector<448x16xbf16>
    %c0_6 = arith.constant 0 : index
    %c0_7 = arith.constant 0 : index
    %9 = vector.load %arg3[%c0_6, %c0_7] : memref<16x64xbf16, #tpu.memory_space<vmem>>, vector<16x64xbf16>
    %cst_8 = arith.constant dense<0.000000e+00> : vector<448x64xf32>
    %10 = tpu.matmul %8, %9, %cst_8 {dimension_numbers = #tpu.dot_dimension_numbers<[1], [0], [0], [1], [0, 0, 1, 1], [], []>} : vector<448x16xbf16>, vector<16x64xbf16>, vector<448x64xf32> -> vector<448x64xf32>
    %c0_9 = arith.constant 0 : index
    %c0_10 = arith.constant 0 : index
    %11 = vector.load %arg4[%c0_9, %c0_10] : memref<1x64xf32, #tpu.memory_space<vmem>>, vector<1x64xf32>
    %12 = vector.broadcast %11 : vector<1x64xf32> to vector<448x64xf32>
    %13 = arith.addf %10, %12 : vector<448x64xf32>
    %cst_11 = arith.constant 0.000000e+00 : f32
    %14 = vector.broadcast %cst_11 : f32 to vector<448x64xf32>
    %15 = arith.maximumf %13, %14 : vector<448x64xf32>
    %16 = vector.shape_cast %15 : vector<448x64xf32> to vector<2x28x8x64xf32>
    %cst_12 = arith.constant 0.000000e+00 : f32
    %17 = vector.broadcast %cst_12 : f32 to vector<2x1x10x64xf32>
    %c0_13 = arith.constant 0 : index
    %c0_14 = arith.constant 0 : index
    %c0_15 = arith.constant 0 : index
    %c0_16 = arith.constant 0 : index
    %18 = vector.load %arg27[%c0_13, %c0_14, %c0_15, %c0_16] : memref<2x30x10x64xf32, #tpu.memory_space<vmem>>, vector<2x1x10x64xf32>
    tpu.vector_store %arg27[%c0_13, %c0_14, %c0_15, %c0_16], %17 {strides = array<i32>} : memref<2x30x10x64xf32, #tpu.memory_space<vmem>>, vector<2x1x10x64xf32>,
    %c0_17 = arith.constant 0 : index
    %c29 = arith.constant 29 : index
    %c0_18 = arith.constant 0 : index
    %c0_19 = arith.constant 0 : index
    %19 = vector.load %arg27[%c0_17, %c29, %c0_18, %c0_19] : memref<2x30x10x64xf32, #tpu.memory_space<vmem>>, vector<2x1x10x64xf32>
    tpu.vector_store %arg27[%c0_17, %c29, %c0_18, %c0_19], %17 {strides = array<i32>} : memref<2x30x10x64xf32, #tpu.memory_space<vmem>>, vector<2x1x10x64xf32>,
    %cst_20 = arith.constant 0.000000e+00 : f32
    %20 = vector.broadcast %cst_20 : f32 to vector<2x30x1x64xf32>
    %c0_21 = arith.constant 0 : index
    %c0_22 = arith.constant 0 : index
    %c0_23 = arith.constant 0 : index
    %c0_24 = arith.constant 0 : index
    %21 = vector.load %arg27[%c0_21, %c0_22, %c0_23, %c0_24] : memref<2x30x10x64xf32, #tpu.memory_space<vmem>>, vector<2x30x1x64xf32>
    tpu.vector_store %arg27[%c0_21, %c0_22, %c0_23, %c0_24], %20 {strides = array<i32>} : memref<2x30x10x64xf32, #tpu.memory_space<vmem>>, vector<2x30x1x64xf32>,
    %cst_25 = arith.constant 0.000000e+00 : f32
    %22 = vector.broadcast %cst_25 : f32 to vector<2x30x1x64xf32>
    %c0_26 = arith.constant 0 : index
    %c0_27 = arith.constant 0 : index
    %c9 = arith.constant 9 : index
    %c0_28 = arith.constant 0 : index
    %23 = vector.load %arg27[%c0_26, %c0_27, %c9, %c0_28] : memref<2x30x10x64xf32, #tpu.memory_space<vmem>>, vector<2x30x1x64xf32>
    tpu.vector_store %arg27[%c0_26, %c0_27, %c9, %c0_28], %22 {strides = array<i32>} : memref<2x30x10x64xf32, #tpu.memory_space<vmem>>, vector<2x30x1x64xf32>,
    %c0_29 = arith.constant 0 : index
    %c1 = arith.constant 1 : index
    %c1_30 = arith.constant 1 : index
    %c0_31 = arith.constant 0 : index
    %24 = vector.load %arg27[%c0_29, %c1, %c1_30, %c0_31] : memref<2x30x10x64xf32, #tpu.memory_space<vmem>>, vector<2x28x8x64xf32>
    tpu.vector_store %arg27[%c0_29, %c1, %c1_30, %c0_31], %16 {strides = array<i32>} : memref<2x30x10x64xf32, #tpu.memory_space<vmem>>, vector<2x28x8x64xf32>,
    %c0_32 = arith.constant 0 : index
    %c0_33 = arith.constant 0 : index
    %25 = vector.load %arg5[%c0_32, %c0_33] : memref<9x64xf32, #tpu.memory_space<vmem>>, vector<9x64xf32>
    %c0_34 = arith.constant 0 : index
    %c0_35 = arith.constant 0 : index
    %c0_36 = arith.constant 0 : index
    %c0_37 = arith.constant 0 : index
    %26 = vector.load %arg27[%c0_34, %c0_35, %c0_36, %c0_37] : memref<2x30x10x64xf32, #tpu.memory_space<vmem>>, vector<2x30x8x64xf32>
    %27 = vector.extract_strided_slice %26 {offsets = [0, 0, 0, 0], sizes = [2, 28, 8, 64], strides = [1, 1, 1, 1]} : vector<2x30x8x64xf32> to vector<2x28x8x64xf32>
    %28 = vector.extract_strided_slice %25 {offsets = [0, 0], sizes = [1, 64], strides = [1, 1]} : vector<9x64xf32> to vector<1x64xf32>
    %29 = vector.shape_cast %28 : vector<1x64xf32> to vector<1x1x1x64xf32>
    %30 = vector.broadcast %29 : vector<1x1x1x64xf32> to vector<2x28x8x64xf32>
    %31 = arith.mulf %27, %30 : vector<2x28x8x64xf32>
    %32 = vector.extract_strided_slice %26 {offsets = [0, 1, 0, 0], sizes = [2, 28, 8, 64], strides = [1, 1, 1, 1]} : vector<2x30x8x64xf32> to vector<2x28x8x64xf32>
    %33 = vector.extract_strided_slice %25 {offsets = [3, 0], sizes = [1, 64], strides = [1, 1]} : vector<9x64xf32> to vector<1x64xf32>
    %34 = vector.shape_cast %33 : vector<1x64xf32> to vector<1x1x1x64xf32>
    %35 = vector.broadcast %34 : vector<1x1x1x64xf32> to vector<2x28x8x64xf32>
    %36 = arith.mulf %32, %35 : vector<2x28x8x64xf32>
    %37 = arith.addf %31, %36 : vector<2x28x8x64xf32>
    %38 = vector.extract_strided_slice %26 {offsets = [0, 2, 0, 0], sizes = [2, 28, 8, 64], strides = [1, 1, 1, 1]} : vector<2x30x8x64xf32> to vector<2x28x8x64xf32>
    %39 = vector.extract_strided_slice %25 {offsets = [6, 0], sizes = [1, 64], strides = [1, 1]} : vector<9x64xf32> to vector<1x64xf32>
    %40 = vector.shape_cast %39 : vector<1x64xf32> to vector<1x1x1x64xf32>
    %41 = vector.broadcast %40 : vector<1x1x1x64xf32> to vector<2x28x8x64xf32>
    %42 = arith.mulf %38, %41 : vector<2x28x8x64xf32>
    %43 = arith.addf %37, %42 : vector<2x28x8x64xf32>
    %c0_38 = arith.constant 0 : index
    %c0_39 = arith.constant 0 : index
    %c1_40 = arith.constant 1 : index
    %c0_41 = arith.constant 0 : index
    %44 = vector.load %arg27[%c0_38, %c0_39, %c1_40, %c0_41] : memref<2x30x10x64xf32, #tpu.memory_space<vmem>>, vector<2x30x8x64xf32>
    %45 = vector.extract_strided_slice %44 {offsets = [0, 0, 0, 0], sizes = [2, 28, 8, 64], strides = [1, 1, 1, 1]} : vector<2x30x8x64xf32> to vector<2x28x8x64xf32>
    %46 = vector.extract_strided_slice %25 {offsets = [1, 0], sizes = [1, 64], strides = [1, 1]} : vector<9x64xf32> to vector<1x64xf32>
    %47 = vector.shape_cast %46 : vector<1x64xf32> to vector<1x1x1x64xf32>
    %48 = vector.broadcast %47 : vector<1x1x1x64xf32> to vector<2x28x8x64xf32>
    %49 = arith.mulf %45, %48 : vector<2x28x8x64xf32>
    %50 = arith.addf %43, %49 : vector<2x28x8x64xf32>
    %51 = vector.extract_strided_slice %44 {offsets = [0, 1, 0, 0], sizes = [2, 28, 8, 64], strides = [1, 1, 1, 1]} : vector<2x30x8x64xf32> to vector<2x28x8x64xf32>
    %52 = vector.extract_strided_slice %25 {offsets = [4, 0], sizes = [1, 64], strides = [1, 1]} : vector<9x64xf32> to vector<1x64xf32>
    %53 = vector.shape_cast %52 : vector<1x64xf32> to vector<1x1x1x64xf32>
    %54 = vector.broadcast %53 : vector<1x1x1x64xf32> to vector<2x28x8x64xf32>
    %55 = arith.mulf %51, %54 : vector<2x28x8x64xf32>
    %56 = arith.addf %50, %55 : vector<2x28x8x64xf32>
    %57 = vector.extract_strided_slice %44 {offsets = [0, 2, 0, 0], sizes = [2, 28, 8, 64], strides = [1, 1, 1, 1]} : vector<2x30x8x64xf32> to vector<2x28x8x64xf32>
    %58 = vector.extract_strided_slice %25 {offsets = [7, 0], sizes = [1, 64], strides = [1, 1]} : vector<9x64xf32> to vector<1x64xf32>
    %59 = vector.shape_cast %58 : vector<1x64xf32> to vector<1x1x1x64xf32>
    %60 = vector.broadcast %59 : vector<1x1x1x64xf32> to vector<2x28x8x64xf32>
    %61 = arith.mulf %57, %60 : vector<2x28x8x64xf32>
    %62 = arith.addf %56, %61 : vector<2x28x8x64xf32>
    %c0_42 = arith.constant 0 : index
    %c0_43 = arith.constant 0 : index
    %c2 = arith.constant 2 : index
    %c0_44 = arith.constant 0 : index
    %63 = vector.load %arg27[%c0_42, %c0_43, %c2, %c0_44] : memref<2x30x10x64xf32, #tpu.memory_space<vmem>>, vector<2x30x8x64xf32>
    %64 = vector.extract_strided_slice %63 {offsets = [0, 0, 0, 0], sizes = [2, 28, 8, 64], strides = [1, 1, 1, 1]} : vector<2x30x8x64xf32> to vector<2x28x8x64xf32>
    %65 = vector.extract_strided_slice %25 {offsets = [2, 0], sizes = [1, 64], strides = [1, 1]} : vector<9x64xf32> to vector<1x64xf32>
    %66 = vector.shape_cast %65 : vector<1x64xf32> to vector<1x1x1x64xf32>
    %67 = vector.broadcast %66 : vector<1x1x1x64xf32> to vector<2x28x8x64xf32>
    %68 = arith.mulf %64, %67 : vector<2x28x8x64xf32>
    %69 = arith.addf %62, %68 : vector<2x28x8x64xf32>
    %70 = vector.extract_strided_slice %63 {offsets = [0, 1, 0, 0], sizes = [2, 28, 8, 64], strides = [1, 1, 1, 1]} : vector<2x30x8x64xf32> to vector<2x28x8x64xf32>
    %71 = vector.extract_strided_slice %25 {offsets = [5, 0], sizes = [1, 64], strides = [1, 1]} : vector<9x64xf32> to vector<1x64xf32>
    %72 = vector.shape_cast %71 : vector<1x64xf32> to vector<1x1x1x64xf32>
    %73 = vector.broadcast %72 : vector<1x1x1x64xf32> to vector<2x28x8x64xf32>
    %74 = arith.mulf %70, %73 : vector<2x28x8x64xf32>
    %75 = arith.addf %69, %74 : vector<2x28x8x64xf32>
    %76 = vector.extract_strided_slice %63 {offsets = [0, 2, 0, 0], sizes = [2, 28, 8, 64], strides = [1, 1, 1, 1]} : vector<2x30x8x64xf32> to vector<2x28x8x64xf32>
    %77 = vector.extract_strided_slice %25 {offsets = [8, 0], sizes = [1, 64], strides = [1, 1]} : vector<9x64xf32> to vector<1x64xf32>
    %78 = vector.shape_cast %77 : vector<1x64xf32> to vector<1x1x1x64xf32>
    %79 = vector.broadcast %78 : vector<1x1x1x64xf32> to vector<2x28x8x64xf32>
    %80 = arith.mulf %76, %79 : vector<2x28x8x64xf32>
    %81 = arith.addf %75, %80 : vector<2x28x8x64xf32>
    %82 = vector.shape_cast %81 : vector<2x28x8x64xf32> to vector<448x64xf32>
    %c0_45 = arith.constant 0 : index
    %c0_46 = arith.constant 0 : index
    %83 = vector.load %arg6[%c0_45, %c0_46] : memref<1x64xf32, #tpu.memory_space<vmem>>, vector<1x64xf32>
    %84 = vector.broadcast %83 : vector<1x64xf32> to vector<448x64xf32>
    %85 = arith.addf %82, %84 : vector<448x64xf32>
    %cst_47 = arith.constant 0.000000e+00 : f32
    %86 = vector.broadcast %cst_47 : f32 to vector<448x64xf32>
    %87 = arith.maximumf %85, %86 : vector<448x64xf32>
    %88 = arith.truncf %87 : vector<448x64xf32> to vector<448x64xbf16>
    %c0_48 = arith.constant 0 : index
    %c0_49 = arith.constant 0 : index
    %89 = vector.load %arg7[%c0_48, %c0_49] : memref<64x64xbf16, #tpu.memory_space<vmem>>, vector<64x64xbf16>
    %cst_50 = arith.constant dense<0.000000e+00> : vector<448x64xf32>
    %90 = tpu.matmul %88, %89, %cst_50 {dimension_numbers = #tpu.dot_dimension_numbers<[1], [0], [0], [1], [0, 0, 1, 1], [], []>} : vector<448x64xbf16>, vector<64x64xbf16>, vector<448x64xf32> -> vector<448x64xf32>
    %c0_51 = arith.constant 0 : index
    %c0_52 = arith.constant 0 : index
    %91 = vector.load %arg8[%c0_51, %c0_52] : memref<1x64xf32, #tpu.memory_space<vmem>>, vector<1x64xf32>
    %92 = vector.broadcast %91 : vector<1x64xf32> to vector<448x64xf32>
    %93 = arith.addf %90, %92 : vector<448x64xf32>
    %c0_53 = arith.constant 0 : index
    %c0_54 = arith.constant 0 : index
    %94 = vector.load %arg9[%c0_53, %c0_54] : memref<16x64xbf16, #tpu.memory_space<vmem>>, vector<16x64xbf16>
    %cst_55 = arith.constant dense<0.000000e+00> : vector<448x64xf32>
    %95 = tpu.matmul %8, %94, %cst_55 {dimension_numbers = #tpu.dot_dimension_numbers<[1], [0], [0], [1], [0, 0, 1, 1], [], []>} : vector<448x16xbf16>, vector<16x64xbf16>, vector<448x64xf32> -> vector<448x64xf32>
    %96 = arith.addf %93, %95 : vector<448x64xf32>
    %c0_56 = arith.constant 0 : index
    %c0_57 = arith.constant 0 : index
    %97 = vector.load %arg10[%c0_56, %c0_57] : memref<1x64xf32, #tpu.memory_space<vmem>>, vector<1x64xf32>
    %98 = vector.broadcast %97 : vector<1x64xf32> to vector<448x64xf32>
    %99 = arith.addf %96, %98 : vector<448x64xf32>
    %cst_58 = arith.constant 0.000000e+00 : f32
    %100 = vector.broadcast %cst_58 : f32 to vector<448x64xf32>
    %101 = arith.maximumf %99, %100 : vector<448x64xf32>
    %c0_59 = arith.constant 0 : index
    %c0_60 = arith.constant 0 : index
    %102 = vector.load %arg11[%c0_59, %c0_60] : memref<224x448xbf16, #tpu.memory_space<vmem>>, vector<224x448xbf16>
    %103 = arith.truncf %101 : vector<448x64xf32> to vector<448x64xbf16>
    %cst_61 = arith.constant dense<0.000000e+00> : vector<224x64xf32>
    %104 = tpu.matmul %102, %103, %cst_61 {dimension_numbers = #tpu.dot_dimension_numbers<[1], [0], [0], [1], [0, 0, 1, 1], [], []>} : vector<224x448xbf16>, vector<448x64xbf16>, vector<224x64xf32> -> vector<224x64xf32>
    %105 = arith.truncf %104 : vector<224x64xf32> to vector<224x64xbf16>
    %c0_62 = arith.constant 0 : index
    %c0_63 = arith.constant 0 : index
    %106 = vector.load %arg12[%c0_62, %c0_63] : memref<64x128xbf16, #tpu.memory_space<vmem>>, vector<64x128xbf16>
    %cst_64 = arith.constant dense<0.000000e+00> : vector<224x128xf32>
    %107 = tpu.matmul %105, %106, %cst_64 {dimension_numbers = #tpu.dot_dimension_numbers<[1], [0], [0], [1], [0, 0, 1, 1], [], []>} : vector<224x64xbf16>, vector<64x128xbf16>, vector<224x128xf32> -> vector<224x128xf32>
    %c0_65 = arith.constant 0 : index
    %c0_66 = arith.constant 0 : index
    %108 = vector.load %arg13[%c0_65, %c0_66] : memref<1x128xf32, #tpu.memory_space<vmem>>, vector<1x128xf32>
    %109 = vector.broadcast %108 : vector<1x128xf32> to vector<224x128xf32>
    %110 = arith.addf %107, %109 : vector<224x128xf32>
    %cst_67 = arith.constant 0.000000e+00 : f32
    %111 = vector.broadcast %cst_67 : f32 to vector<224x128xf32>
    %112 = arith.maximumf %110, %111 : vector<224x128xf32>
    %113 = vector.shape_cast %112 : vector<224x128xf32> to vector<2x14x8x128xf32>
    %114 = vector.extract_strided_slice %113 {offsets = [0, 0, 0, 0], sizes = [2, 14, 4, 128], strides = [1, 1, 1, 1]} : vector<2x14x8x128xf32> to vector<2x14x4x128xf32>
    %cst_68 = arith.constant 0.000000e+00 : f32
    %115 = vector.broadcast %cst_68 : f32 to vector<2x1x10x128xf32>
    %c0_69 = arith.constant 0 : index
    %c0_70 = arith.constant 0 : index
    %c0_71 = arith.constant 0 : index
    %c0_72 = arith.constant 0 : index
    %116 = vector.load %arg28[%c0_69, %c0_70, %c0_71, %c0_72] : memref<2x16x10x128xf32, #tpu.memory_space<vmem>>, vector<2x1x10x128xf32>
    tpu.vector_store %arg28[%c0_69, %c0_70, %c0_71, %c0_72], %115 {strides = array<i32>} : memref<2x16x10x128xf32, #tpu.memory_space<vmem>>, vector<2x1x10x128xf32>,
    %c0_73 = arith.constant 0 : index
    %c15 = arith.constant 15 : index
    %c0_74 = arith.constant 0 : index
    %c0_75 = arith.constant 0 : index
    %117 = vector.load %arg28[%c0_73, %c15, %c0_74, %c0_75] : memref<2x16x10x128xf32, #tpu.memory_space<vmem>>, vector<2x1x10x128xf32>
    tpu.vector_store %arg28[%c0_73, %c15, %c0_74, %c0_75], %115 {strides = array<i32>} : memref<2x16x10x128xf32, #tpu.memory_space<vmem>>, vector<2x1x10x128xf32>,
    %cst_76 = arith.constant 0.000000e+00 : f32
    %118 = vector.broadcast %cst_76 : f32 to vector<2x16x1x128xf32>
    %c0_77 = arith.constant 0 : index
    %c0_78 = arith.constant 0 : index
    %c0_79 = arith.constant 0 : index
    %c0_80 = arith.constant 0 : index
    %119 = vector.load %arg28[%c0_77, %c0_78, %c0_79, %c0_80] : memref<2x16x10x128xf32, #tpu.memory_space<vmem>>, vector<2x16x1x128xf32>
    tpu.vector_store %arg28[%c0_77, %c0_78, %c0_79, %c0_80], %118 {strides = array<i32>} : memref<2x16x10x128xf32, #tpu.memory_space<vmem>>, vector<2x16x1x128xf32>,
    %cst_81 = arith.constant 0.000000e+00 : f32
    %120 = vector.broadcast %cst_81 : f32 to vector<2x16x5x128xf32>
    %c0_82 = arith.constant 0 : index
    %c0_83 = arith.constant 0 : index
    %c5 = arith.constant 5 : index
    %c0_84 = arith.constant 0 : index
    %121 = vector.load %arg28[%c0_82, %c0_83, %c5, %c0_84] : memref<2x16x10x128xf32, #tpu.memory_space<vmem>>, vector<2x16x5x128xf32>
    tpu.vector_store %arg28[%c0_82, %c0_83, %c5, %c0_84], %120 {strides = array<i32>} : memref<2x16x10x128xf32, #tpu.memory_space<vmem>>, vector<2x16x5x128xf32>,
    %c0_85 = arith.constant 0 : index
    %c1_86 = arith.constant 1 : index
    %c1_87 = arith.constant 1 : index
    %c0_88 = arith.constant 0 : index
    %122 = vector.load %arg28[%c0_85, %c1_86, %c1_87, %c0_88] : memref<2x16x10x128xf32, #tpu.memory_space<vmem>>, vector<2x14x4x128xf32>
    tpu.vector_store %arg28[%c0_85, %c1_86, %c1_87, %c0_88], %114 {strides = array<i32>} : memref<2x16x10x128xf32, #tpu.memory_space<vmem>>, vector<2x14x4x128xf32>,
    %c0_89 = arith.constant 0 : index
    %c0_90 = arith.constant 0 : index
    %123 = vector.load %arg14[%c0_89, %c0_90] : memref<9x128xf32, #tpu.memory_space<vmem>>, vector<9x128xf32>
    %c0_91 = arith.constant 0 : index
    %c0_92 = arith.constant 0 : index
    %124 = vector.load %arg15[%c0_91, %c0_92] : memref<9x128xf32, #tpu.memory_space<vmem>>, vector<9x128xf32>
    %c0_93 = arith.constant 0 : index
    %c0_94 = arith.constant 0 : index
    %c0_95 = arith.constant 0 : index
    %c0_96 = arith.constant 0 : index
    %125 = vector.load %arg28[%c0_93, %c0_94, %c0_95, %c0_96] : memref<2x16x10x128xf32, #tpu.memory_space<vmem>>, vector<2x16x8x128xf32>
    %126 = vector.extract_strided_slice %125 {offsets = [0, 0, 0, 0], sizes = [2, 14, 8, 128], strides = [1, 1, 1, 1]} : vector<2x16x8x128xf32> to vector<2x14x8x128xf32>
    %127 = vector.extract_strided_slice %123 {offsets = [0, 0], sizes = [1, 128], strides = [1, 1]} : vector<9x128xf32> to vector<1x128xf32>
    %128 = vector.shape_cast %127 : vector<1x128xf32> to vector<1x1x1x128xf32>
    %129 = vector.broadcast %128 : vector<1x1x1x128xf32> to vector<2x14x8x128xf32>
    %130 = arith.mulf %126, %129 : vector<2x14x8x128xf32>
    %131 = vector.extract_strided_slice %124 {offsets = [0, 0], sizes = [1, 128], strides = [1, 1]} : vector<9x128xf32> to vector<1x128xf32>
    %132 = vector.shape_cast %131 : vector<1x128xf32> to vector<1x1x1x128xf32>
    %133 = vector.broadcast %132 : vector<1x1x1x128xf32> to vector<2x14x8x128xf32>
    %134 = arith.mulf %126, %133 : vector<2x14x8x128xf32>
    %135 = vector.extract_strided_slice %125 {offsets = [0, 1, 0, 0], sizes = [2, 14, 8, 128], strides = [1, 1, 1, 1]} : vector<2x16x8x128xf32> to vector<2x14x8x128xf32>
    %136 = vector.extract_strided_slice %123 {offsets = [3, 0], sizes = [1, 128], strides = [1, 1]} : vector<9x128xf32> to vector<1x128xf32>
    %137 = vector.shape_cast %136 : vector<1x128xf32> to vector<1x1x1x128xf32>
    %138 = vector.broadcast %137 : vector<1x1x1x128xf32> to vector<2x14x8x128xf32>
    %139 = arith.mulf %135, %138 : vector<2x14x8x128xf32>
    %140 = arith.addf %130, %139 : vector<2x14x8x128xf32>
    %141 = vector.extract_strided_slice %124 {offsets = [3, 0], sizes = [1, 128], strides = [1, 1]} : vector<9x128xf32> to vector<1x128xf32>
    %142 = vector.shape_cast %141 : vector<1x128xf32> to vector<1x1x1x128xf32>
    %143 = vector.broadcast %142 : vector<1x1x1x128xf32> to vector<2x14x8x128xf32>
    %144 = arith.mulf %135, %143 : vector<2x14x8x128xf32>
    %145 = arith.addf %134, %144 : vector<2x14x8x128xf32>
    %146 = vector.extract_strided_slice %125 {offsets = [0, 2, 0, 0], sizes = [2, 14, 8, 128], strides = [1, 1, 1, 1]} : vector<2x16x8x128xf32> to vector<2x14x8x128xf32>
    %147 = vector.extract_strided_slice %123 {offsets = [6, 0], sizes = [1, 128], strides = [1, 1]} : vector<9x128xf32> to vector<1x128xf32>
    %148 = vector.shape_cast %147 : vector<1x128xf32> to vector<1x1x1x128xf32>
    %149 = vector.broadcast %148 : vector<1x1x1x128xf32> to vector<2x14x8x128xf32>
    %150 = arith.mulf %146, %149 : vector<2x14x8x128xf32>
    %151 = arith.addf %140, %150 : vector<2x14x8x128xf32>
    %152 = vector.extract_strided_slice %124 {offsets = [6, 0], sizes = [1, 128], strides = [1, 1]} : vector<9x128xf32> to vector<1x128xf32>
    %153 = vector.shape_cast %152 : vector<1x128xf32> to vector<1x1x1x128xf32>
    %154 = vector.broadcast %153 : vector<1x1x1x128xf32> to vector<2x14x8x128xf32>
    %155 = arith.mulf %146, %154 : vector<2x14x8x128xf32>
    %156 = arith.addf %145, %155 : vector<2x14x8x128xf32>
    %c0_97 = arith.constant 0 : index
    %c0_98 = arith.constant 0 : index
    %c1_99 = arith.constant 1 : index
    %c0_100 = arith.constant 0 : index
    %157 = vector.load %arg28[%c0_97, %c0_98, %c1_99, %c0_100] : memref<2x16x10x128xf32, #tpu.memory_space<vmem>>, vector<2x16x8x128xf32>
    %158 = vector.extract_strided_slice %157 {offsets = [0, 0, 0, 0], sizes = [2, 14, 8, 128], strides = [1, 1, 1, 1]} : vector<2x16x8x128xf32> to vector<2x14x8x128xf32>
    %159 = vector.extract_strided_slice %123 {offsets = [1, 0], sizes = [1, 128], strides = [1, 1]} : vector<9x128xf32> to vector<1x128xf32>
    %160 = vector.shape_cast %159 : vector<1x128xf32> to vector<1x1x1x128xf32>
    %161 = vector.broadcast %160 : vector<1x1x1x128xf32> to vector<2x14x8x128xf32>
    %162 = arith.mulf %158, %161 : vector<2x14x8x128xf32>
    %163 = arith.addf %151, %162 : vector<2x14x8x128xf32>
    %164 = vector.extract_strided_slice %124 {offsets = [1, 0], sizes = [1, 128], strides = [1, 1]} : vector<9x128xf32> to vector<1x128xf32>
    %165 = vector.shape_cast %164 : vector<1x128xf32> to vector<1x1x1x128xf32>
    %166 = vector.broadcast %165 : vector<1x1x1x128xf32> to vector<2x14x8x128xf32>
    %167 = arith.mulf %158, %166 : vector<2x14x8x128xf32>
    %168 = arith.addf %156, %167 : vector<2x14x8x128xf32>
    %169 = vector.extract_strided_slice %157 {offsets = [0, 1, 0, 0], sizes = [2, 14, 8, 128], strides = [1, 1, 1, 1]} : vector<2x16x8x128xf32> to vector<2x14x8x128xf32>
    %170 = vector.extract_strided_slice %123 {offsets = [4, 0], sizes = [1, 128], strides = [1, 1]} : vector<9x128xf32> to vector<1x128xf32>
    %171 = vector.shape_cast %170 : vector<1x128xf32> to vector<1x1x1x128xf32>
    %172 = vector.broadcast %171 : vector<1x1x1x128xf32> to vector<2x14x8x128xf32>
    %173 = arith.mulf %169, %172 : vector<2x14x8x128xf32>
    %174 = arith.addf %163, %173 : vector<2x14x8x128xf32>
    %175 = vector.extract_strided_slice %124 {offsets = [4, 0], sizes = [1, 128], strides = [1, 1]} : vector<9x128xf32> to vector<1x128xf32>
    %176 = vector.shape_cast %175 : vector<1x128xf32> to vector<1x1x1x128xf32>
    %177 = vector.broadcast %176 : vector<1x1x1x128xf32> to vector<2x14x8x128xf32>
    %178 = arith.mulf %169, %177 : vector<2x14x8x128xf32>
    %179 = arith.addf %168, %178 : vector<2x14x8x128xf32>
    %180 = vector.extract_strided_slice %157 {offsets = [0, 2, 0, 0], sizes = [2, 14, 8, 128], strides = [1, 1, 1, 1]} : vector<2x16x8x128xf32> to vector<2x14x8x128xf32>
    %181 = vector.extract_strided_slice %123 {offsets = [7, 0], sizes = [1, 128], strides = [1, 1]} : vector<9x128xf32> to vector<1x128xf32>
    %182 = vector.shape_cast %181 : vector<1x128xf32> to vector<1x1x1x128xf32>
    %183 = vector.broadcast %182 : vector<1x1x1x128xf32> to vector<2x14x8x128xf32>
    %184 = arith.mulf %180, %183 : vector<2x14x8x128xf32>
    %185 = arith.addf %174, %184 : vector<2x14x8x128xf32>
    %186 = vector.extract_strided_slice %124 {offsets = [7, 0], sizes = [1, 128], strides = [1, 1]} : vector<9x128xf32> to vector<1x128xf32>
    %187 = vector.shape_cast %186 : vector<1x128xf32> to vector<1x1x1x128xf32>
    %188 = vector.broadcast %187 : vector<1x1x1x128xf32> to vector<2x14x8x128xf32>
    %189 = arith.mulf %180, %188 : vector<2x14x8x128xf32>
    %190 = arith.addf %179, %189 : vector<2x14x8x128xf32>
    %c0_101 = arith.constant 0 : index
    %c0_102 = arith.constant 0 : index
    %c2_103 = arith.constant 2 : index
    %c0_104 = arith.constant 0 : index
    %191 = vector.load %arg28[%c0_101, %c0_102, %c2_103, %c0_104] : memref<2x16x10x128xf32, #tpu.memory_space<vmem>>, vector<2x16x8x128xf32>
    %192 = vector.extract_strided_slice %191 {offsets = [0, 0, 0, 0], sizes = [2, 14, 8, 128], strides = [1, 1, 1, 1]} : vector<2x16x8x128xf32> to vector<2x14x8x128xf32>
    %193 = vector.extract_strided_slice %123 {offsets = [2, 0], sizes = [1, 128], strides = [1, 1]} : vector<9x128xf32> to vector<1x128xf32>
    %194 = vector.shape_cast %193 : vector<1x128xf32> to vector<1x1x1x128xf32>
    %195 = vector.broadcast %194 : vector<1x1x1x128xf32> to vector<2x14x8x128xf32>
    %196 = arith.mulf %192, %195 : vector<2x14x8x128xf32>
    %197 = arith.addf %185, %196 : vector<2x14x8x128xf32>
    %198 = vector.extract_strided_slice %124 {offsets = [2, 0], sizes = [1, 128], strides = [1, 1]} : vector<9x128xf32> to vector<1x128xf32>
    %199 = vector.shape_cast %198 : vector<1x128xf32> to vector<1x1x1x128xf32>
    %200 = vector.broadcast %199 : vector<1x1x1x128xf32> to vector<2x14x8x128xf32>
    %201 = arith.mulf %192, %200 : vector<2x14x8x128xf32>
    %202 = arith.addf %190, %201 : vector<2x14x8x128xf32>
    %203 = vector.extract_strided_slice %191 {offsets = [0, 1, 0, 0], sizes = [2, 14, 8, 128], strides = [1, 1, 1, 1]} : vector<2x16x8x128xf32> to vector<2x14x8x128xf32>
    %204 = vector.extract_strided_slice %123 {offsets = [5, 0], sizes = [1, 128], strides = [1, 1]} : vector<9x128xf32> to vector<1x128xf32>
    %205 = vector.shape_cast %204 : vector<1x128xf32> to vector<1x1x1x128xf32>
    %206 = vector.broadcast %205 : vector<1x1x1x128xf32> to vector<2x14x8x128xf32>
    %207 = arith.mulf %203, %206 : vector<2x14x8x128xf32>
    %208 = arith.addf %197, %207 : vector<2x14x8x128xf32>
    %209 = vector.extract_strided_slice %124 {offsets = [5, 0], sizes = [1, 128], strides = [1, 1]} : vector<9x128xf32> to vector<1x128xf32>
    %210 = vector.shape_cast %209 : vector<1x128xf32> to vector<1x1x1x128xf32>
    %211 = vector.broadcast %210 : vector<1x1x1x128xf32> to vector<2x14x8x128xf32>
    %212 = arith.mulf %203, %211 : vector<2x14x8x128xf32>
    %213 = arith.addf %202, %212 : vector<2x14x8x128xf32>
    %214 = vector.extract_strided_slice %191 {offsets = [0, 2, 0, 0], sizes = [2, 14, 8, 128], strides = [1, 1, 1, 1]} : vector<2x16x8x128xf32> to vector<2x14x8x128xf32>
    %215 = vector.extract_strided_slice %123 {offsets = [8, 0], sizes = [1, 128], strides = [1, 1]} : vector<9x128xf32> to vector<1x128xf32>
    %216 = vector.shape_cast %215 : vector<1x128xf32> to vector<1x1x1x128xf32>
    %217 = vector.broadcast %216 : vector<1x1x1x128xf32> to vector<2x14x8x128xf32>
    %218 = arith.mulf %214, %217 : vector<2x14x8x128xf32>
    %219 = arith.addf %208, %218 : vector<2x14x8x128xf32>
    %220 = vector.extract_strided_slice %124 {offsets = [8, 0], sizes = [1, 128], strides = [1, 1]} : vector<9x128xf32> to vector<1x128xf32>
    %221 = vector.shape_cast %220 : vector<1x128xf32> to vector<1x1x1x128xf32>
    %222 = vector.broadcast %221 : vector<1x1x1x128xf32> to vector<2x14x8x128xf32>
    %223 = arith.mulf %214, %222 : vector<2x14x8x128xf32>
    %224 = arith.addf %213, %223 : vector<2x14x8x128xf32>
    %225 = vector.shape_cast %219 : vector<2x14x8x128xf32> to vector<224x128xf32>
    %226 = vector.shape_cast %224 : vector<2x14x8x128xf32> to vector<224x128xf32>
    %227 = tpu.iota {dimensions = array<i32: 1>} : vector<224x128xi32>
    %c2_i32 = arith.constant 2 : i32
    %c0_i32 = arith.constant 0 : i32
    %228 = arith.cmpi eq, %c2_i32, %c0_i32 : i32
    %c1_i32 = arith.constant 1 : i32
    %229 = arith.select %228, %c1_i32, %c2_i32 : i32
    %230 = vector.broadcast %229 : i32 to vector<224x128xi32>
    %231 = arith.remsi %227, %230 : vector<224x128xi32>
    %c0_i32_105 = arith.constant 0 : i32
    %232 = vector.broadcast %c0_i32_105 : i32 to vector<224x128xi32>
    %233 = arith.cmpi ne, %231, %232 : vector<224x128xi32>
    %c0_i32_106 = arith.constant 0 : i32
    %234 = vector.broadcast %c0_i32_106 : i32 to vector<224x128xi32>
    %235 = arith.cmpi slt, %231, %234 : vector<224x128xi32>
    %c0_i32_107 = arith.constant 0 : i32
    %236 = arith.cmpi slt, %229, %c0_i32_107 : i32
    %237 = vector.broadcast %236 : i1 to vector<224x128xi1>
    %238 = vector.broadcast %237 : vector<224x128xi1> to vector<224x128xi1>
    %239 = arith.xori %235, %238 : vector<224x128xi1>
    %240 = arith.andi %239, %233 : vector<224x128xi1>
    %241 = vector.broadcast %229 : i32 to vector<224x128xi32>
    %242 = arith.addi %231, %241 : vector<224x128xi32>
    %243 = arith.select %240, %242, %231 : vector<224x128xi1>, vector<224x128xi32>
    %c0_i32_108 = arith.constant 0 : i32
    %244 = vector.broadcast %c0_i32_108 : i32 to vector<224x128xi32>
    %245 = arith.cmpi eq, %243, %244 : vector<224x128xi32>
    %c127_i32 = arith.constant 127 : i32
    %246 = tpu.dynamic_rotate %226 by %c127_i32 dim 1 : vector<224x128xf32>, i32 -> vector<224x128xf32>
    %c1_i32_109 = arith.constant 1 : i32
    %247 = tpu.dynamic_rotate %226 by %c1_i32_109 dim 1 : vector<224x128xf32>, i32 -> vector<224x128xf32>
    %248 = arith.select %245, %246, %247 : vector<224x128xi1>, vector<224x128xf32>
    %249 = arith.addf %225, %248 : vector<224x128xf32>
    %c0_110 = arith.constant 0 : index
    %c0_111 = arith.constant 0 : index
    %250 = vector.load %arg16[%c0_110, %c0_111] : memref<1x128xf32, #tpu.memory_space<vmem>>, vector<1x128xf32>
    %251 = vector.broadcast %250 : vector<1x128xf32> to vector<224x128xf32>
    %252 = arith.addf %249, %251 : vector<224x128xf32>
    %cst_112 = arith.constant 0.000000e+00 : f32
    %253 = vector.broadcast %cst_112 : f32 to vector<224x128xf32>
    %254 = arith.maximumf %252, %253 : vector<224x128xf32>
    %255 = arith.truncf %254 : vector<224x128xf32> to vector<224x128xbf16>
    %c0_113 = arith.constant 0 : index
    %c0_114 = arith.constant 0 : index
    %256 = vector.load %arg17[%c0_113, %c0_114] : memref<128x128xbf16, #tpu.memory_space<vmem>>, vector<128x128xbf16>
    %cst_115 = arith.constant dense<0.000000e+00> : vector<224x128xf32>
    %257 = tpu.matmul %255, %256, %cst_115 {dimension_numbers = #tpu.dot_dimension_numbers<[1], [0], [0], [1], [0, 0, 1, 1], [], []>} : vector<224x128xbf16>, vector<128x128xbf16>, vector<224x128xf32> -> vector<224x128xf32>
    %c0_116 = arith.constant 0 : index
    %c0_117 = arith.constant 0 : index
    %258 = vector.load %arg18[%c0_116, %c0_117] : memref<1x128xf32, #tpu.memory_space<vmem>>, vector<1x128xf32>
    %259 = vector.broadcast %258 : vector<1x128xf32> to vector<224x128xf32>
    %260 = arith.addf %257, %259 : vector<224x128xf32>
    %c0_118 = arith.constant 0 : index
    %c0_119 = arith.constant 0 : index
    %261 = vector.load %arg19[%c0_118, %c0_119] : memref<64x128xbf16, #tpu.memory_space<vmem>>, vector<64x128xbf16>
    %cst_120 = arith.constant dense<0.000000e+00> : vector<224x128xf32>
    %262 = tpu.matmul %105, %261, %cst_120 {dimension_numbers = #tpu.dot_dimension_numbers<[1], [0], [0], [1], [0, 0, 1, 1], [], []>} : vector<224x64xbf16>, vector<64x128xbf16>, vector<224x128xf32> -> vector<224x128xf32>
    %263 = arith.addf %260, %262 : vector<224x128xf32>
    %c0_121 = arith.constant 0 : index
    %c0_122 = arith.constant 0 : index
    %264 = vector.load %arg20[%c0_121, %c0_122] : memref<1x128xf32, #tpu.memory_space<vmem>>, vector<1x128xf32>
    %265 = vector.broadcast %264 : vector<1x128xf32> to vector<224x128xf32>
    %266 = arith.addf %263, %265 : vector<224x128xf32>
    %cst_123 = arith.constant 0.000000e+00 : f32
    %267 = vector.broadcast %cst_123 : f32 to vector<224x128xf32>
    %268 = arith.maximumf %266, %267 : vector<224x128xf32>
    %c0_124 = arith.constant 0 : index
    %c0_125 = arith.constant 0 : index
    %269 = vector.load %arg21[%c0_124, %c0_125] : memref<28x224xbf16, #tpu.memory_space<vmem>>, vector<28x224xbf16>
    %270 = arith.truncf %268 : vector<224x128xf32> to vector<224x128xbf16>
    %cst_126 = arith.constant dense<0.000000e+00> : vector<28x128xf32>
    %271 = tpu.matmul %269, %270, %cst_126 {dimension_numbers = #tpu.dot_dimension_numbers<[1], [0], [0], [1], [0, 0, 1, 1], [], []>} : vector<28x224xbf16>, vector<224x128xbf16>, vector<28x128xf32> -> vector<28x128xf32>
    %272 = arith.truncf %271 : vector<28x128xf32> to vector<28x128xbf16>
    %c0_127 = arith.constant 0 : index
    %c0_128 = arith.constant 0 : index
    %273 = vector.load %arg22[%c0_127, %c0_128] : memref<128x448xbf16, #tpu.memory_space<vmem>>, vector<128x448xbf16>
    %cst_129 = arith.constant dense<0.000000e+00> : vector<28x448xf32>
    %274 = tpu.matmul %272, %273, %cst_129 {dimension_numbers = #tpu.dot_dimension_numbers<[1], [0], [0], [1], [0, 0, 1, 1], [], []>} : vector<28x128xbf16>, vector<128x448xbf16>, vector<28x448xf32> -> vector<28x448xf32>
    %275 = vector.extract_strided_slice %274 {offsets = [0, 0], sizes = [2, 32], strides = [1, 1]} : vector<28x448xf32> to vector<2x32xf32>
    %276 = vector.extract_strided_slice %274 {offsets = [2, 32], sizes = [2, 32], strides = [1, 1]} : vector<28x448xf32> to vector<2x32xf32>
    %277 = arith.addf %275, %276 : vector<2x32xf32>
    %278 = vector.extract_strided_slice %274 {offsets = [4, 64], sizes = [2, 32], strides = [1, 1]} : vector<28x448xf32> to vector<2x32xf32>
    %279 = arith.addf %277, %278 : vector<2x32xf32>
    %280 = vector.extract_strided_slice %274 {offsets = [6, 96], sizes = [2, 32], strides = [1, 1]} : vector<28x448xf32> to vector<2x32xf32>
    %281 = arith.addf %279, %280 : vector<2x32xf32>
    %282 = vector.extract_strided_slice %274 {offsets = [8, 128], sizes = [2, 32], strides = [1, 1]} : vector<28x448xf32> to vector<2x32xf32>
    %283 = arith.addf %281, %282 : vector<2x32xf32>
    %284 = vector.extract_strided_slice %274 {offsets = [10, 160], sizes = [2, 32], strides = [1, 1]} : vector<28x448xf32> to vector<2x32xf32>
    %285 = arith.addf %283, %284 : vector<2x32xf32>
    %286 = vector.extract_strided_slice %274 {offsets = [12, 192], sizes = [2, 32], strides = [1, 1]} : vector<28x448xf32> to vector<2x32xf32>
    %287 = arith.addf %285, %286 : vector<2x32xf32>
    %288 = vector.extract_strided_slice %274 {offsets = [14, 224], sizes = [2, 32], strides = [1, 1]} : vector<28x448xf32> to vector<2x32xf32>
    %289 = arith.addf %287, %288 : vector<2x32xf32>
    %290 = vector.extract_strided_slice %274 {offsets = [16, 256], sizes = [2, 32], strides = [1, 1]} : vector<28x448xf32> to vector<2x32xf32>
    %291 = arith.addf %289, %290 : vector<2x32xf32>
    %292 = vector.extract_strided_slice %274 {offsets = [18, 288], sizes = [2, 32], strides = [1, 1]} : vector<28x448xf32> to vector<2x32xf32>
    %293 = arith.addf %291, %292 : vector<2x32xf32>
    %294 = vector.extract_strided_slice %274 {offsets = [20, 320], sizes = [2, 32], strides = [1, 1]} : vector<28x448xf32> to vector<2x32xf32>
    %295 = arith.addf %293, %294 : vector<2x32xf32>
    %296 = vector.extract_strided_slice %274 {offsets = [22, 352], sizes = [2, 32], strides = [1, 1]} : vector<28x448xf32> to vector<2x32xf32>
    %297 = arith.addf %295, %296 : vector<2x32xf32>
    %298 = vector.extract_strided_slice %274 {offsets = [24, 384], sizes = [2, 32], strides = [1, 1]} : vector<28x448xf32> to vector<2x32xf32>
    %299 = arith.addf %297, %298 : vector<2x32xf32>
    %300 = vector.extract_strided_slice %274 {offsets = [26, 416], sizes = [2, 32], strides = [1, 1]} : vector<28x448xf32> to vector<2x32xf32>
    %301 = arith.addf %299, %300 : vector<2x32xf32>
    %c0_130 = arith.constant 0 : index
    %c0_131 = arith.constant 0 : index
    %302 = vector.load %arg23[%c0_130, %c0_131] : memref<1x32xf32, #tpu.memory_space<vmem>>, vector<1x32xf32>
    %303 = vector.broadcast %302 : vector<1x32xf32> to vector<2x32xf32>
    %304 = arith.addf %301, %303 : vector<2x32xf32>
    %cst_132 = arith.constant 0.000000e+00 : f32
    %305 = vector.broadcast %cst_132 : f32 to vector<2x32xf32>
    %306 = arith.maximumf %304, %305 : vector<2x32xf32>
    %307 = arith.truncf %306 : vector<2x32xf32> to vector<2x32xbf16>
    %c0_133 = arith.constant 0 : index
    %c0_134 = arith.constant 0 : index
    %308 = vector.load %arg24[%c0_133, %c0_134] : memref<32x34xbf16, #tpu.memory_space<vmem>>, vector<32x34xbf16>
    %cst_135 = arith.constant dense<0.000000e+00> : vector<2x34xf32>
    %309 = tpu.matmul %307, %308, %cst_135 {dimension_numbers = #tpu.dot_dimension_numbers<[1], [0], [0], [1], [0, 0, 1, 1], [], []>} : vector<2x32xbf16>, vector<32x34xbf16>, vector<2x34xf32> -> vector<2x34xf32>
    %c0_136 = arith.constant 0 : index
    %c0_137 = arith.constant 0 : index
    %310 = vector.load %arg25[%c0_136, %c0_137] : memref<1x34xf32, #tpu.memory_space<vmem>>, vector<1x34xf32>
    %311 = vector.broadcast %310 : vector<1x34xf32> to vector<2x34xf32>
    %312 = arith.addf %309, %311 : vector<2x34xf32>
    %c0_138 = arith.constant 0 : index
    %c0_139 = arith.constant 0 : index
    %313 = vector.load %arg26[%c0_138, %c0_139] : memref<2x34xf32, #tpu.memory_space<vmem>>, vector<2x34xf32>
    tpu.vector_store %arg26[%c0_138, %c0_139], %312 {strides = array<i32>} : memref<2x34xf32, #tpu.memory_space<vmem>>, vector<2x34xf32>,
    return
  }
}

</mosaic_0001>

<llo_original>
// kernel: _forward_jit.1
$region0: #{_forward_jit.1}
  #allocation0 [shape = 'u32[]', space=smem, size = 0x4, offset = 0x4, fixed_abs, tag = 'smem constant byte address 0x4 - core index']
  #allocation1 [shape = 'u32[144,128]{1,0:T(1,128)}', space=vmem, size = 0x12000, scoped, tag = 'internal scratch']
  #allocation2 [shape = 'f32[2,30,10,64]{3,2,1,0:T(8,128)}', space=vmem, size = 0x78000, scoped, tag = 'scratch operand']
  #allocation3 [shape = 'f32[2,16,10,128]{3,2,1,0:T(8,128)}', space=vmem, size = 0x40000, scoped, tag = 'scratch operand']
  %s0 = inlined_call_operand.vmem [shape: bf16[448,36], index: 0, kind: input, shape index: {}]
  %s1 = inlined_call_operand.vmem [shape: bf16[36,16], index: 1, kind: input, shape index: {}]
  %s2 = inlined_call_operand.vmem [shape: f32[1,16], index: 2, kind: input, shape index: {}]
  %s3 = inlined_call_operand.vmem [shape: bf16[16,64], index: 3, kind: input, shape index: {}]
  %s4 = inlined_call_operand.vmem [shape: f32[1,64], index: 4, kind: input, shape index: {}]
  %s5 = inlined_call_operand.vmem [shape: f32[9,64], index: 5, kind: input, shape index: {}]
  %s6 = inlined_call_operand.vmem [shape: f32[1,64], index: 6, kind: input, shape index: {}]
  %s7 = inlined_call_operand.vmem [shape: bf16[64,64], index: 7, kind: input, shape index: {}]
  %s8 = inlined_call_operand.vmem [shape: f32[1,64], index: 8, kind: input, shape index: {}]
  %s9 = inlined_call_operand.vmem [shape: bf16[16,64], index: 9, kind: input, shape index: {}]
  %s10 = inlined_call_operand.vmem [shape: f32[1,64], index: 10, kind: input, shape index: {}]
  %s11 = inlined_call_operand.vmem [shape: bf16[224,448], index: 11, kind: input, shape index: {}]
  %s12 = inlined_call_operand.vmem [shape: bf16[64,128], index: 12, kind: input, shape index: {}]
  %s13 = inlined_call_operand.vmem [shape: f32[1,128], index: 13, kind: input, shape index: {}]
  %s14 = inlined_call_operand.vmem [shape: f32[9,128], index: 14, kind: input, shape index: {}]
  %s15 = inlined_call_operand.vmem [shape: f32[9,128], index: 15, kind: input, shape index: {}]
  %s16 = inlined_call_operand.vmem [shape: f32[1,128], index: 16, kind: input, shape index: {}]
  %s17 = inlined_call_operand.vmem [shape: bf16[128,128], index: 17, kind: input, shape index: {}]
  %s18 = inlined_call_operand.vmem [shape: f32[1,128], index: 18, kind: input, shape index: {}]
  %s19 = inlined_call_operand.vmem [shape: bf16[64,128], index: 19, kind: input, shape index: {}]
  %s20 = inlined_call_operand.vmem [shape: f32[1,128], index: 20, kind: input, shape index: {}]
  %s21 = inlined_call_operand.vmem [shape: bf16[28,224], index: 21, kind: input, shape index: {}]
  %s22 = inlined_call_operand.vmem [shape: bf16[128,448], index: 22, kind: input, shape index: {}]
  %s23 = inlined_call_operand.vmem [shape: f32[1,32], index: 23, kind: input, shape index: {}]
  %s24 = inlined_call_operand.vmem [shape: bf16[32,34], index: 24, kind: input, shape index: {}]
  %s25 = inlined_call_operand.vmem [shape: f32[1,34], index: 25, kind: input, shape index: {}]
  %s26 = inlined_call_operand.vmem [shape: f32[2,34], index: 26, kind: output, shape index: {}]
  %s27 = sld [smem:[#allocation0]]
  $region114: #{_forward_jit.1} parent=0
    _
  %s29 = ssub.s32 1, %s27
  %s30 = scalar_select 0, %s29, %s27
  // Predicated region
  $region2: #{_forward_jit.1} parent=0 // pred_check
    _
  $region3: #{_forward_jit.1} parent=0 // pred_check_branch
    %32 = sbr.rel (0) target = $region5
  $region4: #{_forward_jit.1} parent=0 // pred_region
    _
  $region5: #{_forward_jit.1} parent=0 // pred_fallthru
    _
  // Predicated region
  $region6: #{_forward_jit.1} parent=0 // pred_check
    _
  $region7: #{_forward_jit.1} parent=0 // pred_check_branch
    %34 = sbr.rel (0) target = $region9
  $region8: #{_forward_jit.1} parent=0 // pred_region
    _
  $region9: #{_forward_jit.1} parent=0 // pred_fallthru
    _
  // Predicated region
  $region10: #{_forward_jit.1} parent=0 // pred_check
    _
  $region11: #{_forward_jit.1} parent=0 // pred_check_branch
    %36 = sbr.rel (0) target = $region13
  $region12: #{_forward_jit.1} parent=0 // pred_region
    _
  $region13: #{_forward_jit.1} parent=0 // pred_fallthru
    _
  // Predicated region
  $region14: #{_forward_jit.1} parent=0 // pred_check
    _
  $region15: #{_forward_jit.1} parent=0 // pred_check_branch
    %38 = sbr.rel (0) target = $region17
  $region16: #{_forward_jit.1} parent=0 // pred_region
    _
  $region17: #{_forward_jit.1} parent=0 // pred_fallthru
    _
  // Predicated region
  $region18: #{_forward_jit.1} parent=0 // pred_check
    _
  $region19: #{_forward_jit.1} parent=0 // pred_check_branch
    %40 = sbr.rel (0) target = $region21
  $region20: #{_forward_jit.1} parent=0 // pred_region
    _
  $region21: #{_forward_jit.1} parent=0 // pred_fallthru
    _
  // Predicated region
  $region22: #{_forward_jit.1} parent=0 // pred_check
    _
  $region23: #{_forward_jit.1} parent=0 // pred_check_branch
    %42 = sbr.rel (0) target = $region25
  $region24: #{_forward_jit.1} parent=0 // pred_region
    _
  $region25: #{_forward_jit.1} parent=0 // pred_fallthru
    _
  // Predicated region
  $region26: #{_forward_jit.1} parent=0 // pred_check
    _
  $region27: #{_forward_jit.1} parent=0 // pred_check_branch
    %44 = sbr.rel (0) target = $region29
  $region28: #{_forward_jit.1} parent=0 // pred_region
    _
  $region29: #{_forward_jit.1} parent=0 // pred_fallthru
    _
  // Predicated region
  $region30: #{_forward_jit.1} parent=0 // pred_check
    _
  $region31: #{_forward_jit.1} parent=0 // pred_check_branch
    %46 = sbr.rel (0) target = $region33
  $region32: #{_forward_jit.1} parent=0 // pred_region
    _
  $region33: #{_forward_jit.1} parent=0 // pred_fallthru
    _
  // Predicated region
  $region34: #{_forward_jit.1} parent=0 // pred_check
    _
  $region35: #{_forward_jit.1} parent=0 // pred_check_branch
    %48 = sbr.rel (0) target = $region37
  $region36: #{_forward_jit.1} parent=0 // pred_region
    _
  $region37: #{_forward_jit.1} parent=0 // pred_fallthru
    _
  // Predicated region
  $region38: #{_forward_jit.1} parent=0 // pred_check
    _
  $region39: #{_forward_jit.1} parent=0 // pred_check_branch
    %50 = sbr.rel (0) target = $region41
  $region40: #{_forward_jit.1} parent=0 // pred_region
    _
  $region41: #{_forward_jit.1} parent=0 // pred_fallthru
    _
  // Predicated region
  $region42: #{_forward_jit.1} parent=0 // pred_check
    _
  $region43: #{_forward_jit.1} parent=0 // pred_check_branch
    %52 = sbr.rel (0) target = $region45
  $region44: #{_forward_jit.1} parent=0 // pred_region
    _
  $region45: #{_forward_jit.1} parent=0 // pred_fallthru
    _
  // Predicated region
  $region46: #{_forward_jit.1} parent=0 // pred_check
    _
  $region47: #{_forward_jit.1} parent=0 // pred_check_branch
    %54 = sbr.rel (0) target = $region49
  $region48: #{_forward_jit.1} parent=0 // pred_region
    _
  $region49: #{_forward_jit.1} parent=0 // pred_fallthru
    _
  // Predicated region
  $region50: #{_forward_jit.1} parent=0 // pred_check
    _
  $region51: #{_forward_jit.1} parent=0 // pred_check_branch
    %56 = sbr.rel (0) target = $region53
  $region52: #{_forward_jit.1} parent=0 // pred_region
    _
  $region53: #{_forward_jit.1} parent=0 // pred_fallthru
    _
  // Predicated region
  $region54: #{_forward_jit.1} parent=0 // pred_check
    _
  $region55: #{_forward_jit.1} parent=0 // pred_check_branch
    %58 = sbr.rel (0) target = $region57
  $region56: #{_forward_jit.1} parent=0 // pred_region
    _
  $region57: #{_forward_jit.1} parent=0 // pred_fallthru
    _
  // Predicated region
  $region58: #{_forward_jit.1} parent=0 // pred_check
    _
  $region59: #{_forward_jit.1} parent=0 // pred_check_branch
    %60 = sbr.rel (0) target = $region61
  $region60: #{_forward_jit.1} parent=0 // pred_region
    _
  $region61: #{_forward_jit.1} parent=0 // pred_fallthru
    _
  // Predicated region
  $region62: #{_forward_jit.1} parent=0 // pred_check
    _
  $region63: #{_forward_jit.1} parent=0 // pred_check_branch
    %62 = sbr.rel (0) target = $region65
  $region64: #{_forward_jit.1} parent=0 // pred_region
    _
  $region65: #{_forward_jit.1} parent=0 // pred_fallthru
    _
  // Predicated region
  $region66: #{_forward_jit.1} parent=0 // pred_check
    _
  $region67: #{_forward_jit.1} parent=0 // pred_check_branch
    %64 = sbr.rel (0) target = $region69
  $region68: #{_forward_jit.1} parent=0 // pred_region
    _
  $region69: #{_forward_jit.1} parent=0 // pred_fallthru
    _
  // Predicated region
  $region70: #{_forward_jit.1} parent=0 // pred_check
    _
  $region71: #{_forward_jit.1} parent=0 // pred_check_branch
    %66 = sbr.rel (0) target = $region73
  $region72: #{_forward_jit.1} parent=0 // pred_region
    _
  $region73: #{_forward_jit.1} parent=0 // pred_fallthru
    _
  // Predicated region
  $region74: #{_forward_jit.1} parent=0 // pred_check
    _
  $region75: #{_forward_jit.1} parent=0 // pred_check_branch
    %68 = sbr.rel (0) target = $region77
  $region76: #{_forward_jit.1} parent=0 // pred_region
    _
  $region77: #{_forward_jit.1} parent=0 // pred_fallthru
    _
  // Predicated region
  $region78: #{_forward_jit.1} parent=0 // pred_check
    _
  $region79: #{_forward_jit.1} parent=0 // pred_check_branch
    %70 = sbr.rel (0) target = $region81
  $region80: #{_forward_jit.1} parent=0 // pred_region
    _
  $region81: #{_forward_jit.1} parent=0 // pred_fallthru
    _
  // Predicated region
  $region82: #{_forward_jit.1} parent=0 // pred_check
    _
  $region83: #{_forward_jit.1} parent=0 // pred_check_branch
    %72 = sbr.rel (0) target = $region85
  $region84: #{_forward_jit.1} parent=0 // pred_region
    _
  $region85: #{_forward_jit.1} parent=0 // pred_fallthru
    _
  // Predicated region
  $region86: #{_forward_jit.1} parent=0 // pred_check
    _
  $region87: #{_forward_jit.1} parent=0 // pred_check_branch
    %74 = sbr.rel (0) target = $region89
  $region88: #{_forward_jit.1} parent=0 // pred_region
    _
  $region89: #{_forward_jit.1} parent=0 // pred_fallthru
    _
  // Predicated region
  $region90: #{_forward_jit.1} parent=0 // pred_check
    _
  $region91: #{_forward_jit.1} parent=0 // pred_check_branch
    %76 = sbr.rel (0) target = $region93
  $region92: #{_forward_jit.1} parent=0 // pred_region
    _
  $region93: #{_forward_jit.1} parent=0 // pred_fallthru
    _
  // Predicated region
  $region94: #{_forward_jit.1} parent=0 // pred_check
    _
  $region95: #{_forward_jit.1} parent=0 // pred_check_branch
    %78 = sbr.rel (0) target = $region97
  $region96: #{_forward_jit.1} parent=0 // pred_region
    _
  $region97: #{_forward_jit.1} parent=0 // pred_fallthru
    _
  // Predicated region
  $region98: #{_forward_jit.1} parent=0 // pred_check
    _
  $region99: #{_forward_jit.1} parent=0 // pred_check_branch
    %80 = sbr.rel (0) target = $region101
  $region100: #{_forward_jit.1} parent=0 // pred_region
    _
  $region101: #{_forward_jit.1} parent=0 // pred_fallthru
    _
  // Predicated region
  $region102: #{_forward_jit.1} parent=0 // pred_check
    _
  $region103: #{_forward_jit.1} parent=0 // pred_check_branch
    %82 = sbr.rel (0) target = $region105
  $region104: #{_forward_jit.1} parent=0 // pred_region
    _
  $region105: #{_forward_jit.1} parent=0 // pred_fallthru
    _
  %v84 = vld [vmem:[%s0] sm:$0xf]
  %v85 = vld [vmem:[%s0 + $0x4] sm:$0xf]
  %v86 = vld [vmem:[%s0 + $0x8] sm:$0xf]
  %v87 = vld [vmem:[%s0 + $0xc] sm:$0xf]
  %v88 = vld [vmem:[%s0 + $0x10] sm:$0xf]
  %v89 = vld [vmem:[%s0 + $0x14] sm:$0xf]
  %v90 = vld [vmem:[%s0 + $0x18] sm:$0xf]
  %v91 = vld [vmem:[%s0 + $0x1c] sm:$0xf]
  %v92 = vld [vmem:[%s0 + $0x20] sm:$0xf]
  %v93 = vld [vmem:[%s0 + $0x24] sm:$0xf]
  %v94 = vld [vmem:[%s0 + $0x28] sm:$0xf]
  %v95 = vld [vmem:[%s0 + $0x2c] sm:$0xf]
  %v96 = vld [vmem:[%s0 + $0x30] sm:$0xf]
  %v97 = vld [vmem:[%s0 + $0x34] sm:$0xf]
  %v98 = vld [vmem:[%s0 + $0x38] sm:$0xf]
  %v99 = vld [vmem:[%s0 + $0x3c] sm:$0xf]
  %v100 = vld [vmem:[%s0 + $0x40] sm:$0xf]
  %v101 = vld [vmem:[%s0 + $0x44] sm:$0xf]
  %v102 = vld [vmem:[%s0 + $0x48] sm:$0xf]
  %v103 = vld [vmem:[%s0 + $0x4c] sm:$0xf]
  %v104 = vld [vmem:[%s0 + $0x50] sm:$0xf]
  %v105 = vld [vmem:[%s0 + $0x54] sm:$0xf]
  %v106 = vld [vmem:[%s0 + $0x58] sm:$0xf]
  %v107 = vld [vmem:[%s0 + $0x5c] sm:$0xf]
  %v108 = vld [vmem:[%s0 + $0x60] sm:$0xf]
  %v109 = vld [vmem:[%s0 + $0x64] sm:$0xf]
  %v110 = vld [vmem:[%s0 + $0x68] sm:$0xf]
  %v111 = vld [vmem:[%s0 + $0x6c] sm:$0xf]
  %v112 = vld [vmem:[%s0 + $0x70] sm:$0xf]
  %v113 = vld [vmem:[%s0 + $0x74] sm:$0xf]
  %v114 = vld [vmem:[%s0 + $0x78] sm:$0xf]
  %v115 = vld [vmem:[%s0 + $0x7c] sm:$0xf]
  %v116 = vld [vmem:[%s0 + $0x80] sm:$0xf]
  %v117 = vld [vmem:[%s0 + $0x84] sm:$0xf]
  %v118 = vld [vmem:[%s0 + $0x88] sm:$0xf]
  %v119 = vld [vmem:[%s0 + $0x8c] sm:$0xf]
  %v120 = vld [vmem:[%s0 + $0x90] sm:$0xf]
  %v121 = vld [vmem:[%s0 + $0x94] sm:$0xf]
  %v122 = vld [vmem:[%s0 + $0x98] sm:$0xf]
  %v123 = vld [vmem:[%s0 + $0x9c] sm:$0xf]
  %v124 = vld [vmem:[%s0 + $0xa0] sm:$0xf]
  %v125 = vld [vmem:[%s0 + $0xa4] sm:$0xf]
  %v126 = vld [vmem:[%s0 + $0xa8] sm:$0xf]
  %v127 = vld [vmem:[%s0 + $0xac] sm:$0xf]
  %v128 = vld [vmem:[%s0 + $0xb0] sm:$0xf]
  %v129 = vld [vmem:[%s0 + $0xb4] sm:$0xf]
  %v130 = vld [vmem:[%s0 + $0xb8] sm:$0xf]
  %v131 = vld [vmem:[%s0 + $0xbc] sm:$0xf]
  %v132 = vld [vmem:[%s0 + $0xc0] sm:$0xf]
  %v133 = vld [vmem:[%s0 + $0xc4] sm:$0xf]
  %v134 = vld [vmem:[%s0 + $0xc8] sm:$0xf]
  %v135 = vld [vmem:[%s0 + $0xcc] sm:$0xf]
  %v136 = vld [vmem:[%s0 + $0xd0] sm:$0xf]
  %v137 = vld [vmem:[%s0 + $0xd4] sm:$0xf]
  %v138 = vld [vmem:[%s0 + $0xd8] sm:$0xf]
  %v139 = vld [vmem:[%s0 + $0xdc] sm:$0xf]
  %v140 = vld [vmem:[%s1] sm:$0xf]
  %v141 = vld [vmem:[%s1 + $0x4] sm:$0xf]
  %v142 = vld [vmem:[%s1 + $0x8] sm:$0xf]
  %v143 = vld [vmem:[%s1 + $0xc] sm:$0xf]
  %v144 = vld [vmem:[%s1 + $0x10] sm:$0x3]
  %v145 = vld [vmem:[%s2] sm:$0x1]
  %v147 = vlaneseq
  %v148 = vshrl.u32 %v147, 7
  %v149 = vsub.s32 0, %v148
  %v150 = vrot.slane %v145, %v149
  %v208 = vunpack.c.l.b16 %v84
  %v209 = vunpack.c.l.b16 %v85
  %v210 = vunpack.c.l.b16 %v86
  %v211 = vunpack.c.l.b16 %v87
  %v212 = vunpack.c.l.b16 %v88
  %v213 = vunpack.c.l.b16 %v89
  %v214 = vunpack.c.l.b16 %v90
  %v215 = vunpack.c.l.b16 %v91
  %v216 = vunpack.c.l.b16 %v92
  %v217 = vunpack.c.l.b16 %v93
  %v218 = vunpack.c.l.b16 %v94
  %v219 = vunpack.c.l.b16 %v95
  %v220 = vunpack.c.l.b16 %v96
  %v221 = vunpack.c.l.b16 %v97
  %v222 = vunpack.c.l.b16 %v98
  %v223 = vunpack.c.l.b16 %v99
  %v224 = vunpack.c.l.b16 %v100
  %v225 = vunpack.c.l.b16 %v101
  %v226 = vunpack.c.l.b16 %v102
  %v227 = vunpack.c.l.b16 %v103
  %v228 = vunpack.c.l.b16 %v104
  %v229 = vunpack.c.l.b16 %v105
  %v230 = vunpack.c.l.b16 %v106
  %v231 = vunpack.c.l.b16 %v107
  %v232 = vunpack.c.l.b16 %v108
  %v233 = vunpack.c.l.b16 %v109
  %v234 = vunpack.c.l.b16 %v110
  %v235 = vunpack.c.l.b16 %v111
  %v236 = vunpack.c.l.b16 %v112
  %v237 = vunpack.c.l.b16 %v113
  %v238 = vunpack.c.l.b16 %v114
  %v239 = vunpack.c.l.b16 %v115
  %v240 = vunpack.c.l.b16 %v116
  %v241 = vunpack.c.l.b16 %v117
  %v242 = vunpack.c.l.b16 %v118
  %v243 = vunpack.c.l.b16 %v119
  %v244 = vunpack.c.l.b16 %v120
  %v245 = vunpack.c.l.b16 %v121
  %v246 = vunpack.c.l.b16 %v122
  %v247 = vunpack.c.l.b16 %v123
  %v248 = vunpack.c.l.b16 %v124
  %v249 = vunpack.c.l.b16 %v125
  %v250 = vunpack.c.l.b16 %v126
  %v251 = vunpack.c.l.b16 %v127
  %v252 = vunpack.c.l.b16 %v128
  %v253 = vunpack.c.l.b16 %v129
  %v254 = vunpack.c.l.b16 %v130
  %v255 = vunpack.c.l.b16 %v131
  %v256 = vunpack.c.l.b16 %v132
  %v257 = vunpack.c.l.b16 %v133
  %v258 = vunpack.c.l.b16 %v134
  %v259 = vunpack.c.l.b16 %v135
  %v260 = vunpack.c.l.b16 %v136
  %v261 = vunpack.c.l.b16 %v137
  %v262 = vunpack.c.l.b16 %v138
  %v263 = vunpack.c.l.b16 %v139
  %v264 = vpack.c.b16 %v209, %v208
  %v265 = vpack.c.b16 %v211, %v210
  %v266 = vpack.c.b16 %v213, %v212
  %v267 = vpack.c.b16 %v215, %v214
  %v268 = vpack.c.b16 %v217, %v216
  %v269 = vpack.c.b16 %v219, %v218
  %v270 = vpack.c.b16 %v221, %v220
  %v271 = vpack.c.b16 %v223, %v222
  %v272 = vpack.c.b16 %v225, %v224
  %v273 = vpack.c.b16 %v227, %v226
  %v274 = vpack.c.b16 %v229, %v228
  %v275 = vpack.c.b16 %v231, %v230
  %v276 = vpack.c.b16 %v233, %v232
  %v277 = vpack.c.b16 %v235, %v234
  %v278 = vpack.c.b16 %v237, %v236
  %v279 = vpack.c.b16 %v239, %v238
  %v280 = vpack.c.b16 %v241, %v240
  %v281 = vpack.c.b16 %v243, %v242
  %v282 = vpack.c.b16 %v245, %v244
  %v283 = vpack.c.b16 %v247, %v246
  %v284 = vpack.c.b16 %v249, %v248
  %v285 = vpack.c.b16 %v251, %v250
  %v286 = vpack.c.b16 %v253, %v252
  %v287 = vpack.c.b16 %v255, %v254
  %v288 = vpack.c.b16 %v257, %v256
  %v289 = vpack.c.b16 %v259, %v258
  %v290 = vpack.c.b16 %v261, %v260
  %v291 = vpack.c.b16 %v263, %v262
  %v297 = vunpack.c.l.b16 %v140
  %v298 = vunpack.c.l.b16 %v141
  %v299 = vunpack.c.l.b16 %v142
  %v300 = vunpack.c.l.b16 %v143
  %v301 = vunpack.c.l.b16 %v144
  %v302 = vpack.c.b16 %v298, %v297
  %v303 = vpack.c.b16 %v300, %v299
  %v304 = vpack.c.b16 %v301, %v301
  %vm307 = vcmask 293888
  %v309 = vsel %vm307, %v264, 0
  %v312 = vsel %vm307, %v265, 0
  %v315 = vsel %vm307, %v266, 0
  %v318 = vsel %vm307, %v267, 0
  %v321 = vsel %vm307, %v268, 0
  %v324 = vsel %vm307, %v269, 0
  %v327 = vsel %vm307, %v270, 0
  %v330 = vsel %vm307, %v271, 0
  %v333 = vsel %vm307, %v272, 0
  %v336 = vsel %vm307, %v273, 0
  %v339 = vsel %vm307, %v274, 0
  %v342 = vsel %vm307, %v275, 0
  %v345 = vsel %vm307, %v276, 0
  %v348 = vsel %vm307, %v277, 0
  %v351 = vsel %vm307, %v278, 0
  %v354 = vsel %vm307, %v279, 0
  %v357 = vsel %vm307, %v280, 0
  %v360 = vsel %vm307, %v281, 0
  %v363 = vsel %vm307, %v282, 0
  %v366 = vsel %vm307, %v283, 0
  %v369 = vsel %vm307, %v284, 0
  %v372 = vsel %vm307, %v285, 0
  %v375 = vsel %vm307, %v286, 0
  %v378 = vsel %vm307, %v287, 0
  %v381 = vsel %vm307, %v288, 0
  %v384 = vsel %vm307, %v289, 0
  %v387 = vsel %vm307, %v290, 0
  %v390 = vsel %vm307, %v291, 0
  %vm392 = vcmask 1041408
  %v394 = vsel %vm392, %v304, 0
  %396 = vmatprep.subr.bf16.mxu0 0
  %397 = vmatpush1.bf16.msra.mxu0 %v302
  %398 = vmatprep.subr.bf16.mxu0 0
  %399 = vmatpush1.bf16.msra.mxu0 %v303
  %400 = vmatprep.subr.bf16.mxu0 0
  %401 = vmatpush1.bf16.msra.mxu0 %v394
  %402 = vmatprep.subr.bf16.mxu0 0
  %403 = vmatpush1.bf16.msra.mxu0 0
  %404 = vmatprep.subr.bf16.mxu0 0
  %405 = vmatpush1.bf16.msra.mxu0 0
  %406 = vmatprep.subr.bf16.mxu0 0
  %407 = vmatpush1.bf16.msra.mxu0 0
  %408 = vmatprep.subr.bf16.mxu0 0
  %409 = vmatpush1.bf16.msra.mxu0 0
  %410 = vmatprep.subr.bf16.mxu0 0
  %411 = vmatpush1.bf16.msra.mxu0 0
  %412 = vmatprep.subr.bf16.mxu0 0
  %413 = vmatpush1.bf16.msra.mxu0 0
  %414 = vmatprep.subr.bf16.mxu0 0
  %415 = vmatpush1.bf16.msra.mxu0 0
  %416 = vmatprep.subr.bf16.mxu0 0
  %417 = vmatpush1.bf16.msra.mxu0 0
  %418 = vmatprep.subr.bf16.mxu0 0
  %419 = vmatpush1.bf16.msra.mxu0 0
  %420 = vmatprep.subr.bf16.mxu0 0
  %421 = vmatpush1.bf16.msra.mxu0 0
  %422 = vmatprep.subr.bf16.mxu0 0
  %423 = vmatpush1.bf16.msra.mxu0 0
  %424 = vmatprep.subr.bf16.mxu0 0
  %425 = vmatpush1.bf16.msra.mxu0 0
  %426 = vmatprep.subr.bf16.mxu0 0
  %427 = vmatpush1.bf16.msra.mxu0 0
  %428 = vmatprep.mubr.bf16.mxu0 0
  %429 = vmatmul.mubr.bf16.gmra.mrb[0].mxu0 %v309
  %v430 = vpop.f32.mrb[0].mxu0
  %v431 = vadd.f32 %v150, %v430
  %v432 = vpop.f32.mrb[0].mxu0
  %v433 = vpop.f32.mrb[0].mxu0
  %v434 = vadd.f32 %v150, %v433
  %v435 = vpop.f32.mrb[0].mxu0
  %436 = vmatprep.mubr.bf16.mxu0 0
  %437 = vmatmul.mubr.bf16.gmra.mrb[0].mxu0 %v312
  %v438 = vpop.f32.mrb[0].mxu0
  %v439 = vadd.f32 %v150, %v438
  %v440 = vpop.f32.mrb[0].mxu0
  %v441 = vpop.f32.mrb[0].mxu0
  %v442 = vadd.f32 %v150, %v441
  %v443 = vpop.f32.mrb[0].mxu0
  %444 = vmatprep.mubr.bf16.mxu0 0
  %445 = vmatmul.mubr.bf16.gmra.mrb[0].mxu0 %v315
  %v446 = vpop.f32.mrb[0].mxu0
  %v447 = vadd.f32 %v150, %v446
  %v448 = vpop.f32.mrb[0].mxu0
  %v449 = vpop.f32.mrb[0].mxu0
  %v450 = vadd.f32 %v150, %v449
  %v451 = vpop.f32.mrb[0].mxu0
  %452 = vmatprep.mubr.bf16.mxu0 0
  %453 = vmatmul.mubr.bf16.gmra.mrb[0].mxu0 %v318
  %v454 = vpop.f32.mrb[0].mxu0
  %v455 = vadd.f32 %v150, %v454
  %v456 = vpop.f32.mrb[0].mxu0
  %v457 = vpop.f32.mrb[0].mxu0
  %v458 = vadd.f32 %v150, %v457
  %v459 = vpop.f32.mrb[0].mxu0
  %460 = vmatprep.mubr.bf16.mxu0 0
  %461 = vmatmul.mubr.bf16.gmra.mrb[0].mxu0 %v321
  %v462 = vpop.f32.mrb[0].mxu0
  %v463 = vadd.f32 %v150, %v462
  %v464 = vpop.f32.mrb[0].mxu0
  %v465 = vpop.f32.mrb[0].mxu0
  %v466 = vadd.f32 %v150, %v465
  %v467 = vpop.f32.mrb[0].mxu0
  %468 = vmatprep.mubr.bf16.mxu0 0
  %469 = vmatmul.mubr.bf16.gmra.mrb[0].mxu0 %v324
  %v470 = vpop.f32.mrb[0].mxu0
  %v471 = vadd.f32 %v150, %v470
  %v472 = vpop.f32.mrb[0].mxu0
  %v473 = vpop.f32.mrb[0].mxu0
  %v474 = vadd.f32 %v150, %v473
  %v475 = vpop.f32.mrb[0].mxu0
  %476 = vmatprep.mubr.bf16.mxu0 0
  %477 = vmatmul.mubr.bf16.gmra.mrb[0].mxu0 %v327
  %v478 = vpop.f32.mrb[0].mxu0
  %v479 = vadd.f32 %v150, %v478
  %v480 = vpop.f32.mrb[0].mxu0
  %v481 = vpop.f32.mrb[0].mxu0
  %v482 = vadd.f32 %v150, %v481
  %v483 = vpop.f32.mrb[0].mxu0
  %484 = vmatprep.mubr.bf16.mxu0 0
  %485 = vmatmul.mubr.bf16.gmra.mrb[0].mxu0 %v330
  %v486 = vpop.f32.mrb[0].mxu0
  %v487 = vadd.f32 %v150, %v486
  %v488 = vpop.f32.mrb[0].mxu0
  %v489 = vpop.f32.mrb[0].mxu0
  %v490 = vadd.f32 %v150, %v489
  %v491 = vpop.f32.mrb[0].mxu0
  %492 = vmatprep.mubr.bf16.mxu0 0
  %493 = vmatmul.mubr.bf16.gmra.mrb[0].mxu0 %v333
  %v494 = vpop.f32.mrb[0].mxu0
  %v495 = vadd.f32 %v150, %v494
  %v496 = vpop.f32.mrb[0].mxu0
  %v497 = vpop.f32.mrb[0].mxu0
  %v498 = vadd.f32 %v150, %v497
  %v499 = vpop.f32.mrb[0].mxu0
  %500 = vmatprep.mubr.bf16.mxu0 0
  %501 = vmatmul.mubr.bf16.gmra.mrb[0].mxu0 %v336
  %v502 = vpop.f32.mrb[0].mxu0
  %v503 = vadd.f32 %v150, %v502
  %v504 = vpop.f32.mrb[0].mxu0
  %v505 = vpop.f32.mrb[0].mxu0
  %v506 = vadd.f32 %v150, %v505
  %v507 = vpop.f32.mrb[0].mxu0
  %508 = vmatprep.mubr.bf16.mxu0 0
  %509 = vmatmul.mubr.bf16.gmra.mrb[0].mxu0 %v339
  %v510 = vpop.f32.mrb[0].mxu0
  %v511 = vadd.f32 %v150, %v510
  %v512 = vpop.f32.mrb[0].mxu0
  %v513 = vpop.f32.mrb[0].mxu0
  %v514 = vadd.f32 %v150, %v513
  %v515 = vpop.f32.mrb[0].mxu0
  %516 = vmatprep.mubr.bf16.mxu0 0
  %517 = vmatmul.mubr.bf16.gmra.mrb[0].mxu0 %v342
  %v518 = vpop.f32.mrb[0].mxu0
  %v519 = vadd.f32 %v150, %v518
  %v520 = vpop.f32.mrb[0].mxu0
  %v521 = vpop.f32.mrb[0].mxu0
  %v522 = vadd.f32 %v150, %v521
  %v523 = vpop.f32.mrb[0].mxu0
  %524 = vmatprep.mubr.bf16.mxu0 0
  %525 = vmatmul.mubr.bf16.gmra.mrb[0].mxu0 %v345
  %v526 = vpop.f32.mrb[0].mxu0
  %v527 = vadd.f32 %v150, %v526
  %v528 = vpop.f32.mrb[0].mxu0
  %v529 = vpop.f32.mrb[0].mxu0
  %v530 = vadd.f32 %v150, %v529
  %v531 = vpop.f32.mrb[0].mxu0
  %532 = vmatprep.mubr.bf16.mxu0 0
  %533 = vmatmul.mubr.bf16.gmra.mrb[0].mxu0 %v348
  %v534 = vpop.f32.mrb[0].mxu0
  %v535 = vadd.f32 %v150, %v534
  %v536 = vpop.f32.mrb[0].mxu0
  %v537 = vpop.f32.mrb[0].mxu0
  %v538 = vadd.f32 %v150, %v537
  %v539 = vpop.f32.mrb[0].mxu0
  %540 = vmatprep.mubr.bf16.mxu0 0
  %541 = vmatmul.mubr.bf16.gmra.mrb[0].mxu0 %v351
  %v542 = vpop.f32.mrb[0].mxu0
  %v543 = vadd.f32 %v150, %v542
  %v544 = vpop.f32.mrb[0].mxu0
  %v545 = vpop.f32.mrb[0].mxu0
  %v546 = vadd.f32 %v150, %v545
  %v547 = vpop.f32.mrb[0].mxu0
  %548 = vmatprep.mubr.bf16.mxu0 0
  %549 = vmatmul.mubr.bf16.gmra.mrb[0].mxu0 %v354
  %v550 = vpop.f32.mrb[0].mxu0
  %v551 = vadd.f32 %v150, %v550
  %v552 = vpop.f32.mrb[0].mxu0
  %v553 = vpop.f32.mrb[0].mxu0
  %v554 = vadd.f32 %v150, %v553
  %v555 = vpop.f32.mrb[0].mxu0
  %556 = vmatprep.mubr.bf16.mxu0 0
  %557 = vmatmul.mubr.bf16.gmra.mrb[0].mxu0 %v357
  %v558 = vpop.f32.mrb[0].mxu0
  %v559 = vadd.f32 %v150, %v558
  %v560 = vpop.f32.mrb[0].mxu0
  %v561 = vpop.f32.mrb[0].mxu0
  %v562 = vadd.f32 %v150, %v561
  %v563 = vpop.f32.mrb[0].mxu0
  %564 = vmatprep.mubr.bf16.mxu0 0
  %565 = vmatmul.mubr.bf16.gmra.mrb[0].mxu0 %v360
  %v566 = vpop.f32.mrb[0].mxu0
  %v567 = vadd.f32 %v150, %v566
  %v568 = vpop.f32.mrb[0].mxu0
  %v569 = vpop.f32.mrb[0].mxu0
  %v570 = vadd.f32 %v150, %v569
  %v571 = vpop.f32.mrb[0].mxu0
  %572 = vmatprep.mubr.bf16.mxu0 0
  %573 = vmatmul.mubr.bf16.gmra.mrb[0].mxu0 %v363
  %v574 = vpop.f32.mrb[0].mxu0
  %v575 = vadd.f32 %v150, %v574
  %v576 = vpop.f32.mrb[0].mxu0
  %v577 = vpop.f32.mrb[0].mxu0
  %v578 = vadd.f32 %v150, %v577
  %v579 = vpop.f32.mrb[0].mxu0
  %580 = vmatprep.mubr.bf16.mxu0 0
  %581 = vmatmul.mubr.bf16.gmra.mrb[0].mxu0 %v366
  %v582 = vpop.f32.mrb[0].mxu0
  %v583 = vadd.f32 %v150, %v582
  %v584 = vpop.f32.mrb[0].mxu0
  %v585 = vpop.f32.mrb[0].mxu0
  %v586 = vadd.f32 %v150, %v585
  %v587 = vpop.f32.mrb[0].mxu0
  %588 = vmatprep.mubr.bf16.mxu0 0
  %589 = vmatmul.mubr.bf16.gmra.mrb[0].mxu0 %v369
  %v590 = vpop.f32.mrb[0].mxu0
  %v591 = vadd.f32 %v150, %v590
  %v592 = vpop.f32.mrb[0].mxu0
  %v593 = vpop.f32.mrb[0].mxu0
  %v594 = vadd.f32 %v150, %v593
  %v595 = vpop.f32.mrb[0].mxu0
  %596 = vmatprep.mubr.bf16.mxu0 0
  %597 = vmatmul.mubr.bf16.gmra.mrb[0].mxu0 %v372
  %v598 = vpop.f32.mrb[0].mxu0
  %v599 = vadd.f32 %v150, %v598
  %v600 = vpop.f32.mrb[0].mxu0
  %v601 = vpop.f32.mrb[0].mxu0
  %v602 = vadd.f32 %v150, %v601
  %v603 = vpop.f32.mrb[0].mxu0
  %604 = vmatprep.mubr.bf16.mxu0 0
  %605 = vmatmul.mubr.bf16.gmra.mrb[0].mxu0 %v375
  %v606 = vpop.f32.mrb[0].mxu0
  %v607 = vadd.f32 %v150, %v606
  %v608 = vpop.f32.mrb[0].mxu0
  %v609 = vpop.f32.mrb[0].mxu0
  %v610 = vadd.f32 %v150, %v609
  %v611 = vpop.f32.mrb[0].mxu0
  %612 = vmatprep.mubr.bf16.mxu0 0
  %613 = vmatmul.mubr.bf16.gmra.mrb[0].mxu0 %v378
  %v614 = vpop.f32.mrb[0].mxu0
  %v615 = vadd.f32 %v150, %v614
  %v616 = vpop.f32.mrb[0].mxu0
  %v617 = vpop.f32.mrb[0].mxu0
  %v618 = vadd.f32 %v150, %v617
  %v619 = vpop.f32.mrb[0].mxu0
  %620 = vmatprep.mubr.bf16.mxu0 0
  %621 = vmatmul.mubr.bf16.gmra.mrb[0].mxu0 %v381
  %v622 = vpop.f32.mrb[0].mxu0
  %v623 = vadd.f32 %v150, %v622
  %v624 = vpop.f32.mrb[0].mxu0
  %v625 = vpop.f32.mrb[0].mxu0
  %v626 = vadd.f32 %v150, %v625
  %v627 = vpop.f32.mrb[0].mxu0
  %628 = vmatprep.mubr.bf16.mxu0 0
  %629 = vmatmul.mubr.bf16.gmra.mrb[0].mxu0 %v384
  %v630 = vpop.f32.mrb[0].mxu0
  %v631 = vadd.f32 %v150, %v630
  %v632 = vpop.f32.mrb[0].mxu0
  %v633 = vpop.f32.mrb[0].mxu0
  %v634 = vadd.f32 %v150, %v633
  %v635 = vpop.f32.mrb[0].mxu0
  %636 = vmatprep.mubr.bf16.mxu0 0
  %637 = vmatmul.mubr.bf16.gmra.mrb[0].mxu0 %v387
  %v638 = vpop.f32.mrb[0].mxu0
  %v639 = vadd.f32 %v150, %v638
  %v640 = vpop.f32.mrb[0].mxu0
  %v641 = vpop.f32.mrb[0].mxu0
  %v642 = vadd.f32 %v150, %v641
  %v643 = vpop.f32.mrb[0].mxu0
  %644 = vmatprep.mubr.bf16.mxu0 0
  %645 = vmatmul.mubr.bf16.gmra.mrb[0].mxu0 %v390
  %v646 = vpop.f32.mrb[0].mxu0
  %v647 = vadd.f32 %v150, %v646
  %v648 = vpop.f32.mrb[0].mxu0
  %v649 = vpop.f32.mrb[0].mxu0
  %v650 = vadd.f32 %v150, %v649
  %v651 = vpop.f32.mrb[0].mxu0
  %652 = vdwg.mxu0
  %v653 = vmax.f32 %v431, 0.0
  %v654 = vmax.f32 %v434, 0.0
  %v655 = vmax.f32 %v439, 0.0
  %v656 = vmax.f32 %v442, 0.0
  %v657 = vmax.f32 %v447, 0.0
  %v658 = vmax.f32 %v450, 0.0
  %v659 = vmax.f32 %v455, 0.0
  %v660 = vmax.f32 %v458, 0.0
  %v661 = vmax.f32 %v463, 0.0
  %v662 = vmax.f32 %v466, 0.0
  %v663 = vmax.f32 %v471, 0.0
  %v664 = vmax.f32 %v474, 0.0
  %v665 = vmax.f32 %v479, 0.0
  %v666 = vmax.f32 %v482, 0.0
  %v667 = vmax.f32 %v487, 0.0
  %v668 = vmax.f32 %v490, 0.0
  %v669 = vmax.f32 %v495, 0.0
  %v670 = vmax.f32 %v498, 0.0
  %v671 = vmax.f32 %v503, 0.0
  %v672 = vmax.f32 %v506, 0.0
  %v673 = vmax.f32 %v511, 0.0
  %v674 = vmax.f32 %v514, 0.0
  %v675 = vmax.f32 %v519, 0.0
  %v676 = vmax.f32 %v522, 0.0
  %v677 = vmax.f32 %v527, 0.0
  %v678 = vmax.f32 %v530, 0.0
  %v679 = vmax.f32 %v535, 0.0
  %v680 = vmax.f32 %v538, 0.0
  %v681 = vmax.f32 %v543, 0.0
  %v682 = vmax.f32 %v546, 0.0
  %v683 = vmax.f32 %v551, 0.0
  %v684 = vmax.f32 %v554, 0.0
  %v685 = vmax.f32 %v559, 0.0
  %v686 = vmax.f32 %v562, 0.0
  %v687 = vmax.f32 %v567, 0.0
  %v688 = vmax.f32 %v570, 0.0
  %v689 = vmax.f32 %v575, 0.0
  %v690 = vmax.f32 %v578, 0.0
  %v691 = vmax.f32 %v583, 0.0
  %v692 = vmax.f32 %v586, 0.0
  %v693 = vmax.f32 %v591, 0.0
  %v694 = vmax.f32 %v594, 0.0
  %v695 = vmax.f32 %v599, 0.0
  %v696 = vmax.f32 %v602, 0.0
  %v697 = vmax.f32 %v607, 0.0
  %v698 = vmax.f32 %v610, 0.0
  %v699 = vmax.f32 %v615, 0.0
  %v700 = vmax.f32 %v618, 0.0
  %v701 = vmax.f32 %v623, 0.0
  %v702 = vmax.f32 %v626, 0.0
  %v703 = vmax.f32 %v631, 0.0
  %v704 = vmax.f32 %v634, 0.0
  %v705 = vmax.f32 %v639, 0.0
  %v706 = vmax.f32 %v642, 0.0
  %v707 = vmax.f32 %v647, 0.0
  %v708 = vmax.f32 %v650, 0.0
  %v709 = vpack.c.bf16 %v654, %v653
  %v710 = vpack.c.bf16 %v656, %v655
  %v711 = vpack.c.bf16 %v658, %v657
  %v712 = vpack.c.bf16 %v660, %v659
  %v713 = vpack.c.bf16 %v662, %v661
  %v714 = vpack.c.bf16 %v664, %v663
  %v715 = vpack.c.bf16 %v666, %v665
  %v716 = vpack.c.bf16 %v668, %v667
  %v717 = vpack.c.bf16 %v670, %v669
  %v718 = vpack.c.bf16 %v672, %v671
  %v719 = vpack.c.bf16 %v674, %v673
  %v720 = vpack.c.bf16 %v676, %v675
  %v721 = vpack.c.bf16 %v678, %v677
  %v722 = vpack.c.bf16 %v680, %v679
  %v723 = vpack.c.bf16 %v682, %v681
  %v724 = vpack.c.bf16 %v684, %v683
  %v725 = vpack.c.bf16 %v686, %v685
  %v726 = vpack.c.bf16 %v688, %v687
  %v727 = vpack.c.bf16 %v690, %v689
  %v728 = vpack.c.bf16 %v692, %v691
  %v729 = vpack.c.bf16 %v694, %v693
  %v730 = vpack.c.bf16 %v696, %v695
  %v731 = vpack.c.bf16 %v698, %v697
  %v732 = vpack.c.bf16 %v700, %v699
  %v733 = vpack.c.bf16 %v702, %v701
  %v734 = vpack.c.bf16 %v704, %v703
  %v735 = vpack.c.bf16 %v706, %v705
  %v736 = vpack.c.bf16 %v708, %v707
  %v737 = vld [vmem:[%s3] sm:$0xf]
  %v738 = vld [vmem:[%s3 + $0x4] sm:$0xf]
  %v739 = vld [vmem:[%s4] sm:$0x1]
  %v741 = vlaneseq
  %v742 = vshrl.u32 %v741, 7
  %v743 = vsub.s32 0, %v742
  %v744 = vrot.slane %v739, %v743
  %v748 = vunpack.c.l.b16 %v737
  %v749 = vunpack.c.l.b16 %v738
  %v750 = vpack.c.b16 %v749, %v748
  %vm752 = vcmask 130048
  %v754 = vsel %vm752, %v709, 0
  %v757 = vsel %vm752, %v710, 0
  %v760 = vsel %vm752, %v711, 0
  %v763 = vsel %vm752, %v712, 0
  %v766 = vsel %vm752, %v713, 0
  %v769 = vsel %vm752, %v714, 0
  %v772 = vsel %vm752, %v715, 0
  %v775 = vsel %vm752, %v716, 0
  %v778 = vsel %vm752, %v717, 0
  %v781 = vsel %vm752, %v718, 0
  %v784 = vsel %vm752, %v719, 0
  %v787 = vsel %vm752, %v720, 0
  %v790 = vsel %vm752, %v721, 0
  %v793 = vsel %vm752, %v722, 0
  %v796 = vsel %vm752, %v723, 0
  %v799 = vsel %vm752, %v724, 0
  %v802 = vsel %vm752, %v725, 0
  %v805 = vsel %vm752, %v726, 0
  %v808 = vsel %vm752, %v727, 0
  %v811 = vsel %vm752, %v728, 0
  %v814 = vsel %vm752, %v729, 0
  %v817 = vsel %vm752, %v730, 0
  %v820 = vsel %vm752, %v731, 0
  %v823 = vsel %vm752, %v732, 0
  %v826 = vsel %vm752, %v733, 0
  %v829 = vsel %vm752, %v734, 0
  %v832 = vsel %vm752, %v735, 0
  %v835 = vsel %vm752, %v736, 0
  %837 = vmatprep.subr.bf16.mxu0 0
  %838 = vmatpush1.bf16.msra.mxu0 %v750
  %839 = vmatprep.subr.bf16.mxu0 0
  %840 = vmatpush1.bf16.msra.mxu0 0
  %841 = vmatprep.subr.bf16.mxu0 0
  %842 = vmatpush1.bf16.msra.mxu0 0
  %843 = vmatprep.subr.bf16.mxu0 0
  %844 = vmatpush1.bf16.msra.mxu0 0
  %845 = vmatprep.subr.bf16.mxu0 0
  %846 = vmatpush1.bf16.msra.mxu0 0
  %847 = vmatprep.subr.bf16.mxu0 0
  %848 = vmatpush1.bf16.msra.mxu0 0
  %849 = vmatprep.subr.bf16.mxu0 0
  %850 = vmatpush1.bf16.msra.mxu0 0
  %851 = vmatprep.subr.bf16.mxu0 0
  %852 = vmatpush1.bf16.msra.mxu0 0
  %853 = vmatprep.subr.bf16.mxu0 0
  %854 = vmatpush1.bf16.msra.mxu0 0
  %855 = vmatprep.subr.bf16.mxu0 0
  %856 = vmatpush1.bf16.msra.mxu0 0
  %857 = vmatprep.subr.bf16.mxu0 0
  %858 = vmatpush1.bf16.msra.mxu0 0
  %859 = vmatprep.subr.bf16.mxu0 0
  %860 = vmatpush1.bf16.msra.mxu0 0
  %861 = vmatprep.subr.bf16.mxu0 0
  %862 = vmatpush1.bf16.msra.mxu0 0
  %863 = vmatprep.subr.bf16.mxu0 0
  %864 = vmatpush1.bf16.msra.mxu0 0
  %865 = vmatprep.subr.bf16.mxu0 0
  %866 = vmatpush1.bf16.msra.mxu0 0
  %867 = vmatprep.subr.bf16.mxu0 0
  %868 = vmatpush1.bf16.msra.mxu0 0
  %869 = vmatprep.mubr.bf16.mxu0 0
  %870 = vmatmul.mubr.bf16.gmra.mrb[0].mxu0 %v754
  %v871 = vpop.f32.mrb[0].mxu0
  %v872 = vadd.f32 %v744, %v871
  %v873 = vpop.f32.mrb[0].mxu0
  %v874 = vpop.f32.mrb[0].mxu0
  %v875 = vadd.f32 %v744, %v874
  %v876 = vpop.f32.mrb[0].mxu0
  %877 = vmatprep.mubr.bf16.mxu0 0
  %878 = vmatmul.mubr.bf16.gmra.mrb[0].mxu0 %v757
  %v879 = vpop.f32.mrb[0].mxu0
  %v880 = vadd.f32 %v744, %v879
  %v881 = vpop.f32.mrb[0].mxu0
  %v882 = vpop.f32.mrb[0].mxu0
  %v883 = vadd.f32 %v744, %v882
  %v884 = vpop.f32.mrb[0].mxu0
  %885 = vmatprep.mubr.bf16.mxu0 0
  %886 = vmatmul.mubr.bf16.gmra.mrb[0].mxu0 %v760
  %v887 = vpop.f32.mrb[0].mxu0
  %v888 = vadd.f32 %v744, %v887
  %v889 = vpop.f32.mrb[0].mxu0
  %v890 = vpop.f32.mrb[0].mxu0
  %v891 = vadd.f32 %v744, %v890
  %v892 = vpop.f32.mrb[0].mxu0
  %893 = vmatprep.mubr.bf16.mxu0 0
  %894 = vmatmul.mubr.bf16.gmra.mrb[0].mxu0 %v763
  %v895 = vpop.f32.mrb[0].mxu0
  %v896 = vadd.f32 %v744, %v895
  %v897 = vpop.f32.mrb[0].mxu0
  %v898 = vpop.f32.mrb[0].mxu0
  %v899 = vadd.f32 %v744, %v898
  %v900 = vpop.f32.mrb[0].mxu0
  %901 = vmatprep.mubr.bf16.mxu0 0
  %902 = vmatmul.mubr.bf16.gmra.mrb[0].mxu0 %v766
  %v903 = vpop.f32.mrb[0].mxu0
  %v904 = vadd.f32 %v744, %v903
  %v905 = vpop.f32.mrb[0].mxu0
  %v906 = vpop.f32.mrb[0].mxu0
  %v907 = vadd.f32 %v744, %v906
  %v908 = vpop.f32.mrb[0].mxu0
  %909 = vmatprep.mubr.bf16.mxu0 0
  %910 = vmatmul.mubr.bf16.gmra.mrb[0].mxu0 %v769
  %v911 = vpop.f32.mrb[0].mxu0
  %v912 = vadd.f32 %v744, %v911
  %v913 = vpop.f32.mrb[0].mxu0
  %v914 = vpop.f32.mrb[0].mxu0
  %v915 = vadd.f32 %v744, %v914
  %v916 = vpop.f32.mrb[0].mxu0
  %917 = vmatprep.mubr.bf16.mxu0 0
  %918 = vmatmul.mubr.bf16.gmra.mrb[0].mxu0 %v772
  %v919 = vpop.f32.mrb[0].mxu0
  %v920 = vadd.f32 %v744, %v919
  %v921 = vpop.f32.mrb[0].mxu0
  %v922 = vpop.f32.mrb[0].mxu0
  %v923 = vadd.f32 %v744, %v922
  %v924 = vpop.f32.mrb[0].mxu0
  %925 = vmatprep.mubr.bf16.mxu0 0
  %926 = vmatmul.mubr.bf16.gmra.mrb[0].mxu0 %v775
  %v927 = vpop.f32.mrb[0].mxu0
  %v928 = vadd.f32 %v744, %v927
  %v929 = vpop.f32.mrb[0].mxu0
  %v930 = vpop.f32.mrb[0].mxu0
  %v931 = vadd.f32 %v744, %v930
  %v932 = vpop.f32.mrb[0].mxu0
  %933 = vmatprep.mubr.bf16.mxu0 0
  %934 = vmatmul.mubr.bf16.gmra.mrb[0].mxu0 %v778
  %v935 = vpop.f32.mrb[0].mxu0
  %v936 = vadd.f32 %v744, %v935
  %v937 = vpop.f32.mrb[0].mxu0
  %v938 = vpop.f32.mrb[0].mxu0
  %v939 = vadd.f32 %v744, %v938
  %v940 = vpop.f32.mrb[0].mxu0
  %941 = vmatprep.mubr.bf16.mxu0 0
  %942 = vmatmul.mubr.bf16.gmra.mrb[0].mxu0 %v781
  %v943 = vpop.f32.mrb[0].mxu0
  %v944 = vadd.f32 %v744, %v943
  %v945 = vpop.f32.mrb[0].mxu0
  %v946 = vpop.f32.mrb[0].mxu0
  %v947 = vadd.f32 %v744, %v946
  %v948 = vpop.f32.mrb[0].mxu0
  %949 = vmatprep.mubr.bf16.mxu0 0
  %950 = vmatmul.mubr.bf16.gmra.mrb[0].mxu0 %v784
  %v951 = vpop.f32.mrb[0].mxu0
  %v952 = vadd.f32 %v744, %v951
  %v953 = vpop.f32.mrb[0].mxu0
  %v954 = vpop.f32.mrb[0].mxu0
  %v955 = vadd.f32 %v744, %v954
  %v956 = vpop.f32.mrb[0].mxu0
  %957 = vmatprep.mubr.bf16.mxu0 0
  %958 = vmatmul.mubr.bf16.gmra.mrb[0].mxu0 %v787
  %v959 = vpop.f32.mrb[0].mxu0
  %v960 = vadd.f32 %v744, %v959
  %v961 = vpop.f32.mrb[0].mxu0
  %v962 = vpop.f32.mrb[0].mxu0
  %v963 = vadd.f32 %v744, %v962
  %v964 = vpop.f32.mrb[0].mxu0
  %965 = vmatprep.mubr.bf16.mxu0 0
  %966 = vmatmul.mubr.bf16.gmra.mrb[0].mxu0 %v790
  %v967 = vpop.f32.mrb[0].mxu0
  %v968 = vadd.f32 %v744, %v967
  %v969 = vpop.f32.mrb[0].mxu0
  %v970 = vpop.f32.mrb[0].mxu0
  %v971 = vadd.f32 %v744, %v970
  %v972 = vpop.f32.mrb[0].mxu0
  %973 = vmatprep.mubr.bf16.mxu0 0
  %974 = vmatmul.mubr.bf16.gmra.mrb[0].mxu0 %v793
  %v975 = vpop.f32.mrb[0].mxu0
  %v976 = vadd.f32 %v744, %v975
  %v977 = vpop.f32.mrb[0].mxu0
  %v978 = vpop.f32.mrb[0].mxu0
  %v979 = vadd.f32 %v744, %v978
  %v980 = vpop.f32.mrb[0].mxu0
  %981 = vmatprep.mubr.bf16.mxu0 0
  %982 = vmatmul.mubr.bf16.gmra.mrb[0].mxu0 %v796
  %v983 = vpop.f32.mrb[0].mxu0
  %v984 = vadd.f32 %v744, %v983
  %v985 = vpop.f32.mrb[0].mxu0
  %v986 = vpop.f32.mrb[0].mxu0
  %v987 = vadd.f32 %v744, %v986
  %v988 = vpop.f32.mrb[0].mxu0
  %989 = vmatprep.mubr.bf16.mxu0 0
  %990 = vmatmul.mubr.bf16.gmra.mrb[0].mxu0 %v799
  %v991 = vpop.f32.mrb[0].mxu0
  %v992 = vadd.f32 %v744, %v991
  %v993 = vpop.f32.mrb[0].mxu0
  %v994 = vpop.f32.mrb[0].mxu0
  %v995 = vadd.f32 %v744, %v994
  %v996 = vpop.f32.mrb[0].mxu0
  %997 = vmatprep.mubr.bf16.mxu0 0
  %998 = vmatmul.mubr.bf16.gmra.mrb[0].mxu0 %v802
  %v999 = vpop.f32.mrb[0].mxu0
  %v1000 = vadd.f32 %v744, %v999
  %v1001 = vpop.f32.mrb[0].mxu0
  %v1002 = vpop.f32.mrb[0].mxu0
  %v1003 = vadd.f32 %v744, %v1002
  %v1004 = vpop.f32.mrb[0].mxu0
  %1005 = vmatprep.mubr.bf16.mxu0 0
  %1006 = vmatmul.mubr.bf16.gmra.mrb[0].mxu0 %v805
  %v1007 = vpop.f32.mrb[0].mxu0
  %v1008 = vadd.f32 %v744, %v1007
  %v1009 = vpop.f32.mrb[0].mxu0
  %v1010 = vpop.f32.mrb[0].mxu0
  %v1011 = vadd.f32 %v744, %v1010
  %v1012 = vpop.f32.mrb[0].mxu0
  %1013 = vmatprep.mubr.bf16.mxu0 0
  %1014 = vmatmul.mubr.bf16.gmra.mrb[0].mxu0 %v808
  %v1015 = vpop.f32.mrb[0].mxu0
  %v1016 = vadd.f32 %v744, %v1015
  %v1017 = vpop.f32.mrb[0].mxu0
  %v1018 = vpop.f32.mrb[0].mxu0
  %v1019 = vadd.f32 %v744, %v1018
  %v1020 = vpop.f32.mrb[0].mxu0
  %1021 = vmatprep.mubr.bf16.mxu0 0
  %1022 = vmatmul.mubr.bf16.gmra.mrb[0].mxu0 %v811
  %v1023 = vpop.f32.mrb[0].mxu0
  %v1024 = vadd.f32 %v744, %v1023
  %v1025 = vpop.f32.mrb[0].mxu0
  %v1026 = vpop.f32.mrb[0].mxu0
  %v1027 = vadd.f32 %v744, %v1026
  %v1028 = vpop.f32.mrb[0].mxu0
  %1029 = vmatprep.mubr.bf16.mxu0 0
  %1030 = vmatmul.mubr.bf16.gmra.mrb[0].mxu0 %v814
  %v1031 = vpop.f32.mrb[0].mxu0
  %v1032 = vadd.f32 %v744, %v1031
  %v1033 = vpop.f32.mrb[0].mxu0
  %v1034 = vpop.f32.mrb[0].mxu0
  %v1035 = vadd.f32 %v744, %v1034
  %v1036 = vpop.f32.mrb[0].mxu0
  %1037 = vmatprep.mubr.bf16.mxu0 0
  %1038 = vmatmul.mubr.bf16.gmra.mrb[0].mxu0 %v817
  %v1039 = vpop.f32.mrb[0].mxu0
  %v1040 = vadd.f32 %v744, %v1039
  %v1041 = vpop.f32.mrb[0].mxu0
  %v1042 = vpop.f32.mrb[0].mxu0
  %v1043 = vadd.f32 %v744, %v1042
  %v1044 = vpop.f32.mrb[0].mxu0
  %1045 = vmatprep.mubr.bf16.mxu0 0
  %1046 = vmatmul.mubr.bf16.gmra.mrb[0].mxu0 %v820
  %v1047 = vpop.f32.mrb[0].mxu0
  %v1048 = vadd.f32 %v744, %v1047
  %v1049 = vpop.f32.mrb[0].mxu0
  %v1050 = vpop.f32.mrb[0].mxu0
  %v1051 = vadd.f32 %v744, %v1050
  %v1052 = vpop.f32.mrb[0].mxu0
  %1053 = vmatprep.mubr.bf16.mxu0 0
  %1054 = vmatmul.mubr.bf16.gmra.mrb[0].mxu0 %v823
  %v1055 = vpop.f32.mrb[0].mxu0
  %v1056 = vadd.f32 %v744, %v1055
  %v1057 = vpop.f32.mrb[0].mxu0
  %v1058 = vpop.f32.mrb[0].mxu0
  %v1059 = vadd.f32 %v744, %v1058
  %v1060 = vpop.f32.mrb[0].mxu0
  %1061 = vmatprep.mubr.bf16.mxu0 0
  %1062 = vmatmul.mubr.bf16.gmra.mrb[0].mxu0 %v826
  %v1063 = vpop.f32.mrb[0].mxu0
  %v1064 = vadd.f32 %v744, %v1063
  %v1065 = vpop.f32.mrb[0].mxu0
  %v1066 = vpop.f32.mrb[0].mxu0
  %v1067 = vadd.f32 %v744, %v1066
  %v1068 = vpop.f32.mrb[0].mxu0
  %1069 = vmatprep.mubr.bf16.mxu0 0
  %1070 = vmatmul.mubr.bf16.gmra.mrb[0].mxu0 %v829
  %v1071 = vpop.f32.mrb[0].mxu0
  %v1072 = vadd.f32 %v744, %v1071
  %v1073 = vpop.f32.mrb[0].mxu0
  %v1074 = vpop.f32.mrb[0].mxu0
  %v1075 = vadd.f32 %v744, %v1074
  %v1076 = vpop.f32.mrb[0].mxu0
  %1077 = vmatprep.mubr.bf16.mxu0 0
  %1078 = vmatmul.mubr.bf16.gmra.mrb[0].mxu0 %v832
  %v1079 = vpop.f32.mrb[0].mxu0
  %v1080 = vadd.f32 %v744, %v1079
  %v1081 = vpop.f32.mrb[0].mxu0
  %v1082 = vpop.f32.mrb[0].mxu0
  %v1083 = vadd.f32 %v744, %v1082
  %v1084 = vpop.f32.mrb[0].mxu0
  %1085 = vmatprep.mubr.bf16.mxu0 0
  %1086 = vmatmul.mubr.bf16.gmra.mrb[0].mxu0 %v835
  %v1087 = vpop.f32.mrb[0].mxu0
  %v1088 = vadd.f32 %v744, %v1087
  %v1089 = vpop.f32.mrb[0].mxu0
  %v1090 = vpop.f32.mrb[0].mxu0
  %v1091 = vadd.f32 %v744, %v1090
  %v1092 = vpop.f32.mrb[0].mxu0
  %1093 = vdwg.mxu0
  %v1094 = vmax.f32 %v872, 0.0
  %v1095 = vmax.f32 %v875, 0.0
  %v1096 = vmax.f32 %v880, 0.0
  %v1097 = vmax.f32 %v883, 0.0
  %v1098 = vmax.f32 %v888, 0.0
  %v1099 = vmax.f32 %v891, 0.0
  %v1100 = vmax.f32 %v896, 0.0
  %v1101 = vmax.f32 %v899, 0.0
  %v1102 = vmax.f32 %v904, 0.0
  %v1103 = vmax.f32 %v907, 0.0
  %v1104 = vmax.f32 %v912, 0.0
  %v1105 = vmax.f32 %v915, 0.0
  %v1106 = vmax.f32 %v920, 0.0
  %v1107 = vmax.f32 %v923, 0.0
  %v1108 = vmax.f32 %v928, 0.0
  %v1109 = vmax.f32 %v931, 0.0
  %v1110 = vmax.f32 %v936, 0.0
  %v1111 = vmax.f32 %v939, 0.0
  %v1112 = vmax.f32 %v944, 0.0
  %v1113 = vmax.f32 %v947, 0.0
  %v1114 = vmax.f32 %v952, 0.0
  %v1115 = vmax.f32 %v955, 0.0
  %v1116 = vmax.f32 %v960, 0.0
  %v1117 = vmax.f32 %v963, 0.0
  %v1118 = vmax.f32 %v968, 0.0
  %v1119 = vmax.f32 %v971, 0.0
  %v1120 = vmax.f32 %v976, 0.0
  %v1121 = vmax.f32 %v979, 0.0
  %v1122 = vmax.f32 %v984, 0.0
  %v1123 = vmax.f32 %v987, 0.0
  %v1124 = vmax.f32 %v992, 0.0
  %v1125 = vmax.f32 %v995, 0.0
  %v1126 = vmax.f32 %v1000, 0.0
  %v1127 = vmax.f32 %v1003, 0.0
  %v1128 = vmax.f32 %v1008, 0.0
  %v1129 = vmax.f32 %v1011, 0.0
  %v1130 = vmax.f32 %v1016, 0.0
  %v1131 = vmax.f32 %v1019, 0.0
  %v1132 = vmax.f32 %v1024, 0.0
  %v1133 = vmax.f32 %v1027, 0.0
  %v1134 = vmax.f32 %v1032, 0.0
  %v1135 = vmax.f32 %v1035, 0.0
  %v1136 = vmax.f32 %v1040, 0.0
  %v1137 = vmax.f32 %v1043, 0.0
  %v1138 = vmax.f32 %v1048, 0.0
  %v1139 = vmax.f32 %v1051, 0.0
  %v1140 = vmax.f32 %v1056, 0.0
  %v1141 = vmax.f32 %v1059, 0.0
  %v1142 = vmax.f32 %v1064, 0.0
  %v1143 = vmax.f32 %v1067, 0.0
  %v1144 = vmax.f32 %v1072, 0.0
  %v1145 = vmax.f32 %v1075, 0.0
  %v1146 = vmax.f32 %v1080, 0.0
  %v1147 = vmax.f32 %v1083, 0.0
  %v1148 = vmax.f32 %v1088, 0.0
  %v1149 = vmax.f32 %v1091, 0.0
  %vm1150 = vcmask 523264
  %1151 = vst.msk [vmem:[#allocation2] sm:$0xff] %vm1150, 0.0
  %vm1152 = vcmask 517120
  %1153 = vst.msk [vmem:[#allocation2 + $0x8] sm:$0x3] %vm1152, 0.0
  %1154 = vst.msk [vmem:[#allocation2 + $0x1e0] sm:$0xff] %vm1150, 0.0
  %1155 = vst.msk [vmem:[#allocation2 + $0x1e8] sm:$0x3] %vm1152, 0.0
  %s1156 = scalar_lea.vmem [#allocation2], 464
  %1157 = vst.msk [vmem:[%s1156] sm:$0xff] %vm1150, 0.0
  %1158 = vst.msk [vmem:[%s1156 + $0x8] sm:$0x3] %vm1152, 0.0
  %1159 = vst.msk [vmem:[%s1156 + $0x1e0] sm:$0xff] %vm1150, 0.0
  %1160 = vst.msk [vmem:[%s1156 + $0x1e8] sm:$0x3] %vm1152, 0.0
  %vm1161 = vcmask 516096
  %1162 = vst.msk [vmem:[#allocation2] sm:$0x1] %vm1161, 0.0
  %1163 = vst.msk [vmem:[#allocation2 + $0x10] sm:$0x1] %vm1161, 0.0
  %1164 = vst.msk [vmem:[#allocation2 + $0x20] sm:$0x1] %vm1161, 0.0
  %1165 = vst.msk [vmem:[#allocation2 + $0x30] sm:$0x1] %vm1161, 0.0
  %1166 = vst.msk [vmem:[#allocation2 + $0x40] sm:$0x1] %vm1161, 0.0
  %1167 = vst.msk [vmem:[#allocation2 + $0x50] sm:$0x1] %vm1161, 0.0
  %1168 = vst.msk [vmem:[#allocation2 + $0x60] sm:$0x1] %vm1161, 0.0
  %1169 = vst.msk [vmem:[#allocation2 + $0x70] sm:$0x1] %vm1161, 0.0
  %1170 = vst.msk [vmem:[#allocation2 + $0x80] sm:$0x1] %vm1161, 0.0
  %1171 = vst.msk [vmem:[#allocation2 + $0x90] sm:$0x1] %vm1161, 0.0
  %1172 = vst.msk [vmem:[#allocation2 + $0xa0] sm:$0x1] %vm1161, 0.0
  %1173 = vst.msk [vmem:[#allocation2 + $0xb0] sm:$0x1] %vm1161, 0.0
  %1174 = vst.msk [vmem:[#allocation2 + $0xc0] sm:$0x1] %vm1161, 0.0
  %1175 = vst.msk [vmem:[#allocation2 + $0xd0] sm:$0x1] %vm1161, 0.0
  %1176 = vst.msk [vmem:[#allocation2 + $0xe0] sm:$0x1] %vm1161, 0.0
  %1177 = vst.msk [vmem:[#allocation2 + $0xf0] sm:$0x1] %vm1161, 0.0
  %1178 = vst.msk [vmem:[#allocation2 + $0x100] sm:$0x1] %vm1161, 0.0
  %1179 = vst.msk [vmem:[#allocation2 + $0x110] sm:$0x1] %vm1161, 0.0
  %1180 = vst.msk [vmem:[#allocation2 + $0x120] sm:$0x1] %vm1161, 0.0
  %1181 = vst.msk [vmem:[#allocation2 + $0x130] sm:$0x1] %vm1161, 0.0
  %1182 = vst.msk [vmem:[#allocation2 + $0x140] sm:$0x1] %vm1161, 0.0
  %1183 = vst.msk [vmem:[#allocation2 + $0x150] sm:$0x1] %vm1161, 0.0
  %1184 = vst.msk [vmem:[#allocation2 + $0x160] sm:$0x1] %vm1161, 0.0
  %1185 = vst.msk [vmem:[#allocation2 + $0x170] sm:$0x1] %vm1161, 0.0
  %1186 = vst.msk [vmem:[#allocation2 + $0x180] sm:$0x1] %vm1161, 0.0
  %1187 = vst.msk [vmem:[#allocation2 + $0x190] sm:$0x1] %vm1161, 0.0
  %1188 = vst.msk [vmem:[#allocation2 + $0x1a0] sm:$0x1] %vm1161, 0.0
  %1189 = vst.msk [vmem:[#allocation2 + $0x1b0] sm:$0x1] %vm1161, 0.0
  %1190 = vst.msk [vmem:[#allocation2 + $0x1c0] sm:$0x1] %vm1161, 0.0
  %1191 = vst.msk [vmem:[#allocation2 + $0x1d0] sm:$0x1] %vm1161, 0.0
  %1192 = vst.msk [vmem:[#allocation2 + $0x1e0] sm:$0x1] %vm1161, 0.0
  %1193 = vst.msk [vmem:[#allocation2 + $0x1f0] sm:$0x1] %vm1161, 0.0
  %1194 = vst.msk [vmem:[#allocation2 + $0x200] sm:$0x1] %vm1161, 0.0
  %1195 = vst.msk [vmem:[#allocation2 + $0x210] sm:$0x1] %vm1161, 0.0
  %1196 = vst.msk [vmem:[#allocation2 + $0x220] sm:$0x1] %vm1161, 0.0
  %1197 = vst.msk [vmem:[#allocation2 + $0x230] sm:$0x1] %vm1161, 0.0
  %1198 = vst.msk [vmem:[#allocation2 + $0x240] sm:$0x1] %vm1161, 0.0
  %1199 = vst.msk [vmem:[#allocation2 + $0x250] sm:$0x1] %vm1161, 0.0
  %1200 = vst.msk [vmem:[#allocation2 + $0x260] sm:$0x1] %vm1161, 0.0
  %1201 = vst.msk [vmem:[#allocation2 + $0x270] sm:$0x1] %vm1161, 0.0
  %1202 = vst.msk [vmem:[#allocation2 + $0x280] sm:$0x1] %vm1161, 0.0
  %1203 = vst.msk [vmem:[#allocation2 + $0x290] sm:$0x1] %vm1161, 0.0
  %1204 = vst.msk [vmem:[#allocation2 + $0x2a0] sm:$0x1] %vm1161, 0.0
  %1205 = vst.msk [vmem:[#allocation2 + $0x2b0] sm:$0x1] %vm1161, 0.0
  %1206 = vst.msk [vmem:[#allocation2 + $0x2c0] sm:$0x1] %vm1161, 0.0
  %1207 = vst.msk [vmem:[#allocation2 + $0x2d0] sm:$0x1] %vm1161, 0.0
  %1208 = vst.msk [vmem:[#allocation2 + $0x2e0] sm:$0x1] %vm1161, 0.0
  %1209 = vst.msk [vmem:[#allocation2 + $0x2f0] sm:$0x1] %vm1161, 0.0
  %1210 = vst.msk [vmem:[#allocation2 + $0x300] sm:$0x1] %vm1161, 0.0
  %1211 = vst.msk [vmem:[#allocation2 + $0x310] sm:$0x1] %vm1161, 0.0
  %1212 = vst.msk [vmem:[#allocation2 + $0x320] sm:$0x1] %vm1161, 0.0
  %1213 = vst.msk [vmem:[#allocation2 + $0x330] sm:$0x1] %vm1161, 0.0
  %1214 = vst.msk [vmem:[#allocation2 + $0x340] sm:$0x1] %vm1161, 0.0
  %1215 = vst.msk [vmem:[#allocation2 + $0x350] sm:$0x1] %vm1161, 0.0
  %1216 = vst.msk [vmem:[#allocation2 + $0x360] sm:$0x1] %vm1161, 0.0
  %1217 = vst.msk [vmem:[#allocation2 + $0x370] sm:$0x1] %vm1161, 0.0
  %1218 = vst.msk [vmem:[#allocation2 + $0x380] sm:$0x1] %vm1161, 0.0
  %1219 = vst.msk [vmem:[#allocation2 + $0x390] sm:$0x1] %vm1161, 0.0
  %1220 = vst.msk [vmem:[#allocation2 + $0x3a0] sm:$0x1] %vm1161, 0.0
  %1221 = vst.msk [vmem:[#allocation2 + $0x3b0] sm:$0x1] %vm1161, 0.0
  %1222 = vst.msk [vmem:[#allocation2 + $0x9] sm:$0x1] %vm1161, 0.0
  %1223 = vst.msk [vmem:[#allocation2 + $0x19] sm:$0x1] %vm1161, 0.0
  %1224 = vst.msk [vmem:[#allocation2 + $0x29] sm:$0x1] %vm1161, 0.0
  %1225 = vst.msk [vmem:[#allocation2 + $0x39] sm:$0x1] %vm1161, 0.0
  %1226 = vst.msk [vmem:[#allocation2 + $0x49] sm:$0x1] %vm1161, 0.0
  %1227 = vst.msk [vmem:[#allocation2 + $0x59] sm:$0x1] %vm1161, 0.0
  %1228 = vst.msk [vmem:[#allocation2 + $0x69] sm:$0x1] %vm1161, 0.0
  %1229 = vst.msk [vmem:[#allocation2 + $0x79] sm:$0x1] %vm1161, 0.0
  %1230 = vst.msk [vmem:[#allocation2 + $0x89] sm:$0x1] %vm1161, 0.0
  %1231 = vst.msk [vmem:[#allocation2 + $0x99] sm:$0x1] %vm1161, 0.0
  %1232 = vst.msk [vmem:[#allocation2 + $0xa9] sm:$0x1] %vm1161, 0.0
  %1233 = vst.msk [vmem:[#allocation2 + $0xb9] sm:$0x1] %vm1161, 0.0
  %1234 = vst.msk [vmem:[#allocation2 + $0xc9] sm:$0x1] %vm1161, 0.0
  %1235 = vst.msk [vmem:[#allocation2 + $0xd9] sm:$0x1] %vm1161, 0.0
  %1236 = vst.msk [vmem:[#allocation2 + $0xe9] sm:$0x1] %vm1161, 0.0
  %1237 = vst.msk [vmem:[#allocation2 + $0xf9] sm:$0x1] %vm1161, 0.0
  %1238 = vst.msk [vmem:[#allocation2 + $0x109] sm:$0x1] %vm1161, 0.0
  %1239 = vst.msk [vmem:[#allocation2 + $0x119] sm:$0x1] %vm1161, 0.0
  %1240 = vst.msk [vmem:[#allocation2 + $0x129] sm:$0x1] %vm1161, 0.0
  %1241 = vst.msk [vmem:[#allocation2 + $0x139] sm:$0x1] %vm1161, 0.0
  %1242 = vst.msk [vmem:[#allocation2 + $0x149] sm:$0x1] %vm1161, 0.0
  %1243 = vst.msk [vmem:[#allocation2 + $0x159] sm:$0x1] %vm1161, 0.0
  %1244 = vst.msk [vmem:[#allocation2 + $0x169] sm:$0x1] %vm1161, 0.0
  %1245 = vst.msk [vmem:[#allocation2 + $0x179] sm:$0x1] %vm1161, 0.0
  %1246 = vst.msk [vmem:[#allocation2 + $0x189] sm:$0x1] %vm1161, 0.0
  %1247 = vst.msk [vmem:[#allocation2 + $0x199] sm:$0x1] %vm1161, 0.0
  %1248 = vst.msk [vmem:[#allocation2 + $0x1a9] sm:$0x1] %vm1161, 0.0
  %1249 = vst.msk [vmem:[#allocation2 + $0x1b9] sm:$0x1] %vm1161, 0.0
  %1250 = vst.msk [vmem:[#allocation2 + $0x1c9] sm:$0x1] %vm1161, 0.0
  %1251 = vst.msk [vmem:[#allocation2 + $0x1d9] sm:$0x1] %vm1161, 0.0
  %1252 = vst.msk [vmem:[#allocation2 + $0x1e9] sm:$0x1] %vm1161, 0.0
  %1253 = vst.msk [vmem:[#allocation2 + $0x1f9] sm:$0x1] %vm1161, 0.0
  %1254 = vst.msk [vmem:[#allocation2 + $0x209] sm:$0x1] %vm1161, 0.0
  %1255 = vst.msk [vmem:[#allocation2 + $0x219] sm:$0x1] %vm1161, 0.0
  %1256 = vst.msk [vmem:[#allocation2 + $0x229] sm:$0x1] %vm1161, 0.0
  %1257 = vst.msk [vmem:[#allocation2 + $0x239] sm:$0x1] %vm1161, 0.0
  %1258 = vst.msk [vmem:[#allocation2 + $0x249] sm:$0x1] %vm1161, 0.0
  %1259 = vst.msk [vmem:[#allocation2 + $0x259] sm:$0x1] %vm1161, 0.0
  %1260 = vst.msk [vmem:[#allocation2 + $0x269] sm:$0x1] %vm1161, 0.0
  %1261 = vst.msk [vmem:[#allocation2 + $0x279] sm:$0x1] %vm1161, 0.0
  %1262 = vst.msk [vmem:[#allocation2 + $0x289] sm:$0x1] %vm1161, 0.0
  %1263 = vst.msk [vmem:[#allocation2 + $0x299] sm:$0x1] %vm1161, 0.0
  %1264 = vst.msk [vmem:[#allocation2 + $0x2a9] sm:$0x1] %vm1161, 0.0
  %1265 = vst.msk [vmem:[#allocation2 + $0x2b9] sm:$0x1] %vm1161, 0.0
  %1266 = vst.msk [vmem:[#allocation2 + $0x2c9] sm:$0x1] %vm1161, 0.0
  %1267 = vst.msk [vmem:[#allocation2 + $0x2d9] sm:$0x1] %vm1161, 0.0
  %1268 = vst.msk [vmem:[#allocation2 + $0x2e9] sm:$0x1] %vm1161, 0.0
  %1269 = vst.msk [vmem:[#allocation2 + $0x2f9] sm:$0x1] %vm1161, 0.0
  %1270 = vst.msk [vmem:[#allocation2 + $0x309] sm:$0x1] %vm1161, 0.0
  %1271 = vst.msk [vmem:[#allocation2 + $0x319] sm:$0x1] %vm1161, 0.0
  %1272 = vst.msk [vmem:[#allocation2 + $0x329] sm:$0x1] %vm1161, 0.0
  %1273 = vst.msk [vmem:[#allocation2 + $0x339] sm:$0x1] %vm1161, 0.0
  %1274 = vst.msk [vmem:[#allocation2 + $0x349] sm:$0x1] %vm1161, 0.0
  %1275 = vst.msk [vmem:[#allocation2 + $0x359] sm:$0x1] %vm1161, 0.0
  %1276 = vst.msk [vmem:[#allocation2 + $0x369] sm:$0x1] %vm1161, 0.0
  %1277 = vst.msk [vmem:[#allocation2 + $0x379] sm:$0x1] %vm1161, 0.0
  %1278 = vst.msk [vmem:[#allocation2 + $0x389] sm:$0x1] %vm1161, 0.0
  %1279 = vst.msk [vmem:[#allocation2 + $0x399] sm:$0x1] %vm1161, 0.0
  %1280 = vst.msk [vmem:[#allocation2 + $0x3a9] sm:$0x1] %vm1161, 0.0
  %1281 = vst.msk [vmem:[#allocation2 + $0x3b9] sm:$0x1] %vm1161, 0.0
  %s1282 = scalar_lea.vmem [#allocation2], 16
  %1283 = vst.msk [vmem:[%s1282 + $0x1] sm:$0xff] %vm1150, %v1094
  %1284 = vst.msk [vmem:[%s1282 + $0x11] sm:$0xff] %vm1150, %v1095
  %1285 = vst.msk [vmem:[%s1282 + $0x21] sm:$0xff] %vm1150, %v1096
  %1286 = vst.msk [vmem:[%s1282 + $0x31] sm:$0xff] %vm1150, %v1097
  %1287 = vst.msk [vmem:[%s1282 + $0x41] sm:$0xff] %vm1150, %v1098
  %1288 = vst.msk [vmem:[%s1282 + $0x51] sm:$0xff] %vm1150, %v1099
  %1289 = vst.msk [vmem:[%s1282 + $0x61] sm:$0xff] %vm1150, %v1100
  %1290 = vst.msk [vmem:[%s1282 + $0x71] sm:$0xff] %vm1150, %v1101
  %1291 = vst.msk [vmem:[%s1282 + $0x81] sm:$0xff] %vm1150, %v1102
  %1292 = vst.msk [vmem:[%s1282 + $0x91] sm:$0xff] %vm1150, %v1103
  %1293 = vst.msk [vmem:[%s1282 + $0xa1] sm:$0xff] %vm1150, %v1104
  %1294 = vst.msk [vmem:[%s1282 + $0xb1] sm:$0xff] %vm1150, %v1105
  %1295 = vst.msk [vmem:[%s1282 + $0xc1] sm:$0xff] %vm1150, %v1106
  %1296 = vst.msk [vmem:[%s1282 + $0xd1] sm:$0xff] %vm1150, %v1107
  %1297 = vst.msk [vmem:[%s1282 + $0xe1] sm:$0xff] %vm1150, %v1108
  %1298 = vst.msk [vmem:[%s1282 + $0xf1] sm:$0xff] %vm1150, %v1109
  %1299 = vst.msk [vmem:[%s1282 + $0x101] sm:$0xff] %vm1150, %v1110
  %1300 = vst.msk [vmem:[%s1282 + $0x111] sm:$0xff] %vm1150, %v1111
  %1301 = vst.msk [vmem:[%s1282 + $0x121] sm:$0xff] %vm1150, %v1112
  %1302 = vst.msk [vmem:[%s1282 + $0x131] sm:$0xff] %vm1150, %v1113
  %1303 = vst.msk [vmem:[%s1282 + $0x141] sm:$0xff] %vm1150, %v1114
  %1304 = vst.msk [vmem:[%s1282 + $0x151] sm:$0xff] %vm1150, %v1115
  %1305 = vst.msk [vmem:[%s1282 + $0x161] sm:$0xff] %vm1150, %v1116
  %1306 = vst.msk [vmem:[%s1282 + $0x171] sm:$0xff] %vm1150, %v1117
  %1307 = vst.msk [vmem:[%s1282 + $0x181] sm:$0xff] %vm1150, %v1118
  %1308 = vst.msk [vmem:[%s1282 + $0x191] sm:$0xff] %vm1150, %v1119
  %1309 = vst.msk [vmem:[%s1282 + $0x1a1] sm:$0xff] %vm1150, %v1120
  %1310 = vst.msk [vmem:[%s1282 + $0x1b1] sm:$0xff] %vm1150, %v1121
  %1311 = vst.msk [vmem:[%s1282 + $0x1e1] sm:$0xff] %vm1150, %v1122
  %1312 = vst.msk [vmem:[%s1282 + $0x1f1] sm:$0xff] %vm1150, %v1123
  %1313 = vst.msk [vmem:[%s1282 + $0x201] sm:$0xff] %vm1150, %v1124
  %1314 = vst.msk [vmem:[%s1282 + $0x211] sm:$0xff] %vm1150, %v1125
  %1315 = vst.msk [vmem:[%s1282 + $0x221] sm:$0xff] %vm1150, %v1126
  %1316 = vst.msk [vmem:[%s1282 + $0x231] sm:$0xff] %vm1150, %v1127
  %1317 = vst.msk [vmem:[%s1282 + $0x241] sm:$0xff] %vm1150, %v1128
  %1318 = vst.msk [vmem:[%s1282 + $0x251] sm:$0xff] %vm1150, %v1129
  %1319 = vst.msk [vmem:[%s1282 + $0x261] sm:$0xff] %vm1150, %v1130
  %1320 = vst.msk [vmem:[%s1282 + $0x271] sm:$0xff] %vm1150, %v1131
  %1321 = vst.msk [vmem:[%s1282 + $0x281] sm:$0xff] %vm1150, %v1132
  %1322 = vst.msk [vmem:[%s1282 + $0x291] sm:$0xff] %vm1150, %v1133
  %1323 = vst.msk [vmem:[%s1282 + $0x2a1] sm:$0xff] %vm1150, %v1134
  %1324 = vst.msk [vmem:[%s1282 + $0x2b1] sm:$0xff] %vm1150, %v1135
  %1325 = vst.msk [vmem:[%s1282 + $0x2c1] sm:$0xff] %vm1150, %v1136
  %1326 = vst.msk [vmem:[%s1282 + $0x2d1] sm:$0xff] %vm1150, %v1137
  %1327 = vst.msk [vmem:[%s1282 + $0x2e1] sm:$0xff] %vm1150, %v1138
  %1328 = vst.msk [vmem:[%s1282 + $0x2f1] sm:$0xff] %vm1150, %v1139
  %1329 = vst.msk [vmem:[%s1282 + $0x301] sm:$0xff] %vm1150, %v1140
  %1330 = vst.msk [vmem:[%s1282 + $0x311] sm:$0xff] %vm1150, %v1141
  %1331 = vst.msk [vmem:[%s1282 + $0x321] sm:$0xff] %vm1150, %v1142
  %1332 = vst.msk [vmem:[%s1282 + $0x331] sm:$0xff] %vm1150, %v1143
  %1333 = vst.msk [vmem:[%s1282 + $0x341] sm:$0xff] %vm1150, %v1144
  %1334 = vst.msk [vmem:[%s1282 + $0x351] sm:$0xff] %vm1150, %v1145
  %1335 = vst.msk [vmem:[%s1282 + $0x361] sm:$0xff] %vm1150, %v1146
  %1336 = vst.msk [vmem:[%s1282 + $0x371] sm:$0xff] %vm1150, %v1147
  %1337 = vst.msk [vmem:[%s1282 + $0x381] sm:$0xff] %vm1150, %v1148
  %1338 = vst.msk [vmem:[%s1282 + $0x391] sm:$0xff] %vm1150, %v1149
  %v1339 = vld [vmem:[%s5] sm:$0xff]
  %v1340 = vld [vmem:[%s5 + $0x8] sm:$0x1]
  %v1341 = vld [vmem:[#allocation2] sm:$0xff]
  %v1342 = vld [vmem:[#allocation2 + $0x10] sm:$0xff]
  %v1343 = vld [vmem:[#allocation2 + $0x20] sm:$0xff]
  %v1344 = vld [vmem:[#allocation2 + $0x30] sm:$0xff]
  %v1345 = vld [vmem:[#allocation2 + $0x40] sm:$0xff]
  %v1346 = vld [vmem:[#allocation2 + $0x50] sm:$0xff]
  %v1347 = vld [vmem:[#allocation2 + $0x60] sm:$0xff]
  %v1348 = vld [vmem:[#allocation2 + $0x70] sm:$0xff]
  %v1349 = vld [vmem:[#allocation2 + $0x80] sm:$0xff]
  %v1350 = vld [vmem:[#allocation2 + $0x90] sm:$0xff]
  %v1351 = vld [vmem:[#allocation2 + $0xa0] sm:$0xff]
  %v1352 = vld [vmem:[#allocation2 + $0xb0] sm:$0xff]
  %v1353 = vld [vmem:[#allocation2 + $0xc0] sm:$0xff]
  %v1354 = vld [vmem:[#allocation2 + $0xd0] sm:$0xff]
  %v1355 = vld [vmem:[#allocation2 + $0xe0] sm:$0xff]
  %v1356 = vld [vmem:[#allocation2 + $0xf0] sm:$0xff]
  %v1357 = vld [vmem:[#allocation2 + $0x100] sm:$0xff]
  %v1358 = vld [vmem:[#allocation2 + $0x110] sm:$0xff]
  %v1359 = vld [vmem:[#allocation2 + $0x120] sm:$0xff]
  %v1360 = vld [vmem:[#allocation2 + $0x130] sm:$0xff]
  %v1361 = vld [vmem:[#allocation2 + $0x140] sm:$0xff]
  %v1362 = vld [vmem:[#allocation2 + $0x150] sm:$0xff]
  %v1363 = vld [vmem:[#allocation2 + $0x160] sm:$0xff]
  %v1364 = vld [vmem:[#allocation2 + $0x170] sm:$0xff]
  %v1365 = vld [vmem:[#allocation2 + $0x180] sm:$0xff]
  %v1366 = vld [vmem:[#allocation2 + $0x190] sm:$0xff]
  %v1367 = vld [vmem:[#allocation2 + $0x1a0] sm:$0xff]
  %v1368 = vld [vmem:[#allocation2 + $0x1b0] sm:$0xff]
  %v1369 = vld [vmem:[#allocation2 + $0x1c0] sm:$0xff]
  %v1370 = vld [vmem:[#allocation2 + $0x1d0] sm:$0xff]
  %v1371 = vld [vmem:[#allocation2 + $0x1e0] sm:$0xff]
  %v1372 = vld [vmem:[#allocation2 + $0x1f0] sm:$0xff]
  %v1373 = vld [vmem:[#allocation2 + $0x200] sm:$0xff]
  %v1374 = vld [vmem:[#allocation2 + $0x210] sm:$0xff]
  %v1375 = vld [vmem:[#allocation2 + $0x220] sm:$0xff]
  %v1376 = vld [vmem:[#allocation2 + $0x230] sm:$0xff]
  %v1377 = vld [vmem:[#allocation2 + $0x240] sm:$0xff]
  %v1378 = vld [vmem:[#allocation2 + $0x250] sm:$0xff]
  %v1379 = vld [vmem:[#allocation2 + $0x260] sm:$0xff]
  %v1380 = vld [vmem:[#allocation2 + $0x270] sm:$0xff]
  %v1381 = vld [vmem:[#allocation2 + $0x280] sm:$0xff]
  %v1382 = vld [vmem:[#allocation2 + $0x290] sm:$0xff]
  %v1383 = vld [vmem:[#allocation2 + $0x2a0] sm:$0xff]
  %v1384 = vld [vmem:[#allocation2 + $0x2b0] sm:$0xff]
  %v1385 = vld [vmem:[#allocation2 + $0x2c0] sm:$0xff]
  %v1386 = vld [vmem:[#allocation2 + $0x2d0] sm:$0xff]
  %v1387 = vld [vmem:[#allocation2 + $0x2e0] sm:$0xff]
  %v1388 = vld [vmem:[#allocation2 + $0x2f0] sm:$0xff]
  %v1389 = vld [vmem:[#allocation2 + $0x300] sm:$0xff]
  %v1390 = vld [vmem:[#allocation2 + $0x310] sm:$0xff]
  %v1391 = vld [vmem:[#allocation2 + $0x320] sm:$0xff]
  %v1392 = vld [vmem:[#allocation2 + $0x330] sm:$0xff]
  %v1393 = vld [vmem:[#allocation2 + $0x340] sm:$0xff]
  %v1394 = vld [vmem:[#allocation2 + $0x350] sm:$0xff]
  %v1395 = vld [vmem:[#allocation2 + $0x360] sm:$0xff]
  %v1396 = vld [vmem:[#allocation2 + $0x370] sm:$0xff]
  %v1397 = vld [vmem:[#allocation2 + $0x380] sm:$0xff]
  %v1398 = vld [vmem:[#allocation2 + $0x390] sm:$0xff]
  %v1399 = vld [vmem:[#allocation2 + $0x3a0] sm:$0xff]
  %v1400 = vld [vmem:[#allocation2 + $0x3b0] sm:$0xff]
  %v1401 = vlaneseq
  %v1402 = vshrl.u32 %v1401, 7
  %v1403 = vsub.s32 0, %v1402
  %v1404 = vrot.slane %v1339, %v1403
  %v1405 = vmul.f32 %v1341, %v1404
  %v1406 = vmul.f32 %v1342, %v1404
  %v1407 = vmul.f32 %v1343, %v1404
  %v1408 = vmul.f32 %v1344, %v1404
  %v1409 = vmul.f32 %v1345, %v1404
  %v1410 = vmul.f32 %v1346, %v1404
  %v1411 = vmul.f32 %v1347, %v1404
  %v1412 = vmul.f32 %v1348, %v1404
  %v1413 = vmul.f32 %v1349, %v1404
  %v1414 = vmul.f32 %v1350, %v1404
  %v1415 = vmul.f32 %v1351, %v1404
  %v1416 = vmul.f32 %v1352, %v1404
  %v1417 = vmul.f32 %v1353, %v1404
  %v1418 = vmul.f32 %v1354, %v1404
  %v1419 = vmul.f32 %v1355, %v1404
  %v1420 = vmul.f32 %v1356, %v1404
  %v1421 = vmul.f32 %v1357, %v1404
  %v1422 = vmul.f32 %v1358, %v1404
  %v1423 = vmul.f32 %v1359, %v1404
  %v1424 = vmul.f32 %v1360, %v1404
  %v1425 = vmul.f32 %v1361, %v1404
  %v1426 = vmul.f32 %v1362, %v1404
  %v1427 = vmul.f32 %v1363, %v1404
  %v1428 = vmul.f32 %v1364, %v1404
  %v1429 = vmul.f32 %v1365, %v1404
  %v1430 = vmul.f32 %v1366, %v1404
  %v1431 = vmul.f32 %v1367, %v1404
  %v1432 = vmul.f32 %v1368, %v1404
  %v1433 = vmul.f32 %v1371, %v1404
  %v1434 = vmul.f32 %v1372, %v1404
  %v1435 = vmul.f32 %v1373, %v1404
  %v1436 = vmul.f32 %v1374, %v1404
  %v1437 = vmul.f32 %v1375, %v1404
  %v1438 = vmul.f32 %v1376, %v1404
  %v1439 = vmul.f32 %v1377, %v1404
  %v1440 = vmul.f32 %v1378, %v1404
  %v1441 = vmul.f32 %v1379, %v1404
  %v1442 = vmul.f32 %v1380, %v1404
  %v1443 = vmul.f32 %v1381, %v1404
  %v1444 = vmul.f32 %v1382, %v1404
  %v1445 = vmul.f32 %v1383, %v1404
  %v1446 = vmul.f32 %v1384, %v1404
  %v1447 = vmul.f32 %v1385, %v1404
  %v1448 = vmul.f32 %v1386, %v1404
  %v1449 = vmul.f32 %v1387, %v1404
  %v1450 = vmul.f32 %v1388, %v1404
  %v1451 = vmul.f32 %v1389, %v1404
  %v1452 = vmul.f32 %v1390, %v1404
  %v1453 = vmul.f32 %v1391, %v1404
  %v1454 = vmul.f32 %v1392, %v1404
  %v1455 = vmul.f32 %v1393, %v1404
  %v1456 = vmul.f32 %v1394, %v1404
  %v1457 = vmul.f32 %v1395, %v1404
  %v1458 = vmul.f32 %v1396, %v1404
  %v1459 = vmul.f32 %v1397, %v1404
  %v1460 = vmul.f32 %v1398, %v1404
  %v1461 = vlaneseq
  %v1462 = vshrl.u32 %v1461, 7
  %v1463 = vsub.s32 3, %v1462
  %v1464 = vrot.slane %v1339, %v1463
  %v1465 = vmul.f32 %v1342, %v1464
  %v1466 = vmul.f32 %v1343, %v1464
  %v1467 = vmul.f32 %v1344, %v1464
  %v1468 = vmul.f32 %v1345, %v1464
  %v1469 = vmul.f32 %v1346, %v1464
  %v1470 = vmul.f32 %v1347, %v1464
  %v1471 = vmul.f32 %v1348, %v1464
  %v1472 = vmul.f32 %v1349, %v1464
  %v1473 = vmul.f32 %v1350, %v1464
  %v1474 = vmul.f32 %v1351, %v1464
  %v1475 = vmul.f32 %v1352, %v1464
  %v1476 = vmul.f32 %v1353, %v1464
  %v1477 = vmul.f32 %v1354, %v1464
  %v1478 = vmul.f32 %v1355, %v1464
  %v1479 = vmul.f32 %v1356, %v1464
  %v1480 = vmul.f32 %v1357, %v1464
  %v1481 = vmul.f32 %v1358, %v1464
  %v1482 = vmul.f32 %v1359, %v1464
  %v1483 = vmul.f32 %v1360, %v1464
  %v1484 = vmul.f32 %v1361, %v1464
  %v1485 = vmul.f32 %v1362, %v1464
  %v1486 = vmul.f32 %v1363, %v1464
  %v1487 = vmul.f32 %v1364, %v1464
  %v1488 = vmul.f32 %v1365, %v1464
  %v1489 = vmul.f32 %v1366, %v1464
  %v1490 = vmul.f32 %v1367, %v1464
  %v1491 = vmul.f32 %v1368, %v1464
  %v1492 = vmul.f32 %v1369, %v1464
  %v1493 = vmul.f32 %v1372, %v1464
  %v1494 = vmul.f32 %v1373, %v1464
  %v1495 = vmul.f32 %v1374, %v1464
  %v1496 = vmul.f32 %v1375, %v1464
  %v1497 = vmul.f32 %v1376, %v1464
  %v1498 = vmul.f32 %v1377, %v1464
  %v1499 = vmul.f32 %v1378, %v1464
  %v1500 = vmul.f32 %v1379, %v1464
  %v1501 = vmul.f32 %v1380, %v1464
  %v1502 = vmul.f32 %v1381, %v1464
  %v1503 = vmul.f32 %v1382, %v1464
  %v1504 = vmul.f32 %v1383, %v1464
  %v1505 = vmul.f32 %v1384, %v1464
  %v1506 = vmul.f32 %v1385, %v1464
  %v1507 = vmul.f32 %v1386, %v1464
  %v1508 = vmul.f32 %v1387, %v1464
  %v1509 = vmul.f32 %v1388, %v1464
  %v1510 = vmul.f32 %v1389, %v1464
  %v1511 = vmul.f32 %v1390, %v1464
  %v1512 = vmul.f32 %v1391, %v1464
  %v1513 = vmul.f32 %v1392, %v1464
  %v1514 = vmul.f32 %v1393, %v1464
  %v1515 = vmul.f32 %v1394, %v1464
  %v1516 = vmul.f32 %v1395, %v1464
  %v1517 = vmul.f32 %v1396, %v1464
  %v1518 = vmul.f32 %v1397, %v1464
  %v1519 = vmul.f32 %v1398, %v1464
  %v1520 = vmul.f32 %v1399, %v1464
  %v1521 = vadd.f32 %v1405, %v1465
  %v1522 = vadd.f32 %v1406, %v1466
  %v1523 = vadd.f32 %v1407, %v1467
  %v1524 = vadd.f32 %v1408, %v1468
  %v1525 = vadd.f32 %v1409, %v1469
  %v1526 = vadd.f32 %v1410, %v1470
  %v1527 = vadd.f32 %v1411, %v1471
  %v1528 = vadd.f32 %v1412, %v1472
  %v1529 = vadd.f32 %v1413, %v1473
  %v1530 = vadd.f32 %v1414, %v1474
  %v1531 = vadd.f32 %v1415, %v1475
  %v1532 = vadd.f32 %v1416, %v1476
  %v1533 = vadd.f32 %v1417, %v1477
  %v1534 = vadd.f32 %v1418, %v1478
  %v1535 = vadd.f32 %v1419, %v1479
  %v1536 = vadd.f32 %v1420, %v1480
  %v1537 = vadd.f32 %v1421, %v1481
  %v1538 = vadd.f32 %v1422, %v1482
  %v1539 = vadd.f32 %v1423, %v1483
  %v1540 = vadd.f32 %v1424, %v1484
  %v1541 = vadd.f32 %v1425, %v1485
  %v1542 = vadd.f32 %v1426, %v1486
  %v1543 = vadd.f32 %v1427, %v1487
  %v1544 = vadd.f32 %v1428, %v1488
  %v1545 = vadd.f32 %v1429, %v1489
  %v1546 = vadd.f32 %v1430, %v1490
  %v1547 = vadd.f32 %v1431, %v1491
  %v1548 = vadd.f32 %v1432, %v1492
  %v1549 = vadd.f32 %v1433, %v1493
  %v1550 = vadd.f32 %v1434, %v1494
  %v1551 = vadd.f32 %v1435, %v1495
  %v1552 = vadd.f32 %v1436, %v1496
  %v1553 = vadd.f32 %v1437, %v1497
  %v1554 = vadd.f32 %v1438, %v1498
  %v1555 = vadd.f32 %v1439, %v1499
  %v1556 = vadd.f32 %v1440, %v1500
  %v1557 = vadd.f32 %v1441, %v1501
  %v1558 = vadd.f32 %v1442, %v1502
  %v1559 = vadd.f32 %v1443, %v1503
  %v1560 = vadd.f32 %v1444, %v1504
  %v1561 = vadd.f32 %v1445, %v1505
  %v1562 = vadd.f32 %v1446, %v1506
  %v1563 = vadd.f32 %v1447, %v1507
  %v1564 = vadd.f32 %v1448, %v1508
  %v1565 = vadd.f32 %v1449, %v1509
  %v1566 = vadd.f32 %v1450, %v1510
  %v1567 = vadd.f32 %v1451, %v1511
  %v1568 = vadd.f32 %v1452, %v1512
  %v1569 = vadd.f32 %v1453, %v1513
  %v1570 = vadd.f32 %v1454, %v1514
  %v1571 = vadd.f32 %v1455, %v1515
  %v1572 = vadd.f32 %v1456, %v1516
  %v1573 = vadd.f32 %v1457, %v1517
  %v1574 = vadd.f32 %v1458, %v1518
  %v1575 = vadd.f32 %v1459, %v1519
  %v1576 = vadd.f32 %v1460, %v1520
  %v1577 = vlaneseq
  %v1578 = vshrl.u32 %v1577, 7
  %v1579 = vsub.s32 6, %v1578
  %v1580 = vrot.slane %v1339, %v1579
  %v1581 = vmul.f32 %v1343, %v1580
  %v1582 = vmul.f32 %v1344, %v1580
  %v1583 = vmul.f32 %v1345, %v1580
  %v1584 = vmul.f32 %v1346, %v1580
  %v1585 = vmul.f32 %v1347, %v1580
  %v1586 = vmul.f32 %v1348, %v1580
  %v1587 = vmul.f32 %v1349, %v1580
  %v1588 = vmul.f32 %v1350, %v1580
  %v1589 = vmul.f32 %v1351, %v1580
  %v1590 = vmul.f32 %v1352, %v1580
  %v1591 = vmul.f32 %v1353, %v1580
  %v1592 = vmul.f32 %v1354, %v1580
  %v1593 = vmul.f32 %v1355, %v1580
  %v1594 = vmul.f32 %v1356, %v1580
  %v1595 = vmul.f32 %v1357, %v1580
  %v1596 = vmul.f32 %v1358, %v1580
  %v1597 = vmul.f32 %v1359, %v1580
  %v1598 = vmul.f32 %v1360, %v1580
  %v1599 = vmul.f32 %v1361, %v1580
  %v1600 = vmul.f32 %v1362, %v1580
  %v1601 = vmul.f32 %v1363, %v1580
  %v1602 = vmul.f32 %v1364, %v1580
  %v1603 = vmul.f32 %v1365, %v1580
  %v1604 = vmul.f32 %v1366, %v1580
  %v1605 = vmul.f32 %v1367, %v1580
  %v1606 = vmul.f32 %v1368, %v1580
  %v1607 = vmul.f32 %v1369, %v1580
  %v1608 = vmul.f32 %v1370, %v1580
  %v1609 = vmul.f32 %v1373, %v1580
  %v1610 = vmul.f32 %v1374, %v1580
  %v1611 = vmul.f32 %v1375, %v1580
  %v1612 = vmul.f32 %v1376, %v1580
  %v1613 = vmul.f32 %v1377, %v1580
  %v1614 = vmul.f32 %v1378, %v1580
  %v1615 = vmul.f32 %v1379, %v1580
  %v1616 = vmul.f32 %v1380, %v1580
  %v1617 = vmul.f32 %v1381, %v1580
  %v1618 = vmul.f32 %v1382, %v1580
  %v1619 = vmul.f32 %v1383, %v1580
  %v1620 = vmul.f32 %v1384, %v1580
  %v1621 = vmul.f32 %v1385, %v1580
  %v1622 = vmul.f32 %v1386, %v1580
  %v1623 = vmul.f32 %v1387, %v1580
  %v1624 = vmul.f32 %v1388, %v1580
  %v1625 = vmul.f32 %v1389, %v1580
  %v1626 = vmul.f32 %v1390, %v1580
  %v1627 = vmul.f32 %v1391, %v1580
  %v1628 = vmul.f32 %v1392, %v1580
  %v1629 = vmul.f32 %v1393, %v1580
  %v1630 = vmul.f32 %v1394, %v1580
  %v1631 = vmul.f32 %v1395, %v1580
  %v1632 = vmul.f32 %v1396, %v1580
  %v1633 = vmul.f32 %v1397, %v1580
  %v1634 = vmul.f32 %v1398, %v1580
  %v1635 = vmul.f32 %v1399, %v1580
  %v1636 = vmul.f32 %v1400, %v1580
  %v1637 = vadd.f32 %v1521, %v1581
  %v1638 = vadd.f32 %v1522, %v1582
  %v1639 = vadd.f32 %v1523, %v1583
  %v1640 = vadd.f32 %v1524, %v1584
  %v1641 = vadd.f32 %v1525, %v1585
  %v1642 = vadd.f32 %v1526, %v1586
  %v1643 = vadd.f32 %v1527, %v1587
  %v1644 = vadd.f32 %v1528, %v1588
  %v1645 = vadd.f32 %v1529, %v1589
  %v1646 = vadd.f32 %v1530, %v1590
  %v1647 = vadd.f32 %v1531, %v1591
  %v1648 = vadd.f32 %v1532, %v1592
  %v1649 = vadd.f32 %v1533, %v1593
  %v1650 = vadd.f32 %v1534, %v1594
  %v1651 = vadd.f32 %v1535, %v1595
  %v1652 = vadd.f32 %v1536, %v1596
  %v1653 = vadd.f32 %v1537, %v1597
  %v1654 = vadd.f32 %v1538, %v1598
  %v1655 = vadd.f32 %v1539, %v1599
  %v1656 = vadd.f32 %v1540, %v1600
  %v1657 = vadd.f32 %v1541, %v1601
  %v1658 = vadd.f32 %v1542, %v1602
  %v1659 = vadd.f32 %v1543, %v1603
  %v1660 = vadd.f32 %v1544, %v1604
  %v1661 = vadd.f32 %v1545, %v1605
  %v1662 = vadd.f32 %v1546, %v1606
  %v1663 = vadd.f32 %v1547, %v1607
  %v1664 = vadd.f32 %v1548, %v1608
  %v1665 = vadd.f32 %v1549, %v1609
  %v1666 = vadd.f32 %v1550, %v1610
  %v1667 = vadd.f32 %v1551, %v1611
  %v1668 = vadd.f32 %v1552, %v1612
  %v1669 = vadd.f32 %v1553, %v1613
  %v1670 = vadd.f32 %v1554, %v1614
  %v1671 = vadd.f32 %v1555, %v1615
  %v1672 = vadd.f32 %v1556, %v1616
  %v1673 = vadd.f32 %v1557, %v1617
  %v1674 = vadd.f32 %v1558, %v1618
  %v1675 = vadd.f32 %v1559, %v1619
  %v1676 = vadd.f32 %v1560, %v1620
  %v1677 = vadd.f32 %v1561, %v1621
  %v1678 = vadd.f32 %v1562, %v1622
  %v1679 = vadd.f32 %v1563, %v1623
  %v1680 = vadd.f32 %v1564, %v1624
  %v1681 = vadd.f32 %v1565, %v1625
  %v1682 = vadd.f32 %v1566, %v1626
  %v1683 = vadd.f32 %v1567, %v1627
  %v1684 = vadd.f32 %v1568, %v1628
  %v1685 = vadd.f32 %v1569, %v1629
  %v1686 = vadd.f32 %v1570, %v1630
  %v1687 = vadd.f32 %v1571, %v1631
  %v1688 = vadd.f32 %v1572, %v1632
  %v1689 = vadd.f32 %v1573, %v1633
  %v1690 = vadd.f32 %v1574, %v1634
  %v1691 = vadd.f32 %v1575, %v1635
  %v1692 = vadd.f32 %v1576, %v1636
  %v1693 = vld [vmem:[#allocation2 + $0x1] sm:$0xff]
  %v1694 = vld [vmem:[#allocation2 + $0x11] sm:$0xff]
  %v1695 = vld [vmem:[#allocation2 + $0x21] sm:$0xff]
  %v1696 = vld [vmem:[#allocation2 + $0x31] sm:$0xff]
  %v1697 = vld [vmem:[#allocation2 + $0x41] sm:$0xff]
  %v1698 = vld [vmem:[#allocation2 + $0x51] sm:$0xff]
  %v1699 = vld [vmem:[#allocation2 + $0x61] sm:$0xff]
  %v1700 = vld [vmem:[#allocation2 + $0x71] sm:$0xff]
  %v1701 = vld [vmem:[#allocation2 + $0x81] sm:$0xff]
  %v1702 = vld [vmem:[#allocation2 + $0x91] sm:$0xff]
  %v1703 = vld [vmem:[#allocation2 + $0xa1] sm:$0xff]
  %v1704 = vld [vmem:[#allocation2 + $0xb1] sm:$0xff]
  %v1705 = vld [vmem:[#allocation2 + $0xc1] sm:$0xff]
  %v1706 = vld [vmem:[#allocation2 + $0xd1] sm:$0xff]
  %v1707 = vld [vmem:[#allocation2 + $0xe1] sm:$0xff]
  %v1708 = vld [vmem:[#allocation2 + $0xf1] sm:$0xff]
  %v1709 = vld [vmem:[#allocation2 + $0x101] sm:$0xff]
  %v1710 = vld [vmem:[#allocation2 + $0x111] sm:$0xff]
  %v1711 = vld [vmem:[#allocation2 + $0x121] sm:$0xff]
  %v1712 = vld [vmem:[#allocation2 + $0x131] sm:$0xff]
  %v1713 = vld [vmem:[#allocation2 + $0x141] sm:$0xff]
  %v1714 = vld [vmem:[#allocation2 + $0x151] sm:$0xff]
  %v1715 = vld [vmem:[#allocation2 + $0x161] sm:$0xff]
  %v1716 = vld [vmem:[#allocation2 + $0x171] sm:$0xff]
  %v1717 = vld [vmem:[#allocation2 + $0x181] sm:$0xff]
  %v1718 = vld [vmem:[#allocation2 + $0x191] sm:$0xff]
  %v1719 = vld [vmem:[#allocation2 + $0x1a1] sm:$0xff]
  %v1720 = vld [vmem:[#allocation2 + $0x1b1] sm:$0xff]
  %v1721 = vld [vmem:[#allocation2 + $0x1c1] sm:$0xff]
  %v1722 = vld [vmem:[#allocation2 + $0x1d1] sm:$0xff]
  %v1723 = vld [vmem:[#allocation2 + $0x1e1] sm:$0xff]
  %v1724 = vld [vmem:[#allocation2 + $0x1f1] sm:$0xff]
  %v1725 = vld [vmem:[#allocation2 + $0x201] sm:$0xff]
  %v1726 = vld [vmem:[#allocation2 + $0x211] sm:$0xff]
  %v1727 = vld [vmem:[#allocation2 + $0x221] sm:$0xff]
  %v1728 = vld [vmem:[#allocation2 + $0x231] sm:$0xff]
  %v1729 = vld [vmem:[#allocation2 + $0x241] sm:$0xff]
  %v1730 = vld [vmem:[#allocation2 + $0x251] sm:$0xff]
  %v1731 = vld [vmem:[#allocation2 + $0x261] sm:$0xff]
  %v1732 = vld [vmem:[#allocation2 + $0x271] sm:$0xff]
  %v1733 = vld [vmem:[#allocation2 + $0x281] sm:$0xff]
  %v1734 = vld [vmem:[#allocation2 + $0x291] sm:$0xff]
  %v1735 = vld [vmem:[#allocation2 + $0x2a1] sm:$0xff]
  %v1736 = vld [vmem:[#allocation2 + $0x2b1] sm:$0xff]
  %v1737 = vld [vmem:[#allocation2 + $0x2c1] sm:$0xff]
  %v1738 = vld [vmem:[#allocation2 + $0x2d1] sm:$0xff]
  %v1739 = vld [vmem:[#allocation2 + $0x2e1] sm:$0xff]
  %v1740 = vld [vmem:[#allocation2 + $0x2f1] sm:$0xff]
  %v1741 = vld [vmem:[#allocation2 + $0x301] sm:$0xff]
  %v1742 = vld [vmem:[#allocation2 + $0x311] sm:$0xff]
  %v1743 = vld [vmem:[#allocation2 + $0x321] sm:$0xff]
  %v1744 = vld [vmem:[#allocation2 + $0x331] sm:$0xff]
  %v1745 = vld [vmem:[#allocation2 + $0x341] sm:$0xff]
  %v1746 = vld [vmem:[#allocation2 + $0x351] sm:$0xff]
  %v1747 = vld [vmem:[#allocation2 + $0x361] sm:$0xff]
  %v1748 = vld [vmem:[#allocation2 + $0x371] sm:$0xff]
  %v1749 = vld [vmem:[#allocation2 + $0x381] sm:$0xff]
  %v1750 = vld [vmem:[#allocation2 + $0x391] sm:$0xff]
  %v1751 = vld [vmem:[#allocation2 + $0x3a1] sm:$0xff]
  %v1752 = vld [vmem:[#allocation2 + $0x3b1] sm:$0xff]
  %v1753 = vlaneseq
  %v1754 = vshrl.u32 %v1753, 7
  %v1755 = vsub.s32 1, %v1754
  %v1756 = vrot.slane %v1339, %v1755
  %v1757 = vmul.f32 %v1693, %v1756
  %v1758 = vmul.f32 %v1694, %v1756
  %v1759 = vmul.f32 %v1695, %v1756
  %v1760 = vmul.f32 %v1696, %v1756
  %v1761 = vmul.f32 %v1697, %v1756
  %v1762 = vmul.f32 %v1698, %v1756
  %v1763 = vmul.f32 %v1699, %v1756
  %v1764 = vmul.f32 %v1700, %v1756
  %v1765 = vmul.f32 %v1701, %v1756
  %v1766 = vmul.f32 %v1702, %v1756
  %v1767 = vmul.f32 %v1703, %v1756
  %v1768 = vmul.f32 %v1704, %v1756
  %v1769 = vmul.f32 %v1705, %v1756
  %v1770 = vmul.f32 %v1706, %v1756
  %v1771 = vmul.f32 %v1707, %v1756
  %v1772 = vmul.f32 %v1708, %v1756
  %v1773 = vmul.f32 %v1709, %v1756
  %v1774 = vmul.f32 %v1710, %v1756
  %v1775 = vmul.f32 %v1711, %v1756
  %v1776 = vmul.f32 %v1712, %v1756
  %v1777 = vmul.f32 %v1713, %v1756
  %v1778 = vmul.f32 %v1714, %v1756
  %v1779 = vmul.f32 %v1715, %v1756
  %v1780 = vmul.f32 %v1716, %v1756
  %v1781 = vmul.f32 %v1717, %v1756
  %v1782 = vmul.f32 %v1718, %v1756
  %v1783 = vmul.f32 %v1719, %v1756
  %v1784 = vmul.f32 %v1720, %v1756
  %v1785 = vmul.f32 %v1723, %v1756
  %v1786 = vmul.f32 %v1724, %v1756
  %v1787 = vmul.f32 %v1725, %v1756
  %v1788 = vmul.f32 %v1726, %v1756
  %v1789 = vmul.f32 %v1727, %v1756
  %v1790 = vmul.f32 %v1728, %v1756
  %v1791 = vmul.f32 %v1729, %v1756
  %v1792 = vmul.f32 %v1730, %v1756
  %v1793 = vmul.f32 %v1731, %v1756
  %v1794 = vmul.f32 %v1732, %v1756
  %v1795 = vmul.f32 %v1733, %v1756
  %v1796 = vmul.f32 %v1734, %v1756
  %v1797 = vmul.f32 %v1735, %v1756
  %v1798 = vmul.f32 %v1736, %v1756
  %v1799 = vmul.f32 %v1737, %v1756
  %v1800 = vmul.f32 %v1738, %v1756
  %v1801 = vmul.f32 %v1739, %v1756
  %v1802 = vmul.f32 %v1740, %v1756
  %v1803 = vmul.f32 %v1741, %v1756
  %v1804 = vmul.f32 %v1742, %v1756
  %v1805 = vmul.f32 %v1743, %v1756
  %v1806 = vmul.f32 %v1744, %v1756
  %v1807 = vmul.f32 %v1745, %v1756
  %v1808 = vmul.f32 %v1746, %v1756
  %v1809 = vmul.f32 %v1747, %v1756
  %v1810 = vmul.f32 %v1748, %v1756
  %v1811 = vmul.f32 %v1749, %v1756
  %v1812 = vmul.f32 %v1750, %v1756
  %v1813 = vadd.f32 %v1637, %v1757
  %v1814 = vadd.f32 %v1638, %v1758
  %v1815 = vadd.f32 %v1639, %v1759
  %v1816 = vadd.f32 %v1640, %v1760
  %v1817 = vadd.f32 %v1641, %v1761
  %v1818 = vadd.f32 %v1642, %v1762
  %v1819 = vadd.f32 %v1643, %v1763
  %v1820 = vadd.f32 %v1644, %v1764
  %v1821 = vadd.f32 %v1645, %v1765
  %v1822 = vadd.f32 %v1646, %v1766
  %v1823 = vadd.f32 %v1647, %v1767
  %v1824 = vadd.f32 %v1648, %v1768
  %v1825 = vadd.f32 %v1649, %v1769
  %v1826 = vadd.f32 %v1650, %v1770
  %v1827 = vadd.f32 %v1651, %v1771
  %v1828 = vadd.f32 %v1652, %v1772
  %v1829 = vadd.f32 %v1653, %v1773
  %v1830 = vadd.f32 %v1654, %v1774
  %v1831 = vadd.f32 %v1655, %v1775
  %v1832 = vadd.f32 %v1656, %v1776
  %v1833 = vadd.f32 %v1657, %v1777
  %v1834 = vadd.f32 %v1658, %v1778
  %v1835 = vadd.f32 %v1659, %v1779
  %v1836 = vadd.f32 %v1660, %v1780
  %v1837 = vadd.f32 %v1661, %v1781
  %v1838 = vadd.f32 %v1662, %v1782
  %v1839 = vadd.f32 %v1663, %v1783
  %v1840 = vadd.f32 %v1664, %v1784
  %v1841 = vadd.f32 %v1665, %v1785
  %v1842 = vadd.f32 %v1666, %v1786
  %v1843 = vadd.f32 %v1667, %v1787
  %v1844 = vadd.f32 %v1668, %v1788
  %v1845 = vadd.f32 %v1669, %v1789
  %v1846 = vadd.f32 %v1670, %v1790
  %v1847 = vadd.f32 %v1671, %v1791
  %v1848 = vadd.f32 %v1672, %v1792
  %v1849 = vadd.f32 %v1673, %v1793
  %v1850 = vadd.f32 %v1674, %v1794
  %v1851 = vadd.f32 %v1675, %v1795
  %v1852 = vadd.f32 %v1676, %v1796
  %v1853 = vadd.f32 %v1677, %v1797
  %v1854 = vadd.f32 %v1678, %v1798
  %v1855 = vadd.f32 %v1679, %v1799
  %v1856 = vadd.f32 %v1680, %v1800
  %v1857 = vadd.f32 %v1681, %v1801
  %v1858 = vadd.f32 %v1682, %v1802
  %v1859 = vadd.f32 %v1683, %v1803
  %v1860 = vadd.f32 %v1684, %v1804
  %v1861 = vadd.f32 %v1685, %v1805
  %v1862 = vadd.f32 %v1686, %v1806
  %v1863 = vadd.f32 %v1687, %v1807
  %v1864 = vadd.f32 %v1688, %v1808
  %v1865 = vadd.f32 %v1689, %v1809
  %v1866 = vadd.f32 %v1690, %v1810
  %v1867 = vadd.f32 %v1691, %v1811
  %v1868 = vadd.f32 %v1692, %v1812
  %v1869 = vlaneseq
  %v1870 = vshrl.u32 %v1869, 7
  %v1871 = vsub.s32 4, %v1870
  %v1872 = vrot.slane %v1339, %v1871
  %v1873 = vmul.f32 %v1694, %v1872
  %v1874 = vmul.f32 %v1695, %v1872
  %v1875 = vmul.f32 %v1696, %v1872
  %v1876 = vmul.f32 %v1697, %v1872
  %v1877 = vmul.f32 %v1698, %v1872
  %v1878 = vmul.f32 %v1699, %v1872
  %v1879 = vmul.f32 %v1700, %v1872
  %v1880 = vmul.f32 %v1701, %v1872
  %v1881 = vmul.f32 %v1702, %v1872
  %v1882 = vmul.f32 %v1703, %v1872
  %v1883 = vmul.f32 %v1704, %v1872
  %v1884 = vmul.f32 %v1705, %v1872
  %v1885 = vmul.f32 %v1706, %v1872
  %v1886 = vmul.f32 %v1707, %v1872
  %v1887 = vmul.f32 %v1708, %v1872
  %v1888 = vmul.f32 %v1709, %v1872
  %v1889 = vmul.f32 %v1710, %v1872
  %v1890 = vmul.f32 %v1711, %v1872
  %v1891 = vmul.f32 %v1712, %v1872
  %v1892 = vmul.f32 %v1713, %v1872
  %v1893 = vmul.f32 %v1714, %v1872
  %v1894 = vmul.f32 %v1715, %v1872
  %v1895 = vmul.f32 %v1716, %v1872
  %v1896 = vmul.f32 %v1717, %v1872
  %v1897 = vmul.f32 %v1718, %v1872
  %v1898 = vmul.f32 %v1719, %v1872
  %v1899 = vmul.f32 %v1720, %v1872
  %v1900 = vmul.f32 %v1721, %v1872
  %v1901 = vmul.f32 %v1724, %v1872
  %v1902 = vmul.f32 %v1725, %v1872
  %v1903 = vmul.f32 %v1726, %v1872
  %v1904 = vmul.f32 %v1727, %v1872
  %v1905 = vmul.f32 %v1728, %v1872
  %v1906 = vmul.f32 %v1729, %v1872
  %v1907 = vmul.f32 %v1730, %v1872
  %v1908 = vmul.f32 %v1731, %v1872
  %v1909 = vmul.f32 %v1732, %v1872
  %v1910 = vmul.f32 %v1733, %v1872
  %v1911 = vmul.f32 %v1734, %v1872
  %v1912 = vmul.f32 %v1735, %v1872
  %v1913 = vmul.f32 %v1736, %v1872
  %v1914 = vmul.f32 %v1737, %v1872
  %v1915 = vmul.f32 %v1738, %v1872
  %v1916 = vmul.f32 %v1739, %v1872
  %v1917 = vmul.f32 %v1740, %v1872
  %v1918 = vmul.f32 %v1741, %v1872
  %v1919 = vmul.f32 %v1742, %v1872
  %v1920 = vmul.f32 %v1743, %v1872
  %v1921 = vmul.f32 %v1744, %v1872
  %v1922 = vmul.f32 %v1745, %v1872
  %v1923 = vmul.f32 %v1746, %v1872
  %v1924 = vmul.f32 %v1747, %v1872
  %v1925 = vmul.f32 %v1748, %v1872
  %v1926 = vmul.f32 %v1749, %v1872
  %v1927 = vmul.f32 %v1750, %v1872
  %v1928 = vmul.f32 %v1751, %v1872
  %v1929 = vadd.f32 %v1813, %v1873
  %v1930 = vadd.f32 %v1814, %v1874
  %v1931 = vadd.f32 %v1815, %v1875
  %v1932 = vadd.f32 %v1816, %v1876
  %v1933 = vadd.f32 %v1817, %v1877
  %v1934 = vadd.f32 %v1818, %v1878
  %v1935 = vadd.f32 %v1819, %v1879
  %v1936 = vadd.f32 %v1820, %v1880
  %v1937 = vadd.f32 %v1821, %v1881
  %v1938 = vadd.f32 %v1822, %v1882
  %v1939 = vadd.f32 %v1823, %v1883
  %v1940 = vadd.f32 %v1824, %v1884
  %v1941 = vadd.f32 %v1825, %v1885
  %v1942 = vadd.f32 %v1826, %v1886
  %v1943 = vadd.f32 %v1827, %v1887
  %v1944 = vadd.f32 %v1828, %v1888
  %v1945 = vadd.f32 %v1829, %v1889
  %v1946 = vadd.f32 %v1830, %v1890
  %v1947 = vadd.f32 %v1831, %v1891
  %v1948 = vadd.f32 %v1832, %v1892
  %v1949 = vadd.f32 %v1833, %v1893
  %v1950 = vadd.f32 %v1834, %v1894
  %v1951 = vadd.f32 %v1835, %v1895
  %v1952 = vadd.f32 %v1836, %v1896
  %v1953 = vadd.f32 %v1837, %v1897
  %v1954 = vadd.f32 %v1838, %v1898
  %v1955 = vadd.f32 %v1839, %v1899
  %v1956 = vadd.f32 %v1840, %v1900
  %v1957 = vadd.f32 %v1841, %v1901
  %v1958 = vadd.f32 %v1842, %v1902
  %v1959 = vadd.f32 %v1843, %v1903
  %v1960 = vadd.f32 %v1844, %v1904
  %v1961 = vadd.f32 %v1845, %v1905
  %v1962 = vadd.f32 %v1846, %v1906
  %v1963 = vadd.f32 %v1847, %v1907
  %v1964 = vadd.f32 %v1848, %v1908
  %v1965 = vadd.f32 %v1849, %v1909
  %v1966 = vadd.f32 %v1850, %v1910
  %v1967 = vadd.f32 %v1851, %v1911
  %v1968 = vadd.f32 %v1852, %v1912
  %v1969 = vadd.f32 %v1853, %v1913
  %v1970 = vadd.f32 %v1854, %v1914
  %v1971 = vadd.f32 %v1855, %v1915
  %v1972 = vadd.f32 %v1856, %v1916
  %v1973 = vadd.f32 %v1857, %v1917
  %v1974 = vadd.f32 %v1858, %v1918
  %v1975 = vadd.f32 %v1859, %v1919
  %v1976 = vadd.f32 %v1860, %v1920
  %v1977 = vadd.f32 %v1861, %v1921
  %v1978 = vadd.f32 %v1862, %v1922
  %v1979 = vadd.f32 %v1863, %v1923
  %v1980 = vadd.f32 %v1864, %v1924
  %v1981 = vadd.f32 %v1865, %v1925
  %v1982 = vadd.f32 %v1866, %v1926
  %v1983 = vadd.f32 %v1867, %v1927
  %v1984 = vadd.f32 %v1868, %v1928
  %v1985 = vlaneseq
  %v1986 = vshrl.u32 %v1985, 7
  %v1987 = vsub.s32 7, %v1986
  %v1988 = vrot.slane %v1339, %v1987
  %v1989 = vmul.f32 %v1695, %v1988
  %v1990 = vmul.f32 %v1696, %v1988
  %v1991 = vmul.f32 %v1697, %v1988
  %v1992 = vmul.f32 %v1698, %v1988
  %v1993 = vmul.f32 %v1699, %v1988
  %v1994 = vmul.f32 %v1700, %v1988
  %v1995 = vmul.f32 %v1701, %v1988
  %v1996 = vmul.f32 %v1702, %v1988
  %v1997 = vmul.f32 %v1703, %v1988
  %v1998 = vmul.f32 %v1704, %v1988
  %v1999 = vmul.f32 %v1705, %v1988
  %v2000 = vmul.f32 %v1706, %v1988
  %v2001 = vmul.f32 %v1707, %v1988
  %v2002 = vmul.f32 %v1708, %v1988
  %v2003 = vmul.f32 %v1709, %v1988
  %v2004 = vmul.f32 %v1710, %v1988
  %v2005 = vmul.f32 %v1711, %v1988
  %v2006 = vmul.f32 %v1712, %v1988
  %v2007 = vmul.f32 %v1713, %v1988
  %v2008 = vmul.f32 %v1714, %v1988
  %v2009 = vmul.f32 %v1715, %v1988
  %v2010 = vmul.f32 %v1716, %v1988
  %v2011 = vmul.f32 %v1717, %v1988
  %v2012 = vmul.f32 %v1718, %v1988
  %v2013 = vmul.f32 %v1719, %v1988
  %v2014 = vmul.f32 %v1720, %v1988
  %v2015 = vmul.f32 %v1721, %v1988
  %v2016 = vmul.f32 %v1722, %v1988
  %v2017 = vmul.f32 %v1725, %v1988
  %v2018 = vmul.f32 %v1726, %v1988
  %v2019 = vmul.f32 %v1727, %v1988
  %v2020 = vmul.f32 %v1728, %v1988
  %v2021 = vmul.f32 %v1729, %v1988
  %v2022 = vmul.f32 %v1730, %v1988
  %v2023 = vmul.f32 %v1731, %v1988
  %v2024 = vmul.f32 %v1732, %v1988
  %v2025 = vmul.f32 %v1733, %v1988
  %v2026 = vmul.f32 %v1734, %v1988
  %v2027 = vmul.f32 %v1735, %v1988
  %v2028 = vmul.f32 %v1736, %v1988
  %v2029 = vmul.f32 %v1737, %v1988
  %v2030 = vmul.f32 %v1738, %v1988
  %v2031 = vmul.f32 %v1739, %v1988
  %v2032 = vmul.f32 %v1740, %v1988
  %v2033 = vmul.f32 %v1741, %v1988
  %v2034 = vmul.f32 %v1742, %v1988
  %v2035 = vmul.f32 %v1743, %v1988
  %v2036 = vmul.f32 %v1744, %v1988
  %v2037 = vmul.f32 %v1745, %v1988
  %v2038 = vmul.f32 %v1746, %v1988
  %v2039 = vmul.f32 %v1747, %v1988
  %v2040 = vmul.f32 %v1748, %v1988
  %v2041 = vmul.f32 %v1749, %v1988
  %v2042 = vmul.f32 %v1750, %v1988
  %v2043 = vmul.f32 %v1751, %v1988
  %v2044 = vmul.f32 %v1752, %v1988
  %v2045 = vadd.f32 %v1929, %v1989
  %v2046 = vadd.f32 %v1930, %v1990
  %v2047 = vadd.f32 %v1931, %v1991
  %v2048 = vadd.f32 %v1932, %v1992
  %v2049 = vadd.f32 %v1933, %v1993
  %v2050 = vadd.f32 %v1934, %v1994
  %v2051 = vadd.f32 %v1935, %v1995
  %v2052 = vadd.f32 %v1936, %v1996
  %v2053 = vadd.f32 %v1937, %v1997
  %v2054 = vadd.f32 %v1938, %v1998
  %v2055 = vadd.f32 %v1939, %v1999
  %v2056 = vadd.f32 %v1940, %v2000
  %v2057 = vadd.f32 %v1941, %v2001
  %v2058 = vadd.f32 %v1942, %v2002
  %v2059 = vadd.f32 %v1943, %v2003
  %v2060 = vadd.f32 %v1944, %v2004
  %v2061 = vadd.f32 %v1945, %v2005
  %v2062 = vadd.f32 %v1946, %v2006
  %v2063 = vadd.f32 %v1947, %v2007
  %v2064 = vadd.f32 %v1948, %v2008
  %v2065 = vadd.f32 %v1949, %v2009
  %v2066 = vadd.f32 %v1950, %v2010
  %v2067 = vadd.f32 %v1951, %v2011
  %v2068 = vadd.f32 %v1952, %v2012
  %v2069 = vadd.f32 %v1953, %v2013
  %v2070 = vadd.f32 %v1954, %v2014
  %v2071 = vadd.f32 %v1955, %v2015
  %v2072 = vadd.f32 %v1956, %v2016
  %v2073 = vadd.f32 %v1957, %v2017
  %v2074 = vadd.f32 %v1958, %v2018
  %v2075 = vadd.f32 %v1959, %v2019
  %v2076 = vadd.f32 %v1960, %v2020
  %v2077 = vadd.f32 %v1961, %v2021
  %v2078 = vadd.f32 %v1962, %v2022
  %v2079 = vadd.f32 %v1963, %v2023
  %v2080 = vadd.f32 %v1964, %v2024
  %v2081 = vadd.f32 %v1965, %v2025
  %v2082 = vadd.f32 %v1966, %v2026
  %v2083 = vadd.f32 %v1967, %v2027
  %v2084 = vadd.f32 %v1968, %v2028
  %v2085 = vadd.f32 %v1969, %v2029
  %v2086 = vadd.f32 %v1970, %v2030
  %v2087 = vadd.f32 %v1971, %v2031
  %v2088 = vadd.f32 %v1972, %v2032
  %v2089 = vadd.f32 %v1973, %v2033
  %v2090 = vadd.f32 %v1974, %v2034
  %v2091 = vadd.f32 %v1975, %v2035
  %v2092 = vadd.f32 %v1976, %v2036
  %v2093 = vadd.f32 %v1977, %v2037
  %v2094 = vadd.f32 %v1978, %v2038
  %v2095 = vadd.f32 %v1979, %v2039
  %v2096 = vadd.f32 %v1980, %v2040
  %v2097 = vadd.f32 %v1981, %v2041
  %v2098 = vadd.f32 %v1982, %v2042
  %v2099 = vadd.f32 %v1983, %v2043
  %v2100 = vadd.f32 %v1984, %v2044
  %v2101 = vld [vmem:[#allocation2 + $0x2] sm:$0xff]
  %v2102 = vld [vmem:[#allocation2 + $0x12] sm:$0xff]
  %v2103 = vld [vmem:[#allocation2 + $0x22] sm:$0xff]
  %v2104 = vld [vmem:[#allocation2 + $0x32] sm:$0xff]
  %v2105 = vld [vmem:[#allocation2 + $0x42] sm:$0xff]
  %v2106 = vld [vmem:[#allocation2 + $0x52] sm:$0xff]
  %v2107 = vld [vmem:[#allocation2 + $0x62] sm:$0xff]
  %v2108 = vld [vmem:[#allocation2 + $0x72] sm:$0xff]
  %v2109 = vld [vmem:[#allocation2 + $0x82] sm:$0xff]
  %v2110 = vld [vmem:[#allocation2 + $0x92] sm:$0xff]
  %v2111 = vld [vmem:[#allocation2 + $0xa2] sm:$0xff]
  %v2112 = vld [vmem:[#allocation2 + $0xb2] sm:$0xff]
  %v2113 = vld [vmem:[#allocation2 + $0xc2] sm:$0xff]
  %v2114 = vld [vmem:[#allocation2 + $0xd2] sm:$0xff]
  %v2115 = vld [vmem:[#allocation2 + $0xe2] sm:$0xff]
  %v2116 = vld [vmem:[#allocation2 + $0xf2] sm:$0xff]
  %v2117 = vld [vmem:[#allocation2 + $0x102] sm:$0xff]
  %v2118 = vld [vmem:[#allocation2 + $0x112] sm:$0xff]
  %v2119 = vld [vmem:[#allocation2 + $0x122] sm:$0xff]
  %v2120 = vld [vmem:[#allocation2 + $0x132] sm:$0xff]
  %v2121 = vld [vmem:[#allocation2 + $0x142] sm:$0xff]
  %v2122 = vld [vmem:[#allocation2 + $0x152] sm:$0xff]
  %v2123 = vld [vmem:[#allocation2 + $0x162] sm:$0xff]
  %v2124 = vld [vmem:[#allocation2 + $0x172] sm:$0xff]
  %v2125 = vld [vmem:[#allocation2 + $0x182] sm:$0xff]
  %v2126 = vld [vmem:[#allocation2 + $0x192] sm:$0xff]
  %v2127 = vld [vmem:[#allocation2 + $0x1a2] sm:$0xff]
  %v2128 = vld [vmem:[#allocation2 + $0x1b2] sm:$0xff]
  %v2129 = vld [vmem:[#allocation2 + $0x1c2] sm:$0xff]
  %v2130 = vld [vmem:[#allocation2 + $0x1d2] sm:$0xff]
  %v2131 = vld [vmem:[#allocation2 + $0x1e2] sm:$0xff]
  %v2132 = vld [vmem:[#allocation2 + $0x1f2] sm:$0xff]
  %v2133 = vld [vmem:[#allocation2 + $0x202] sm:$0xff]
  %v2134 = vld [vmem:[#allocation2 + $0x212] sm:$0xff]
  %v2135 = vld [vmem:[#allocation2 + $0x222] sm:$0xff]
  %v2136 = vld [vmem:[#allocation2 + $0x232] sm:$0xff]
  %v2137 = vld [vmem:[#allocation2 + $0x242] sm:$0xff]
  %v2138 = vld [vmem:[#allocation2 + $0x252] sm:$0xff]
  %v2139 = vld [vmem:[#allocation2 + $0x262] sm:$0xff]
  %v2140 = vld [vmem:[#allocation2 + $0x272] sm:$0xff]
  %v2141 = vld [vmem:[#allocation2 + $0x282] sm:$0xff]
  %v2142 = vld [vmem:[#allocation2 + $0x292] sm:$0xff]
  %v2143 = vld [vmem:[#allocation2 + $0x2a2] sm:$0xff]
  %v2144 = vld [vmem:[#allocation2 + $0x2b2] sm:$0xff]
  %v2145 = vld [vmem:[#allocation2 + $0x2c2] sm:$0xff]
  %v2146 = vld [vmem:[#allocation2 + $0x2d2] sm:$0xff]
  %v2147 = vld [vmem:[#allocation2 + $0x2e2] sm:$0xff]
  %v2148 = vld [vmem:[#allocation2 + $0x2f2] sm:$0xff]
  %v2149 = vld [vmem:[#allocation2 + $0x302] sm:$0xff]
  %v2150 = vld [vmem:[#allocation2 + $0x312] sm:$0xff]
  %v2151 = vld [vmem:[#allocation2 + $0x322] sm:$0xff]
  %v2152 = vld [vmem:[#allocation2 + $0x332] sm:$0xff]
  %v2153 = vld [vmem:[#allocation2 + $0x342] sm:$0xff]
  %v2154 = vld [vmem:[#allocation2 + $0x352] sm:$0xff]
  %v2155 = vld [vmem:[#allocation2 + $0x362] sm:$0xff]
  %v2156 = vld [vmem:[#allocation2 + $0x372] sm:$0xff]
  %v2157 = vld [vmem:[#allocation2 + $0x382] sm:$0xff]
  %v2158 = vld [vmem:[#allocation2 + $0x392] sm:$0xff]
  %v2159 = vld [vmem:[#allocation2 + $0x3a2] sm:$0xff]
  %v2160 = vld [vmem:[#allocation2 + $0x3b2] sm:$0xff]
  %v2161 = vlaneseq
  %v2162 = vshrl.u32 %v2161, 7
  %v2163 = vsub.s32 2, %v2162
  %v2164 = vrot.slane %v1339, %v2163
  %v2165 = vmul.f32 %v2101, %v2164
  %v2166 = vmul.f32 %v2102, %v2164
  %v2167 = vmul.f32 %v2103, %v2164
  %v2168 = vmul.f32 %v2104, %v2164
  %v2169 = vmul.f32 %v2105, %v2164
  %v2170 = vmul.f32 %v2106, %v2164
  %v2171 = vmul.f32 %v2107, %v2164
  %v2172 = vmul.f32 %v2108, %v2164
  %v2173 = vmul.f32 %v2109, %v2164
  %v2174 = vmul.f32 %v2110, %v2164
  %v2175 = vmul.f32 %v2111, %v2164
  %v2176 = vmul.f32 %v2112, %v2164
  %v2177 = vmul.f32 %v2113, %v2164
  %v2178 = vmul.f32 %v2114, %v2164
  %v2179 = vmul.f32 %v2115, %v2164
  %v2180 = vmul.f32 %v2116, %v2164
  %v2181 = vmul.f32 %v2117, %v2164
  %v2182 = vmul.f32 %v2118, %v2164
  %v2183 = vmul.f32 %v2119, %v2164
  %v2184 = vmul.f32 %v2120, %v2164
  %v2185 = vmul.f32 %v2121, %v2164
  %v2186 = vmul.f32 %v2122, %v2164
  %v2187 = vmul.f32 %v2123, %v2164
  %v2188 = vmul.f32 %v2124, %v2164
  %v2189 = vmul.f32 %v2125, %v2164
  %v2190 = vmul.f32 %v2126, %v2164
  %v2191 = vmul.f32 %v2127, %v2164
  %v2192 = vmul.f32 %v2128, %v2164
  %v2193 = vmul.f32 %v2131, %v2164
  %v2194 = vmul.f32 %v2132, %v2164
  %v2195 = vmul.f32 %v2133, %v2164
  %v2196 = vmul.f32 %v2134, %v2164
  %v2197 = vmul.f32 %v2135, %v2164
  %v2198 = vmul.f32 %v2136, %v2164
  %v2199 = vmul.f32 %v2137, %v2164
  %v2200 = vmul.f32 %v2138, %v2164
  %v2201 = vmul.f32 %v2139, %v2164
  %v2202 = vmul.f32 %v2140, %v2164
  %v2203 = vmul.f32 %v2141, %v2164
  %v2204 = vmul.f32 %v2142, %v2164
  %v2205 = vmul.f32 %v2143, %v2164
  %v2206 = vmul.f32 %v2144, %v2164
  %v2207 = vmul.f32 %v2145, %v2164
  %v2208 = vmul.f32 %v2146, %v2164
  %v2209 = vmul.f32 %v2147, %v2164
  %v2210 = vmul.f32 %v2148, %v2164
  %v2211 = vmul.f32 %v2149, %v2164
  %v2212 = vmul.f32 %v2150, %v2164
  %v2213 = vmul.f32 %v2151, %v2164
  %v2214 = vmul.f32 %v2152, %v2164
  %v2215 = vmul.f32 %v2153, %v2164
  %v2216 = vmul.f32 %v2154, %v2164
  %v2217 = vmul.f32 %v2155, %v2164
  %v2218 = vmul.f32 %v2156, %v2164
  %v2219 = vmul.f32 %v2157, %v2164
  %v2220 = vmul.f32 %v2158, %v2164
  %v2221 = vadd.f32 %v2045, %v2165
  %v2222 = vadd.f32 %v2046, %v2166
  %v2223 = vadd.f32 %v2047, %v2167
  %v2224 = vadd.f32 %v2048, %v2168
  %v2225 = vadd.f32 %v2049, %v2169
  %v2226 = vadd.f32 %v2050, %v2170
  %v2227 = vadd.f32 %v2051, %v2171
  %v2228 = vadd.f32 %v2052, %v2172
  %v2229 = vadd.f32 %v2053, %v2173
  %v2230 = vadd.f32 %v2054, %v2174
  %v2231 = vadd.f32 %v2055, %v2175
  %v2232 = vadd.f32 %v2056, %v2176
  %v2233 = vadd.f32 %v2057, %v2177
  %v2234 = vadd.f32 %v2058, %v2178
  %v2235 = vadd.f32 %v2059, %v2179
  %v2236 = vadd.f32 %v2060, %v2180
  %v2237 = vadd.f32 %v2061, %v2181
  %v2238 = vadd.f32 %v2062, %v2182
  %v2239 = vadd.f32 %v2063, %v2183
  %v2240 = vadd.f32 %v2064, %v2184
  %v2241 = vadd.f32 %v2065, %v2185
  %v2242 = vadd.f32 %v2066, %v2186
  %v2243 = vadd.f32 %v2067, %v2187
  %v2244 = vadd.f32 %v2068, %v2188
  %v2245 = vadd.f32 %v2069, %v2189
  %v2246 = vadd.f32 %v2070, %v2190
  %v2247 = vadd.f32 %v2071, %v2191
  %v2248 = vadd.f32 %v2072, %v2192
  %v2249 = vadd.f32 %v2073, %v2193
  %v2250 = vadd.f32 %v2074, %v2194
  %v2251 = vadd.f32 %v2075, %v2195
  %v2252 = vadd.f32 %v2076, %v2196
  %v2253 = vadd.f32 %v2077, %v2197
  %v2254 = vadd.f32 %v2078, %v2198
  %v2255 = vadd.f32 %v2079, %v2199
  %v2256 = vadd.f32 %v2080, %v2200
  %v2257 = vadd.f32 %v2081, %v2201
  %v2258 = vadd.f32 %v2082, %v2202
  %v2259 = vadd.f32 %v2083, %v2203
  %v2260 = vadd.f32 %v2084, %v2204
  %v2261 = vadd.f32 %v2085, %v2205
  %v2262 = vadd.f32 %v2086, %v2206
  %v2263 = vadd.f32 %v2087, %v2207
  %v2264 = vadd.f32 %v2088, %v2208
  %v2265 = vadd.f32 %v2089, %v2209
  %v2266 = vadd.f32 %v2090, %v2210
  %v2267 = vadd.f32 %v2091, %v2211
  %v2268 = vadd.f32 %v2092, %v2212
  %v2269 = vadd.f32 %v2093, %v2213
  %v2270 = vadd.f32 %v2094, %v2214
  %v2271 = vadd.f32 %v2095, %v2215
  %v2272 = vadd.f32 %v2096, %v2216
  %v2273 = vadd.f32 %v2097, %v2217
  %v2274 = vadd.f32 %v2098, %v2218
  %v2275 = vadd.f32 %v2099, %v2219
  %v2276 = vadd.f32 %v2100, %v2220
  %v2277 = vlaneseq
  %v2278 = vshrl.u32 %v2277, 7
  %v2279 = vsub.s32 5, %v2278
  %v2280 = vrot.slane %v1339, %v2279
  %v2281 = vmul.f32 %v2102, %v2280
  %v2282 = vmul.f32 %v2103, %v2280
  %v2283 = vmul.f32 %v2104, %v2280
  %v2284 = vmul.f32 %v2105, %v2280
  %v2285 = vmul.f32 %v2106, %v2280
  %v2286 = vmul.f32 %v2107, %v2280
  %v2287 = vmul.f32 %v2108, %v2280
  %v2288 = vmul.f32 %v2109, %v2280
  %v2289 = vmul.f32 %v2110, %v2280
  %v2290 = vmul.f32 %v2111, %v2280
  %v2291 = vmul.f32 %v2112, %v2280
  %v2292 = vmul.f32 %v2113, %v2280
  %v2293 = vmul.f32 %v2114, %v2280
  %v2294 = vmul.f32 %v2115, %v2280
  %v2295 = vmul.f32 %v2116, %v2280
  %v2296 = vmul.f32 %v2117, %v2280
  %v2297 = vmul.f32 %v2118, %v2280
  %v2298 = vmul.f32 %v2119, %v2280
  %v2299 = vmul.f32 %v2120, %v2280
  %v2300 = vmul.f32 %v2121, %v2280
  %v2301 = vmul.f32 %v2122, %v2280
  %v2302 = vmul.f32 %v2123, %v2280
  %v2303 = vmul.f32 %v2124, %v2280
  %v2304 = vmul.f32 %v2125, %v2280
  %v2305 = vmul.f32 %v2126, %v2280
  %v2306 = vmul.f32 %v2127, %v2280
  %v2307 = vmul.f32 %v2128, %v2280
  %v2308 = vmul.f32 %v2129, %v2280
  %v2309 = vmul.f32 %v2132, %v2280
  %v2310 = vmul.f32 %v2133, %v2280
  %v2311 = vmul.f32 %v2134, %v2280
  %v2312 = vmul.f32 %v2135, %v2280
  %v2313 = vmul.f32 %v2136, %v2280
  %v2314 = vmul.f32 %v2137, %v2280
  %v2315 = vmul.f32 %v2138, %v2280
  %v2316 = vmul.f32 %v2139, %v2280
  %v2317 = vmul.f32 %v2140, %v2280
  %v2318 = vmul.f32 %v2141, %v2280
  %v2319 = vmul.f32 %v2142, %v2280
  %v2320 = vmul.f32 %v2143, %v2280
  %v2321 = vmul.f32 %v2144, %v2280
  %v2322 = vmul.f32 %v2145, %v2280
  %v2323 = vmul.f32 %v2146, %v2280
  %v2324 = vmul.f32 %v2147, %v2280
  %v2325 = vmul.f32 %v2148, %v2280
  %v2326 = vmul.f32 %v2149, %v2280
  %v2327 = vmul.f32 %v2150, %v2280
  %v2328 = vmul.f32 %v2151, %v2280
  %v2329 = vmul.f32 %v2152, %v2280
  %v2330 = vmul.f32 %v2153, %v2280
  %v2331 = vmul.f32 %v2154, %v2280
  %v2332 = vmul.f32 %v2155, %v2280
  %v2333 = vmul.f32 %v2156, %v2280
  %v2334 = vmul.f32 %v2157, %v2280
  %v2335 = vmul.f32 %v2158, %v2280
  %v2336 = vmul.f32 %v2159, %v2280
  %v2337 = vadd.f32 %v2221, %v2281
  %v2338 = vadd.f32 %v2222, %v2282
  %v2339 = vadd.f32 %v2223, %v2283
  %v2340 = vadd.f32 %v2224, %v2284
  %v2341 = vadd.f32 %v2225, %v2285
  %v2342 = vadd.f32 %v2226, %v2286
  %v2343 = vadd.f32 %v2227, %v2287
  %v2344 = vadd.f32 %v2228, %v2288
  %v2345 = vadd.f32 %v2229, %v2289
  %v2346 = vadd.f32 %v2230, %v2290
  %v2347 = vadd.f32 %v2231, %v2291
  %v2348 = vadd.f32 %v2232, %v2292
  %v2349 = vadd.f32 %v2233, %v2293
  %v2350 = vadd.f32 %v2234, %v2294
  %v2351 = vadd.f32 %v2235, %v2295
  %v2352 = vadd.f32 %v2236, %v2296
  %v2353 = vadd.f32 %v2237, %v2297
  %v2354 = vadd.f32 %v2238, %v2298
  %v2355 = vadd.f32 %v2239, %v2299
  %v2356 = vadd.f32 %v2240, %v2300
  %v2357 = vadd.f32 %v2241, %v2301
  %v2358 = vadd.f32 %v2242, %v2302
  %v2359 = vadd.f32 %v2243, %v2303
  %v2360 = vadd.f32 %v2244, %v2304
  %v2361 = vadd.f32 %v2245, %v2305
  %v2362 = vadd.f32 %v2246, %v2306
  %v2363 = vadd.f32 %v2247, %v2307
  %v2364 = vadd.f32 %v2248, %v2308
  %v2365 = vadd.f32 %v2249, %v2309
  %v2366 = vadd.f32 %v2250, %v2310
  %v2367 = vadd.f32 %v2251, %v2311
  %v2368 = vadd.f32 %v2252, %v2312
  %v2369 = vadd.f32 %v2253, %v2313
  %v2370 = vadd.f32 %v2254, %v2314
  %v2371 = vadd.f32 %v2255, %v2315
  %v2372 = vadd.f32 %v2256, %v2316
  %v2373 = vadd.f32 %v2257, %v2317
  %v2374 = vadd.f32 %v2258, %v2318
  %v2375 = vadd.f32 %v2259, %v2319
  %v2376 = vadd.f32 %v2260, %v2320
  %v2377 = vadd.f32 %v2261, %v2321
  %v2378 = vadd.f32 %v2262, %v2322
  %v2379 = vadd.f32 %v2263, %v2323
  %v2380 = vadd.f32 %v2264, %v2324
  %v2381 = vadd.f32 %v2265, %v2325
  %v2382 = vadd.f32 %v2266, %v2326
  %v2383 = vadd.f32 %v2267, %v2327
  %v2384 = vadd.f32 %v2268, %v2328
  %v2385 = vadd.f32 %v2269, %v2329
  %v2386 = vadd.f32 %v2270, %v2330
  %v2387 = vadd.f32 %v2271, %v2331
  %v2388 = vadd.f32 %v2272, %v2332
  %v2389 = vadd.f32 %v2273, %v2333
  %v2390 = vadd.f32 %v2274, %v2334
  %v2391 = vadd.f32 %v2275, %v2335
  %v2392 = vadd.f32 %v2276, %v2336
  %v2393 = vlaneseq
  %v2394 = vshrl.u32 %v2393, 7
  %v2395 = vsub.s32 0, %v2394
  %v2396 = vrot.slane %v1340, %v2395
  %v2397 = vmul.f32 %v2103, %v2396
  %v2398 = vmul.f32 %v2104, %v2396
  %v2399 = vmul.f32 %v2105, %v2396
  %v2400 = vmul.f32 %v2106, %v2396
  %v2401 = vmul.f32 %v2107, %v2396
  %v2402 = vmul.f32 %v2108, %v2396
  %v2403 = vmul.f32 %v2109, %v2396
  %v2404 = vmul.f32 %v2110, %v2396
  %v2405 = vmul.f32 %v2111, %v2396
  %v2406 = vmul.f32 %v2112, %v2396
  %v2407 = vmul.f32 %v2113, %v2396
  %v2408 = vmul.f32 %v2114, %v2396
  %v2409 = vmul.f32 %v2115, %v2396
  %v2410 = vmul.f32 %v2116, %v2396
  %v2411 = vmul.f32 %v2117, %v2396
  %v2412 = vmul.f32 %v2118, %v2396
  %v2413 = vmul.f32 %v2119, %v2396
  %v2414 = vmul.f32 %v2120, %v2396
  %v2415 = vmul.f32 %v2121, %v2396
  %v2416 = vmul.f32 %v2122, %v2396
  %v2417 = vmul.f32 %v2123, %v2396
  %v2418 = vmul.f32 %v2124, %v2396
  %v2419 = vmul.f32 %v2125, %v2396
  %v2420 = vmul.f32 %v2126, %v2396
  %v2421 = vmul.f32 %v2127, %v2396
  %v2422 = vmul.f32 %v2128, %v2396
  %v2423 = vmul.f32 %v2129, %v2396
  %v2424 = vmul.f32 %v2130, %v2396
  %v2425 = vmul.f32 %v2133, %v2396
  %v2426 = vmul.f32 %v2134, %v2396
  %v2427 = vmul.f32 %v2135, %v2396
  %v2428 = vmul.f32 %v2136, %v2396
  %v2429 = vmul.f32 %v2137, %v2396
  %v2430 = vmul.f32 %v2138, %v2396
  %v2431 = vmul.f32 %v2139, %v2396
  %v2432 = vmul.f32 %v2140, %v2396
  %v2433 = vmul.f32 %v2141, %v2396
  %v2434 = vmul.f32 %v2142, %v2396
  %v2435 = vmul.f32 %v2143, %v2396
  %v2436 = vmul.f32 %v2144, %v2396
  %v2437 = vmul.f32 %v2145, %v2396
  %v2438 = vmul.f32 %v2146, %v2396
  %v2439 = vmul.f32 %v2147, %v2396
  %v2440 = vmul.f32 %v2148, %v2396
  %v2441 = vmul.f32 %v2149, %v2396
  %v2442 = vmul.f32 %v2150, %v2396
  %v2443 = vmul.f32 %v2151, %v2396
  %v2444 = vmul.f32 %v2152, %v2396
  %v2445 = vmul.f32 %v2153, %v2396
  %v2446 = vmul.f32 %v2154, %v2396
  %v2447 = vmul.f32 %v2155, %v2396
  %v2448 = vmul.f32 %v2156, %v2396
  %v2449 = vmul.f32 %v2157, %v2396
  %v2450 = vmul.f32 %v2158, %v2396
  %v2451 = vmul.f32 %v2159, %v2396
  %v2452 = vmul.f32 %v2160, %v2396
  %v2453 = vadd.f32 %v2337, %v2397
  %v2454 = vadd.f32 %v2338, %v2398
  %v2455 = vadd.f32 %v2339, %v2399
  %v2456 = vadd.f32 %v2340, %v2400
  %v2457 = vadd.f32 %v2341, %v2401
  %v2458 = vadd.f32 %v2342, %v2402
  %v2459 = vadd.f32 %v2343, %v2403
  %v2460 = vadd.f32 %v2344, %v2404
  %v2461 = vadd.f32 %v2345, %v2405
  %v2462 = vadd.f32 %v2346, %v2406
  %v2463 = vadd.f32 %v2347, %v2407
  %v2464 = vadd.f32 %v2348, %v2408
  %v2465 = vadd.f32 %v2349, %v2409
  %v2466 = vadd.f32 %v2350, %v2410
  %v2467 = vadd.f32 %v2351, %v2411
  %v2468 = vadd.f32 %v2352, %v2412
  %v2469 = vadd.f32 %v2353, %v2413
  %v2470 = vadd.f32 %v2354, %v2414
  %v2471 = vadd.f32 %v2355, %v2415
  %v2472 = vadd.f32 %v2356, %v2416
  %v2473 = vadd.f32 %v2357, %v2417
  %v2474 = vadd.f32 %v2358, %v2418
  %v2475 = vadd.f32 %v2359, %v2419
  %v2476 = vadd.f32 %v2360, %v2420
  %v2477 = vadd.f32 %v2361, %v2421
  %v2478 = vadd.f32 %v2362, %v2422
  %v2479 = vadd.f32 %v2363, %v2423
  %v2480 = vadd.f32 %v2364, %v2424
  %v2481 = vadd.f32 %v2365, %v2425
  %v2482 = vadd.f32 %v2366, %v2426
  %v2483 = vadd.f32 %v2367, %v2427
  %v2484 = vadd.f32 %v2368, %v2428
  %v2485 = vadd.f32 %v2369, %v2429
  %v2486 = vadd.f32 %v2370, %v2430
  %v2487 = vadd.f32 %v2371, %v2431
  %v2488 = vadd.f32 %v2372, %v2432
  %v2489 = vadd.f32 %v2373, %v2433
  %v2490 = vadd.f32 %v2374, %v2434
  %v2491 = vadd.f32 %v2375, %v2435
  %v2492 = vadd.f32 %v2376, %v2436
  %v2493 = vadd.f32 %v2377, %v2437
  %v2494 = vadd.f32 %v2378, %v2438
  %v2495 = vadd.f32 %v2379, %v2439
  %v2496 = vadd.f32 %v2380, %v2440
  %v2497 = vadd.f32 %v2381, %v2441
  %v2498 = vadd.f32 %v2382, %v2442
  %v2499 = vadd.f32 %v2383, %v2443
  %v2500 = vadd.f32 %v2384, %v2444
  %v2501 = vadd.f32 %v2385, %v2445
  %v2502 = vadd.f32 %v2386, %v2446
  %v2503 = vadd.f32 %v2387, %v2447
  %v2504 = vadd.f32 %v2388, %v2448
  %v2505 = vadd.f32 %v2389, %v2449
  %v2506 = vadd.f32 %v2390, %v2450
  %v2507 = vadd.f32 %v2391, %v2451
  %v2508 = vadd.f32 %v2392, %v2452
  %v2509 = vld [vmem:[%s6] sm:$0x1]
  %v2511 = vlaneseq
  %v2512 = vshrl.u32 %v2511, 7
  %v2513 = vsub.s32 0, %v2512
  %v2514 = vrot.slane %v2509, %v2513
  %v2516 = vadd.f32 %v2453, %v2514
  %v2517 = vadd.f32 %v2454, %v2514
  %v2518 = vadd.f32 %v2455, %v2514
  %v2519 = vadd.f32 %v2456, %v2514
  %v2520 = vadd.f32 %v2457, %v2514
  %v2521 = vadd.f32 %v2458, %v2514
  %v2522 = vadd.f32 %v2459, %v2514
  %v2523 = vadd.f32 %v2460, %v2514
  %v2524 = vadd.f32 %v2461, %v2514
  %v2525 = vadd.f32 %v2462, %v2514
  %v2526 = vadd.f32 %v2463, %v2514
  %v2527 = vadd.f32 %v2464, %v2514
  %v2528 = vadd.f32 %v2465, %v2514
  %v2529 = vadd.f32 %v2466, %v2514
  %v2530 = vadd.f32 %v2467, %v2514
  %v2531 = vadd.f32 %v2468, %v2514
  %v2532 = vadd.f32 %v2469, %v2514
  %v2533 = vadd.f32 %v2470, %v2514
  %v2534 = vadd.f32 %v2471, %v2514
  %v2535 = vadd.f32 %v2472, %v2514
  %v2536 = vadd.f32 %v2473, %v2514
  %v2537 = vadd.f32 %v2474, %v2514
  %v2538 = vadd.f32 %v2475, %v2514
  %v2539 = vadd.f32 %v2476, %v2514
  %v2540 = vadd.f32 %v2477, %v2514
  %v2541 = vadd.f32 %v2478, %v2514
  %v2542 = vadd.f32 %v2479, %v2514
  %v2543 = vadd.f32 %v2480, %v2514
  %v2544 = vadd.f32 %v2481, %v2514
  %v2545 = vadd.f32 %v2482, %v2514
  %v2546 = vadd.f32 %v2483, %v2514
  %v2547 = vadd.f32 %v2484, %v2514
  %v2548 = vadd.f32 %v2485, %v2514
  %v2549 = vadd.f32 %v2486, %v2514
  %v2550 = vadd.f32 %v2487, %v2514
  %v2551 = vadd.f32 %v2488, %v2514
  %v2552 = vadd.f32 %v2489, %v2514
  %v2553 = vadd.f32 %v2490, %v2514
  %v2554 = vadd.f32 %v2491, %v2514
  %v2555 = vadd.f32 %v2492, %v2514
  %v2556 = vadd.f32 %v2493, %v2514
  %v2557 = vadd.f32 %v2494, %v2514
  %v2558 = vadd.f32 %v2495, %v2514
  %v2559 = vadd.f32 %v2496, %v2514
  %v2560 = vadd.f32 %v2497, %v2514
  %v2561 = vadd.f32 %v2498, %v2514
  %v2562 = vadd.f32 %v2499, %v2514
  %v2563 = vadd.f32 %v2500, %v2514
  %v2564 = vadd.f32 %v2501, %v2514
  %v2565 = vadd.f32 %v2502, %v2514
  %v2566 = vadd.f32 %v2503, %v2514
  %v2567 = vadd.f32 %v2504, %v2514
  %v2568 = vadd.f32 %v2505, %v2514
  %v2569 = vadd.f32 %v2506, %v2514
  %v2570 = vadd.f32 %v2507, %v2514
  %v2571 = vadd.f32 %v2508, %v2514
  %v2572 = vmax.f32 %v2516, 0.0
  %v2573 = vmax.f32 %v2517, 0.0
  %v2574 = vmax.f32 %v2518, 0.0
  %v2575 = vmax.f32 %v2519, 0.0
  %v2576 = vmax.f32 %v2520, 0.0
  %v2577 = vmax.f32 %v2521, 0.0
  %v2578 = vmax.f32 %v2522, 0.0
  %v2579 = vmax.f32 %v2523, 0.0
  %v2580 = vmax.f32 %v2524, 0.0
  %v2581 = vmax.f32 %v2525, 0.0
  %v2582 = vmax.f32 %v2526, 0.0
  %v2583 = vmax.f32 %v2527, 0.0
  %v2584 = vmax.f32 %v2528, 0.0
  %v2585 = vmax.f32 %v2529, 0.0
  %v2586 = vmax.f32 %v2530, 0.0
  %v2587 = vmax.f32 %v2531, 0.0
  %v2588 = vmax.f32 %v2532, 0.0
  %v2589 = vmax.f32 %v2533, 0.0
  %v2590 = vmax.f32 %v2534, 0.0
  %v2591 = vmax.f32 %v2535, 0.0
  %v2592 = vmax.f32 %v2536, 0.0
  %v2593 = vmax.f32 %v2537, 0.0
  %v2594 = vmax.f32 %v2538, 0.0
  %v2595 = vmax.f32 %v2539, 0.0
  %v2596 = vmax.f32 %v2540, 0.0
  %v2597 = vmax.f32 %v2541, 0.0
  %v2598 = vmax.f32 %v2542, 0.0
  %v2599 = vmax.f32 %v2543, 0.0
  %v2600 = vmax.f32 %v2544, 0.0
  %v2601 = vmax.f32 %v2545, 0.0
  %v2602 = vmax.f32 %v2546, 0.0
  %v2603 = vmax.f32 %v2547, 0.0
  %v2604 = vmax.f32 %v2548, 0.0
  %v2605 = vmax.f32 %v2549, 0.0
  %v2606 = vmax.f32 %v2550, 0.0
  %v2607 = vmax.f32 %v2551, 0.0
  %v2608 = vmax.f32 %v2552, 0.0
  %v2609 = vmax.f32 %v2553, 0.0
  %v2610 = vmax.f32 %v2554, 0.0
  %v2611 = vmax.f32 %v2555, 0.0
  %v2612 = vmax.f32 %v2556, 0.0
  %v2613 = vmax.f32 %v2557, 0.0
  %v2614 = vmax.f32 %v2558, 0.0
  %v2615 = vmax.f32 %v2559, 0.0
  %v2616 = vmax.f32 %v2560, 0.0
  %v2617 = vmax.f32 %v2561, 0.0
  %v2618 = vmax.f32 %v2562, 0.0
  %v2619 = vmax.f32 %v2563, 0.0
  %v2620 = vmax.f32 %v2564, 0.0
  %v2621 = vmax.f32 %v2565, 0.0
  %v2622 = vmax.f32 %v2566, 0.0
  %v2623 = vmax.f32 %v2567, 0.0
  %v2624 = vmax.f32 %v2568, 0.0
  %v2625 = vmax.f32 %v2569, 0.0
  %v2626 = vmax.f32 %v2570, 0.0
  %v2627 = vmax.f32 %v2571, 0.0
  %v2628 = vpack.c.bf16 %v2573, %v2572
  %v2629 = vpack.c.bf16 %v2575, %v2574
  %v2630 = vpack.c.bf16 %v2577, %v2576
  %v2631 = vpack.c.bf16 %v2579, %v2578
  %v2632 = vpack.c.bf16 %v2581, %v2580
  %v2633 = vpack.c.bf16 %v2583, %v2582
  %v2634 = vpack.c.bf16 %v2585, %v2584
  %v2635 = vpack.c.bf16 %v2587, %v2586
  %v2636 = vpack.c.bf16 %v2589, %v2588
  %v2637 = vpack.c.bf16 %v2591, %v2590
  %v2638 = vpack.c.bf16 %v2593, %v2592
  %v2639 = vpack.c.bf16 %v2595, %v2594
  %v2640 = vpack.c.bf16 %v2597, %v2596
  %v2641 = vpack.c.bf16 %v2599, %v2598
  %v2642 = vpack.c.bf16 %v2601, %v2600
  %v2643 = vpack.c.bf16 %v2603, %v2602
  %v2644 = vpack.c.bf16 %v2605, %v2604
  %v2645 = vpack.c.bf16 %v2607, %v2606
  %v2646 = vpack.c.bf16 %v2609, %v2608
  %v2647 = vpack.c.bf16 %v2611, %v2610
  %v2648 = vpack.c.bf16 %v2613, %v2612
  %v2649 = vpack.c.bf16 %v2615, %v2614
  %v2650 = vpack.c.bf16 %v2617, %v2616
  %v2651 = vpack.c.bf16 %v2619, %v2618
  %v2652 = vpack.c.bf16 %v2621, %v2620
  %v2653 = vpack.c.bf16 %v2623, %v2622
  %v2654 = vpack.c.bf16 %v2625, %v2624
  %v2655 = vpack.c.bf16 %v2627, %v2626
  %v2656 = vld [vmem:[%s7] sm:$0xf]
  %v2657 = vld [vmem:[%s7 + $0x4] sm:$0xf]
  %v2658 = vld [vmem:[%s7 + $0x8] sm:$0xf]
  %v2659 = vld [vmem:[%s7 + $0xc] sm:$0xf]
  %v2660 = vld [vmem:[%s7 + $0x10] sm:$0xf]
  %v2661 = vld [vmem:[%s7 + $0x14] sm:$0xf]
  %v2662 = vld [vmem:[%s7 + $0x18] sm:$0xf]
  %v2663 = vld [vmem:[%s7 + $0x1c] sm:$0xf]
  %v2664 = vld [vmem:[%s8] sm:$0x1]
  %v2666 = vlaneseq
  %v2667 = vshrl.u32 %v2666, 7
  %v2668 = vsub.s32 0, %v2667
  %v2669 = vrot.slane %v2664, %v2668
  %v2679 = vunpack.c.l.b16 %v2656
  %v2680 = vunpack.c.l.b16 %v2657
  %v2681 = vunpack.c.l.b16 %v2658
  %v2682 = vunpack.c.l.b16 %v2659
  %v2683 = vunpack.c.l.b16 %v2660
  %v2684 = vunpack.c.l.b16 %v2661
  %v2685 = vunpack.c.l.b16 %v2662
  %v2686 = vunpack.c.l.b16 %v2663
  %v2687 = vpack.c.b16 %v2680, %v2679
  %v2688 = vpack.c.b16 %v2682, %v2681
  %v2689 = vpack.c.b16 %v2684, %v2683
  %v2690 = vpack.c.b16 %v2686, %v2685
  %v2696 = vsel %vm1150, %v2628, 0
  %v2699 = vsel %vm1150, %v2629, 0
  %v2702 = vsel %vm1150, %v2630, 0
  %v2705 = vsel %vm1150, %v2631, 0
  %v2708 = vsel %vm1150, %v2632, 0
  %v2711 = vsel %vm1150, %v2633, 0
  %v2714 = vsel %vm1150, %v2634, 0
  %v2717 = vsel %vm1150, %v2635, 0
  %v2720 = vsel %vm1150, %v2636, 0
  %v2723 = vsel %vm1150, %v2637, 0
  %v2726 = vsel %vm1150, %v2638, 0
  %v2729 = vsel %vm1150, %v2639, 0
  %v2732 = vsel %vm1150, %v2640, 0
  %v2735 = vsel %vm1150, %v2641, 0
  %v2738 = vsel %vm1150, %v2642, 0
  %v2741 = vsel %vm1150, %v2643, 0
  %v2744 = vsel %vm1150, %v2644, 0
  %v2747 = vsel %vm1150, %v2645, 0
  %v2750 = vsel %vm1150, %v2646, 0
  %v2753 = vsel %vm1150, %v2647, 0
  %v2756 = vsel %vm1150, %v2648, 0
  %v2759 = vsel %vm1150, %v2649, 0
  %v2762 = vsel %vm1150, %v2650, 0
  %v2765 = vsel %vm1150, %v2651, 0
  %v2768 = vsel %vm1150, %v2652, 0
  %v2771 = vsel %vm1150, %v2653, 0
  %v2774 = vsel %vm1150, %v2654, 0
  %v2777 = vsel %vm1150, %v2655, 0
  %2779 = vmatprep.subr.bf16.mxu0 0
  %2780 = vmatpush1.bf16.msra.mxu0 %v2687
  %2781 = vmatprep.subr.bf16.mxu0 0
  %2782 = vmatpush1.bf16.msra.mxu0 %v2688
  %2783 = vmatprep.subr.bf16.mxu0 0
  %2784 = vmatpush1.bf16.msra.mxu0 %v2689
  %2785 = vmatprep.subr.bf16.mxu0 0
  %2786 = vmatpush1.bf16.msra.mxu0 %v2690
  %2787 = vmatprep.subr.bf16.mxu0 0
  %2788 = vmatpush1.bf16.msra.mxu0 0
  %2789 = vmatprep.subr.bf16.mxu0 0
  %2790 = vmatpush1.bf16.msra.mxu0 0
  %2791 = vmatprep.subr.bf16.mxu0 0
  %2792 = vmatpush1.bf16.msra.mxu0 0
  %2793 = vmatprep.subr.bf16.mxu0 0
  %2794 = vmatpush1.bf16.msra.mxu0 0
  %2795 = vmatprep.subr.bf16.mxu0 0
  %2796 = vmatpush1.bf16.msra.mxu0 0
  %2797 = vmatprep.subr.bf16.mxu0 0
  %2798 = vmatpush1.bf16.msra.mxu0 0
  %2799 = vmatprep.subr.bf16.mxu0 0
  %2800 = vmatpush1.bf16.msra.mxu0 0
  %2801 = vmatprep.subr.bf16.mxu0 0
  %2802 = vmatpush1.bf16.msra.mxu0 0
  %2803 = vmatprep.subr.bf16.mxu0 0
  %2804 = vmatpush1.bf16.msra.mxu0 0
  %2805 = vmatprep.subr.bf16.mxu0 0
  %2806 = vmatpush1.bf16.msra.mxu0 0
  %2807 = vmatprep.subr.bf16.mxu0 0
  %2808 = vmatpush1.bf16.msra.mxu0 0
  %2809 = vmatprep.subr.bf16.mxu0 0
  %2810 = vmatpush1.bf16.msra.mxu0 0
  %2811 = vmatprep.mubr.bf16.mxu0 0
  %2812 = vmatmul.mubr.bf16.gmra.mrb[0].mxu0 %v2696
  %v2813 = vpop.f32.mrb[0].mxu0
  %v2814 = vadd.f32 %v2669, %v2813
  %v2815 = vpop.f32.mrb[0].mxu0
  %v2816 = vpop.f32.mrb[0].mxu0
  %v2817 = vadd.f32 %v2669, %v2816
  %v2818 = vpop.f32.mrb[0].mxu0
  %2819 = vmatprep.mubr.bf16.mxu0 0
  %2820 = vmatmul.mubr.bf16.gmra.mrb[0].mxu0 %v2699
  %v2821 = vpop.f32.mrb[0].mxu0
  %v2822 = vadd.f32 %v2669, %v2821
  %v2823 = vpop.f32.mrb[0].mxu0
  %v2824 = vpop.f32.mrb[0].mxu0
  %v2825 = vadd.f32 %v2669, %v2824
  %v2826 = vpop.f32.mrb[0].mxu0
  %2827 = vmatprep.mubr.bf16.mxu0 0
  %2828 = vmatmul.mubr.bf16.gmra.mrb[0].mxu0 %v2702
  %v2829 = vpop.f32.mrb[0].mxu0
  %v2830 = vadd.f32 %v2669, %v2829
  %v2831 = vpop.f32.mrb[0].mxu0
  %v2832 = vpop.f32.mrb[0].mxu0
  %v2833 = vadd.f32 %v2669, %v2832
  %v2834 = vpop.f32.mrb[0].mxu0
  %2835 = vmatprep.mubr.bf16.mxu0 0
  %2836 = vmatmul.mubr.bf16.gmra.mrb[0].mxu0 %v2705
  %v2837 = vpop.f32.mrb[0].mxu0
  %v2838 = vadd.f32 %v2669, %v2837
  %v2839 = vpop.f32.mrb[0].mxu0
  %v2840 = vpop.f32.mrb[0].mxu0
  %v2841 = vadd.f32 %v2669, %v2840
  %v2842 = vpop.f32.mrb[0].mxu0
  %2843 = vmatprep.mubr.bf16.mxu0 0
  %2844 = vmatmul.mubr.bf16.gmra.mrb[0].mxu0 %v2708
  %v2845 = vpop.f32.mrb[0].mxu0
  %v2846 = vadd.f32 %v2669, %v2845
  %v2847 = vpop.f32.mrb[0].mxu0
  %v2848 = vpop.f32.mrb[0].mxu0
  %v2849 = vadd.f32 %v2669, %v2848
  %v2850 = vpop.f32.mrb[0].mxu0
  %2851 = vmatprep.mubr.bf16.mxu0 0
  %2852 = vmatmul.mubr.bf16.gmra.mrb[0].mxu0 %v2711
  %v2853 = vpop.f32.mrb[0].mxu0
  %v2854 = vadd.f32 %v2669, %v2853
  %v2855 = vpop.f32.mrb[0].mxu0
  %v2856 = vpop.f32.mrb[0].mxu0
  %v2857 = vadd.f32 %v2669, %v2856
  %v2858 = vpop.f32.mrb[0].mxu0
  %2859 = vmatprep.mubr.bf16.mxu0 0
  %2860 = vmatmul.mubr.bf16.gmra.mrb[0].mxu0 %v2714
  %v2861 = vpop.f32.mrb[0].mxu0
  %v2862 = vadd.f32 %v2669, %v2861
  %v2863 = vpop.f32.mrb[0].mxu0
  %v2864 = vpop.f32.mrb[0].mxu0
  %v2865 = vadd.f32 %v2669, %v2864
  %v2866 = vpop.f32.mrb[0].mxu0
  %2867 = vmatprep.mubr.bf16.mxu0 0
  %2868 = vmatmul.mubr.bf16.gmra.mrb[0].mxu0 %v2717
  %v2869 = vpop.f32.mrb[0].mxu0
  %v2870 = vadd.f32 %v2669, %v2869
  %v2871 = vpop.f32.mrb[0].mxu0
  %v2872 = vpop.f32.mrb[0].mxu0
  %v2873 = vadd.f32 %v2669, %v2872
  %v2874 = vpop.f32.mrb[0].mxu0
  %2875 = vmatprep.mubr.bf16.mxu0 0
  %2876 = vmatmul.mubr.bf16.gmra.mrb[0].mxu0 %v2720
  %v2877 = vpop.f32.mrb[0].mxu0
  %v2878 = vadd.f32 %v2669, %v2877
  %v2879 = vpop.f32.mrb[0].mxu0
  %v2880 = vpop.f32.mrb[0].mxu0
  %v2881 = vadd.f32 %v2669, %v2880
  %v2882 = vpop.f32.mrb[0].mxu0
  %2883 = vmatprep.mubr.bf16.mxu0 0
  %2884 = vmatmul.mubr.bf16.gmra.mrb[0].mxu0 %v2723
  %v2885 = vpop.f32.mrb[0].mxu0
  %v2886 = vadd.f32 %v2669, %v2885
  %v2887 = vpop.f32.mrb[0].mxu0
  %v2888 = vpop.f32.mrb[0].mxu0
  %v2889 = vadd.f32 %v2669, %v2888
  %v2890 = vpop.f32.mrb[0].mxu0
  %2891 = vmatprep.mubr.bf16.mxu0 0
  %2892 = vmatmul.mubr.bf16.gmra.mrb[0].mxu0 %v2726
  %v2893 = vpop.f32.mrb[0].mxu0
  %v2894 = vadd.f32 %v2669, %v2893
  %v2895 = vpop.f32.mrb[0].mxu0
  %v2896 = vpop.f32.mrb[0].mxu0
  %v2897 = vadd.f32 %v2669, %v2896
  %v2898 = vpop.f32.mrb[0].mxu0
  %2899 = vmatprep.mubr.bf16.mxu0 0
  %2900 = vmatmul.mubr.bf16.gmra.mrb[0].mxu0 %v2729
  %v2901 = vpop.f32.mrb[0].mxu0
  %v2902 = vadd.f32 %v2669, %v2901
  %v2903 = vpop.f32.mrb[0].mxu0
  %v2904 = vpop.f32.mrb[0].mxu0
  %v2905 = vadd.f32 %v2669, %v2904
  %v2906 = vpop.f32.mrb[0].mxu0
  %2907 = vmatprep.mubr.bf16.mxu0 0
  %2908 = vmatmul.mubr.bf16.gmra.mrb[0].mxu0 %v2732
  %v2909 = vpop.f32.mrb[0].mxu0
  %v2910 = vadd.f32 %v2669, %v2909
  %v2911 = vpop.f32.mrb[0].mxu0
  %v2912 = vpop.f32.mrb[0].mxu0
  %v2913 = vadd.f32 %v2669, %v2912
  %v2914 = vpop.f32.mrb[0].mxu0
  %2915 = vmatprep.mubr.bf16.mxu0 0
  %2916 = vmatmul.mubr.bf16.gmra.mrb[0].mxu0 %v2735
  %v2917 = vpop.f32.mrb[0].mxu0
  %v2918 = vadd.f32 %v2669, %v2917
  %v2919 = vpop.f32.mrb[0].mxu0
  %v2920 = vpop.f32.mrb[0].mxu0
  %v2921 = vadd.f32 %v2669, %v2920
  %v2922 = vpop.f32.mrb[0].mxu0
  %2923 = vmatprep.mubr.bf16.mxu0 0
  %2924 = vmatmul.mubr.bf16.gmra.mrb[0].mxu0 %v2738
  %v2925 = vpop.f32.mrb[0].mxu0
  %v2926 = vadd.f32 %v2669, %v2925
  %v2927 = vpop.f32.mrb[0].mxu0
  %v2928 = vpop.f32.mrb[0].mxu0
  %v2929 = vadd.f32 %v2669, %v2928
  %v2930 = vpop.f32.mrb[0].mxu0
  %2931 = vmatprep.mubr.bf16.mxu0 0
  %2932 = vmatmul.mubr.bf16.gmra.mrb[0].mxu0 %v2741
  %v2933 = vpop.f32.mrb[0].mxu0
  %v2934 = vadd.f32 %v2669, %v2933
  %v2935 = vpop.f32.mrb[0].mxu0
  %v2936 = vpop.f32.mrb[0].mxu0
  %v2937 = vadd.f32 %v2669, %v2936
  %v2938 = vpop.f32.mrb[0].mxu0
  %2939 = vmatprep.mubr.bf16.mxu0 0
  %2940 = vmatmul.mubr.bf16.gmra.mrb[0].mxu0 %v2744
  %v2941 = vpop.f32.mrb[0].mxu0
  %v2942 = vadd.f32 %v2669, %v2941
  %v2943 = vpop.f32.mrb[0].mxu0
  %v2944 = vpop.f32.mrb[0].mxu0
  %v2945 = vadd.f32 %v2669, %v2944
  %v2946 = vpop.f32.mrb[0].mxu0
  %2947 = vmatprep.mubr.bf16.mxu0 0
  %2948 = vmatmul.mubr.bf16.gmra.mrb[0].mxu0 %v2747
  %v2949 = vpop.f32.mrb[0].mxu0
  %v2950 = vadd.f32 %v2669, %v2949
  %v2951 = vpop.f32.mrb[0].mxu0
  %v2952 = vpop.f32.mrb[0].mxu0
  %v2953 = vadd.f32 %v2669, %v2952
  %v2954 = vpop.f32.mrb[0].mxu0
  %2955 = vmatprep.mubr.bf16.mxu0 0
  %2956 = vmatmul.mubr.bf16.gmra.mrb[0].mxu0 %v2750
  %v2957 = vpop.f32.mrb[0].mxu0
  %v2958 = vadd.f32 %v2669, %v2957
  %v2959 = vpop.f32.mrb[0].mxu0
  %v2960 = vpop.f32.mrb[0].mxu0
  %v2961 = vadd.f32 %v2669, %v2960
  %v2962 = vpop.f32.mrb[0].mxu0
  %2963 = vmatprep.mubr.bf16.mxu0 0
  %2964 = vmatmul.mubr.bf16.gmra.mrb[0].mxu0 %v2753
  %v2965 = vpop.f32.mrb[0].mxu0
  %v2966 = vadd.f32 %v2669, %v2965
  %v2967 = vpop.f32.mrb[0].mxu0
  %v2968 = vpop.f32.mrb[0].mxu0
  %v2969 = vadd.f32 %v2669, %v2968
  %v2970 = vpop.f32.mrb[0].mxu0
  %2971 = vmatprep.mubr.bf16.mxu0 0
  %2972 = vmatmul.mubr.bf16.gmra.mrb[0].mxu0 %v2756
  %v2973 = vpop.f32.mrb[0].mxu0
  %v2974 = vadd.f32 %v2669, %v2973
  %v2975 = vpop.f32.mrb[0].mxu0
  %v2976 = vpop.f32.mrb[0].mxu0
  %v2977 = vadd.f32 %v2669, %v2976
  %v2978 = vpop.f32.mrb[0].mxu0
  %2979 = vmatprep.mubr.bf16.mxu0 0
  %2980 = vmatmul.mubr.bf16.gmra.mrb[0].mxu0 %v2759
  %v2981 = vpop.f32.mrb[0].mxu0
  %v2982 = vadd.f32 %v2669, %v2981
  %v2983 = vpop.f32.mrb[0].mxu0
  %v2984 = vpop.f32.mrb[0].mxu0
  %v2985 = vadd.f32 %v2669, %v2984
  %v2986 = vpop.f32.mrb[0].mxu0
  %2987 = vmatprep.mubr.bf16.mxu0 0
  %2988 = vmatmul.mubr.bf16.gmra.mrb[0].mxu0 %v2762
  %v2989 = vpop.f32.mrb[0].mxu0
  %v2990 = vadd.f32 %v2669, %v2989
  %v2991 = vpop.f32.mrb[0].mxu0
  %v2992 = vpop.f32.mrb[0].mxu0
  %v2993 = vadd.f32 %v2669, %v2992
  %v2994 = vpop.f32.mrb[0].mxu0
  %2995 = vmatprep.mubr.bf16.mxu0 0
  %2996 = vmatmul.mubr.bf16.gmra.mrb[0].mxu0 %v2765
  %v2997 = vpop.f32.mrb[0].mxu0
  %v2998 = vadd.f32 %v2669, %v2997
  %v2999 = vpop.f32.mrb[0].mxu0
  %v3000 = vpop.f32.mrb[0].mxu0
  %v3001 = vadd.f32 %v2669, %v3000
  %v3002 = vpop.f32.mrb[0].mxu0
  %3003 = vmatprep.mubr.bf16.mxu0 0
  %3004 = vmatmul.mubr.bf16.gmra.mrb[0].mxu0 %v2768
  %v3005 = vpop.f32.mrb[0].mxu0
  %v3006 = vadd.f32 %v2669, %v3005
  %v3007 = vpop.f32.mrb[0].mxu0
  %v3008 = vpop.f32.mrb[0].mxu0
  %v3009 = vadd.f32 %v2669, %v3008
  %v3010 = vpop.f32.mrb[0].mxu0
  %3011 = vmatprep.mubr.bf16.mxu0 0
  %3012 = vmatmul.mubr.bf16.gmra.mrb[0].mxu0 %v2771
  %v3013 = vpop.f32.mrb[0].mxu0
  %v3014 = vadd.f32 %v2669, %v3013
  %v3015 = vpop.f32.mrb[0].mxu0
  %v3016 = vpop.f32.mrb[0].mxu0
  %v3017 = vadd.f32 %v2669, %v3016
  %v3018 = vpop.f32.mrb[0].mxu0
  %3019 = vmatprep.mubr.bf16.mxu0 0
  %3020 = vmatmul.mubr.bf16.gmra.mrb[0].mxu0 %v2774
  %v3021 = vpop.f32.mrb[0].mxu0
  %v3022 = vadd.f32 %v2669, %v3021
  %v3023 = vpop.f32.mrb[0].mxu0
  %v3024 = vpop.f32.mrb[0].mxu0
  %v3025 = vadd.f32 %v2669, %v3024
  %v3026 = vpop.f32.mrb[0].mxu0
  %3027 = vmatprep.mubr.bf16.mxu0 0
  %3028 = vmatmul.mubr.bf16.gmra.mrb[0].mxu0 %v2777
  %v3029 = vpop.f32.mrb[0].mxu0
  %v3030 = vadd.f32 %v2669, %v3029
  %v3031 = vpop.f32.mrb[0].mxu0
  %v3032 = vpop.f32.mrb[0].mxu0
  %v3033 = vadd.f32 %v2669, %v3032
  %v3034 = vpop.f32.mrb[0].mxu0
  %3035 = vdwg.mxu0
  %v3036 = vld [vmem:[%s9] sm:$0xf]
  %v3037 = vld [vmem:[%s9 + $0x4] sm:$0xf]
  %v3040 = vunpack.c.l.b16 %v3036
  %v3041 = vunpack.c.l.b16 %v3037
  %v3042 = vpack.c.b16 %v3041, %v3040
  %3044 = vmatprep.subr.bf16.mxu0 0
  %3045 = vmatpush1.bf16.msra.mxu0 %v3042
  %3046 = vmatprep.subr.bf16.mxu0 0
  %3047 = vmatpush1.bf16.msra.mxu0 0
  %3048 = vmatprep.subr.bf16.mxu0 0
  %3049 = vmatpush1.bf16.msra.mxu0 0
  %3050 = vmatprep.subr.bf16.mxu0 0
  %3051 = vmatpush1.bf16.msra.mxu0 0
  %3052 = vmatprep.subr.bf16.mxu0 0
  %3053 = vmatpush1.bf16.msra.mxu0 0
  %3054 = vmatprep.subr.bf16.mxu0 0
  %3055 = vmatpush1.bf16.msra.mxu0 0
  %3056 = vmatprep.subr.bf16.mxu0 0
  %3057 = vmatpush1.bf16.msra.mxu0 0
  %3058 = vmatprep.subr.bf16.mxu0 0
  %3059 = vmatpush1.bf16.msra.mxu0 0
  %3060 = vmatprep.subr.bf16.mxu0 0
  %3061 = vmatpush1.bf16.msra.mxu0 0
  %3062 = vmatprep.subr.bf16.mxu0 0
  %3063 = vmatpush1.bf16.msra.mxu0 0
  %3064 = vmatprep.subr.bf16.mxu0 0
  %3065 = vmatpush1.bf16.msra.mxu0 0
  %3066 = vmatprep.subr.bf16.mxu0 0
  %3067 = vmatpush1.bf16.msra.mxu0 0
  %3068 = vmatprep.subr.bf16.mxu0 0
  %3069 = vmatpush1.bf16.msra.mxu0 0
  %3070 = vmatprep.subr.bf16.mxu0 0
  %3071 = vmatpush1.bf16.msra.mxu0 0
  %3072 = vmatprep.subr.bf16.mxu0 0
  %3073 = vmatpush1.bf16.msra.mxu0 0
  %3074 = vmatprep.subr.bf16.mxu0 0
  %3075 = vmatpush1.bf16.msra.mxu0 0
  %3076 = vmatprep.mubr.bf16.mxu0 0
  %3077 = vmatmul.mubr.bf16.gmra.mrb[0].mxu0 %v754
  %v3078 = vpop.f32.mrb[0].mxu0
  %v3079 = vadd.f32 0.0, %v3078
  %v3080 = vpop.f32.mrb[0].mxu0
  %v3081 = vpop.f32.mrb[0].mxu0
  %v3082 = vadd.f32 0.0, %v3081
  %v3083 = vpop.f32.mrb[0].mxu0
  %3084 = vmatprep.mubr.bf16.mxu0 0
  %3085 = vmatmul.mubr.bf16.gmra.mrb[0].mxu0 %v757
  %v3086 = vpop.f32.mrb[0].mxu0
  %v3087 = vadd.f32 0.0, %v3086
  %v3088 = vpop.f32.mrb[0].mxu0
  %v3089 = vpop.f32.mrb[0].mxu0
  %v3090 = vadd.f32 0.0, %v3089
  %v3091 = vpop.f32.mrb[0].mxu0
  %3092 = vmatprep.mubr.bf16.mxu0 0
  %3093 = vmatmul.mubr.bf16.gmra.mrb[0].mxu0 %v760
  %v3094 = vpop.f32.mrb[0].mxu0
  %v3095 = vadd.f32 0.0, %v3094
  %v3096 = vpop.f32.mrb[0].mxu0
  %v3097 = vpop.f32.mrb[0].mxu0
  %v3098 = vadd.f32 0.0, %v3097
  %v3099 = vpop.f32.mrb[0].mxu0
  %3100 = vmatprep.mubr.bf16.mxu0 0
  %3101 = vmatmul.mubr.bf16.gmra.mrb[0].mxu0 %v763
  %v3102 = vpop.f32.mrb[0].mxu0
  %v3103 = vadd.f32 0.0, %v3102
  %v3104 = vpop.f32.mrb[0].mxu0
  %v3105 = vpop.f32.mrb[0].mxu0
  %v3106 = vadd.f32 0.0, %v3105
  %v3107 = vpop.f32.mrb[0].mxu0
  %3108 = vmatprep.mubr.bf16.mxu0 0
  %3109 = vmatmul.mubr.bf16.gmra.mrb[0].mxu0 %v766
  %v3110 = vpop.f32.mrb[0].mxu0
  %v3111 = vadd.f32 0.0, %v3110
  %v3112 = vpop.f32.mrb[0].mxu0
  %v3113 = vpop.f32.mrb[0].mxu0
  %v3114 = vadd.f32 0.0, %v3113
  %v3115 = vpop.f32.mrb[0].mxu0
  %3116 = vmatprep.mubr.bf16.mxu0 0
  %3117 = vmatmul.mubr.bf16.gmra.mrb[0].mxu0 %v769
  %v3118 = vpop.f32.mrb[0].mxu0
  %v3119 = vadd.f32 0.0, %v3118
  %v3120 = vpop.f32.mrb[0].mxu0
  %v3121 = vpop.f32.mrb[0].mxu0
  %v3122 = vadd.f32 0.0, %v3121
  %v3123 = vpop.f32.mrb[0].mxu0
  %3124 = vmatprep.mubr.bf16.mxu0 0
  %3125 = vmatmul.mubr.bf16.gmra.mrb[0].mxu0 %v772
  %v3126 = vpop.f32.mrb[0].mxu0
  %v3127 = vadd.f32 0.0, %v3126
  %v3128 = vpop.f32.mrb[0].mxu0
  %v3129 = vpop.f32.mrb[0].mxu0
  %v3130 = vadd.f32 0.0, %v3129
  %v3131 = vpop.f32.mrb[0].mxu0
  %3132 = vmatprep.mubr.bf16.mxu0 0
  %3133 = vmatmul.mubr.bf16.gmra.mrb[0].mxu0 %v775
  %v3134 = vpop.f32.mrb[0].mxu0
  %v3135 = vadd.f32 0.0, %v3134
  %v3136 = vpop.f32.mrb[0].mxu0
  %v3137 = vpop.f32.mrb[0].mxu0
  %v3138 = vadd.f32 0.0, %v3137
  %v3139 = vpop.f32.mrb[0].mxu0
  %3140 = vmatprep.mubr.bf16.mxu0 0
  %3141 = vmatmul.mubr.bf16.gmra.mrb[0].mxu0 %v778
  %v3142 = vpop.f32.mrb[0].mxu0
  %v3143 = vadd.f32 0.0, %v3142
  %v3144 = vpop.f32.mrb[0].mxu0
  %v3145 = vpop.f32.mrb[0].mxu0
  %v3146 = vadd.f32 0.0, %v3145
  %v3147 = vpop.f32.mrb[0].mxu0
  %3148 = vmatprep.mubr.bf16.mxu0 0
  %3149 = vmatmul.mubr.bf16.gmra.mrb[0].mxu0 %v781
  %v3150 = vpop.f32.mrb[0].mxu0
  %v3151 = vadd.f32 0.0, %v3150
  %v3152 = vpop.f32.mrb[0].mxu0
  %v3153 = vpop.f32.mrb[0].mxu0
  %v3154 = vadd.f32 0.0, %v3153
  %v3155 = vpop.f32.mrb[0].mxu0
  %3156 = vmatprep.mubr.bf16.mxu0 0
  %3157 = vmatmul.mubr.bf16.gmra.mrb[0].mxu0 %v784
  %v3158 = vpop.f32.mrb[0].mxu0
  %v3159 = vadd.f32 0.0, %v3158
  %v3160 = vpop.f32.mrb[0].mxu0
  %v3161 = vpop.f32.mrb[0].mxu0
  %v3162 = vadd.f32 0.0, %v3161
  %v3163 = vpop.f32.mrb[0].mxu0
  %3164 = vmatprep.mubr.bf16.mxu0 0
  %3165 = vmatmul.mubr.bf16.gmra.mrb[0].mxu0 %v787
  %v3166 = vpop.f32.mrb[0].mxu0
  %v3167 = vadd.f32 0.0, %v3166
  %v3168 = vpop.f32.mrb[0].mxu0
  %v3169 = vpop.f32.mrb[0].mxu0
  %v3170 = vadd.f32 0.0, %v3169
  %v3171 = vpop.f32.mrb[0].mxu0
  %3172 = vmatprep.mubr.bf16.mxu0 0
  %3173 = vmatmul.mubr.bf16.gmra.mrb[0].mxu0 %v790
  %v3174 = vpop.f32.mrb[0].mxu0
  %v3175 = vadd.f32 0.0, %v3174
  %v3176 = vpop.f32.mrb[0].mxu0
  %v3177 = vpop.f32.mrb[0].mxu0
  %v3178 = vadd.f32 0.0, %v3177
  %v3179 = vpop.f32.mrb[0].mxu0
  %3180 = vmatprep.mubr.bf16.mxu0 0
  %3181 = vmatmul.mubr.bf16.gmra.mrb[0].mxu0 %v793
  %v3182 = vpop.f32.mrb[0].mxu0
  %v3183 = vadd.f32 0.0, %v3182
  %v3184 = vpop.f32.mrb[0].mxu0
  %v3185 = vpop.f32.mrb[0].mxu0
  %v3186 = vadd.f32 0.0, %v3185
  %v3187 = vpop.f32.mrb[0].mxu0
  %3188 = vmatprep.mubr.bf16.mxu0 0
  %3189 = vmatmul.mubr.bf16.gmra.mrb[0].mxu0 %v796
  %v3190 = vpop.f32.mrb[0].mxu0
  %v3191 = vadd.f32 0.0, %v3190
  %v3192 = vpop.f32.mrb[0].mxu0
  %v3193 = vpop.f32.mrb[0].mxu0
  %v3194 = vadd.f32 0.0, %v3193
  %v3195 = vpop.f32.mrb[0].mxu0
  %3196 = vmatprep.mubr.bf16.mxu0 0
  %3197 = vmatmul.mubr.bf16.gmra.mrb[0].mxu0 %v799
  %v3198 = vpop.f32.mrb[0].mxu0
  %v3199 = vadd.f32 0.0, %v3198
  %v3200 = vpop.f32.mrb[0].mxu0
  %v3201 = vpop.f32.mrb[0].mxu0
  %v3202 = vadd.f32 0.0, %v3201
  %v3203 = vpop.f32.mrb[0].mxu0
  %3204 = vmatprep.mubr.bf16.mxu0 0
  %3205 = vmatmul.mubr.bf16.gmra.mrb[0].mxu0 %v802
  %v3206 = vpop.f32.mrb[0].mxu0
  %v3207 = vadd.f32 0.0, %v3206
  %v3208 = vpop.f32.mrb[0].mxu0
  %v3209 = vpop.f32.mrb[0].mxu0
  %v3210 = vadd.f32 0.0, %v3209
  %v3211 = vpop.f32.mrb[0].mxu0
  %3212 = vmatprep.mubr.bf16.mxu0 0
  %3213 = vmatmul.mubr.bf16.gmra.mrb[0].mxu0 %v805
  %v3214 = vpop.f32.mrb[0].mxu0
  %v3215 = vadd.f32 0.0, %v3214
  %v3216 = vpop.f32.mrb[0].mxu0
  %v3217 = vpop.f32.mrb[0].mxu0
  %v3218 = vadd.f32 0.0, %v3217
  %v3219 = vpop.f32.mrb[0].mxu0
  %3220 = vmatprep.mubr.bf16.mxu0 0
  %3221 = vmatmul.mubr.bf16.gmra.mrb[0].mxu0 %v808
  %v3222 = vpop.f32.mrb[0].mxu0
  %v3223 = vadd.f32 0.0, %v3222
  %v3224 = vpop.f32.mrb[0].mxu0
  %v3225 = vpop.f32.mrb[0].mxu0
  %v3226 = vadd.f32 0.0, %v3225
  %v3227 = vpop.f32.mrb[0].mxu0
  %3228 = vmatprep.mubr.bf16.mxu0 0
  %3229 = vmatmul.mubr.bf16.gmra.mrb[0].mxu0 %v811
  %v3230 = vpop.f32.mrb[0].mxu0
  %v3231 = vadd.f32 0.0, %v3230
  %v3232 = vpop.f32.mrb[0].mxu0
  %v3233 = vpop.f32.mrb[0].mxu0
  %v3234 = vadd.f32 0.0, %v3233
  %v3235 = vpop.f32.mrb[0].mxu0
  %3236 = vmatprep.mubr.bf16.mxu0 0
  %3237 = vmatmul.mubr.bf16.gmra.mrb[0].mxu0 %v814
  %v3238 = vpop.f32.mrb[0].mxu0
  %v3239 = vadd.f32 0.0, %v3238
  %v3240 = vpop.f32.mrb[0].mxu0
  %v3241 = vpop.f32.mrb[0].mxu0
  %v3242 = vadd.f32 0.0, %v3241
  %v3243 = vpop.f32.mrb[0].mxu0
  %3244 = vmatprep.mubr.bf16.mxu0 0
  %3245 = vmatmul.mubr.bf16.gmra.mrb[0].mxu0 %v817
  %v3246 = vpop.f32.mrb[0].mxu0
  %v3247 = vadd.f32 0.0, %v3246
  %v3248 = vpop.f32.mrb[0].mxu0
  %v3249 = vpop.f32.mrb[0].mxu0
  %v3250 = vadd.f32 0.0, %v3249
  %v3251 = vpop.f32.mrb[0].mxu0
  %3252 = vmatprep.mubr.bf16.mxu0 0
  %3253 = vmatmul.mubr.bf16.gmra.mrb[0].mxu0 %v820
  %v3254 = vpop.f32.mrb[0].mxu0
  %v3255 = vadd.f32 0.0, %v3254
  %v3256 = vpop.f32.mrb[0].mxu0
  %v3257 = vpop.f32.mrb[0].mxu0
  %v3258 = vadd.f32 0.0, %v3257
  %v3259 = vpop.f32.mrb[0].mxu0
  %3260 = vmatprep.mubr.bf16.mxu0 0
  %3261 = vmatmul.mubr.bf16.gmra.mrb[0].mxu0 %v823
  %v3262 = vpop.f32.mrb[0].mxu0
  %v3263 = vadd.f32 0.0, %v3262
  %v3264 = vpop.f32.mrb[0].mxu0
  %v3265 = vpop.f32.mrb[0].mxu0
  %v3266 = vadd.f32 0.0, %v3265
  %v3267 = vpop.f32.mrb[0].mxu0
  %3268 = vmatprep.mubr.bf16.mxu0 0
  %3269 = vmatmul.mubr.bf16.gmra.mrb[0].mxu0 %v826
  %v3270 = vpop.f32.mrb[0].mxu0
  %v3271 = vadd.f32 0.0, %v3270
  %v3272 = vpop.f32.mrb[0].mxu0
  %v3273 = vpop.f32.mrb[0].mxu0
  %v3274 = vadd.f32 0.0, %v3273
  %v3275 = vpop.f32.mrb[0].mxu0
  %3276 = vmatprep.mubr.bf16.mxu0 0
  %3277 = vmatmul.mubr.bf16.gmra.mrb[0].mxu0 %v829
  %v3278 = vpop.f32.mrb[0].mxu0
  %v3279 = vadd.f32 0.0, %v3278
  %v3280 = vpop.f32.mrb[0].mxu0
  %v3281 = vpop.f32.mrb[0].mxu0
  %v3282 = vadd.f32 0.0, %v3281
  %v3283 = vpop.f32.mrb[0].mxu0
  %3284 = vmatprep.mubr.bf16.mxu0 0
  %3285 = vmatmul.mubr.bf16.gmra.mrb[0].mxu0 %v832
  %v3286 = vpop.f32.mrb[0].mxu0
  %v3287 = vadd.f32 0.0, %v3286
  %v3288 = vpop.f32.mrb[0].mxu0
  %v3289 = vpop.f32.mrb[0].mxu0
  %v3290 = vadd.f32 0.0, %v3289
  %v3291 = vpop.f32.mrb[0].mxu0
  %3292 = vmatprep.mubr.bf16.mxu0 0
  %3293 = vmatmul.mubr.bf16.gmra.mrb[0].mxu0 %v835
  %v3294 = vpop.f32.mrb[0].mxu0
  %v3295 = vadd.f32 0.0, %v3294
  %v3296 = vpop.f32.mrb[0].mxu0
  %v3297 = vpop.f32.mrb[0].mxu0
  %v3298 = vadd.f32 0.0, %v3297
  %v3299 = vpop.f32.mrb[0].mxu0
  %3300 = vdwg.mxu0
  %v3301 = vadd.f32 %v2814, %v3079
  %v3302 = vadd.f32 %v2817, %v3082
  %v3303 = vadd.f32 %v2822, %v3087
  %v3304 = vadd.f32 %v2825, %v3090
  %v3305 = vadd.f32 %v2830, %v3095
  %v3306 = vadd.f32 %v2833, %v3098
  %v3307 = vadd.f32 %v2838, %v3103
  %v3308 = vadd.f32 %v2841, %v3106
  %v3309 = vadd.f32 %v2846, %v3111
  %v3310 = vadd.f32 %v2849, %v3114
  %v3311 = vadd.f32 %v2854, %v3119
  %v3312 = vadd.f32 %v2857, %v3122
  %v3313 = vadd.f32 %v2862, %v3127
  %v3314 = vadd.f32 %v2865, %v3130
  %v3315 = vadd.f32 %v2870, %v3135
  %v3316 = vadd.f32 %v2873, %v3138
  %v3317 = vadd.f32 %v2878, %v3143
  %v3318 = vadd.f32 %v2881, %v3146
  %v3319 = vadd.f32 %v2886, %v3151
  %v3320 = vadd.f32 %v2889, %v3154
  %v3321 = vadd.f32 %v2894, %v3159
  %v3322 = vadd.f32 %v2897, %v3162
  %v3323 = vadd.f32 %v2902, %v3167
  %v3324 = vadd.f32 %v2905, %v3170
  %v3325 = vadd.f32 %v2910, %v3175
  %v3326 = vadd.f32 %v2913, %v3178
  %v3327 = vadd.f32 %v2918, %v3183
  %v3328 = vadd.f32 %v2921, %v3186
  %v3329 = vadd.f32 %v2926, %v3191
  %v3330 = vadd.f32 %v2929, %v3194
  %v3331 = vadd.f32 %v2934, %v3199
  %v3332 = vadd.f32 %v2937, %v3202
  %v3333 = vadd.f32 %v2942, %v3207
  %v3334 = vadd.f32 %v2945, %v3210
  %v3335 = vadd.f32 %v2950, %v3215
  %v3336 = vadd.f32 %v2953, %v3218
  %v3337 = vadd.f32 %v2958, %v3223
  %v3338 = vadd.f32 %v2961, %v3226
  %v3339 = vadd.f32 %v2966, %v3231
  %v3340 = vadd.f32 %v2969, %v3234
  %v3341 = vadd.f32 %v2974, %v3239
  %v3342 = vadd.f32 %v2977, %v3242
  %v3343 = vadd.f32 %v2982, %v3247
  %v3344 = vadd.f32 %v2985, %v3250
  %v3345 = vadd.f32 %v2990, %v3255
  %v3346 = vadd.f32 %v2993, %v3258
  %v3347 = vadd.f32 %v2998, %v3263
  %v3348 = vadd.f32 %v3001, %v3266
  %v3349 = vadd.f32 %v3006, %v3271
  %v3350 = vadd.f32 %v3009, %v3274
  %v3351 = vadd.f32 %v3014, %v3279
  %v3352 = vadd.f32 %v3017, %v3282
  %v3353 = vadd.f32 %v3022, %v3287
  %v3354 = vadd.f32 %v3025, %v3290
  %v3355 = vadd.f32 %v3030, %v3295
  %v3356 = vadd.f32 %v3033, %v3298
  %v3357 = vld [vmem:[%s10] sm:$0x1]
  %v3359 = vlaneseq
  %v3360 = vshrl.u32 %v3359, 7
  %v3361 = vsub.s32 0, %v3360
  %v3362 = vrot.slane %v3357, %v3361
  %v3364 = vadd.f32 %v3301, %v3362
  %v3365 = vadd.f32 %v3302, %v3362
  %v3366 = vadd.f32 %v3303, %v3362
  %v3367 = vadd.f32 %v3304, %v3362
  %v3368 = vadd.f32 %v3305, %v3362
  %v3369 = vadd.f32 %v3306, %v3362
  %v3370 = vadd.f32 %v3307, %v3362
  %v3371 = vadd.f32 %v3308, %v3362
  %v3372 = vadd.f32 %v3309, %v3362
  %v3373 = vadd.f32 %v3310, %v3362
  %v3374 = vadd.f32 %v3311, %v3362
  %v3375 = vadd.f32 %v3312, %v3362
  %v3376 = vadd.f32 %v3313, %v3362
  %v3377 = vadd.f32 %v3314, %v3362
  %v3378 = vadd.f32 %v3315, %v3362
  %v3379 = vadd.f32 %v3316, %v3362
  %v3380 = vadd.f32 %v3317, %v3362
  %v3381 = vadd.f32 %v3318, %v3362
  %v3382 = vadd.f32 %v3319, %v3362
  %v3383 = vadd.f32 %v3320, %v3362
  %v3384 = vadd.f32 %v3321, %v3362
  %v3385 = vadd.f32 %v3322, %v3362
  %v3386 = vadd.f32 %v3323, %v3362
  %v3387 = vadd.f32 %v3324, %v3362
  %v3388 = vadd.f32 %v3325, %v3362
  %v3389 = vadd.f32 %v3326, %v3362
  %v3390 = vadd.f32 %v3327, %v3362
  %v3391 = vadd.f32 %v3328, %v3362
  %v3392 = vadd.f32 %v3329, %v3362
  %v3393 = vadd.f32 %v3330, %v3362
  %v3394 = vadd.f32 %v3331, %v3362
  %v3395 = vadd.f32 %v3332, %v3362
  %v3396 = vadd.f32 %v3333, %v3362
  %v3397 = vadd.f32 %v3334, %v3362
  %v3398 = vadd.f32 %v3335, %v3362
  %v3399 = vadd.f32 %v3336, %v3362
  %v3400 = vadd.f32 %v3337, %v3362
  %v3401 = vadd.f32 %v3338, %v3362
  %v3402 = vadd.f32 %v3339, %v3362
  %v3403 = vadd.f32 %v3340, %v3362
  %v3404 = vadd.f32 %v3341, %v3362
  %v3405 = vadd.f32 %v3342, %v3362
  %v3406 = vadd.f32 %v3343, %v3362
  %v3407 = vadd.f32 %v3344, %v3362
  %v3408 = vadd.f32 %v3345, %v3362
  %v3409 = vadd.f32 %v3346, %v3362
  %v3410 = vadd.f32 %v3347, %v3362
  %v3411 = vadd.f32 %v3348, %v3362
  %v3412 = vadd.f32 %v3349, %v3362
  %v3413 = vadd.f32 %v3350, %v3362
  %v3414 = vadd.f32 %v3351, %v3362
  %v3415 = vadd.f32 %v3352, %v3362
  %v3416 = vadd.f32 %v3353, %v3362
  %v3417 = vadd.f32 %v3354, %v3362
  %v3418 = vadd.f32 %v3355, %v3362
  %v3419 = vadd.f32 %v3356, %v3362
  %v3420 = vmax.f32 %v3364, 0.0
  %v3421 = vmax.f32 %v3365, 0.0
  %v3422 = vmax.f32 %v3366, 0.0
  %v3423 = vmax.f32 %v3367, 0.0
  %v3424 = vmax.f32 %v3368, 0.0
  %v3425 = vmax.f32 %v3369, 0.0
  %v3426 = vmax.f32 %v3370, 0.0
  %v3427 = vmax.f32 %v3371, 0.0
  %v3428 = vmax.f32 %v3372, 0.0
  %v3429 = vmax.f32 %v3373, 0.0
  %v3430 = vmax.f32 %v3374, 0.0
  %v3431 = vmax.f32 %v3375, 0.0
  %v3432 = vmax.f32 %v3376, 0.0
  %v3433 = vmax.f32 %v3377, 0.0
  %v3434 = vmax.f32 %v3378, 0.0
  %v3435 = vmax.f32 %v3379, 0.0
  %v3436 = vmax.f32 %v3380, 0.0
  %v3437 = vmax.f32 %v3381, 0.0
  %v3438 = vmax.f32 %v3382, 0.0
  %v3439 = vmax.f32 %v3383, 0.0
  %v3440 = vmax.f32 %v3384, 0.0
  %v3441 = vmax.f32 %v3385, 0.0
  %v3442 = vmax.f32 %v3386, 0.0
  %v3443 = vmax.f32 %v3387, 0.0
  %v3444 = vmax.f32 %v3388, 0.0
  %v3445 = vmax.f32 %v3389, 0.0
  %v3446 = vmax.f32 %v3390, 0.0
  %v3447 = vmax.f32 %v3391, 0.0
  %v3448 = vmax.f32 %v3392, 0.0
  %v3449 = vmax.f32 %v3393, 0.0
  %v3450 = vmax.f32 %v3394, 0.0
  %v3451 = vmax.f32 %v3395, 0.0
  %v3452 = vmax.f32 %v3396, 0.0
  %v3453 = vmax.f32 %v3397, 0.0
  %v3454 = vmax.f32 %v3398, 0.0
  %v3455 = vmax.f32 %v3399, 0.0
  %v3456 = vmax.f32 %v3400, 0.0
  %v3457 = vmax.f32 %v3401, 0.0
  %v3458 = vmax.f32 %v3402, 0.0
  %v3459 = vmax.f32 %v3403, 0.0
  %v3460 = vmax.f32 %v3404, 0.0
  %v3461 = vmax.f32 %v3405, 0.0
  %v3462 = vmax.f32 %v3406, 0.0
  %v3463 = vmax.f32 %v3407, 0.0
  %v3464 = vmax.f32 %v3408, 0.0
  %v3465 = vmax.f32 %v3409, 0.0
  %v3466 = vmax.f32 %v3410, 0.0
  %v3467 = vmax.f32 %v3411, 0.0
  %v3468 = vmax.f32 %v3412, 0.0
  %v3469 = vmax.f32 %v3413, 0.0
  %v3470 = vmax.f32 %v3414, 0.0
  %v3471 = vmax.f32 %v3415, 0.0
  %v3472 = vmax.f32 %v3416, 0.0
  %v3473 = vmax.f32 %v3417, 0.0
  %v3474 = vmax.f32 %v3418, 0.0
  %v3475 = vmax.f32 %v3419, 0.0
  %v3476 = vld [vmem:[%s11] sm:$0xff]
  %v3477 = vld [vmem:[%s11 + $0x8] sm:$0xff]
  %v3478 = vld [vmem:[%s11 + $0x10] sm:$0xff]
  %v3479 = vld [vmem:[%s11 + $0x18] sm:$0xff]
  %v3480 = vld [vmem:[%s11 + $0x20] sm:$0xff]
  %v3481 = vld [vmem:[%s11 + $0x28] sm:$0xff]
  %v3482 = vld [vmem:[%s11 + $0x30] sm:$0xff]
  %v3483 = vld [vmem:[%s11 + $0x38] sm:$0xff]
  %v3484 = vld [vmem:[%s11 + $0x40] sm:$0xff]
  %v3485 = vld [vmem:[%s11 + $0x48] sm:$0xff]
  %v3486 = vld [vmem:[%s11 + $0x50] sm:$0xff]
  %v3487 = vld [vmem:[%s11 + $0x58] sm:$0xff]
  %v3488 = vld [vmem:[%s11 + $0x60] sm:$0xff]
  %v3489 = vld [vmem:[%s11 + $0x68] sm:$0xff]
  %v3490 = vld [vmem:[%s11 + $0x70] sm:$0xff]
  %v3491 = vld [vmem:[%s11 + $0x78] sm:$0xff]
  %v3492 = vld [vmem:[%s11 + $0x80] sm:$0xff]
  %v3493 = vld [vmem:[%s11 + $0x88] sm:$0xff]
  %v3494 = vld [vmem:[%s11 + $0x90] sm:$0xff]
  %v3495 = vld [vmem:[%s11 + $0x98] sm:$0xff]
  %v3496 = vld [vmem:[%s11 + $0xa0] sm:$0xff]
  %v3497 = vld [vmem:[%s11 + $0xa8] sm:$0xff]
  %v3498 = vld [vmem:[%s11 + $0xb0] sm:$0xff]
  %v3499 = vld [vmem:[%s11 + $0xb8] sm:$0xff]
  %v3500 = vld [vmem:[%s11 + $0xc0] sm:$0xff]
  %v3501 = vld [vmem:[%s11 + $0xc8] sm:$0xff]
  %v3502 = vld [vmem:[%s11 + $0xd0] sm:$0xff]
  %v3503 = vld [vmem:[%s11 + $0xd8] sm:$0xff]
  %v3504 = vld [vmem:[%s11 + $0xe0] sm:$0xff]
  %v3505 = vld [vmem:[%s11 + $0xe8] sm:$0xff]
  %v3506 = vld [vmem:[%s11 + $0xf0] sm:$0xff]
  %v3507 = vld [vmem:[%s11 + $0xf8] sm:$0xff]
  %v3508 = vld [vmem:[%s11 + $0x100] sm:$0xff]
  %v3509 = vld [vmem:[%s11 + $0x108] sm:$0xff]
  %v3510 = vld [vmem:[%s11 + $0x110] sm:$0xff]
  %v3511 = vld [vmem:[%s11 + $0x118] sm:$0xff]
  %v3512 = vld [vmem:[%s11 + $0x120] sm:$0xff]
  %v3513 = vld [vmem:[%s11 + $0x128] sm:$0xff]
  %v3514 = vld [vmem:[%s11 + $0x130] sm:$0xff]
  %v3515 = vld [vmem:[%s11 + $0x138] sm:$0xff]
  %v3516 = vld [vmem:[%s11 + $0x140] sm:$0xff]
  %v3517 = vld [vmem:[%s11 + $0x148] sm:$0xff]
  %v3518 = vld [vmem:[%s11 + $0x150] sm:$0xff]
  %v3519 = vld [vmem:[%s11 + $0x158] sm:$0xff]
  %v3520 = vld [vmem:[%s11 + $0x160] sm:$0xff]
  %v3521 = vld [vmem:[%s11 + $0x168] sm:$0xff]
  %v3522 = vld [vmem:[%s11 + $0x170] sm:$0xff]
  %v3523 = vld [vmem:[%s11 + $0x178] sm:$0xff]
  %v3524 = vld [vmem:[%s11 + $0x180] sm:$0xff]
  %v3525 = vld [vmem:[%s11 + $0x188] sm:$0xff]
  %v3526 = vld [vmem:[%s11 + $0x190] sm:$0xff]
  %v3527 = vld [vmem:[%s11 + $0x198] sm:$0xff]
  %v3528 = vld [vmem:[%s11 + $0x1a0] sm:$0xff]
  %v3529 = vld [vmem:[%s11 + $0x1a8] sm:$0xff]
  %v3530 = vld [vmem:[%s11 + $0x1b0] sm:$0xff]
  %v3531 = vld [vmem:[%s11 + $0x1b8] sm:$0xff]
  %v3532 = vpack.c.bf16 %v3421, %v3420
  %v3533 = vpack.c.bf16 %v3423, %v3422
  %v3534 = vpack.c.bf16 %v3425, %v3424
  %v3535 = vpack.c.bf16 %v3427, %v3426
  %v3536 = vpack.c.bf16 %v3429, %v3428
  %v3537 = vpack.c.bf16 %v3431, %v3430
  %v3538 = vpack.c.bf16 %v3433, %v3432
  %v3539 = vpack.c.bf16 %v3435, %v3434
  %v3540 = vpack.c.bf16 %v3437, %v3436
  %v3541 = vpack.c.bf16 %v3439, %v3438
  %v3542 = vpack.c.bf16 %v3441, %v3440
  %v3543 = vpack.c.bf16 %v3443, %v3442
  %v3544 = vpack.c.bf16 %v3445, %v3444
  %v3545 = vpack.c.bf16 %v3447, %v3446
  %v3546 = vpack.c.bf16 %v3449, %v3448
  %v3547 = vpack.c.bf16 %v3451, %v3450
  %v3548 = vpack.c.bf16 %v3453, %v3452
  %v3549 = vpack.c.bf16 %v3455, %v3454
  %v3550 = vpack.c.bf16 %v3457, %v3456
  %v3551 = vpack.c.bf16 %v3459, %v3458
  %v3552 = vpack.c.bf16 %v3461, %v3460
  %v3553 = vpack.c.bf16 %v3463, %v3462
  %v3554 = vpack.c.bf16 %v3465, %v3464
  %v3555 = vpack.c.bf16 %v3467, %v3466
  %v3556 = vpack.c.bf16 %v3469, %v3468
  %v3557 = vpack.c.bf16 %v3471, %v3470
  %v3558 = vpack.c.bf16 %v3473, %v3472
  %v3559 = vpack.c.bf16 %v3475, %v3474
  %v3616 = vunpack.c.l.b16 %v3476
  %v3617 = vunpack.c.h.b16 %v3476
  %v3618 = vunpack.c.l.b16 %v3477
  %v3619 = vunpack.c.h.b16 %v3477
  %v3620 = vunpack.c.l.b16 %v3478
  %v3621 = vunpack.c.h.b16 %v3478
  %v3622 = vunpack.c.l.b16 %v3479
  %v3623 = vunpack.c.h.b16 %v3479
  %v3624 = vunpack.c.l.b16 %v3480
  %v3625 = vunpack.c.h.b16 %v3480
  %v3626 = vunpack.c.l.b16 %v3481
  %v3627 = vunpack.c.h.b16 %v3481
  %v3628 = vunpack.c.l.b16 %v3482
  %v3629 = vunpack.c.h.b16 %v3482
  %v3630 = vunpack.c.l.b16 %v3483
  %v3631 = vunpack.c.h.b16 %v3483
  %v3632 = vunpack.c.l.b16 %v3484
  %v3633 = vunpack.c.h.b16 %v3484
  %v3634 = vunpack.c.l.b16 %v3485
  %v3635 = vunpack.c.h.b16 %v3485
  %v3636 = vunpack.c.l.b16 %v3486
  %v3637 = vunpack.c.h.b16 %v3486
  %v3638 = vunpack.c.l.b16 %v3487
  %v3639 = vunpack.c.h.b16 %v3487
  %v3640 = vunpack.c.l.b16 %v3488
  %v3641 = vunpack.c.h.b16 %v3488
  %v3642 = vunpack.c.l.b16 %v3489
  %v3643 = vunpack.c.h.b16 %v3489
  %v3644 = vunpack.c.l.b16 %v3490
  %v3645 = vunpack.c.h.b16 %v3490
  %v3646 = vunpack.c.l.b16 %v3491
  %v3647 = vunpack.c.h.b16 %v3491
  %v3648 = vunpack.c.l.b16 %v3492
  %v3649 = vunpack.c.h.b16 %v3492
  %v3650 = vunpack.c.l.b16 %v3493
  %v3651 = vunpack.c.h.b16 %v3493
  %v3652 = vunpack.c.l.b16 %v3494
  %v3653 = vunpack.c.h.b16 %v3494
  %v3654 = vunpack.c.l.b16 %v3495
  %v3655 = vunpack.c.h.b16 %v3495
  %v3656 = vunpack.c.l.b16 %v3496
  %v3657 = vunpack.c.h.b16 %v3496
  %v3658 = vunpack.c.l.b16 %v3497
  %v3659 = vunpack.c.h.b16 %v3497
  %v3660 = vunpack.c.l.b16 %v3498
  %v3661 = vunpack.c.h.b16 %v3498
  %v3662 = vunpack.c.l.b16 %v3499
  %v3663 = vunpack.c.h.b16 %v3499
  %v3664 = vunpack.c.l.b16 %v3500
  %v3665 = vunpack.c.h.b16 %v3500
  %v3666 = vunpack.c.l.b16 %v3501
  %v3667 = vunpack.c.h.b16 %v3501
  %v3668 = vunpack.c.l.b16 %v3502
  %v3669 = vunpack.c.h.b16 %v3502
  %v3670 = vunpack.c.l.b16 %v3503
  %v3671 = vunpack.c.h.b16 %v3503
  %v3672 = vunpack.c.l.b16 %v3504
  %v3673 = vunpack.c.h.b16 %v3504
  %v3674 = vunpack.c.l.b16 %v3505
  %v3675 = vunpack.c.h.b16 %v3505
  %v3676 = vunpack.c.l.b16 %v3506
  %v3677 = vunpack.c.h.b16 %v3506
  %v3678 = vunpack.c.l.b16 %v3507
  %v3679 = vunpack.c.h.b16 %v3507
  %v3680 = vunpack.c.l.b16 %v3508
  %v3681 = vunpack.c.h.b16 %v3508
  %v3682 = vunpack.c.l.b16 %v3509
  %v3683 = vunpack.c.h.b16 %v3509
  %v3684 = vunpack.c.l.b16 %v3510
  %v3685 = vunpack.c.h.b16 %v3510
  %v3686 = vunpack.c.l.b16 %v3511
  %v3687 = vunpack.c.h.b16 %v3511
  %v3688 = vunpack.c.l.b16 %v3512
  %v3689 = vunpack.c.h.b16 %v3512
  %v3690 = vunpack.c.l.b16 %v3513
  %v3691 = vunpack.c.h.b16 %v3513
  %v3692 = vunpack.c.l.b16 %v3514
  %v3693 = vunpack.c.h.b16 %v3514
  %v3694 = vunpack.c.l.b16 %v3515
  %v3695 = vunpack.c.h.b16 %v3515
  %v3696 = vunpack.c.l.b16 %v3516
  %v3697 = vunpack.c.h.b16 %v3516
  %v3698 = vunpack.c.l.b16 %v3517
  %v3699 = vunpack.c.h.b16 %v3517
  %v3700 = vunpack.c.l.b16 %v3518
  %v3701 = vunpack.c.h.b16 %v3518
  %v3702 = vunpack.c.l.b16 %v3519
  %v3703 = vunpack.c.h.b16 %v3519
  %v3704 = vunpack.c.l.b16 %v3520
  %v3705 = vunpack.c.h.b16 %v3520
  %v3706 = vunpack.c.l.b16 %v3521
  %v3707 = vunpack.c.h.b16 %v3521
  %v3708 = vunpack.c.l.b16 %v3522
  %v3709 = vunpack.c.h.b16 %v3522
  %v3710 = vunpack.c.l.b16 %v3523
  %v3711 = vunpack.c.h.b16 %v3523
  %v3712 = vunpack.c.l.b16 %v3524
  %v3713 = vunpack.c.h.b16 %v3524
  %v3714 = vunpack.c.l.b16 %v3525
  %v3715 = vunpack.c.h.b16 %v3525
  %v3716 = vunpack.c.l.b16 %v3526
  %v3717 = vunpack.c.h.b16 %v3526
  %v3718 = vunpack.c.l.b16 %v3527
  %v3719 = vunpack.c.h.b16 %v3527
  %v3720 = vunpack.c.l.b16 %v3528
  %v3721 = vunpack.c.h.b16 %v3528
  %v3722 = vunpack.c.l.b16 %v3529
  %v3723 = vunpack.c.h.b16 %v3529
  %v3724 = vunpack.c.l.b16 %v3530
  %v3725 = vunpack.c.h.b16 %v3530
  %v3726 = vunpack.c.l.b16 %v3531
  %v3727 = vunpack.c.h.b16 %v3531
  %v3728 = vpack.c.b16 %v3620, %v3616
  %v3729 = vpack.c.b16 %v3621, %v3617
  %v3730 = vpack.c.b16 %v3622, %v3618
  %v3731 = vpack.c.b16 %v3623, %v3619
  %v3732 = vpack.c.b16 %v3628, %v3624
  %v3733 = vpack.c.b16 %v3629, %v3625
  %v3734 = vpack.c.b16 %v3630, %v3626
  %v3735 = vpack.c.b16 %v3631, %v3627
  %v3736 = vpack.c.b16 %v3636, %v3632
  %v3737 = vpack.c.b16 %v3637, %v3633
  %v3738 = vpack.c.b16 %v3638, %v3634
  %v3739 = vpack.c.b16 %v3639, %v3635
  %v3740 = vpack.c.b16 %v3644, %v3640
  %v3741 = vpack.c.b16 %v3645, %v3641
  %v3742 = vpack.c.b16 %v3646, %v3642
  %v3743 = vpack.c.b16 %v3647, %v3643
  %v3744 = vpack.c.b16 %v3652, %v3648
  %v3745 = vpack.c.b16 %v3653, %v3649
  %v3746 = vpack.c.b16 %v3654, %v3650
  %v3747 = vpack.c.b16 %v3655, %v3651
  %v3748 = vpack.c.b16 %v3660, %v3656
  %v3749 = vpack.c.b16 %v3661, %v3657
  %v3750 = vpack.c.b16 %v3662, %v3658
  %v3751 = vpack.c.b16 %v3663, %v3659
  %v3752 = vpack.c.b16 %v3668, %v3664
  %v3753 = vpack.c.b16 %v3669, %v3665
  %v3754 = vpack.c.b16 %v3670, %v3666
  %v3755 = vpack.c.b16 %v3671, %v3667
  %v3756 = vpack.c.b16 %v3676, %v3672
  %v3757 = vpack.c.b16 %v3677, %v3673
  %v3758 = vpack.c.b16 %v3678, %v3674
  %v3759 = vpack.c.b16 %v3679, %v3675
  %v3760 = vpack.c.b16 %v3684, %v3680
  %v3761 = vpack.c.b16 %v3685, %v3681
  %v3762 = vpack.c.b16 %v3686, %v3682
  %v3763 = vpack.c.b16 %v3687, %v3683
  %v3764 = vpack.c.b16 %v3692, %v3688
  %v3765 = vpack.c.b16 %v3693, %v3689
  %v3766 = vpack.c.b16 %v3694, %v3690
  %v3767 = vpack.c.b16 %v3695, %v3691
  %v3768 = vpack.c.b16 %v3700, %v3696
  %v3769 = vpack.c.b16 %v3701, %v3697
  %v3770 = vpack.c.b16 %v3702, %v3698
  %v3771 = vpack.c.b16 %v3703, %v3699
  %v3772 = vpack.c.b16 %v3708, %v3704
  %v3773 = vpack.c.b16 %v3709, %v3705
  %v3774 = vpack.c.b16 %v3710, %v3706
  %v3775 = vpack.c.b16 %v3711, %v3707
  %v3776 = vpack.c.b16 %v3716, %v3712
  %v3777 = vpack.c.b16 %v3717, %v3713
  %v3778 = vpack.c.b16 %v3718, %v3714
  %v3779 = vpack.c.b16 %v3719, %v3715
  %v3780 = vpack.c.b16 %v3724, %v3720
  %v3781 = vpack.c.b16 %v3725, %v3721
  %v3782 = vpack.c.b16 %v3726, %v3722
  %v3783 = vpack.c.b16 %v3727, %v3723
  %v3827 = vsel %vm1150, %v3731, 0
  %v3830 = vsel %vm1150, %v3735, 0
  %v3833 = vsel %vm1150, %v3739, 0
  %v3836 = vsel %vm1150, %v3743, 0
  %v3839 = vsel %vm1150, %v3747, 0
  %v3842 = vsel %vm1150, %v3751, 0
  %v3845 = vsel %vm1150, %v3755, 0
  %v3848 = vsel %vm1150, %v3759, 0
  %v3851 = vsel %vm1150, %v3763, 0
  %v3854 = vsel %vm1150, %v3767, 0
  %v3857 = vsel %vm1150, %v3771, 0
  %v3860 = vsel %vm1150, %v3775, 0
  %v3863 = vsel %vm1150, %v3779, 0
  %v3866 = vsel %vm1150, %v3783, 0
  %3868 = vmatprep.subr.bf16.mxu0 0
  %3869 = vmatpush1.bf16.msra.mxu0 %v3532
  %3870 = vmatprep.subr.bf16.mxu0 0
  %3871 = vmatpush1.bf16.msra.mxu0 %v3533
  %3872 = vmatprep.subr.bf16.mxu0 0
  %3873 = vmatpush1.bf16.msra.mxu0 %v3534
  %3874 = vmatprep.subr.bf16.mxu0 0
  %3875 = vmatpush1.bf16.msra.mxu0 %v3535
  %3876 = vmatprep.subr.bf16.mxu0 0
  %3877 = vmatpush1.bf16.msra.mxu0 %v3536
  %3878 = vmatprep.subr.bf16.mxu0 0
  %3879 = vmatpush1.bf16.msra.mxu0 %v3537
  %3880 = vmatprep.subr.bf16.mxu0 0
  %3881 = vmatpush1.bf16.msra.mxu0 %v3538
  %3882 = vmatprep.subr.bf16.mxu0 0
  %3883 = vmatpush1.bf16.msra.mxu0 %v3539
  %3884 = vmatprep.subr.bf16.mxu0 0
  %3885 = vmatpush1.bf16.msra.mxu0 %v3540
  %3886 = vmatprep.subr.bf16.mxu0 0
  %3887 = vmatpush1.bf16.msra.mxu0 %v3541
  %3888 = vmatprep.subr.bf16.mxu0 0
  %3889 = vmatpush1.bf16.msra.mxu0 %v3542
  %3890 = vmatprep.subr.bf16.mxu0 0
  %3891 = vmatpush1.bf16.msra.mxu0 %v3543
  %3892 = vmatprep.subr.bf16.mxu0 0
  %3893 = vmatpush1.bf16.msra.mxu0 %v3544
  %3894 = vmatprep.subr.bf16.mxu0 0
  %3895 = vmatpush1.bf16.msra.mxu0 %v3545
  %3896 = vmatprep.subr.bf16.mxu0 0
  %3897 = vmatpush1.bf16.msra.mxu0 %v3546
  %3898 = vmatprep.subr.bf16.mxu0 0
  %3899 = vmatpush1.bf16.msra.mxu0 %v3547
  %3900 = vmatprep.mubr.bf16.mxu0 %v3729
  %3901 = vmatmul.mubr.bf16.gmra.mrb[0].mxu0 %v3728
  %v3902 = vpop.f32.mrb[0].mxu0
  %v3903 = vadd.f32 0.0, %v3902
  %v3904 = vpop.f32.mrb[0].mxu0
  %v3905 = vpop.f32.mrb[0].mxu0
  %v3906 = vadd.f32 0.0, %v3905
  %v3907 = vpop.f32.mrb[0].mxu0
  %3908 = vmatprep.mubr.bf16.mxu0 %v3733
  %3909 = vmatmul.mubr.bf16.gmra.mrb[0].mxu0 %v3732
  %v3910 = vpop.f32.mrb[0].mxu0
  %v3911 = vadd.f32 0.0, %v3910
  %v3912 = vpop.f32.mrb[0].mxu0
  %v3913 = vpop.f32.mrb[0].mxu0
  %v3914 = vadd.f32 0.0, %v3913
  %v3915 = vpop.f32.mrb[0].mxu0
  %3916 = vmatprep.mubr.bf16.mxu0 %v3737
  %3917 = vmatmul.mubr.bf16.gmra.mrb[0].mxu0 %v3736
  %v3918 = vpop.f32.mrb[0].mxu0
  %v3919 = vadd.f32 0.0, %v3918
  %v3920 = vpop.f32.mrb[0].mxu0
  %v3921 = vpop.f32.mrb[0].mxu0
  %v3922 = vadd.f32 0.0, %v3921
  %v3923 = vpop.f32.mrb[0].mxu0
  %3924 = vmatprep.mubr.bf16.mxu0 %v3741
  %3925 = vmatmul.mubr.bf16.gmra.mrb[0].mxu0 %v3740
  %v3926 = vpop.f32.mrb[0].mxu0
  %v3927 = vadd.f32 0.0, %v3926
  %v3928 = vpop.f32.mrb[0].mxu0
  %v3929 = vpop.f32.mrb[0].mxu0
  %v3930 = vadd.f32 0.0, %v3929
  %v3931 = vpop.f32.mrb[0].mxu0
  %3932 = vmatprep.mubr.bf16.mxu0 %v3745
  %3933 = vmatmul.mubr.bf16.gmra.mrb[0].mxu0 %v3744
  %v3934 = vpop.f32.mrb[0].mxu0
  %v3935 = vadd.f32 0.0, %v3934
  %v3936 = vpop.f32.mrb[0].mxu0
  %v3937 = vpop.f32.mrb[0].mxu0
  %v3938 = vadd.f32 0.0, %v3937
  %v3939 = vpop.f32.mrb[0].mxu0
  %3940 = vmatprep.mubr.bf16.mxu0 %v3749
  %3941 = vmatmul.mubr.bf16.gmra.mrb[0].mxu0 %v3748
  %v3942 = vpop.f32.mrb[0].mxu0
  %v3943 = vadd.f32 0.0, %v3942
  %v3944 = vpop.f32.mrb[0].mxu0
  %v3945 = vpop.f32.mrb[0].mxu0
  %v3946 = vadd.f32 0.0, %v3945
  %v3947 = vpop.f32.mrb[0].mxu0
  %3948 = vmatprep.mubr.bf16.mxu0 %v3753
  %3949 = vmatmul.mubr.bf16.gmra.mrb[0].mxu0 %v3752
  %v3950 = vpop.f32.mrb[0].mxu0
  %v3951 = vadd.f32 0.0, %v3950
  %v3952 = vpop.f32.mrb[0].mxu0
  %v3953 = vpop.f32.mrb[0].mxu0
  %v3954 = vadd.f32 0.0, %v3953
  %v3955 = vpop.f32.mrb[0].mxu0
  %3956 = vmatprep.mubr.bf16.mxu0 %v3757
  %3957 = vmatmul.mubr.bf16.gmra.mrb[0].mxu0 %v3756
  %v3958 = vpop.f32.mrb[0].mxu0
  %v3959 = vadd.f32 0.0, %v3958
  %v3960 = vpop.f32.mrb[0].mxu0
  %v3961 = vpop.f32.mrb[0].mxu0
  %v3962 = vadd.f32 0.0, %v3961
  %v3963 = vpop.f32.mrb[0].mxu0
  %3964 = vmatprep.mubr.bf16.mxu0 %v3761
  %3965 = vmatmul.mubr.bf16.gmra.mrb[0].mxu0 %v3760
  %v3966 = vpop.f32.mrb[0].mxu0
  %v3967 = vadd.f32 0.0, %v3966
  %v3968 = vpop.f32.mrb[0].mxu0
  %v3969 = vpop.f32.mrb[0].mxu0
  %v3970 = vadd.f32 0.0, %v3969
  %v3971 = vpop.f32.mrb[0].mxu0
  %3972 = vmatprep.mubr.bf16.mxu0 %v3765
  %3973 = vmatmul.mubr.bf16.gmra.mrb[0].mxu0 %v3764
  %v3974 = vpop.f32.mrb[0].mxu0
  %v3975 = vadd.f32 0.0, %v3974
  %v3976 = vpop.f32.mrb[0].mxu0
  %v3977 = vpop.f32.mrb[0].mxu0
  %v3978 = vadd.f32 0.0, %v3977
  %v3979 = vpop.f32.mrb[0].mxu0
  %3980 = vmatprep.mubr.bf16.mxu0 %v3769
  %3981 = vmatmul.mubr.bf16.gmra.mrb[0].mxu0 %v3768
  %v3982 = vpop.f32.mrb[0].mxu0
  %v3983 = vadd.f32 0.0, %v3982
  %v3984 = vpop.f32.mrb[0].mxu0
  %v3985 = vpop.f32.mrb[0].mxu0
  %v3986 = vadd.f32 0.0, %v3985
  %v3987 = vpop.f32.mrb[0].mxu0
  %3988 = vmatprep.mubr.bf16.mxu0 %v3773
  %3989 = vmatmul.mubr.bf16.gmra.mrb[0].mxu0 %v3772
  %v3990 = vpop.f32.mrb[0].mxu0
  %v3991 = vadd.f32 0.0, %v3990
  %v3992 = vpop.f32.mrb[0].mxu0
  %v3993 = vpop.f32.mrb[0].mxu0
  %v3994 = vadd.f32 0.0, %v3993
  %v3995 = vpop.f32.mrb[0].mxu0
  %3996 = vmatprep.mubr.bf16.mxu0 %v3777
  %3997 = vmatmul.mubr.bf16.gmra.mrb[0].mxu0 %v3776
  %v3998 = vpop.f32.mrb[0].mxu0
  %v3999 = vadd.f32 0.0, %v3998
  %v4000 = vpop.f32.mrb[0].mxu0
  %v4001 = vpop.f32.mrb[0].mxu0
  %v4002 = vadd.f32 0.0, %v4001
  %v4003 = vpop.f32.mrb[0].mxu0
  %4004 = vmatprep.mubr.bf16.mxu0 %v3781
  %4005 = vmatmul.mubr.bf16.gmra.mrb[0].mxu0 %v3780
  %v4006 = vpop.f32.mrb[0].mxu0
  %v4007 = vadd.f32 0.0, %v4006
  %v4008 = vpop.f32.mrb[0].mxu0
  %v4009 = vpop.f32.mrb[0].mxu0
  %v4010 = vadd.f32 0.0, %v4009
  %v4011 = vpop.f32.mrb[0].mxu0
  %4012 = vdwg.mxu0
  %4013 = vmatprep.subr.bf16.mxu0 0
  %4014 = vmatpush1.bf16.msra.mxu0 %v3548
  %4015 = vmatprep.subr.bf16.mxu0 0
  %4016 = vmatpush1.bf16.msra.mxu0 %v3549
  %4017 = vmatprep.subr.bf16.mxu0 0
  %4018 = vmatpush1.bf16.msra.mxu0 %v3550
  %4019 = vmatprep.subr.bf16.mxu0 0
  %4020 = vmatpush1.bf16.msra.mxu0 %v3551
  %4021 = vmatprep.subr.bf16.mxu0 0
  %4022 = vmatpush1.bf16.msra.mxu0 %v3552
  %4023 = vmatprep.subr.bf16.mxu0 0
  %4024 = vmatpush1.bf16.msra.mxu0 %v3553
  %4025 = vmatprep.subr.bf16.mxu0 0
  %4026 = vmatpush1.bf16.msra.mxu0 %v3554
  %4027 = vmatprep.subr.bf16.mxu0 0
  %4028 = vmatpush1.bf16.msra.mxu0 %v3555
  %4029 = vmatprep.subr.bf16.mxu0 0
  %4030 = vmatpush1.bf16.msra.mxu0 %v3556
  %4031 = vmatprep.subr.bf16.mxu0 0
  %4032 = vmatpush1.bf16.msra.mxu0 %v3557
  %4033 = vmatprep.subr.bf16.mxu0 0
  %4034 = vmatpush1.bf16.msra.mxu0 %v3558
  %4035 = vmatprep.subr.bf16.mxu0 0
  %4036 = vmatpush1.bf16.msra.mxu0 %v3559
  %4037 = vmatprep.subr.bf16.mxu0 0
  %4038 = vmatpush1.bf16.msra.mxu0 0
  %4039 = vmatprep.subr.bf16.mxu0 0
  %4040 = vmatpush1.bf16.msra.mxu0 0
  %4041 = vmatprep.subr.bf16.mxu0 0
  %4042 = vmatpush1.bf16.msra.mxu0 0
  %4043 = vmatprep.subr.bf16.mxu0 0
  %4044 = vmatpush1.bf16.msra.mxu0 0
  %4045 = vmatprep.mubr.bf16.mxu0 %v3827
  %4046 = vmatmul.mubr.bf16.gmra.mrb[0].mxu0 %v3730
  %v4047 = vpop.f32.mrb[0].mxu0
  %v4048 = vadd.f32 %v3903, %v4047
  %v4049 = vpop.f32.mrb[0].mxu0
  %v4050 = vpop.f32.mrb[0].mxu0
  %v4051 = vadd.f32 %v3906, %v4050
  %v4052 = vpop.f32.mrb[0].mxu0
  %4053 = vmatprep.mubr.bf16.mxu0 %v3830
  %4054 = vmatmul.mubr.bf16.gmra.mrb[0].mxu0 %v3734
  %v4055 = vpop.f32.mrb[0].mxu0
  %v4056 = vadd.f32 %v3911, %v4055
  %v4057 = vpop.f32.mrb[0].mxu0
  %v4058 = vpop.f32.mrb[0].mxu0
  %v4059 = vadd.f32 %v3914, %v4058
  %v4060 = vpop.f32.mrb[0].mxu0
  %4061 = vmatprep.mubr.bf16.mxu0 %v3833
  %4062 = vmatmul.mubr.bf16.gmra.mrb[0].mxu0 %v3738
  %v4063 = vpop.f32.mrb[0].mxu0
  %v4064 = vadd.f32 %v3919, %v4063
  %v4065 = vpop.f32.mrb[0].mxu0
  %v4066 = vpop.f32.mrb[0].mxu0
  %v4067 = vadd.f32 %v3922, %v4066
  %v4068 = vpop.f32.mrb[0].mxu0
  %4069 = vmatprep.mubr.bf16.mxu0 %v3836
  %4070 = vmatmul.mubr.bf16.gmra.mrb[0].mxu0 %v3742
  %v4071 = vpop.f32.mrb[0].mxu0
  %v4072 = vadd.f32 %v3927, %v4071
  %v4073 = vpop.f32.mrb[0].mxu0
  %v4074 = vpop.f32.mrb[0].mxu0
  %v4075 = vadd.f32 %v3930, %v4074
  %v4076 = vpop.f32.mrb[0].mxu0
  %4077 = vmatprep.mubr.bf16.mxu0 %v3839
  %4078 = vmatmul.mubr.bf16.gmra.mrb[0].mxu0 %v3746
  %v4079 = vpop.f32.mrb[0].mxu0
  %v4080 = vadd.f32 %v3935, %v4079
  %v4081 = vpop.f32.mrb[0].mxu0
  %v4082 = vpop.f32.mrb[0].mxu0
  %v4083 = vadd.f32 %v3938, %v4082
  %v4084 = vpop.f32.mrb[0].mxu0
  %4085 = vmatprep.mubr.bf16.mxu0 %v3842
  %4086 = vmatmul.mubr.bf16.gmra.mrb[0].mxu0 %v3750
  %v4087 = vpop.f32.mrb[0].mxu0
  %v4088 = vadd.f32 %v3943, %v4087
  %v4089 = vpop.f32.mrb[0].mxu0
  %v4090 = vpop.f32.mrb[0].mxu0
  %v4091 = vadd.f32 %v3946, %v4090
  %v4092 = vpop.f32.mrb[0].mxu0
  %4093 = vmatprep.mubr.bf16.mxu0 %v3845
  %4094 = vmatmul.mubr.bf16.gmra.mrb[0].mxu0 %v3754
  %v4095 = vpop.f32.mrb[0].mxu0
  %v4096 = vadd.f32 %v3951, %v4095
  %v4097 = vpop.f32.mrb[0].mxu0
  %v4098 = vpop.f32.mrb[0].mxu0
  %v4099 = vadd.f32 %v3954, %v4098
  %v4100 = vpop.f32.mrb[0].mxu0
  %4101 = vmatprep.mubr.bf16.mxu0 %v3848
  %4102 = vmatmul.mubr.bf16.gmra.mrb[0].mxu0 %v3758
  %v4103 = vpop.f32.mrb[0].mxu0
  %v4104 = vadd.f32 %v3959, %v4103
  %v4105 = vpop.f32.mrb[0].mxu0
  %v4106 = vpop.f32.mrb[0].mxu0
  %v4107 = vadd.f32 %v3962, %v4106
  %v4108 = vpop.f32.mrb[0].mxu0
  %4109 = vmatprep.mubr.bf16.mxu0 %v3851
  %4110 = vmatmul.mubr.bf16.gmra.mrb[0].mxu0 %v3762
  %v4111 = vpop.f32.mrb[0].mxu0
  %v4112 = vadd.f32 %v3967, %v4111
  %v4113 = vpop.f32.mrb[0].mxu0
  %v4114 = vpop.f32.mrb[0].mxu0
  %v4115 = vadd.f32 %v3970, %v4114
  %v4116 = vpop.f32.mrb[0].mxu0
  %4117 = vmatprep.mubr.bf16.mxu0 %v3854
  %4118 = vmatmul.mubr.bf16.gmra.mrb[0].mxu0 %v3766
  %v4119 = vpop.f32.mrb[0].mxu0
  %v4120 = vadd.f32 %v3975, %v4119
  %v4121 = vpop.f32.mrb[0].mxu0
  %v4122 = vpop.f32.mrb[0].mxu0
  %v4123 = vadd.f32 %v3978, %v4122
  %v4124 = vpop.f32.mrb[0].mxu0
  %4125 = vmatprep.mubr.bf16.mxu0 %v3857
  %4126 = vmatmul.mubr.bf16.gmra.mrb[0].mxu0 %v3770
  %v4127 = vpop.f32.mrb[0].mxu0
  %v4128 = vadd.f32 %v3983, %v4127
  %v4129 = vpop.f32.mrb[0].mxu0
  %v4130 = vpop.f32.mrb[0].mxu0
  %v4131 = vadd.f32 %v3986, %v4130
  %v4132 = vpop.f32.mrb[0].mxu0
  %4133 = vmatprep.mubr.bf16.mxu0 %v3860
  %4134 = vmatmul.mubr.bf16.gmra.mrb[0].mxu0 %v3774
  %v4135 = vpop.f32.mrb[0].mxu0
  %v4136 = vadd.f32 %v3991, %v4135
  %v4137 = vpop.f32.mrb[0].mxu0
  %v4138 = vpop.f32.mrb[0].mxu0
  %v4139 = vadd.f32 %v3994, %v4138
  %v4140 = vpop.f32.mrb[0].mxu0
  %4141 = vmatprep.mubr.bf16.mxu0 %v3863
  %4142 = vmatmul.mubr.bf16.gmra.mrb[0].mxu0 %v3778
  %v4143 = vpop.f32.mrb[0].mxu0
  %v4144 = vadd.f32 %v3999, %v4143
  %v4145 = vpop.f32.mrb[0].mxu0
  %v4146 = vpop.f32.mrb[0].mxu0
  %v4147 = vadd.f32 %v4002, %v4146
  %v4148 = vpop.f32.mrb[0].mxu0
  %4149 = vmatprep.mubr.bf16.mxu0 %v3866
  %4150 = vmatmul.mubr.bf16.gmra.mrb[0].mxu0 %v3782
  %v4151 = vpop.f32.mrb[0].mxu0
  %v4152 = vadd.f32 %v4007, %v4151
  %v4153 = vpop.f32.mrb[0].mxu0
  %v4154 = vpop.f32.mrb[0].mxu0
  %v4155 = vadd.f32 %v4010, %v4154
  %v4156 = vpop.f32.mrb[0].mxu0
  %4157 = vdwg.mxu0
  %v4158 = vpack.c.bf16 %v4051, %v4048
  %v4159 = vpack.c.bf16 %v4059, %v4056
  %v4160 = vpack.c.bf16 %v4067, %v4064
  %v4161 = vpack.c.bf16 %v4075, %v4072
  %v4162 = vpack.c.bf16 %v4083, %v4080
  %v4163 = vpack.c.bf16 %v4091, %v4088
  %v4164 = vpack.c.bf16 %v4099, %v4096
  %v4165 = vpack.c.bf16 %v4107, %v4104
  %v4166 = vpack.c.bf16 %v4115, %v4112
  %v4167 = vpack.c.bf16 %v4123, %v4120
  %v4168 = vpack.c.bf16 %v4131, %v4128
  %v4169 = vpack.c.bf16 %v4139, %v4136
  %v4170 = vpack.c.bf16 %v4147, %v4144
  %v4171 = vpack.c.bf16 %v4155, %v4152
  %v4172 = vld [vmem:[%s12] sm:$0xf]
  %v4173 = vld [vmem:[%s12 + $0x4] sm:$0xf]
  %v4174 = vld [vmem:[%s12 + $0x8] sm:$0xf]
  %v4175 = vld [vmem:[%s12 + $0xc] sm:$0xf]
  %v4176 = vld [vmem:[%s12 + $0x10] sm:$0xf]
  %v4177 = vld [vmem:[%s12 + $0x14] sm:$0xf]
  %v4178 = vld [vmem:[%s12 + $0x18] sm:$0xf]
  %v4179 = vld [vmem:[%s12 + $0x1c] sm:$0xf]
  %v4180 = vld [vmem:[%s13] sm:$0x1]
  %v4182 = vlaneseq
  %v4183 = vshrl.u32 %v4182, 7
  %v4184 = vsub.s32 0, %v4183
  %v4185 = vrot.slane %v4180, %v4184
  %v4195 = vunpack.c.l.b16 %v4172
  %v4196 = vunpack.c.l.b16 %v4173
  %v4197 = vunpack.c.l.b16 %v4174
  %v4198 = vunpack.c.l.b16 %v4175
  %v4199 = vunpack.c.l.b16 %v4176
  %v4200 = vunpack.c.l.b16 %v4177
  %v4201 = vunpack.c.l.b16 %v4178
  %v4202 = vunpack.c.l.b16 %v4179
  %v4203 = vpack.c.b16 %v4196, %v4195
  %v4204 = vpack.c.b16 %v4198, %v4197
  %v4205 = vpack.c.b16 %v4200, %v4199
  %v4206 = vpack.c.b16 %v4202, %v4201
  %v4212 = vsel %vm1150, %v4158, 0
  %v4215 = vsel %vm1150, %v4159, 0
  %v4218 = vsel %vm1150, %v4160, 0
  %v4221 = vsel %vm1150, %v4161, 0
  %v4224 = vsel %vm1150, %v4162, 0
  %v4227 = vsel %vm1150, %v4163, 0
  %v4230 = vsel %vm1150, %v4164, 0
  %v4233 = vsel %vm1150, %v4165, 0
  %v4236 = vsel %vm1150, %v4166, 0
  %v4239 = vsel %vm1150, %v4167, 0
  %v4242 = vsel %vm1150, %v4168, 0
  %v4245 = vsel %vm1150, %v4169, 0
  %v4248 = vsel %vm1150, %v4170, 0
  %v4251 = vsel %vm1150, %v4171, 0
  %4253 = vmatprep.subr.bf16.mxu0 0
  %4254 = vmatpush1.bf16.msra.mxu0 %v4203
  %4255 = vmatprep.subr.bf16.mxu0 0
  %4256 = vmatpush1.bf16.msra.mxu0 %v4204
  %4257 = vmatprep.subr.bf16.mxu0 0
  %4258 = vmatpush1.bf16.msra.mxu0 %v4205
  %4259 = vmatprep.subr.bf16.mxu0 0
  %4260 = vmatpush1.bf16.msra.mxu0 %v4206
  %4261 = vmatprep.subr.bf16.mxu0 0
  %4262 = vmatpush1.bf16.msra.mxu0 0
  %4263 = vmatprep.subr.bf16.mxu0 0
  %4264 = vmatpush1.bf16.msra.mxu0 0
  %4265 = vmatprep.subr.bf16.mxu0 0
  %4266 = vmatpush1.bf16.msra.mxu0 0
  %4267 = vmatprep.subr.bf16.mxu0 0
  %4268 = vmatpush1.bf16.msra.mxu0 0
  %4269 = vmatprep.subr.bf16.mxu0 0
  %4270 = vmatpush1.bf16.msra.mxu0 0
  %4271 = vmatprep.subr.bf16.mxu0 0
  %4272 = vmatpush1.bf16.msra.mxu0 0
  %4273 = vmatprep.subr.bf16.mxu0 0
  %4274 = vmatpush1.bf16.msra.mxu0 0
  %4275 = vmatprep.subr.bf16.mxu0 0
  %4276 = vmatpush1.bf16.msra.mxu0 0
  %4277 = vmatprep.subr.bf16.mxu0 0
  %4278 = vmatpush1.bf16.msra.mxu0 0
  %4279 = vmatprep.subr.bf16.mxu0 0
  %4280 = vmatpush1.bf16.msra.mxu0 0
  %4281 = vmatprep.subr.bf16.mxu0 0
  %4282 = vmatpush1.bf16.msra.mxu0 0
  %4283 = vmatprep.subr.bf16.mxu0 0
  %4284 = vmatpush1.bf16.msra.mxu0 0
  %4285 = vmatprep.mubr.bf16.mxu0 0
  %4286 = vmatmul.mubr.bf16.gmra.mrb[0].mxu0 %v4212
  %v4287 = vpop.f32.mrb[0].mxu0
  %v4288 = vadd.f32 %v4185, %v4287
  %v4289 = vpop.f32.mrb[0].mxu0
  %v4290 = vpop.f32.mrb[0].mxu0
  %v4291 = vadd.f32 %v4185, %v4290
  %v4292 = vpop.f32.mrb[0].mxu0
  %4293 = vmatprep.mubr.bf16.mxu0 0
  %4294 = vmatmul.mubr.bf16.gmra.mrb[0].mxu0 %v4215
  %v4295 = vpop.f32.mrb[0].mxu0
  %v4296 = vadd.f32 %v4185, %v4295
  %v4297 = vpop.f32.mrb[0].mxu0
  %v4298 = vpop.f32.mrb[0].mxu0
  %v4299 = vadd.f32 %v4185, %v4298
  %v4300 = vpop.f32.mrb[0].mxu0
  %4301 = vmatprep.mubr.bf16.mxu0 0
  %4302 = vmatmul.mubr.bf16.gmra.mrb[0].mxu0 %v4218
  %v4303 = vpop.f32.mrb[0].mxu0
  %v4304 = vadd.f32 %v4185, %v4303
  %v4305 = vpop.f32.mrb[0].mxu0
  %v4306 = vpop.f32.mrb[0].mxu0
  %v4307 = vadd.f32 %v4185, %v4306
  %v4308 = vpop.f32.mrb[0].mxu0
  %4309 = vmatprep.mubr.bf16.mxu0 0
  %4310 = vmatmul.mubr.bf16.gmra.mrb[0].mxu0 %v4221
  %v4311 = vpop.f32.mrb[0].mxu0
  %v4312 = vadd.f32 %v4185, %v4311
  %v4313 = vpop.f32.mrb[0].mxu0
  %v4314 = vpop.f32.mrb[0].mxu0
  %v4315 = vadd.f32 %v4185, %v4314
  %v4316 = vpop.f32.mrb[0].mxu0
  %4317 = vmatprep.mubr.bf16.mxu0 0
  %4318 = vmatmul.mubr.bf16.gmra.mrb[0].mxu0 %v4224
  %v4319 = vpop.f32.mrb[0].mxu0
  %v4320 = vadd.f32 %v4185, %v4319
  %v4321 = vpop.f32.mrb[0].mxu0
  %v4322 = vpop.f32.mrb[0].mxu0
  %v4323 = vadd.f32 %v4185, %v4322
  %v4324 = vpop.f32.mrb[0].mxu0
  %4325 = vmatprep.mubr.bf16.mxu0 0
  %4326 = vmatmul.mubr.bf16.gmra.mrb[0].mxu0 %v4227
  %v4327 = vpop.f32.mrb[0].mxu0
  %v4328 = vadd.f32 %v4185, %v4327
  %v4329 = vpop.f32.mrb[0].mxu0
  %v4330 = vpop.f32.mrb[0].mxu0
  %v4331 = vadd.f32 %v4185, %v4330
  %v4332 = vpop.f32.mrb[0].mxu0
  %4333 = vmatprep.mubr.bf16.mxu0 0
  %4334 = vmatmul.mubr.bf16.gmra.mrb[0].mxu0 %v4230
  %v4335 = vpop.f32.mrb[0].mxu0
  %v4336 = vadd.f32 %v4185, %v4335
  %v4337 = vpop.f32.mrb[0].mxu0
  %v4338 = vpop.f32.mrb[0].mxu0
  %v4339 = vadd.f32 %v4185, %v4338
  %v4340 = vpop.f32.mrb[0].mxu0
  %4341 = vmatprep.mubr.bf16.mxu0 0
  %4342 = vmatmul.mubr.bf16.gmra.mrb[0].mxu0 %v4233
  %v4343 = vpop.f32.mrb[0].mxu0
  %v4344 = vadd.f32 %v4185, %v4343
  %v4345 = vpop.f32.mrb[0].mxu0
  %v4346 = vpop.f32.mrb[0].mxu0
  %v4347 = vadd.f32 %v4185, %v4346
  %v4348 = vpop.f32.mrb[0].mxu0
  %4349 = vmatprep.mubr.bf16.mxu0 0
  %4350 = vmatmul.mubr.bf16.gmra.mrb[0].mxu0 %v4236
  %v4351 = vpop.f32.mrb[0].mxu0
  %v4352 = vadd.f32 %v4185, %v4351
  %v4353 = vpop.f32.mrb[0].mxu0
  %v4354 = vpop.f32.mrb[0].mxu0
  %v4355 = vadd.f32 %v4185, %v4354
  %v4356 = vpop.f32.mrb[0].mxu0
  %4357 = vmatprep.mubr.bf16.mxu0 0
  %4358 = vmatmul.mubr.bf16.gmra.mrb[0].mxu0 %v4239
  %v4359 = vpop.f32.mrb[0].mxu0
  %v4360 = vadd.f32 %v4185, %v4359
  %v4361 = vpop.f32.mrb[0].mxu0
  %v4362 = vpop.f32.mrb[0].mxu0
  %v4363 = vadd.f32 %v4185, %v4362
  %v4364 = vpop.f32.mrb[0].mxu0
  %4365 = vmatprep.mubr.bf16.mxu0 0
  %4366 = vmatmul.mubr.bf16.gmra.mrb[0].mxu0 %v4242
  %v4367 = vpop.f32.mrb[0].mxu0
  %v4368 = vadd.f32 %v4185, %v4367
  %v4369 = vpop.f32.mrb[0].mxu0
  %v4370 = vpop.f32.mrb[0].mxu0
  %v4371 = vadd.f32 %v4185, %v4370
  %v4372 = vpop.f32.mrb[0].mxu0
  %4373 = vmatprep.mubr.bf16.mxu0 0
  %4374 = vmatmul.mubr.bf16.gmra.mrb[0].mxu0 %v4245
  %v4375 = vpop.f32.mrb[0].mxu0
  %v4376 = vadd.f32 %v4185, %v4375
  %v4377 = vpop.f32.mrb[0].mxu0
  %v4378 = vpop.f32.mrb[0].mxu0
  %v4379 = vadd.f32 %v4185, %v4378
  %v4380 = vpop.f32.mrb[0].mxu0
  %4381 = vmatprep.mubr.bf16.mxu0 0
  %4382 = vmatmul.mubr.bf16.gmra.mrb[0].mxu0 %v4248
  %v4383 = vpop.f32.mrb[0].mxu0
  %v4384 = vadd.f32 %v4185, %v4383
  %v4385 = vpop.f32.mrb[0].mxu0
  %v4386 = vpop.f32.mrb[0].mxu0
  %v4387 = vadd.f32 %v4185, %v4386
  %v4388 = vpop.f32.mrb[0].mxu0
  %4389 = vmatprep.mubr.bf16.mxu0 0
  %4390 = vmatmul.mubr.bf16.gmra.mrb[0].mxu0 %v4251
  %v4391 = vpop.f32.mrb[0].mxu0
  %v4392 = vadd.f32 %v4185, %v4391
  %v4393 = vpop.f32.mrb[0].mxu0
  %v4394 = vpop.f32.mrb[0].mxu0
  %v4395 = vadd.f32 %v4185, %v4394
  %v4396 = vpop.f32.mrb[0].mxu0
  %4397 = vdwg.mxu0
  %v4398 = vmax.f32 %v4288, 0.0
  %v4399 = vmax.f32 %v4291, 0.0
  %v4400 = vmax.f32 %v4296, 0.0
  %v4401 = vmax.f32 %v4299, 0.0
  %v4402 = vmax.f32 %v4304, 0.0
  %v4403 = vmax.f32 %v4307, 0.0
  %v4404 = vmax.f32 %v4312, 0.0
  %v4405 = vmax.f32 %v4315, 0.0
  %v4406 = vmax.f32 %v4320, 0.0
  %v4407 = vmax.f32 %v4323, 0.0
  %v4408 = vmax.f32 %v4328, 0.0
  %v4409 = vmax.f32 %v4331, 0.0
  %v4410 = vmax.f32 %v4336, 0.0
  %v4411 = vmax.f32 %v4339, 0.0
  %v4412 = vmax.f32 %v4344, 0.0
  %v4413 = vmax.f32 %v4347, 0.0
  %v4414 = vmax.f32 %v4352, 0.0
  %v4415 = vmax.f32 %v4355, 0.0
  %v4416 = vmax.f32 %v4360, 0.0
  %v4417 = vmax.f32 %v4363, 0.0
  %v4418 = vmax.f32 %v4368, 0.0
  %v4419 = vmax.f32 %v4371, 0.0
  %v4420 = vmax.f32 %v4376, 0.0
  %v4421 = vmax.f32 %v4379, 0.0
  %v4422 = vmax.f32 %v4384, 0.0
  %v4423 = vmax.f32 %v4387, 0.0
  %v4424 = vmax.f32 %v4392, 0.0
  %v4425 = vmax.f32 %v4395, 0.0
  %4426 = vst [vmem:[#allocation3] sm:$0xff] 0.0
  %4427 = vst [vmem:[#allocation3 + $0x8] sm:$0x3] 0.0
  %4428 = vst [vmem:[#allocation3 + $0x100] sm:$0xff] 0.0
  %4429 = vst [vmem:[#allocation3 + $0x108] sm:$0x3] 0.0
  %s4430 = scalar_lea.vmem [#allocation3], 240
  %4431 = vst [vmem:[%s4430] sm:$0xff] 0.0
  %4432 = vst [vmem:[%s4430 + $0x8] sm:$0x3] 0.0
  %4433 = vst [vmem:[%s4430 + $0x100] sm:$0xff] 0.0
  %4434 = vst [vmem:[%s4430 + $0x108] sm:$0x3] 0.0
  %4435 = vst [vmem:[#allocation3] sm:$0x1] 0.0
  %4436 = vst [vmem:[#allocation3 + $0x10] sm:$0x1] 0.0
  %4437 = vst [vmem:[#allocation3 + $0x20] sm:$0x1] 0.0
  %4438 = vst [vmem:[#allocation3 + $0x30] sm:$0x1] 0.0
  %4439 = vst [vmem:[#allocation3 + $0x40] sm:$0x1] 0.0
  %4440 = vst [vmem:[#allocation3 + $0x50] sm:$0x1] 0.0
  %4441 = vst [vmem:[#allocation3 + $0x60] sm:$0x1] 0.0
  %4442 = vst [vmem:[#allocation3 + $0x70] sm:$0x1] 0.0
  %4443 = vst [vmem:[#allocation3 + $0x80] sm:$0x1] 0.0
  %4444 = vst [vmem:[#allocation3 + $0x90] sm:$0x1] 0.0
  %4445 = vst [vmem:[#allocation3 + $0xa0] sm:$0x1] 0.0
  %4446 = vst [vmem:[#allocation3 + $0xb0] sm:$0x1] 0.0
  %4447 = vst [vmem:[#allocation3 + $0xc0] sm:$0x1] 0.0
  %4448 = vst [vmem:[#allocation3 + $0xd0] sm:$0x1] 0.0
  %4449 = vst [vmem:[#allocation3 + $0xe0] sm:$0x1] 0.0
  %4450 = vst [vmem:[#allocation3 + $0xf0] sm:$0x1] 0.0
  %4451 = vst [vmem:[#allocation3 + $0x100] sm:$0x1] 0.0
  %4452 = vst [vmem:[#allocation3 + $0x110] sm:$0x1] 0.0
  %4453 = vst [vmem:[#allocation3 + $0x120] sm:$0x1] 0.0
  %4454 = vst [vmem:[#allocation3 + $0x130] sm:$0x1] 0.0
  %4455 = vst [vmem:[#allocation3 + $0x140] sm:$0x1] 0.0
  %4456 = vst [vmem:[#allocation3 + $0x150] sm:$0x1] 0.0
  %4457 = vst [vmem:[#allocation3 + $0x160] sm:$0x1] 0.0
  %4458 = vst [vmem:[#allocation3 + $0x170] sm:$0x1] 0.0
  %4459 = vst [vmem:[#allocation3 + $0x180] sm:$0x1] 0.0
  %4460 = vst [vmem:[#allocation3 + $0x190] sm:$0x1] 0.0
  %4461 = vst [vmem:[#allocation3 + $0x1a0] sm:$0x1] 0.0
  %4462 = vst [vmem:[#allocation3 + $0x1b0] sm:$0x1] 0.0
  %4463 = vst [vmem:[#allocation3 + $0x1c0] sm:$0x1] 0.0
  %4464 = vst [vmem:[#allocation3 + $0x1d0] sm:$0x1] 0.0
  %4465 = vst [vmem:[#allocation3 + $0x1e0] sm:$0x1] 0.0
  %4466 = vst [vmem:[#allocation3 + $0x1f0] sm:$0x1] 0.0
  %4467 = vst [vmem:[#allocation3 + $0x5] sm:$0x1f] 0.0
  %4468 = vst [vmem:[#allocation3 + $0x15] sm:$0x1f] 0.0
  %4469 = vst [vmem:[#allocation3 + $0x25] sm:$0x1f] 0.0
  %4470 = vst [vmem:[#allocation3 + $0x35] sm:$0x1f] 0.0
  %4471 = vst [vmem:[#allocation3 + $0x45] sm:$0x1f] 0.0
  %4472 = vst [vmem:[#allocation3 + $0x55] sm:$0x1f] 0.0
  %4473 = vst [vmem:[#allocation3 + $0x65] sm:$0x1f] 0.0
  %4474 = vst [vmem:[#allocation3 + $0x75] sm:$0x1f] 0.0
  %4475 = vst [vmem:[#allocation3 + $0x85] sm:$0x1f] 0.0
  %4476 = vst [vmem:[#allocation3 + $0x95] sm:$0x1f] 0.0
  %4477 = vst [vmem:[#allocation3 + $0xa5] sm:$0x1f] 0.0
  %4478 = vst [vmem:[#allocation3 + $0xb5] sm:$0x1f] 0.0
  %4479 = vst [vmem:[#allocation3 + $0xc5] sm:$0x1f] 0.0
  %4480 = vst [vmem:[#allocation3 + $0xd5] sm:$0x1f] 0.0
  %4481 = vst [vmem:[#allocation3 + $0xe5] sm:$0x1f] 0.0
  %4482 = vst [vmem:[#allocation3 + $0xf5] sm:$0x1f] 0.0
  %4483 = vst [vmem:[#allocation3 + $0x105] sm:$0x1f] 0.0
  %4484 = vst [vmem:[#allocation3 + $0x115] sm:$0x1f] 0.0
  %4485 = vst [vmem:[#allocation3 + $0x125] sm:$0x1f] 0.0
  %4486 = vst [vmem:[#allocation3 + $0x135] sm:$0x1f] 0.0
  %4487 = vst [vmem:[#allocation3 + $0x145] sm:$0x1f] 0.0
  %4488 = vst [vmem:[#allocation3 + $0x155] sm:$0x1f] 0.0
  %4489 = vst [vmem:[#allocation3 + $0x165] sm:$0x1f] 0.0
  %4490 = vst [vmem:[#allocation3 + $0x175] sm:$0x1f] 0.0
  %4491 = vst [vmem:[#allocation3 + $0x185] sm:$0x1f] 0.0
  %4492 = vst [vmem:[#allocation3 + $0x195] sm:$0x1f] 0.0
  %4493 = vst [vmem:[#allocation3 + $0x1a5] sm:$0x1f] 0.0
  %4494 = vst [vmem:[#allocation3 + $0x1b5] sm:$0x1f] 0.0
  %4495 = vst [vmem:[#allocation3 + $0x1c5] sm:$0x1f] 0.0
  %4496 = vst [vmem:[#allocation3 + $0x1d5] sm:$0x1f] 0.0
  %4497 = vst [vmem:[#allocation3 + $0x1e5] sm:$0x1f] 0.0
  %4498 = vst [vmem:[#allocation3 + $0x1f5] sm:$0x1f] 0.0
  %s4499 = scalar_lea.vmem [#allocation3], 16
  %4500 = vst [vmem:[%s4499 + $0x1] sm:$0xf] %v4398
  %4501 = vst [vmem:[%s4499 + $0x11] sm:$0xf] %v4399
  %4502 = vst [vmem:[%s4499 + $0x21] sm:$0xf] %v4400
  %4503 = vst [vmem:[%s4499 + $0x31] sm:$0xf] %v4401
  %4504 = vst [vmem:[%s4499 + $0x41] sm:$0xf] %v4402
  %4505 = vst [vmem:[%s4499 + $0x51] sm:$0xf] %v4403
  %4506 = vst [vmem:[%s4499 + $0x61] sm:$0xf] %v4404
  %4507 = vst [vmem:[%s4499 + $0x71] sm:$0xf] %v4405
  %4508 = vst [vmem:[%s4499 + $0x81] sm:$0xf] %v4406
  %4509 = vst [vmem:[%s4499 + $0x91] sm:$0xf] %v4407
  %4510 = vst [vmem:[%s4499 + $0xa1] sm:$0xf] %v4408
  %4511 = vst [vmem:[%s4499 + $0xb1] sm:$0xf] %v4409
  %4512 = vst [vmem:[%s4499 + $0xc1] sm:$0xf] %v4410
  %4513 = vst [vmem:[%s4499 + $0xd1] sm:$0xf] %v4411
  %4514 = vst [vmem:[%s4499 + $0x101] sm:$0xf] %v4412
  %4515 = vst [vmem:[%s4499 + $0x111] sm:$0xf] %v4413
  %4516 = vst [vmem:[%s4499 + $0x121] sm:$0xf] %v4414
  %4517 = vst [vmem:[%s4499 + $0x131] sm:$0xf] %v4415
  %4518 = vst [vmem:[%s4499 + $0x141] sm:$0xf] %v4416
  %4519 = vst [vmem:[%s4499 + $0x151] sm:$0xf] %v4417
  %4520 = vst [vmem:[%s4499 + $0x161] sm:$0xf] %v4418
  %4521 = vst [vmem:[%s4499 + $0x171] sm:$0xf] %v4419
  %4522 = vst [vmem:[%s4499 + $0x181] sm:$0xf] %v4420
  %4523 = vst [vmem:[%s4499 + $0x191] sm:$0xf] %v4421
  %4524 = vst [vmem:[%s4499 + $0x1a1] sm:$0xf] %v4422
  %4525 = vst [vmem:[%s4499 + $0x1b1] sm:$0xf] %v4423
  %4526 = vst [vmem:[%s4499 + $0x1c1] sm:$0xf] %v4424
  %4527 = vst [vmem:[%s4499 + $0x1d1] sm:$0xf] %v4425
  %v4528 = vld [vmem:[%s14] sm:$0xff]
  %v4529 = vld [vmem:[%s14 + $0x8] sm:$0x1]
  %v4530 = vld [vmem:[%s15] sm:$0xff]
  %v4531 = vld [vmem:[%s15 + $0x8] sm:$0x1]
  %v4532 = vld [vmem:[#allocation3] sm:$0xff]
  %v4533 = vld [vmem:[#allocation3 + $0x10] sm:$0xff]
  %v4534 = vld [vmem:[#allocation3 + $0x20] sm:$0xff]
  %v4535 = vld [vmem:[#allocation3 + $0x30] sm:$0xff]
  %v4536 = vld [vmem:[#allocation3 + $0x40] sm:$0xff]
  %v4537 = vld [vmem:[#allocation3 + $0x50] sm:$0xff]
  %v4538 = vld [vmem:[#allocation3 + $0x60] sm:$0xff]
  %v4539 = vld [vmem:[#allocation3 + $0x70] sm:$0xff]
  %v4540 = vld [vmem:[#allocation3 + $0x80] sm:$0xff]
  %v4541 = vld [vmem:[#allocation3 + $0x90] sm:$0xff]
  %v4542 = vld [vmem:[#allocation3 + $0xa0] sm:$0xff]
  %v4543 = vld [vmem:[#allocation3 + $0xb0] sm:$0xff]
  %v4544 = vld [vmem:[#allocation3 + $0xc0] sm:$0xff]
  %v4545 = vld [vmem:[#allocation3 + $0xd0] sm:$0xff]
  %v4546 = vld [vmem:[#allocation3 + $0xe0] sm:$0xff]
  %v4547 = vld [vmem:[#allocation3 + $0xf0] sm:$0xff]
  %v4548 = vld [vmem:[#allocation3 + $0x100] sm:$0xff]
  %v4549 = vld [vmem:[#allocation3 + $0x110] sm:$0xff]
  %v4550 = vld [vmem:[#allocation3 + $0x120] sm:$0xff]
  %v4551 = vld [vmem:[#allocation3 + $0x130] sm:$0xff]
  %v4552 = vld [vmem:[#allocation3 + $0x140] sm:$0xff]
  %v4553 = vld [vmem:[#allocation3 + $0x150] sm:$0xff]
  %v4554 = vld [vmem:[#allocation3 + $0x160] sm:$0xff]
  %v4555 = vld [vmem:[#allocation3 + $0x170] sm:$0xff]
  %v4556 = vld [vmem:[#allocation3 + $0x180] sm:$0xff]
  %v4557 = vld [vmem:[#allocation3 + $0x190] sm:$0xff]
  %v4558 = vld [vmem:[#allocation3 + $0x1a0] sm:$0xff]
  %v4559 = vld [vmem:[#allocation3 + $0x1b0] sm:$0xff]
  %v4560 = vld [vmem:[#allocation3 + $0x1c0] sm:$0xff]
  %v4561 = vld [vmem:[#allocation3 + $0x1d0] sm:$0xff]
  %v4562 = vld [vmem:[#allocation3 + $0x1e0] sm:$0xff]
  %v4563 = vld [vmem:[#allocation3 + $0x1f0] sm:$0xff]
  %v4564 = vlaneseq
  %v4565 = vshrl.u32 %v4564, 7
  %v4566 = vsub.s32 0, %v4565
  %v4567 = vrot.slane %v4528, %v4566
  %v4568 = vmul.f32 %v4532, %v4567
  %v4569 = vmul.f32 %v4533, %v4567
  %v4570 = vmul.f32 %v4534, %v4567
  %v4571 = vmul.f32 %v4535, %v4567
  %v4572 = vmul.f32 %v4536, %v4567
  %v4573 = vmul.f32 %v4537, %v4567
  %v4574 = vmul.f32 %v4538, %v4567
  %v4575 = vmul.f32 %v4539, %v4567
  %v4576 = vmul.f32 %v4540, %v4567
  %v4577 = vmul.f32 %v4541, %v4567
  %v4578 = vmul.f32 %v4542, %v4567
  %v4579 = vmul.f32 %v4543, %v4567
  %v4580 = vmul.f32 %v4544, %v4567
  %v4581 = vmul.f32 %v4545, %v4567
  %v4582 = vmul.f32 %v4548, %v4567
  %v4583 = vmul.f32 %v4549, %v4567
  %v4584 = vmul.f32 %v4550, %v4567
  %v4585 = vmul.f32 %v4551, %v4567
  %v4586 = vmul.f32 %v4552, %v4567
  %v4587 = vmul.f32 %v4553, %v4567
  %v4588 = vmul.f32 %v4554, %v4567
  %v4589 = vmul.f32 %v4555, %v4567
  %v4590 = vmul.f32 %v4556, %v4567
  %v4591 = vmul.f32 %v4557, %v4567
  %v4592 = vmul.f32 %v4558, %v4567
  %v4593 = vmul.f32 %v4559, %v4567
  %v4594 = vmul.f32 %v4560, %v4567
  %v4595 = vmul.f32 %v4561, %v4567
  %v4596 = vlaneseq
  %v4597 = vshrl.u32 %v4596, 7
  %v4598 = vsub.s32 0, %v4597
  %v4599 = vrot.slane %v4530, %v4598
  %v4600 = vmul.f32 %v4532, %v4599
  %v4601 = vmul.f32 %v4533, %v4599
  %v4602 = vmul.f32 %v4534, %v4599
  %v4603 = vmul.f32 %v4535, %v4599
  %v4604 = vmul.f32 %v4536, %v4599
  %v4605 = vmul.f32 %v4537, %v4599
  %v4606 = vmul.f32 %v4538, %v4599
  %v4607 = vmul.f32 %v4539, %v4599
  %v4608 = vmul.f32 %v4540, %v4599
  %v4609 = vmul.f32 %v4541, %v4599
  %v4610 = vmul.f32 %v4542, %v4599
  %v4611 = vmul.f32 %v4543, %v4599
  %v4612 = vmul.f32 %v4544, %v4599
  %v4613 = vmul.f32 %v4545, %v4599
  %v4614 = vmul.f32 %v4548, %v4599
  %v4615 = vmul.f32 %v4549, %v4599
  %v4616 = vmul.f32 %v4550, %v4599
  %v4617 = vmul.f32 %v4551, %v4599
  %v4618 = vmul.f32 %v4552, %v4599
  %v4619 = vmul.f32 %v4553, %v4599
  %v4620 = vmul.f32 %v4554, %v4599
  %v4621 = vmul.f32 %v4555, %v4599
  %v4622 = vmul.f32 %v4556, %v4599
  %v4623 = vmul.f32 %v4557, %v4599
  %v4624 = vmul.f32 %v4558, %v4599
  %v4625 = vmul.f32 %v4559, %v4599
  %v4626 = vmul.f32 %v4560, %v4599
  %v4627 = vmul.f32 %v4561, %v4599
  %v4628 = vlaneseq
  %v4629 = vshrl.u32 %v4628, 7
  %v4630 = vsub.s32 3, %v4629
  %v4631 = vrot.slane %v4528, %v4630
  %v4632 = vmul.f32 %v4533, %v4631
  %v4633 = vmul.f32 %v4534, %v4631
  %v4634 = vmul.f32 %v4535, %v4631
  %v4635 = vmul.f32 %v4536, %v4631
  %v4636 = vmul.f32 %v4537, %v4631
  %v4637 = vmul.f32 %v4538, %v4631
  %v4638 = vmul.f32 %v4539, %v4631
  %v4639 = vmul.f32 %v4540, %v4631
  %v4640 = vmul.f32 %v4541, %v4631
  %v4641 = vmul.f32 %v4542, %v4631
  %v4642 = vmul.f32 %v4543, %v4631
  %v4643 = vmul.f32 %v4544, %v4631
  %v4644 = vmul.f32 %v4545, %v4631
  %v4645 = vmul.f32 %v4546, %v4631
  %v4646 = vmul.f32 %v4549, %v4631
  %v4647 = vmul.f32 %v4550, %v4631
  %v4648 = vmul.f32 %v4551, %v4631
  %v4649 = vmul.f32 %v4552, %v4631
  %v4650 = vmul.f32 %v4553, %v4631
  %v4651 = vmul.f32 %v4554, %v4631
  %v4652 = vmul.f32 %v4555, %v4631
  %v4653 = vmul.f32 %v4556, %v4631
  %v4654 = vmul.f32 %v4557, %v4631
  %v4655 = vmul.f32 %v4558, %v4631
  %v4656 = vmul.f32 %v4559, %v4631
  %v4657 = vmul.f32 %v4560, %v4631
  %v4658 = vmul.f32 %v4561, %v4631
  %v4659 = vmul.f32 %v4562, %v4631
  %v4660 = vadd.f32 %v4568, %v4632
  %v4661 = vadd.f32 %v4569, %v4633
  %v4662 = vadd.f32 %v4570, %v4634
  %v4663 = vadd.f32 %v4571, %v4635
  %v4664 = vadd.f32 %v4572, %v4636
  %v4665 = vadd.f32 %v4573, %v4637
  %v4666 = vadd.f32 %v4574, %v4638
  %v4667 = vadd.f32 %v4575, %v4639
  %v4668 = vadd.f32 %v4576, %v4640
  %v4669 = vadd.f32 %v4577, %v4641
  %v4670 = vadd.f32 %v4578, %v4642
  %v4671 = vadd.f32 %v4579, %v4643
  %v4672 = vadd.f32 %v4580, %v4644
  %v4673 = vadd.f32 %v4581, %v4645
  %v4674 = vadd.f32 %v4582, %v4646
  %v4675 = vadd.f32 %v4583, %v4647
  %v4676 = vadd.f32 %v4584, %v4648
  %v4677 = vadd.f32 %v4585, %v4649
  %v4678 = vadd.f32 %v4586, %v4650
  %v4679 = vadd.f32 %v4587, %v4651
  %v4680 = vadd.f32 %v4588, %v4652
  %v4681 = vadd.f32 %v4589, %v4653
  %v4682 = vadd.f32 %v4590, %v4654
  %v4683 = vadd.f32 %v4591, %v4655
  %v4684 = vadd.f32 %v4592, %v4656
  %v4685 = vadd.f32 %v4593, %v4657
  %v4686 = vadd.f32 %v4594, %v4658
  %v4687 = vadd.f32 %v4595, %v4659
  %v4688 = vlaneseq
  %v4689 = vshrl.u32 %v4688, 7
  %v4690 = vsub.s32 3, %v4689
  %v4691 = vrot.slane %v4530, %v4690
  %v4692 = vmul.f32 %v4533, %v4691
  %v4693 = vmul.f32 %v4534, %v4691
  %v4694 = vmul.f32 %v4535, %v4691
  %v4695 = vmul.f32 %v4536, %v4691
  %v4696 = vmul.f32 %v4537, %v4691
  %v4697 = vmul.f32 %v4538, %v4691
  %v4698 = vmul.f32 %v4539, %v4691
  %v4699 = vmul.f32 %v4540, %v4691
  %v4700 = vmul.f32 %v4541, %v4691
  %v4701 = vmul.f32 %v4542, %v4691
  %v4702 = vmul.f32 %v4543, %v4691
  %v4703 = vmul.f32 %v4544, %v4691
  %v4704 = vmul.f32 %v4545, %v4691
  %v4705 = vmul.f32 %v4546, %v4691
  %v4706 = vmul.f32 %v4549, %v4691
  %v4707 = vmul.f32 %v4550, %v4691
  %v4708 = vmul.f32 %v4551, %v4691
  %v4709 = vmul.f32 %v4552, %v4691
  %v4710 = vmul.f32 %v4553, %v4691
  %v4711 = vmul.f32 %v4554, %v4691
  %v4712 = vmul.f32 %v4555, %v4691
  %v4713 = vmul.f32 %v4556, %v4691
  %v4714 = vmul.f32 %v4557, %v4691
  %v4715 = vmul.f32 %v4558, %v4691
  %v4716 = vmul.f32 %v4559, %v4691
  %v4717 = vmul.f32 %v4560, %v4691
  %v4718 = vmul.f32 %v4561, %v4691
  %v4719 = vmul.f32 %v4562, %v4691
  %v4720 = vadd.f32 %v4600, %v4692
  %v4721 = vadd.f32 %v4601, %v4693
  %v4722 = vadd.f32 %v4602, %v4694
  %v4723 = vadd.f32 %v4603, %v4695
  %v4724 = vadd.f32 %v4604, %v4696
  %v4725 = vadd.f32 %v4605, %v4697
  %v4726 = vadd.f32 %v4606, %v4698
  %v4727 = vadd.f32 %v4607, %v4699
  %v4728 = vadd.f32 %v4608, %v4700
  %v4729 = vadd.f32 %v4609, %v4701
  %v4730 = vadd.f32 %v4610, %v4702
  %v4731 = vadd.f32 %v4611, %v4703
  %v4732 = vadd.f32 %v4612, %v4704
  %v4733 = vadd.f32 %v4613, %v4705
  %v4734 = vadd.f32 %v4614, %v4706
  %v4735 = vadd.f32 %v4615, %v4707
  %v4736 = vadd.f32 %v4616, %v4708
  %v4737 = vadd.f32 %v4617, %v4709
  %v4738 = vadd.f32 %v4618, %v4710
  %v4739 = vadd.f32 %v4619, %v4711
  %v4740 = vadd.f32 %v4620, %v4712
  %v4741 = vadd.f32 %v4621, %v4713
  %v4742 = vadd.f32 %v4622, %v4714
  %v4743 = vadd.f32 %v4623, %v4715
  %v4744 = vadd.f32 %v4624, %v4716
  %v4745 = vadd.f32 %v4625, %v4717
  %v4746 = vadd.f32 %v4626, %v4718
  %v4747 = vadd.f32 %v4627, %v4719
  %v4748 = vlaneseq
  %v4749 = vshrl.u32 %v4748, 7
  %v4750 = vsub.s32 6, %v4749
  %v4751 = vrot.slane %v4528, %v4750
  %v4752 = vmul.f32 %v4534, %v4751
  %v4753 = vmul.f32 %v4535, %v4751
  %v4754 = vmul.f32 %v4536, %v4751
  %v4755 = vmul.f32 %v4537, %v4751
  %v4756 = vmul.f32 %v4538, %v4751
  %v4757 = vmul.f32 %v4539, %v4751
  %v4758 = vmul.f32 %v4540, %v4751
  %v4759 = vmul.f32 %v4541, %v4751
  %v4760 = vmul.f32 %v4542, %v4751
  %v4761 = vmul.f32 %v4543, %v4751
  %v4762 = vmul.f32 %v4544, %v4751
  %v4763 = vmul.f32 %v4545, %v4751
  %v4764 = vmul.f32 %v4546, %v4751
  %v4765 = vmul.f32 %v4547, %v4751
  %v4766 = vmul.f32 %v4550, %v4751
  %v4767 = vmul.f32 %v4551, %v4751
  %v4768 = vmul.f32 %v4552, %v4751
  %v4769 = vmul.f32 %v4553, %v4751
  %v4770 = vmul.f32 %v4554, %v4751
  %v4771 = vmul.f32 %v4555, %v4751
  %v4772 = vmul.f32 %v4556, %v4751
  %v4773 = vmul.f32 %v4557, %v4751
  %v4774 = vmul.f32 %v4558, %v4751
  %v4775 = vmul.f32 %v4559, %v4751
  %v4776 = vmul.f32 %v4560, %v4751
  %v4777 = vmul.f32 %v4561, %v4751
  %v4778 = vmul.f32 %v4562, %v4751
  %v4779 = vmul.f32 %v4563, %v4751
  %v4780 = vadd.f32 %v4660, %v4752
  %v4781 = vadd.f32 %v4661, %v4753
  %v4782 = vadd.f32 %v4662, %v4754
  %v4783 = vadd.f32 %v4663, %v4755
  %v4784 = vadd.f32 %v4664, %v4756
  %v4785 = vadd.f32 %v4665, %v4757
  %v4786 = vadd.f32 %v4666, %v4758
  %v4787 = vadd.f32 %v4667, %v4759
  %v4788 = vadd.f32 %v4668, %v4760
  %v4789 = vadd.f32 %v4669, %v4761
  %v4790 = vadd.f32 %v4670, %v4762
  %v4791 = vadd.f32 %v4671, %v4763
  %v4792 = vadd.f32 %v4672, %v4764
  %v4793 = vadd.f32 %v4673, %v4765
  %v4794 = vadd.f32 %v4674, %v4766
  %v4795 = vadd.f32 %v4675, %v4767
  %v4796 = vadd.f32 %v4676, %v4768
  %v4797 = vadd.f32 %v4677, %v4769
  %v4798 = vadd.f32 %v4678, %v4770
  %v4799 = vadd.f32 %v4679, %v4771
  %v4800 = vadd.f32 %v4680, %v4772
  %v4801 = vadd.f32 %v4681, %v4773
  %v4802 = vadd.f32 %v4682, %v4774
  %v4803 = vadd.f32 %v4683, %v4775
  %v4804 = vadd.f32 %v4684, %v4776
  %v4805 = vadd.f32 %v4685, %v4777
  %v4806 = vadd.f32 %v4686, %v4778
  %v4807 = vadd.f32 %v4687, %v4779
  %v4808 = vlaneseq
  %v4809 = vshrl.u32 %v4808, 7
  %v4810 = vsub.s32 6, %v4809
  %v4811 = vrot.slane %v4530, %v4810
  %v4812 = vmul.f32 %v4534, %v4811
  %v4813 = vmul.f32 %v4535, %v4811
  %v4814 = vmul.f32 %v4536, %v4811
  %v4815 = vmul.f32 %v4537, %v4811
  %v4816 = vmul.f32 %v4538, %v4811
  %v4817 = vmul.f32 %v4539, %v4811
  %v4818 = vmul.f32 %v4540, %v4811
  %v4819 = vmul.f32 %v4541, %v4811
  %v4820 = vmul.f32 %v4542, %v4811
  %v4821 = vmul.f32 %v4543, %v4811
  %v4822 = vmul.f32 %v4544, %v4811
  %v4823 = vmul.f32 %v4545, %v4811
  %v4824 = vmul.f32 %v4546, %v4811
  %v4825 = vmul.f32 %v4547, %v4811
  %v4826 = vmul.f32 %v4550, %v4811
  %v4827 = vmul.f32 %v4551, %v4811
  %v4828 = vmul.f32 %v4552, %v4811
  %v4829 = vmul.f32 %v4553, %v4811
  %v4830 = vmul.f32 %v4554, %v4811
  %v4831 = vmul.f32 %v4555, %v4811
  %v4832 = vmul.f32 %v4556, %v4811
  %v4833 = vmul.f32 %v4557, %v4811
  %v4834 = vmul.f32 %v4558, %v4811
  %v4835 = vmul.f32 %v4559, %v4811
  %v4836 = vmul.f32 %v4560, %v4811
  %v4837 = vmul.f32 %v4561, %v4811
  %v4838 = vmul.f32 %v4562, %v4811
  %v4839 = vmul.f32 %v4563, %v4811
  %v4840 = vadd.f32 %v4720, %v4812
  %v4841 = vadd.f32 %v4721, %v4813
  %v4842 = vadd.f32 %v4722, %v4814
  %v4843 = vadd.f32 %v4723, %v4815
  %v4844 = vadd.f32 %v4724, %v4816
  %v4845 = vadd.f32 %v4725, %v4817
  %v4846 = vadd.f32 %v4726, %v4818
  %v4847 = vadd.f32 %v4727, %v4819
  %v4848 = vadd.f32 %v4728, %v4820
  %v4849 = vadd.f32 %v4729, %v4821
  %v4850 = vadd.f32 %v4730, %v4822
  %v4851 = vadd.f32 %v4731, %v4823
  %v4852 = vadd.f32 %v4732, %v4824
  %v4853 = vadd.f32 %v4733, %v4825
  %v4854 = vadd.f32 %v4734, %v4826
  %v4855 = vadd.f32 %v4735, %v4827
  %v4856 = vadd.f32 %v4736, %v4828
  %v4857 = vadd.f32 %v4737, %v4829
  %v4858 = vadd.f32 %v4738, %v4830
  %v4859 = vadd.f32 %v4739, %v4831
  %v4860 = vadd.f32 %v4740, %v4832
  %v4861 = vadd.f32 %v4741, %v4833
  %v4862 = vadd.f32 %v4742, %v4834
  %v4863 = vadd.f32 %v4743, %v4835
  %v4864 = vadd.f32 %v4744, %v4836
  %v4865 = vadd.f32 %v4745, %v4837
  %v4866 = vadd.f32 %v4746, %v4838
  %v4867 = vadd.f32 %v4747, %v4839
  %v4868 = vld [vmem:[#allocation3 + $0x1] sm:$0xff]
  %v4869 = vld [vmem:[#allocation3 + $0x11] sm:$0xff]
  %v4870 = vld [vmem:[#allocation3 + $0x21] sm:$0xff]
  %v4871 = vld [vmem:[#allocation3 + $0x31] sm:$0xff]
  %v4872 = vld [vmem:[#allocation3 + $0x41] sm:$0xff]
  %v4873 = vld [vmem:[#allocation3 + $0x51] sm:$0xff]
  %v4874 = vld [vmem:[#allocation3 + $0x61] sm:$0xff]
  %v4875 = vld [vmem:[#allocation3 + $0x71] sm:$0xff]
  %v4876 = vld [vmem:[#allocation3 + $0x81] sm:$0xff]
  %v4877 = vld [vmem:[#allocation3 + $0x91] sm:$0xff]
  %v4878 = vld [vmem:[#allocation3 + $0xa1] sm:$0xff]
  %v4879 = vld [vmem:[#allocation3 + $0xb1] sm:$0xff]
  %v4880 = vld [vmem:[#allocation3 + $0xc1] sm:$0xff]
  %v4881 = vld [vmem:[#allocation3 + $0xd1] sm:$0xff]
  %v4882 = vld [vmem:[#allocation3 + $0xe1] sm:$0xff]
  %v4883 = vld [vmem:[#allocation3 + $0xf1] sm:$0xff]
  %v4884 = vld [vmem:[#allocation3 + $0x101] sm:$0xff]
  %v4885 = vld [vmem:[#allocation3 + $0x111] sm:$0xff]
  %v4886 = vld [vmem:[#allocation3 + $0x121] sm:$0xff]
  %v4887 = vld [vmem:[#allocation3 + $0x131] sm:$0xff]
  %v4888 = vld [vmem:[#allocation3 + $0x141] sm:$0xff]
  %v4889 = vld [vmem:[#allocation3 + $0x151] sm:$0xff]
  %v4890 = vld [vmem:[#allocation3 + $0x161] sm:$0xff]
  %v4891 = vld [vmem:[#allocation3 + $0x171] sm:$0xff]
  %v4892 = vld [vmem:[#allocation3 + $0x181] sm:$0xff]
  %v4893 = vld [vmem:[#allocation3 + $0x191] sm:$0xff]
  %v4894 = vld [vmem:[#allocation3 + $0x1a1] sm:$0xff]
  %v4895 = vld [vmem:[#allocation3 + $0x1b1] sm:$0xff]
  %v4896 = vld [vmem:[#allocation3 + $0x1c1] sm:$0xff]
  %v4897 = vld [vmem:[#allocation3 + $0x1d1] sm:$0xff]
  %v4898 = vld [vmem:[#allocation3 + $0x1e1] sm:$0xff]
  %v4899 = vld [vmem:[#allocation3 + $0x1f1] sm:$0xff]
  %v4900 = vlaneseq
  %v4901 = vshrl.u32 %v4900, 7
  %v4902 = vsub.s32 1, %v4901
  %v4903 = vrot.slane %v4528, %v4902
  %v4904 = vmul.f32 %v4868, %v4903
  %v4905 = vmul.f32 %v4869, %v4903
  %v4906 = vmul.f32 %v4870, %v4903
  %v4907 = vmul.f32 %v4871, %v4903
  %v4908 = vmul.f32 %v4872, %v4903
  %v4909 = vmul.f32 %v4873, %v4903
  %v4910 = vmul.f32 %v4874, %v4903
  %v4911 = vmul.f32 %v4875, %v4903
  %v4912 = vmul.f32 %v4876, %v4903
  %v4913 = vmul.f32 %v4877, %v4903
  %v4914 = vmul.f32 %v4878, %v4903
  %v4915 = vmul.f32 %v4879, %v4903
  %v4916 = vmul.f32 %v4880, %v4903
  %v4917 = vmul.f32 %v4881, %v4903
  %v4918 = vmul.f32 %v4884, %v4903
  %v4919 = vmul.f32 %v4885, %v4903
  %v4920 = vmul.f32 %v4886, %v4903
  %v4921 = vmul.f32 %v4887, %v4903
  %v4922 = vmul.f32 %v4888, %v4903
  %v4923 = vmul.f32 %v4889, %v4903
  %v4924 = vmul.f32 %v4890, %v4903
  %v4925 = vmul.f32 %v4891, %v4903
  %v4926 = vmul.f32 %v4892, %v4903
  %v4927 = vmul.f32 %v4893, %v4903
  %v4928 = vmul.f32 %v4894, %v4903
  %v4929 = vmul.f32 %v4895, %v4903
  %v4930 = vmul.f32 %v4896, %v4903
  %v4931 = vmul.f32 %v4897, %v4903
  %v4932 = vadd.f32 %v4780, %v4904
  %v4933 = vadd.f32 %v4781, %v4905
  %v4934 = vadd.f32 %v4782, %v4906
  %v4935 = vadd.f32 %v4783, %v4907
  %v4936 = vadd.f32 %v4784, %v4908
  %v4937 = vadd.f32 %v4785, %v4909
  %v4938 = vadd.f32 %v4786, %v4910
  %v4939 = vadd.f32 %v4787, %v4911
  %v4940 = vadd.f32 %v4788, %v4912
  %v4941 = vadd.f32 %v4789, %v4913
  %v4942 = vadd.f32 %v4790, %v4914
  %v4943 = vadd.f32 %v4791, %v4915
  %v4944 = vadd.f32 %v4792, %v4916
  %v4945 = vadd.f32 %v4793, %v4917
  %v4946 = vadd.f32 %v4794, %v4918
  %v4947 = vadd.f32 %v4795, %v4919
  %v4948 = vadd.f32 %v4796, %v4920
  %v4949 = vadd.f32 %v4797, %v4921
  %v4950 = vadd.f32 %v4798, %v4922
  %v4951 = vadd.f32 %v4799, %v4923
  %v4952 = vadd.f32 %v4800, %v4924
  %v4953 = vadd.f32 %v4801, %v4925
  %v4954 = vadd.f32 %v4802, %v4926
  %v4955 = vadd.f32 %v4803, %v4927
  %v4956 = vadd.f32 %v4804, %v4928
  %v4957 = vadd.f32 %v4805, %v4929
  %v4958 = vadd.f32 %v4806, %v4930
  %v4959 = vadd.f32 %v4807, %v4931
  %v4960 = vlaneseq
  %v4961 = vshrl.u32 %v4960, 7
  %v4962 = vsub.s32 1, %v4961
  %v4963 = vrot.slane %v4530, %v4962
  %v4964 = vmul.f32 %v4868, %v4963
  %v4965 = vmul.f32 %v4869, %v4963
  %v4966 = vmul.f32 %v4870, %v4963
  %v4967 = vmul.f32 %v4871, %v4963
  %v4968 = vmul.f32 %v4872, %v4963
  %v4969 = vmul.f32 %v4873, %v4963
  %v4970 = vmul.f32 %v4874, %v4963
  %v4971 = vmul.f32 %v4875, %v4963
  %v4972 = vmul.f32 %v4876, %v4963
  %v4973 = vmul.f32 %v4877, %v4963
  %v4974 = vmul.f32 %v4878, %v4963
  %v4975 = vmul.f32 %v4879, %v4963
  %v4976 = vmul.f32 %v4880, %v4963
  %v4977 = vmul.f32 %v4881, %v4963
  %v4978 = vmul.f32 %v4884, %v4963
  %v4979 = vmul.f32 %v4885, %v4963
  %v4980 = vmul.f32 %v4886, %v4963
  %v4981 = vmul.f32 %v4887, %v4963
  %v4982 = vmul.f32 %v4888, %v4963
  %v4983 = vmul.f32 %v4889, %v4963
  %v4984 = vmul.f32 %v4890, %v4963
  %v4985 = vmul.f32 %v4891, %v4963
  %v4986 = vmul.f32 %v4892, %v4963
  %v4987 = vmul.f32 %v4893, %v4963
  %v4988 = vmul.f32 %v4894, %v4963
  %v4989 = vmul.f32 %v4895, %v4963
  %v4990 = vmul.f32 %v4896, %v4963
  %v4991 = vmul.f32 %v4897, %v4963
  %v4992 = vadd.f32 %v4840, %v4964
  %v4993 = vadd.f32 %v4841, %v4965
  %v4994 = vadd.f32 %v4842, %v4966
  %v4995 = vadd.f32 %v4843, %v4967
  %v4996 = vadd.f32 %v4844, %v4968
  %v4997 = vadd.f32 %v4845, %v4969
  %v4998 = vadd.f32 %v4846, %v4970
  %v4999 = vadd.f32 %v4847, %v4971
  %v5000 = vadd.f32 %v4848, %v4972
  %v5001 = vadd.f32 %v4849, %v4973
  %v5002 = vadd.f32 %v4850, %v4974
  %v5003 = vadd.f32 %v4851, %v4975
  %v5004 = vadd.f32 %v4852, %v4976
  %v5005 = vadd.f32 %v4853, %v4977
  %v5006 = vadd.f32 %v4854, %v4978
  %v5007 = vadd.f32 %v4855, %v4979
  %v5008 = vadd.f32 %v4856, %v4980
  %v5009 = vadd.f32 %v4857, %v4981
  %v5010 = vadd.f32 %v4858, %v4982
  %v5011 = vadd.f32 %v4859, %v4983
  %v5012 = vadd.f32 %v4860, %v4984
  %v5013 = vadd.f32 %v4861, %v4985
  %v5014 = vadd.f32 %v4862, %v4986
  %v5015 = vadd.f32 %v4863, %v4987
  %v5016 = vadd.f32 %v4864, %v4988
  %v5017 = vadd.f32 %v4865, %v4989
  %v5018 = vadd.f32 %v4866, %v4990
  %v5019 = vadd.f32 %v4867, %v4991
  %v5020 = vlaneseq
  %v5021 = vshrl.u32 %v5020, 7
  %v5022 = vsub.s32 4, %v5021
  %v5023 = vrot.slane %v4528, %v5022
  %v5024 = vmul.f32 %v4869, %v5023
  %v5025 = vmul.f32 %v4870, %v5023
  %v5026 = vmul.f32 %v4871, %v5023
  %v5027 = vmul.f32 %v4872, %v5023
  %v5028 = vmul.f32 %v4873, %v5023
  %v5029 = vmul.f32 %v4874, %v5023
  %v5030 = vmul.f32 %v4875, %v5023
  %v5031 = vmul.f32 %v4876, %v5023
  %v5032 = vmul.f32 %v4877, %v5023
  %v5033 = vmul.f32 %v4878, %v5023
  %v5034 = vmul.f32 %v4879, %v5023
  %v5035 = vmul.f32 %v4880, %v5023
  %v5036 = vmul.f32 %v4881, %v5023
  %v5037 = vmul.f32 %v4882, %v5023
  %v5038 = vmul.f32 %v4885, %v5023
  %v5039 = vmul.f32 %v4886, %v5023
  %v5040 = vmul.f32 %v4887, %v5023
  %v5041 = vmul.f32 %v4888, %v5023
  %v5042 = vmul.f32 %v4889, %v5023
  %v5043 = vmul.f32 %v4890, %v5023
  %v5044 = vmul.f32 %v4891, %v5023
  %v5045 = vmul.f32 %v4892, %v5023
  %v5046 = vmul.f32 %v4893, %v5023
  %v5047 = vmul.f32 %v4894, %v5023
  %v5048 = vmul.f32 %v4895, %v5023
  %v5049 = vmul.f32 %v4896, %v5023
  %v5050 = vmul.f32 %v4897, %v5023
  %v5051 = vmul.f32 %v4898, %v5023
  %v5052 = vadd.f32 %v4932, %v5024
  %v5053 = vadd.f32 %v4933, %v5025
  %v5054 = vadd.f32 %v4934, %v5026
  %v5055 = vadd.f32 %v4935, %v5027
  %v5056 = vadd.f32 %v4936, %v5028
  %v5057 = vadd.f32 %v4937, %v5029
  %v5058 = vadd.f32 %v4938, %v5030
  %v5059 = vadd.f32 %v4939, %v5031
  %v5060 = vadd.f32 %v4940, %v5032
  %v5061 = vadd.f32 %v4941, %v5033
  %v5062 = vadd.f32 %v4942, %v5034
  %v5063 = vadd.f32 %v4943, %v5035
  %v5064 = vadd.f32 %v4944, %v5036
  %v5065 = vadd.f32 %v4945, %v5037
  %v5066 = vadd.f32 %v4946, %v5038
  %v5067 = vadd.f32 %v4947, %v5039
  %v5068 = vadd.f32 %v4948, %v5040
  %v5069 = vadd.f32 %v4949, %v5041
  %v5070 = vadd.f32 %v4950, %v5042
  %v5071 = vadd.f32 %v4951, %v5043
  %v5072 = vadd.f32 %v4952, %v5044
  %v5073 = vadd.f32 %v4953, %v5045
  %v5074 = vadd.f32 %v4954, %v5046
  %v5075 = vadd.f32 %v4955, %v5047
  %v5076 = vadd.f32 %v4956, %v5048
  %v5077 = vadd.f32 %v4957, %v5049
  %v5078 = vadd.f32 %v4958, %v5050
  %v5079 = vadd.f32 %v4959, %v5051
  %v5080 = vlaneseq
  %v5081 = vshrl.u32 %v5080, 7
  %v5082 = vsub.s32 4, %v5081
  %v5083 = vrot.slane %v4530, %v5082
  %v5084 = vmul.f32 %v4869, %v5083
  %v5085 = vmul.f32 %v4870, %v5083
  %v5086 = vmul.f32 %v4871, %v5083
  %v5087 = vmul.f32 %v4872, %v5083
  %v5088 = vmul.f32 %v4873, %v5083
  %v5089 = vmul.f32 %v4874, %v5083
  %v5090 = vmul.f32 %v4875, %v5083
  %v5091 = vmul.f32 %v4876, %v5083
  %v5092 = vmul.f32 %v4877, %v5083
  %v5093 = vmul.f32 %v4878, %v5083
  %v5094 = vmul.f32 %v4879, %v5083
  %v5095 = vmul.f32 %v4880, %v5083
  %v5096 = vmul.f32 %v4881, %v5083
  %v5097 = vmul.f32 %v4882, %v5083
  %v5098 = vmul.f32 %v4885, %v5083
  %v5099 = vmul.f32 %v4886, %v5083
  %v5100 = vmul.f32 %v4887, %v5083
  %v5101 = vmul.f32 %v4888, %v5083
  %v5102 = vmul.f32 %v4889, %v5083
  %v5103 = vmul.f32 %v4890, %v5083
  %v5104 = vmul.f32 %v4891, %v5083
  %v5105 = vmul.f32 %v4892, %v5083
  %v5106 = vmul.f32 %v4893, %v5083
  %v5107 = vmul.f32 %v4894, %v5083
  %v5108 = vmul.f32 %v4895, %v5083
  %v5109 = vmul.f32 %v4896, %v5083
  %v5110 = vmul.f32 %v4897, %v5083
  %v5111 = vmul.f32 %v4898, %v5083
  %v5112 = vadd.f32 %v4992, %v5084
  %v5113 = vadd.f32 %v4993, %v5085
  %v5114 = vadd.f32 %v4994, %v5086
  %v5115 = vadd.f32 %v4995, %v5087
  %v5116 = vadd.f32 %v4996, %v5088
  %v5117 = vadd.f32 %v4997, %v5089
  %v5118 = vadd.f32 %v4998, %v5090
  %v5119 = vadd.f32 %v4999, %v5091
  %v5120 = vadd.f32 %v5000, %v5092
  %v5121 = vadd.f32 %v5001, %v5093
  %v5122 = vadd.f32 %v5002, %v5094
  %v5123 = vadd.f32 %v5003, %v5095
  %v5124 = vadd.f32 %v5004, %v5096
  %v5125 = vadd.f32 %v5005, %v5097
  %v5126 = vadd.f32 %v5006, %v5098
  %v5127 = vadd.f32 %v5007, %v5099
  %v5128 = vadd.f32 %v5008, %v5100
  %v5129 = vadd.f32 %v5009, %v5101
  %v5130 = vadd.f32 %v5010, %v5102
  %v5131 = vadd.f32 %v5011, %v5103
  %v5132 = vadd.f32 %v5012, %v5104
  %v5133 = vadd.f32 %v5013, %v5105
  %v5134 = vadd.f32 %v5014, %v5106
  %v5135 = vadd.f32 %v5015, %v5107
  %v5136 = vadd.f32 %v5016, %v5108
  %v5137 = vadd.f32 %v5017, %v5109
  %v5138 = vadd.f32 %v5018, %v5110
  %v5139 = vadd.f32 %v5019, %v5111
  %v5140 = vlaneseq
  %v5141 = vshrl.u32 %v5140, 7
  %v5142 = vsub.s32 7, %v5141
  %v5143 = vrot.slane %v4528, %v5142
  %v5144 = vmul.f32 %v4870, %v5143
  %v5145 = vmul.f32 %v4871, %v5143
  %v5146 = vmul.f32 %v4872, %v5143
  %v5147 = vmul.f32 %v4873, %v5143
  %v5148 = vmul.f32 %v4874, %v5143
  %v5149 = vmul.f32 %v4875, %v5143
  %v5150 = vmul.f32 %v4876, %v5143
  %v5151 = vmul.f32 %v4877, %v5143
  %v5152 = vmul.f32 %v4878, %v5143
  %v5153 = vmul.f32 %v4879, %v5143
  %v5154 = vmul.f32 %v4880, %v5143
  %v5155 = vmul.f32 %v4881, %v5143
  %v5156 = vmul.f32 %v4882, %v5143
  %v5157 = vmul.f32 %v4883, %v5143
  %v5158 = vmul.f32 %v4886, %v5143
  %v5159 = vmul.f32 %v4887, %v5143
  %v5160 = vmul.f32 %v4888, %v5143
  %v5161 = vmul.f32 %v4889, %v5143
  %v5162 = vmul.f32 %v4890, %v5143
  %v5163 = vmul.f32 %v4891, %v5143
  %v5164 = vmul.f32 %v4892, %v5143
  %v5165 = vmul.f32 %v4893, %v5143
  %v5166 = vmul.f32 %v4894, %v5143
  %v5167 = vmul.f32 %v4895, %v5143
  %v5168 = vmul.f32 %v4896, %v5143
  %v5169 = vmul.f32 %v4897, %v5143
  %v5170 = vmul.f32 %v4898, %v5143
  %v5171 = vmul.f32 %v4899, %v5143
  %v5172 = vadd.f32 %v5052, %v5144
  %v5173 = vadd.f32 %v5053, %v5145
  %v5174 = vadd.f32 %v5054, %v5146
  %v5175 = vadd.f32 %v5055, %v5147
  %v5176 = vadd.f32 %v5056, %v5148
  %v5177 = vadd.f32 %v5057, %v5149
  %v5178 = vadd.f32 %v5058, %v5150
  %v5179 = vadd.f32 %v5059, %v5151
  %v5180 = vadd.f32 %v5060, %v5152
  %v5181 = vadd.f32 %v5061, %v5153
  %v5182 = vadd.f32 %v5062, %v5154
  %v5183 = vadd.f32 %v5063, %v5155
  %v5184 = vadd.f32 %v5064, %v5156
  %v5185 = vadd.f32 %v5065, %v5157
  %v5186 = vadd.f32 %v5066, %v5158
  %v5187 = vadd.f32 %v5067, %v5159
  %v5188 = vadd.f32 %v5068, %v5160
  %v5189 = vadd.f32 %v5069, %v5161
  %v5190 = vadd.f32 %v5070, %v5162
  %v5191 = vadd.f32 %v5071, %v5163
  %v5192 = vadd.f32 %v5072, %v5164
  %v5193 = vadd.f32 %v5073, %v5165
  %v5194 = vadd.f32 %v5074, %v5166
  %v5195 = vadd.f32 %v5075, %v5167
  %v5196 = vadd.f32 %v5076, %v5168
  %v5197 = vadd.f32 %v5077, %v5169
  %v5198 = vadd.f32 %v5078, %v5170
  %v5199 = vadd.f32 %v5079, %v5171
  %v5200 = vlaneseq
  %v5201 = vshrl.u32 %v5200, 7
  %v5202 = vsub.s32 7, %v5201
  %v5203 = vrot.slane %v4530, %v5202
  %v5204 = vmul.f32 %v4870, %v5203
  %v5205 = vmul.f32 %v4871, %v5203
  %v5206 = vmul.f32 %v4872, %v5203
  %v5207 = vmul.f32 %v4873, %v5203
  %v5208 = vmul.f32 %v4874, %v5203
  %v5209 = vmul.f32 %v4875, %v5203
  %v5210 = vmul.f32 %v4876, %v5203
  %v5211 = vmul.f32 %v4877, %v5203
  %v5212 = vmul.f32 %v4878, %v5203
  %v5213 = vmul.f32 %v4879, %v5203
  %v5214 = vmul.f32 %v4880, %v5203
  %v5215 = vmul.f32 %v4881, %v5203
  %v5216 = vmul.f32 %v4882, %v5203
  %v5217 = vmul.f32 %v4883, %v5203
  %v5218 = vmul.f32 %v4886, %v5203
  %v5219 = vmul.f32 %v4887, %v5203
  %v5220 = vmul.f32 %v4888, %v5203
  %v5221 = vmul.f32 %v4889, %v5203
  %v5222 = vmul.f32 %v4890, %v5203
  %v5223 = vmul.f32 %v4891, %v5203
  %v5224 = vmul.f32 %v4892, %v5203
  %v5225 = vmul.f32 %v4893, %v5203
  %v5226 = vmul.f32 %v4894, %v5203
  %v5227 = vmul.f32 %v4895, %v5203
  %v5228 = vmul.f32 %v4896, %v5203
  %v5229 = vmul.f32 %v4897, %v5203
  %v5230 = vmul.f32 %v4898, %v5203
  %v5231 = vmul.f32 %v4899, %v5203
  %v5232 = vadd.f32 %v5112, %v5204
  %v5233 = vadd.f32 %v5113, %v5205
  %v5234 = vadd.f32 %v5114, %v5206
  %v5235 = vadd.f32 %v5115, %v5207
  %v5236 = vadd.f32 %v5116, %v5208
  %v5237 = vadd.f32 %v5117, %v5209
  %v5238 = vadd.f32 %v5118, %v5210
  %v5239 = vadd.f32 %v5119, %v5211
  %v5240 = vadd.f32 %v5120, %v5212
  %v5241 = vadd.f32 %v5121, %v5213
  %v5242 = vadd.f32 %v5122, %v5214
  %v5243 = vadd.f32 %v5123, %v5215
  %v5244 = vadd.f32 %v5124, %v5216
  %v5245 = vadd.f32 %v5125, %v5217
  %v5246 = vadd.f32 %v5126, %v5218
  %v5247 = vadd.f32 %v5127, %v5219
  %v5248 = vadd.f32 %v5128, %v5220
  %v5249 = vadd.f32 %v5129, %v5221
  %v5250 = vadd.f32 %v5130, %v5222
  %v5251 = vadd.f32 %v5131, %v5223
  %v5252 = vadd.f32 %v5132, %v5224
  %v5253 = vadd.f32 %v5133, %v5225
  %v5254 = vadd.f32 %v5134, %v5226
  %v5255 = vadd.f32 %v5135, %v5227
  %v5256 = vadd.f32 %v5136, %v5228
  %v5257 = vadd.f32 %v5137, %v5229
  %v5258 = vadd.f32 %v5138, %v5230
  %v5259 = vadd.f32 %v5139, %v5231
  %v5260 = vld [vmem:[#allocation3 + $0x2] sm:$0xff]
  %v5261 = vld [vmem:[#allocation3 + $0x12] sm:$0xff]
  %v5262 = vld [vmem:[#allocation3 + $0x22] sm:$0xff]
  %v5263 = vld [vmem:[#allocation3 + $0x32] sm:$0xff]
  %v5264 = vld [vmem:[#allocation3 + $0x42] sm:$0xff]
  %v5265 = vld [vmem:[#allocation3 + $0x52] sm:$0xff]
  %v5266 = vld [vmem:[#allocation3 + $0x62] sm:$0xff]
  %v5267 = vld [vmem:[#allocation3 + $0x72] sm:$0xff]
  %v5268 = vld [vmem:[#allocation3 + $0x82] sm:$0xff]
  %v5269 = vld [vmem:[#allocation3 + $0x92] sm:$0xff]
  %v5270 = vld [vmem:[#allocation3 + $0xa2] sm:$0xff]
  %v5271 = vld [vmem:[#allocation3 + $0xb2] sm:$0xff]
  %v5272 = vld [vmem:[#allocation3 + $0xc2] sm:$0xff]
  %v5273 = vld [vmem:[#allocation3 + $0xd2] sm:$0xff]
  %v5274 = vld [vmem:[#allocation3 + $0xe2] sm:$0xff]
  %v5275 = vld [vmem:[#allocation3 + $0xf2] sm:$0xff]
  %v5276 = vld [vmem:[#allocation3 + $0x102] sm:$0xff]
  %v5277 = vld [vmem:[#allocation3 + $0x112] sm:$0xff]
  %v5278 = vld [vmem:[#allocation3 + $0x122] sm:$0xff]
  %v5279 = vld [vmem:[#allocation3 + $0x132] sm:$0xff]
  %v5280 = vld [vmem:[#allocation3 + $0x142] sm:$0xff]
  %v5281 = vld [vmem:[#allocation3 + $0x152] sm:$0xff]
  %v5282 = vld [vmem:[#allocation3 + $0x162] sm:$0xff]
  %v5283 = vld [vmem:[#allocation3 + $0x172] sm:$0xff]
  %v5284 = vld [vmem:[#allocation3 + $0x182] sm:$0xff]
  %v5285 = vld [vmem:[#allocation3 + $0x192] sm:$0xff]
  %v5286 = vld [vmem:[#allocation3 + $0x1a2] sm:$0xff]
  %v5287 = vld [vmem:[#allocation3 + $0x1b2] sm:$0xff]
  %v5288 = vld [vmem:[#allocation3 + $0x1c2] sm:$0xff]
  %v5289 = vld [vmem:[#allocation3 + $0x1d2] sm:$0xff]
  %v5290 = vld [vmem:[#allocation3 + $0x1e2] sm:$0xff]
  %v5291 = vld [vmem:[#allocation3 + $0x1f2] sm:$0xff]
  %v5292 = vlaneseq
  %v5293 = vshrl.u32 %v5292, 7
  %v5294 = vsub.s32 2, %v5293
  %v5295 = vrot.slane %v4528, %v5294
  %v5296 = vmul.f32 %v5260, %v5295
  %v5297 = vmul.f32 %v5261, %v5295
  %v5298 = vmul.f32 %v5262, %v5295
  %v5299 = vmul.f32 %v5263, %v5295
  %v5300 = vmul.f32 %v5264, %v5295
  %v5301 = vmul.f32 %v5265, %v5295
  %v5302 = vmul.f32 %v5266, %v5295
  %v5303 = vmul.f32 %v5267, %v5295
  %v5304 = vmul.f32 %v5268, %v5295
  %v5305 = vmul.f32 %v5269, %v5295
  %v5306 = vmul.f32 %v5270, %v5295
  %v5307 = vmul.f32 %v5271, %v5295
  %v5308 = vmul.f32 %v5272, %v5295
  %v5309 = vmul.f32 %v5273, %v5295
  %v5310 = vmul.f32 %v5276, %v5295
  %v5311 = vmul.f32 %v5277, %v5295
  %v5312 = vmul.f32 %v5278, %v5295
  %v5313 = vmul.f32 %v5279, %v5295
  %v5314 = vmul.f32 %v5280, %v5295
  %v5315 = vmul.f32 %v5281, %v5295
  %v5316 = vmul.f32 %v5282, %v5295
  %v5317 = vmul.f32 %v5283, %v5295
  %v5318 = vmul.f32 %v5284, %v5295
  %v5319 = vmul.f32 %v5285, %v5295
  %v5320 = vmul.f32 %v5286, %v5295
  %v5321 = vmul.f32 %v5287, %v5295
  %v5322 = vmul.f32 %v5288, %v5295
  %v5323 = vmul.f32 %v5289, %v5295
  %v5324 = vadd.f32 %v5172, %v5296
  %v5325 = vadd.f32 %v5173, %v5297
  %v5326 = vadd.f32 %v5174, %v5298
  %v5327 = vadd.f32 %v5175, %v5299
  %v5328 = vadd.f32 %v5176, %v5300
  %v5329 = vadd.f32 %v5177, %v5301
  %v5330 = vadd.f32 %v5178, %v5302
  %v5331 = vadd.f32 %v5179, %v5303
  %v5332 = vadd.f32 %v5180, %v5304
  %v5333 = vadd.f32 %v5181, %v5305
  %v5334 = vadd.f32 %v5182, %v5306
  %v5335 = vadd.f32 %v5183, %v5307
  %v5336 = vadd.f32 %v5184, %v5308
  %v5337 = vadd.f32 %v5185, %v5309
  %v5338 = vadd.f32 %v5186, %v5310
  %v5339 = vadd.f32 %v5187, %v5311
  %v5340 = vadd.f32 %v5188, %v5312
  %v5341 = vadd.f32 %v5189, %v5313
  %v5342 = vadd.f32 %v5190, %v5314
  %v5343 = vadd.f32 %v5191, %v5315
  %v5344 = vadd.f32 %v5192, %v5316
  %v5345 = vadd.f32 %v5193, %v5317
  %v5346 = vadd.f32 %v5194, %v5318
  %v5347 = vadd.f32 %v5195, %v5319
  %v5348 = vadd.f32 %v5196, %v5320
  %v5349 = vadd.f32 %v5197, %v5321
  %v5350 = vadd.f32 %v5198, %v5322
  %v5351 = vadd.f32 %v5199, %v5323
  %v5352 = vlaneseq
  %v5353 = vshrl.u32 %v5352, 7
  %v5354 = vsub.s32 2, %v5353
  %v5355 = vrot.slane %v4530, %v5354
  %v5356 = vmul.f32 %v5260, %v5355
  %v5357 = vmul.f32 %v5261, %v5355
  %v5358 = vmul.f32 %v5262, %v5355
  %v5359 = vmul.f32 %v5263, %v5355
  %v5360 = vmul.f32 %v5264, %v5355
  %v5361 = vmul.f32 %v5265, %v5355
  %v5362 = vmul.f32 %v5266, %v5355
  %v5363 = vmul.f32 %v5267, %v5355
  %v5364 = vmul.f32 %v5268, %v5355
  %v5365 = vmul.f32 %v5269, %v5355
  %v5366 = vmul.f32 %v5270, %v5355
  %v5367 = vmul.f32 %v5271, %v5355
  %v5368 = vmul.f32 %v5272, %v5355
  %v5369 = vmul.f32 %v5273, %v5355
  %v5370 = vmul.f32 %v5276, %v5355
  %v5371 = vmul.f32 %v5277, %v5355
  %v5372 = vmul.f32 %v5278, %v5355
  %v5373 = vmul.f32 %v5279, %v5355
  %v5374 = vmul.f32 %v5280, %v5355
  %v5375 = vmul.f32 %v5281, %v5355
  %v5376 = vmul.f32 %v5282, %v5355
  %v5377 = vmul.f32 %v5283, %v5355
  %v5378 = vmul.f32 %v5284, %v5355
  %v5379 = vmul.f32 %v5285, %v5355
  %v5380 = vmul.f32 %v5286, %v5355
  %v5381 = vmul.f32 %v5287, %v5355
  %v5382 = vmul.f32 %v5288, %v5355
  %v5383 = vmul.f32 %v5289, %v5355
  %v5384 = vadd.f32 %v5232, %v5356
  %v5385 = vadd.f32 %v5233, %v5357
  %v5386 = vadd.f32 %v5234, %v5358
  %v5387 = vadd.f32 %v5235, %v5359
  %v5388 = vadd.f32 %v5236, %v5360
  %v5389 = vadd.f32 %v5237, %v5361
  %v5390 = vadd.f32 %v5238, %v5362
  %v5391 = vadd.f32 %v5239, %v5363
  %v5392 = vadd.f32 %v5240, %v5364
  %v5393 = vadd.f32 %v5241, %v5365
  %v5394 = vadd.f32 %v5242, %v5366
  %v5395 = vadd.f32 %v5243, %v5367
  %v5396 = vadd.f32 %v5244, %v5368
  %v5397 = vadd.f32 %v5245, %v5369
  %v5398 = vadd.f32 %v5246, %v5370
  %v5399 = vadd.f32 %v5247, %v5371
  %v5400 = vadd.f32 %v5248, %v5372
  %v5401 = vadd.f32 %v5249, %v5373
  %v5402 = vadd.f32 %v5250, %v5374
  %v5403 = vadd.f32 %v5251, %v5375
  %v5404 = vadd.f32 %v5252, %v5376
  %v5405 = vadd.f32 %v5253, %v5377
  %v5406 = vadd.f32 %v5254, %v5378
  %v5407 = vadd.f32 %v5255, %v5379
  %v5408 = vadd.f32 %v5256, %v5380
  %v5409 = vadd.f32 %v5257, %v5381
  %v5410 = vadd.f32 %v5258, %v5382
  %v5411 = vadd.f32 %v5259, %v5383
  %v5412 = vlaneseq
  %v5413 = vshrl.u32 %v5412, 7
  %v5414 = vsub.s32 5, %v5413
  %v5415 = vrot.slane %v4528, %v5414
  %v5416 = vmul.f32 %v5261, %v5415
  %v5417 = vmul.f32 %v5262, %v5415
  %v5418 = vmul.f32 %v5263, %v5415
  %v5419 = vmul.f32 %v5264, %v5415
  %v5420 = vmul.f32 %v5265, %v5415
  %v5421 = vmul.f32 %v5266, %v5415
  %v5422 = vmul.f32 %v5267, %v5415
  %v5423 = vmul.f32 %v5268, %v5415
  %v5424 = vmul.f32 %v5269, %v5415
  %v5425 = vmul.f32 %v5270, %v5415
  %v5426 = vmul.f32 %v5271, %v5415
  %v5427 = vmul.f32 %v5272, %v5415
  %v5428 = vmul.f32 %v5273, %v5415
  %v5429 = vmul.f32 %v5274, %v5415
  %v5430 = vmul.f32 %v5277, %v5415
  %v5431 = vmul.f32 %v5278, %v5415
  %v5432 = vmul.f32 %v5279, %v5415
  %v5433 = vmul.f32 %v5280, %v5415
  %v5434 = vmul.f32 %v5281, %v5415
  %v5435 = vmul.f32 %v5282, %v5415
  %v5436 = vmul.f32 %v5283, %v5415
  %v5437 = vmul.f32 %v5284, %v5415
  %v5438 = vmul.f32 %v5285, %v5415
  %v5439 = vmul.f32 %v5286, %v5415
  %v5440 = vmul.f32 %v5287, %v5415
  %v5441 = vmul.f32 %v5288, %v5415
  %v5442 = vmul.f32 %v5289, %v5415
  %v5443 = vmul.f32 %v5290, %v5415
  %v5444 = vadd.f32 %v5324, %v5416
  %v5445 = vadd.f32 %v5325, %v5417
  %v5446 = vadd.f32 %v5326, %v5418
  %v5447 = vadd.f32 %v5327, %v5419
  %v5448 = vadd.f32 %v5328, %v5420
  %v5449 = vadd.f32 %v5329, %v5421
  %v5450 = vadd.f32 %v5330, %v5422
  %v5451 = vadd.f32 %v5331, %v5423
  %v5452 = vadd.f32 %v5332, %v5424
  %v5453 = vadd.f32 %v5333, %v5425
  %v5454 = vadd.f32 %v5334, %v5426
  %v5455 = vadd.f32 %v5335, %v5427
  %v5456 = vadd.f32 %v5336, %v5428
  %v5457 = vadd.f32 %v5337, %v5429
  %v5458 = vadd.f32 %v5338, %v5430
  %v5459 = vadd.f32 %v5339, %v5431
  %v5460 = vadd.f32 %v5340, %v5432
  %v5461 = vadd.f32 %v5341, %v5433
  %v5462 = vadd.f32 %v5342, %v5434
  %v5463 = vadd.f32 %v5343, %v5435
  %v5464 = vadd.f32 %v5344, %v5436
  %v5465 = vadd.f32 %v5345, %v5437
  %v5466 = vadd.f32 %v5346, %v5438
  %v5467 = vadd.f32 %v5347, %v5439
  %v5468 = vadd.f32 %v5348, %v5440
  %v5469 = vadd.f32 %v5349, %v5441
  %v5470 = vadd.f32 %v5350, %v5442
  %v5471 = vadd.f32 %v5351, %v5443
  %v5472 = vlaneseq
  %v5473 = vshrl.u32 %v5472, 7
  %v5474 = vsub.s32 5, %v5473
  %v5475 = vrot.slane %v4530, %v5474
  %v5476 = vmul.f32 %v5261, %v5475
  %v5477 = vmul.f32 %v5262, %v5475
  %v5478 = vmul.f32 %v5263, %v5475
  %v5479 = vmul.f32 %v5264, %v5475
  %v5480 = vmul.f32 %v5265, %v5475
  %v5481 = vmul.f32 %v5266, %v5475
  %v5482 = vmul.f32 %v5267, %v5475
  %v5483 = vmul.f32 %v5268, %v5475
  %v5484 = vmul.f32 %v5269, %v5475
  %v5485 = vmul.f32 %v5270, %v5475
  %v5486 = vmul.f32 %v5271, %v5475
  %v5487 = vmul.f32 %v5272, %v5475
  %v5488 = vmul.f32 %v5273, %v5475
  %v5489 = vmul.f32 %v5274, %v5475
  %v5490 = vmul.f32 %v5277, %v5475
  %v5491 = vmul.f32 %v5278, %v5475
  %v5492 = vmul.f32 %v5279, %v5475
  %v5493 = vmul.f32 %v5280, %v5475
  %v5494 = vmul.f32 %v5281, %v5475
  %v5495 = vmul.f32 %v5282, %v5475
  %v5496 = vmul.f32 %v5283, %v5475
  %v5497 = vmul.f32 %v5284, %v5475
  %v5498 = vmul.f32 %v5285, %v5475
  %v5499 = vmul.f32 %v5286, %v5475
  %v5500 = vmul.f32 %v5287, %v5475
  %v5501 = vmul.f32 %v5288, %v5475
  %v5502 = vmul.f32 %v5289, %v5475
  %v5503 = vmul.f32 %v5290, %v5475
  %v5504 = vadd.f32 %v5384, %v5476
  %v5505 = vadd.f32 %v5385, %v5477
  %v5506 = vadd.f32 %v5386, %v5478
  %v5507 = vadd.f32 %v5387, %v5479
  %v5508 = vadd.f32 %v5388, %v5480
  %v5509 = vadd.f32 %v5389, %v5481
  %v5510 = vadd.f32 %v5390, %v5482
  %v5511 = vadd.f32 %v5391, %v5483
  %v5512 = vadd.f32 %v5392, %v5484
  %v5513 = vadd.f32 %v5393, %v5485
  %v5514 = vadd.f32 %v5394, %v5486
  %v5515 = vadd.f32 %v5395, %v5487
  %v5516 = vadd.f32 %v5396, %v5488
  %v5517 = vadd.f32 %v5397, %v5489
  %v5518 = vadd.f32 %v5398, %v5490
  %v5519 = vadd.f32 %v5399, %v5491
  %v5520 = vadd.f32 %v5400, %v5492
  %v5521 = vadd.f32 %v5401, %v5493
  %v5522 = vadd.f32 %v5402, %v5494
  %v5523 = vadd.f32 %v5403, %v5495
  %v5524 = vadd.f32 %v5404, %v5496
  %v5525 = vadd.f32 %v5405, %v5497
  %v5526 = vadd.f32 %v5406, %v5498
  %v5527 = vadd.f32 %v5407, %v5499
  %v5528 = vadd.f32 %v5408, %v5500
  %v5529 = vadd.f32 %v5409, %v5501
  %v5530 = vadd.f32 %v5410, %v5502
  %v5531 = vadd.f32 %v5411, %v5503
  %v5532 = vlaneseq
  %v5533 = vshrl.u32 %v5532, 7
  %v5534 = vsub.s32 0, %v5533
  %v5535 = vrot.slane %v4529, %v5534
  %v5536 = vmul.f32 %v5262, %v5535
  %v5537 = vmul.f32 %v5263, %v5535
  %v5538 = vmul.f32 %v5264, %v5535
  %v5539 = vmul.f32 %v5265, %v5535
  %v5540 = vmul.f32 %v5266, %v5535
  %v5541 = vmul.f32 %v5267, %v5535
  %v5542 = vmul.f32 %v5268, %v5535
  %v5543 = vmul.f32 %v5269, %v5535
  %v5544 = vmul.f32 %v5270, %v5535
  %v5545 = vmul.f32 %v5271, %v5535
  %v5546 = vmul.f32 %v5272, %v5535
  %v5547 = vmul.f32 %v5273, %v5535
  %v5548 = vmul.f32 %v5274, %v5535
  %v5549 = vmul.f32 %v5275, %v5535
  %v5550 = vmul.f32 %v5278, %v5535
  %v5551 = vmul.f32 %v5279, %v5535
  %v5552 = vmul.f32 %v5280, %v5535
  %v5553 = vmul.f32 %v5281, %v5535
  %v5554 = vmul.f32 %v5282, %v5535
  %v5555 = vmul.f32 %v5283, %v5535
  %v5556 = vmul.f32 %v5284, %v5535
  %v5557 = vmul.f32 %v5285, %v5535
  %v5558 = vmul.f32 %v5286, %v5535
  %v5559 = vmul.f32 %v5287, %v5535
  %v5560 = vmul.f32 %v5288, %v5535
  %v5561 = vmul.f32 %v5289, %v5535
  %v5562 = vmul.f32 %v5290, %v5535
  %v5563 = vmul.f32 %v5291, %v5535
  %v5564 = vadd.f32 %v5444, %v5536
  %v5565 = vadd.f32 %v5445, %v5537
  %v5566 = vadd.f32 %v5446, %v5538
  %v5567 = vadd.f32 %v5447, %v5539
  %v5568 = vadd.f32 %v5448, %v5540
  %v5569 = vadd.f32 %v5449, %v5541
  %v5570 = vadd.f32 %v5450, %v5542
  %v5571 = vadd.f32 %v5451, %v5543
  %v5572 = vadd.f32 %v5452, %v5544
  %v5573 = vadd.f32 %v5453, %v5545
  %v5574 = vadd.f32 %v5454, %v5546
  %v5575 = vadd.f32 %v5455, %v5547
  %v5576 = vadd.f32 %v5456, %v5548
  %v5577 = vadd.f32 %v5457, %v5549
  %v5578 = vadd.f32 %v5458, %v5550
  %v5579 = vadd.f32 %v5459, %v5551
  %v5580 = vadd.f32 %v5460, %v5552
  %v5581 = vadd.f32 %v5461, %v5553
  %v5582 = vadd.f32 %v5462, %v5554
  %v5583 = vadd.f32 %v5463, %v5555
  %v5584 = vadd.f32 %v5464, %v5556
  %v5585 = vadd.f32 %v5465, %v5557
  %v5586 = vadd.f32 %v5466, %v5558
  %v5587 = vadd.f32 %v5467, %v5559
  %v5588 = vadd.f32 %v5468, %v5560
  %v5589 = vadd.f32 %v5469, %v5561
  %v5590 = vadd.f32 %v5470, %v5562
  %v5591 = vadd.f32 %v5471, %v5563
  %v5592 = vlaneseq
  %v5593 = vshrl.u32 %v5592, 7
  %v5594 = vsub.s32 0, %v5593
  %v5595 = vrot.slane %v4531, %v5594
  %v5596 = vmul.f32 %v5262, %v5595
  %v5597 = vmul.f32 %v5263, %v5595
  %v5598 = vmul.f32 %v5264, %v5595
  %v5599 = vmul.f32 %v5265, %v5595
  %v5600 = vmul.f32 %v5266, %v5595
  %v5601 = vmul.f32 %v5267, %v5595
  %v5602 = vmul.f32 %v5268, %v5595
  %v5603 = vmul.f32 %v5269, %v5595
  %v5604 = vmul.f32 %v5270, %v5595
  %v5605 = vmul.f32 %v5271, %v5595
  %v5606 = vmul.f32 %v5272, %v5595
  %v5607 = vmul.f32 %v5273, %v5595
  %v5608 = vmul.f32 %v5274, %v5595
  %v5609 = vmul.f32 %v5275, %v5595
  %v5610 = vmul.f32 %v5278, %v5595
  %v5611 = vmul.f32 %v5279, %v5595
  %v5612 = vmul.f32 %v5280, %v5595
  %v5613 = vmul.f32 %v5281, %v5595
  %v5614 = vmul.f32 %v5282, %v5595
  %v5615 = vmul.f32 %v5283, %v5595
  %v5616 = vmul.f32 %v5284, %v5595
  %v5617 = vmul.f32 %v5285, %v5595
  %v5618 = vmul.f32 %v5286, %v5595
  %v5619 = vmul.f32 %v5287, %v5595
  %v5620 = vmul.f32 %v5288, %v5595
  %v5621 = vmul.f32 %v5289, %v5595
  %v5622 = vmul.f32 %v5290, %v5595
  %v5623 = vmul.f32 %v5291, %v5595
  %v5624 = vadd.f32 %v5504, %v5596
  %v5625 = vadd.f32 %v5505, %v5597
  %v5626 = vadd.f32 %v5506, %v5598
  %v5627 = vadd.f32 %v5507, %v5599
  %v5628 = vadd.f32 %v5508, %v5600
  %v5629 = vadd.f32 %v5509, %v5601
  %v5630 = vadd.f32 %v5510, %v5602
  %v5631 = vadd.f32 %v5511, %v5603
  %v5632 = vadd.f32 %v5512, %v5604
  %v5633 = vadd.f32 %v5513, %v5605
  %v5634 = vadd.f32 %v5514, %v5606
  %v5635 = vadd.f32 %v5515, %v5607
  %v5636 = vadd.f32 %v5516, %v5608
  %v5637 = vadd.f32 %v5517, %v5609
  %v5638 = vadd.f32 %v5518, %v5610
  %v5639 = vadd.f32 %v5519, %v5611
  %v5640 = vadd.f32 %v5520, %v5612
  %v5641 = vadd.f32 %v5521, %v5613
  %v5642 = vadd.f32 %v5522, %v5614
  %v5643 = vadd.f32 %v5523, %v5615
  %v5644 = vadd.f32 %v5524, %v5616
  %v5645 = vadd.f32 %v5525, %v5617
  %v5646 = vadd.f32 %v5526, %v5618
  %v5647 = vadd.f32 %v5527, %v5619
  %v5648 = vadd.f32 %v5528, %v5620
  %v5649 = vadd.f32 %v5529, %v5621
  %v5650 = vadd.f32 %v5530, %v5622
  %v5651 = vadd.f32 %v5531, %v5623
  %v5652 = vlaneseq
  %v5653 = vand.u32 %v5652, 127
  %vm5654 = vcmp.lt.s32.totalorder %v5653, 0
  %v5655 = vsub.s32 0, %v5653
  %v5656 = vsel %vm5654, %v5655, %v5653
  %v5657 = vshrl.u32 %v5656, 1
  %v5658 = vand.u32 %v5656, 1
  %v5659 = vsub.s32 0, %v5658
  %v5660 = vsel %vm5654, %v5659, %v5658
  %vm5661 = vcmp.ne.s32.totalorder %v5660, 0
  %vm5662 = vcmp.lt.s32.totalorder %v5660, 0
  %vm5663 = vmand %vm5662, %vm5661
  %v5664 = vadd.s32 %v5660, 2
  %v5665 = vsel %vm5663, %v5664, %v5660
  %vm5666 = vcmp.eq.s32.totalorder %v5665, 0
  %5667 = vrot.lane.b32.xlu0 %v5624, 127
  %v5668 = vpop.permute.xlu0 %5667
  %5669 = vrot.lane.b32.xlu0 %v5625, 127
  %v5670 = vpop.permute.xlu0 %5669
  %5671 = vrot.lane.b32.xlu0 %v5626, 127
  %v5672 = vpop.permute.xlu0 %5671
  %5673 = vrot.lane.b32.xlu0 %v5627, 127
  %v5674 = vpop.permute.xlu0 %5673
  %5675 = vrot.lane.b32.xlu0 %v5628, 127
  %v5676 = vpop.permute.xlu0 %5675
  %5677 = vrot.lane.b32.xlu0 %v5629, 127
  %v5678 = vpop.permute.xlu0 %5677
  %5679 = vrot.lane.b32.xlu0 %v5630, 127
  %v5680 = vpop.permute.xlu0 %5679
  %5681 = vrot.lane.b32.xlu0 %v5631, 127
  %v5682 = vpop.permute.xlu0 %5681
  %5683 = vrot.lane.b32.xlu0 %v5632, 127
  %v5684 = vpop.permute.xlu0 %5683
  %5685 = vrot.lane.b32.xlu0 %v5633, 127
  %v5686 = vpop.permute.xlu0 %5685
  %5687 = vrot.lane.b32.xlu0 %v5634, 127
  %v5688 = vpop.permute.xlu0 %5687
  %5689 = vrot.lane.b32.xlu0 %v5635, 127
  %v5690 = vpop.permute.xlu0 %5689
  %5691 = vrot.lane.b32.xlu0 %v5636, 127
  %v5692 = vpop.permute.xlu0 %5691
  %5693 = vrot.lane.b32.xlu0 %v5637, 127
  %v5694 = vpop.permute.xlu0 %5693
  %5695 = vrot.lane.b32.xlu0 %v5638, 127
  %v5696 = vpop.permute.xlu0 %5695
  %5697 = vrot.lane.b32.xlu0 %v5639, 127
  %v5698 = vpop.permute.xlu0 %5697
  %5699 = vrot.lane.b32.xlu0 %v5640, 127
  %v5700 = vpop.permute.xlu0 %5699
  %5701 = vrot.lane.b32.xlu0 %v5641, 127
  %v5702 = vpop.permute.xlu0 %5701
  %5703 = vrot.lane.b32.xlu0 %v5642, 127
  %v5704 = vpop.permute.xlu0 %5703
  %5705 = vrot.lane.b32.xlu0 %v5643, 127
  %v5706 = vpop.permute.xlu0 %5705
  %5707 = vrot.lane.b32.xlu0 %v5644, 127
  %v5708 = vpop.permute.xlu0 %5707
  %5709 = vrot.lane.b32.xlu0 %v5645, 127
  %v5710 = vpop.permute.xlu0 %5709
  %5711 = vrot.lane.b32.xlu0 %v5646, 127
  %v5712 = vpop.permute.xlu0 %5711
  %5713 = vrot.lane.b32.xlu0 %v5647, 127
  %v5714 = vpop.permute.xlu0 %5713
  %5715 = vrot.lane.b32.xlu0 %v5648, 127
  %v5716 = vpop.permute.xlu0 %5715
  %5717 = vrot.lane.b32.xlu0 %v5649, 127
  %v5718 = vpop.permute.xlu0 %5717
  %5719 = vrot.lane.b32.xlu0 %v5650, 127
  %v5720 = vpop.permute.xlu0 %5719
  %5721 = vrot.lane.b32.xlu0 %v5651, 127
  %v5722 = vpop.permute.xlu0 %5721
  %5723 = vrot.lane.b32.xlu0 %v5624, 1
  %v5724 = vpop.permute.xlu0 %5723
  %5725 = vrot.lane.b32.xlu0 %v5625, 1
  %v5726 = vpop.permute.xlu0 %5725
  %5727 = vrot.lane.b32.xlu0 %v5626, 1
  %v5728 = vpop.permute.xlu0 %5727
  %5729 = vrot.lane.b32.xlu0 %v5627, 1
  %v5730 = vpop.permute.xlu0 %5729
  %5731 = vrot.lane.b32.xlu0 %v5628, 1
  %v5732 = vpop.permute.xlu0 %5731
  %5733 = vrot.lane.b32.xlu0 %v5629, 1
  %v5734 = vpop.permute.xlu0 %5733
  %5735 = vrot.lane.b32.xlu0 %v5630, 1
  %v5736 = vpop.permute.xlu0 %5735
  %5737 = vrot.lane.b32.xlu0 %v5631, 1
  %v5738 = vpop.permute.xlu0 %5737
  %5739 = vrot.lane.b32.xlu0 %v5632, 1
  %v5740 = vpop.permute.xlu0 %5739
  %5741 = vrot.lane.b32.xlu0 %v5633, 1
  %v5742 = vpop.permute.xlu0 %5741
  %5743 = vrot.lane.b32.xlu0 %v5634, 1
  %v5744 = vpop.permute.xlu0 %5743
  %5745 = vrot.lane.b32.xlu0 %v5635, 1
  %v5746 = vpop.permute.xlu0 %5745
  %5747 = vrot.lane.b32.xlu0 %v5636, 1
  %v5748 = vpop.permute.xlu0 %5747
  %5749 = vrot.lane.b32.xlu0 %v5637, 1
  %v5750 = vpop.permute.xlu0 %5749
  %5751 = vrot.lane.b32.xlu0 %v5638, 1
  %v5752 = vpop.permute.xlu0 %5751
  %5753 = vrot.lane.b32.xlu0 %v5639, 1
  %v5754 = vpop.permute.xlu0 %5753
  %5755 = vrot.lane.b32.xlu0 %v5640, 1
  %v5756 = vpop.permute.xlu0 %5755
  %5757 = vrot.lane.b32.xlu0 %v5641, 1
  %v5758 = vpop.permute.xlu0 %5757
  %5759 = vrot.lane.b32.xlu0 %v5642, 1
  %v5760 = vpop.permute.xlu0 %5759
  %5761 = vrot.lane.b32.xlu0 %v5643, 1
  %v5762 = vpop.permute.xlu0 %5761
  %5763 = vrot.lane.b32.xlu0 %v5644, 1
  %v5764 = vpop.permute.xlu0 %5763
  %5765 = vrot.lane.b32.xlu0 %v5645, 1
  %v5766 = vpop.permute.xlu0 %5765
  %5767 = vrot.lane.b32.xlu0 %v5646, 1
  %v5768 = vpop.permute.xlu0 %5767
  %5769 = vrot.lane.b32.xlu0 %v5647, 1
  %v5770 = vpop.permute.xlu0 %5769
  %5771 = vrot.lane.b32.xlu0 %v5648, 1
  %v5772 = vpop.permute.xlu0 %5771
  %5773 = vrot.lane.b32.xlu0 %v5649, 1
  %v5774 = vpop.permute.xlu0 %5773
  %5775 = vrot.lane.b32.xlu0 %v5650, 1
  %v5776 = vpop.permute.xlu0 %5775
  %5777 = vrot.lane.b32.xlu0 %v5651, 1
  %v5778 = vpop.permute.xlu0 %5777
  %v5779 = vsel %vm5666, %v5668, %v5724
  %v5780 = vsel %vm5666, %v5670, %v5726
  %v5781 = vsel %vm5666, %v5672, %v5728
  %v5782 = vsel %vm5666, %v5674, %v5730
  %v5783 = vsel %vm5666, %v5676, %v5732
  %v5784 = vsel %vm5666, %v5678, %v5734
  %v5785 = vsel %vm5666, %v5680, %v5736
  %v5786 = vsel %vm5666, %v5682, %v5738
  %v5787 = vsel %vm5666, %v5684, %v5740
  %v5788 = vsel %vm5666, %v5686, %v5742
  %v5789 = vsel %vm5666, %v5688, %v5744
  %v5790 = vsel %vm5666, %v5690, %v5746
  %v5791 = vsel %vm5666, %v5692, %v5748
  %v5792 = vsel %vm5666, %v5694, %v5750
  %v5793 = vsel %vm5666, %v5696, %v5752
  %v5794 = vsel %vm5666, %v5698, %v5754
  %v5795 = vsel %vm5666, %v5700, %v5756
  %v5796 = vsel %vm5666, %v5702, %v5758
  %v5797 = vsel %vm5666, %v5704, %v5760
  %v5798 = vsel %vm5666, %v5706, %v5762
  %v5799 = vsel %vm5666, %v5708, %v5764
  %v5800 = vsel %vm5666, %v5710, %v5766
  %v5801 = vsel %vm5666, %v5712, %v5768
  %v5802 = vsel %vm5666, %v5714, %v5770
  %v5803 = vsel %vm5666, %v5716, %v5772
  %v5804 = vsel %vm5666, %v5718, %v5774
  %v5805 = vsel %vm5666, %v5720, %v5776
  %v5806 = vsel %vm5666, %v5722, %v5778
  %v5807 = vadd.f32 %v5564, %v5779
  %v5808 = vadd.f32 %v5565, %v5780
  %v5809 = vadd.f32 %v5566, %v5781
  %v5810 = vadd.f32 %v5567, %v5782
  %v5811 = vadd.f32 %v5568, %v5783
  %v5812 = vadd.f32 %v5569, %v5784
  %v5813 = vadd.f32 %v5570, %v5785
  %v5814 = vadd.f32 %v5571, %v5786
  %v5815 = vadd.f32 %v5572, %v5787
  %v5816 = vadd.f32 %v5573, %v5788
  %v5817 = vadd.f32 %v5574, %v5789
  %v5818 = vadd.f32 %v5575, %v5790
  %v5819 = vadd.f32 %v5576, %v5791
  %v5820 = vadd.f32 %v5577, %v5792
  %v5821 = vadd.f32 %v5578, %v5793
  %v5822 = vadd.f32 %v5579, %v5794
  %v5823 = vadd.f32 %v5580, %v5795
  %v5824 = vadd.f32 %v5581, %v5796
  %v5825 = vadd.f32 %v5582, %v5797
  %v5826 = vadd.f32 %v5583, %v5798
  %v5827 = vadd.f32 %v5584, %v5799
  %v5828 = vadd.f32 %v5585, %v5800
  %v5829 = vadd.f32 %v5586, %v5801
  %v5830 = vadd.f32 %v5587, %v5802
  %v5831 = vadd.f32 %v5588, %v5803
  %v5832 = vadd.f32 %v5589, %v5804
  %v5833 = vadd.f32 %v5590, %v5805
  %v5834 = vadd.f32 %v5591, %v5806
  %v5835 = vld [vmem:[%s16] sm:$0x1]
  %v5837 = vlaneseq
  %v5838 = vshrl.u32 %v5837, 7
  %v5839 = vsub.s32 0, %v5838
  %v5840 = vrot.slane %v5835, %v5839
  %v5842 = vadd.f32 %v5807, %v5840
  %v5843 = vadd.f32 %v5808, %v5840
  %v5844 = vadd.f32 %v5809, %v5840
  %v5845 = vadd.f32 %v5810, %v5840
  %v5846 = vadd.f32 %v5811, %v5840
  %v5847 = vadd.f32 %v5812, %v5840
  %v5848 = vadd.f32 %v5813, %v5840
  %v5849 = vadd.f32 %v5814, %v5840
  %v5850 = vadd.f32 %v5815, %v5840
  %v5851 = vadd.f32 %v5816, %v5840
  %v5852 = vadd.f32 %v5817, %v5840
  %v5853 = vadd.f32 %v5818, %v5840
  %v5854 = vadd.f32 %v5819, %v5840
  %v5855 = vadd.f32 %v5820, %v5840
  %v5856 = vadd.f32 %v5821, %v5840
  %v5857 = vadd.f32 %v5822, %v5840
  %v5858 = vadd.f32 %v5823, %v5840
  %v5859 = vadd.f32 %v5824, %v5840
  %v5860 = vadd.f32 %v5825, %v5840
  %v5861 = vadd.f32 %v5826, %v5840
  %v5862 = vadd.f32 %v5827, %v5840
  %v5863 = vadd.f32 %v5828, %v5840
  %v5864 = vadd.f32 %v5829, %v5840
  %v5865 = vadd.f32 %v5830, %v5840
  %v5866 = vadd.f32 %v5831, %v5840
  %v5867 = vadd.f32 %v5832, %v5840
  %v5868 = vadd.f32 %v5833, %v5840
  %v5869 = vadd.f32 %v5834, %v5840
  %v5870 = vmax.f32 %v5842, 0.0
  %v5871 = vmax.f32 %v5843, 0.0
  %v5872 = vmax.f32 %v5844, 0.0
  %v5873 = vmax.f32 %v5845, 0.0
  %v5874 = vmax.f32 %v5846, 0.0
  %v5875 = vmax.f32 %v5847, 0.0
  %v5876 = vmax.f32 %v5848, 0.0
  %v5877 = vmax.f32 %v5849, 0.0
  %v5878 = vmax.f32 %v5850, 0.0
  %v5879 = vmax.f32 %v5851, 0.0
  %v5880 = vmax.f32 %v5852, 0.0
  %v5881 = vmax.f32 %v5853, 0.0
  %v5882 = vmax.f32 %v5854, 0.0
  %v5883 = vmax.f32 %v5855, 0.0
  %v5884 = vmax.f32 %v5856, 0.0
  %v5885 = vmax.f32 %v5857, 0.0
  %v5886 = vmax.f32 %v5858, 0.0
  %v5887 = vmax.f32 %v5859, 0.0
  %v5888 = vmax.f32 %v5860, 0.0
  %v5889 = vmax.f32 %v5861, 0.0
  %v5890 = vmax.f32 %v5862, 0.0
  %v5891 = vmax.f32 %v5863, 0.0
  %v5892 = vmax.f32 %v5864, 0.0
  %v5893 = vmax.f32 %v5865, 0.0
  %v5894 = vmax.f32 %v5866, 0.0
  %v5895 = vmax.f32 %v5867, 0.0
  %v5896 = vmax.f32 %v5868, 0.0
  %v5897 = vmax.f32 %v5869, 0.0
  %v5898 = vpack.c.bf16 %v5871, %v5870
  %v5899 = vpack.c.bf16 %v5873, %v5872
  %v5900 = vpack.c.bf16 %v5875, %v5874
  %v5901 = vpack.c.bf16 %v5877, %v5876
  %v5902 = vpack.c.bf16 %v5879, %v5878
  %v5903 = vpack.c.bf16 %v5881, %v5880
  %v5904 = vpack.c.bf16 %v5883, %v5882
  %v5905 = vpack.c.bf16 %v5885, %v5884
  %v5906 = vpack.c.bf16 %v5887, %v5886
  %v5907 = vpack.c.bf16 %v5889, %v5888
  %v5908 = vpack.c.bf16 %v5891, %v5890
  %v5909 = vpack.c.bf16 %v5893, %v5892
  %v5910 = vpack.c.bf16 %v5895, %v5894
  %v5911 = vpack.c.bf16 %v5897, %v5896
  %v5912 = vld [vmem:[%s17] sm:$0xf]
  %v5913 = vld [vmem:[%s17 + $0x4] sm:$0xf]
  %v5914 = vld [vmem:[%s17 + $0x8] sm:$0xf]
  %v5915 = vld [vmem:[%s17 + $0xc] sm:$0xf]
  %v5916 = vld [vmem:[%s17 + $0x10] sm:$0xf]
  %v5917 = vld [vmem:[%s17 + $0x14] sm:$0xf]
  %v5918 = vld [vmem:[%s17 + $0x18] sm:$0xf]
  %v5919 = vld [vmem:[%s17 + $0x1c] sm:$0xf]
  %v5920 = vld [vmem:[%s17 + $0x20] sm:$0xf]
  %v5921 = vld [vmem:[%s17 + $0x24] sm:$0xf]
  %v5922 = vld [vmem:[%s17 + $0x28] sm:$0xf]
  %v5923 = vld [vmem:[%s17 + $0x2c] sm:$0xf]
  %v5924 = vld [vmem:[%s17 + $0x30] sm:$0xf]
  %v5925 = vld [vmem:[%s17 + $0x34] sm:$0xf]
  %v5926 = vld [vmem:[%s17 + $0x38] sm:$0xf]
  %v5927 = vld [vmem:[%s17 + $0x3c] sm:$0xf]
  %v5928 = vld [vmem:[%s18] sm:$0x1]
  %v5930 = vlaneseq
  %v5931 = vshrl.u32 %v5930, 7
  %v5932 = vsub.s32 0, %v5931
  %v5933 = vrot.slane %v5928, %v5932
  %v5951 = vunpack.c.l.b16 %v5912
  %v5952 = vunpack.c.l.b16 %v5913
  %v5953 = vunpack.c.l.b16 %v5914
  %v5954 = vunpack.c.l.b16 %v5915
  %v5955 = vunpack.c.l.b16 %v5916
  %v5956 = vunpack.c.l.b16 %v5917
  %v5957 = vunpack.c.l.b16 %v5918
  %v5958 = vunpack.c.l.b16 %v5919
  %v5959 = vunpack.c.l.b16 %v5920
  %v5960 = vunpack.c.l.b16 %v5921
  %v5961 = vunpack.c.l.b16 %v5922
  %v5962 = vunpack.c.l.b16 %v5923
  %v5963 = vunpack.c.l.b16 %v5924
  %v5964 = vunpack.c.l.b16 %v5925
  %v5965 = vunpack.c.l.b16 %v5926
  %v5966 = vunpack.c.l.b16 %v5927
  %v5967 = vpack.c.b16 %v5952, %v5951
  %v5968 = vpack.c.b16 %v5954, %v5953
  %v5969 = vpack.c.b16 %v5956, %v5955
  %v5970 = vpack.c.b16 %v5958, %v5957
  %v5971 = vpack.c.b16 %v5960, %v5959
  %v5972 = vpack.c.b16 %v5962, %v5961
  %v5973 = vpack.c.b16 %v5964, %v5963
  %v5974 = vpack.c.b16 %v5966, %v5965
  %5983 = vmatprep.subr.bf16.mxu0 0
  %5984 = vmatpush1.bf16.msra.mxu0 %v5967
  %5985 = vmatprep.subr.bf16.mxu0 0
  %5986 = vmatpush1.bf16.msra.mxu0 %v5968
  %5987 = vmatprep.subr.bf16.mxu0 0
  %5988 = vmatpush1.bf16.msra.mxu0 %v5969
  %5989 = vmatprep.subr.bf16.mxu0 0
  %5990 = vmatpush1.bf16.msra.mxu0 %v5970
  %5991 = vmatprep.subr.bf16.mxu0 0
  %5992 = vmatpush1.bf16.msra.mxu0 %v5971
  %5993 = vmatprep.subr.bf16.mxu0 0
  %5994 = vmatpush1.bf16.msra.mxu0 %v5972
  %5995 = vmatprep.subr.bf16.mxu0 0
  %5996 = vmatpush1.bf16.msra.mxu0 %v5973
  %5997 = vmatprep.subr.bf16.mxu0 0
  %5998 = vmatpush1.bf16.msra.mxu0 %v5974
  %5999 = vmatprep.subr.bf16.mxu0 0
  %6000 = vmatpush1.bf16.msra.mxu0 0
  %6001 = vmatprep.subr.bf16.mxu0 0
  %6002 = vmatpush1.bf16.msra.mxu0 0
  %6003 = vmatprep.subr.bf16.mxu0 0
  %6004 = vmatpush1.bf16.msra.mxu0 0
  %6005 = vmatprep.subr.bf16.mxu0 0
  %6006 = vmatpush1.bf16.msra.mxu0 0
  %6007 = vmatprep.subr.bf16.mxu0 0
  %6008 = vmatpush1.bf16.msra.mxu0 0
  %6009 = vmatprep.subr.bf16.mxu0 0
  %6010 = vmatpush1.bf16.msra.mxu0 0
  %6011 = vmatprep.subr.bf16.mxu0 0
  %6012 = vmatpush1.bf16.msra.mxu0 0
  %6013 = vmatprep.subr.bf16.mxu0 0
  %6014 = vmatpush1.bf16.msra.mxu0 0
  %6015 = vmatprep.mubr.bf16.mxu0 0
  %6016 = vmatmul.mubr.bf16.gmra.mrb[0].mxu0 %v5898
  %v6017 = vpop.f32.mrb[0].mxu0
  %v6018 = vadd.f32 %v5933, %v6017
  %v6019 = vpop.f32.mrb[0].mxu0
  %v6020 = vpop.f32.mrb[0].mxu0
  %v6021 = vadd.f32 %v5933, %v6020
  %v6022 = vpop.f32.mrb[0].mxu0
  %6023 = vmatprep.mubr.bf16.mxu0 0
  %6024 = vmatmul.mubr.bf16.gmra.mrb[0].mxu0 %v5899
  %v6025 = vpop.f32.mrb[0].mxu0
  %v6026 = vadd.f32 %v5933, %v6025
  %v6027 = vpop.f32.mrb[0].mxu0
  %v6028 = vpop.f32.mrb[0].mxu0
  %v6029 = vadd.f32 %v5933, %v6028
  %v6030 = vpop.f32.mrb[0].mxu0
  %6031 = vmatprep.mubr.bf16.mxu0 0
  %6032 = vmatmul.mubr.bf16.gmra.mrb[0].mxu0 %v5900
  %v6033 = vpop.f32.mrb[0].mxu0
  %v6034 = vadd.f32 %v5933, %v6033
  %v6035 = vpop.f32.mrb[0].mxu0
  %v6036 = vpop.f32.mrb[0].mxu0
  %v6037 = vadd.f32 %v5933, %v6036
  %v6038 = vpop.f32.mrb[0].mxu0
  %6039 = vmatprep.mubr.bf16.mxu0 0
  %6040 = vmatmul.mubr.bf16.gmra.mrb[0].mxu0 %v5901
  %v6041 = vpop.f32.mrb[0].mxu0
  %v6042 = vadd.f32 %v5933, %v6041
  %v6043 = vpop.f32.mrb[0].mxu0
  %v6044 = vpop.f32.mrb[0].mxu0
  %v6045 = vadd.f32 %v5933, %v6044
  %v6046 = vpop.f32.mrb[0].mxu0
  %6047 = vmatprep.mubr.bf16.mxu0 0
  %6048 = vmatmul.mubr.bf16.gmra.mrb[0].mxu0 %v5902
  %v6049 = vpop.f32.mrb[0].mxu0
  %v6050 = vadd.f32 %v5933, %v6049
  %v6051 = vpop.f32.mrb[0].mxu0
  %v6052 = vpop.f32.mrb[0].mxu0
  %v6053 = vadd.f32 %v5933, %v6052
  %v6054 = vpop.f32.mrb[0].mxu0
  %6055 = vmatprep.mubr.bf16.mxu0 0
  %6056 = vmatmul.mubr.bf16.gmra.mrb[0].mxu0 %v5903
  %v6057 = vpop.f32.mrb[0].mxu0
  %v6058 = vadd.f32 %v5933, %v6057
  %v6059 = vpop.f32.mrb[0].mxu0
  %v6060 = vpop.f32.mrb[0].mxu0
  %v6061 = vadd.f32 %v5933, %v6060
  %v6062 = vpop.f32.mrb[0].mxu0
  %6063 = vmatprep.mubr.bf16.mxu0 0
  %6064 = vmatmul.mubr.bf16.gmra.mrb[0].mxu0 %v5904
  %v6065 = vpop.f32.mrb[0].mxu0
  %v6066 = vadd.f32 %v5933, %v6065
  %v6067 = vpop.f32.mrb[0].mxu0
  %v6068 = vpop.f32.mrb[0].mxu0
  %v6069 = vadd.f32 %v5933, %v6068
  %v6070 = vpop.f32.mrb[0].mxu0
  %6071 = vmatprep.mubr.bf16.mxu0 0
  %6072 = vmatmul.mubr.bf16.gmra.mrb[0].mxu0 %v5905
  %v6073 = vpop.f32.mrb[0].mxu0
  %v6074 = vadd.f32 %v5933, %v6073
  %v6075 = vpop.f32.mrb[0].mxu0
  %v6076 = vpop.f32.mrb[0].mxu0
  %v6077 = vadd.f32 %v5933, %v6076
  %v6078 = vpop.f32.mrb[0].mxu0
  %6079 = vmatprep.mubr.bf16.mxu0 0
  %6080 = vmatmul.mubr.bf16.gmra.mrb[0].mxu0 %v5906
  %v6081 = vpop.f32.mrb[0].mxu0
  %v6082 = vadd.f32 %v5933, %v6081
  %v6083 = vpop.f32.mrb[0].mxu0
  %v6084 = vpop.f32.mrb[0].mxu0
  %v6085 = vadd.f32 %v5933, %v6084
  %v6086 = vpop.f32.mrb[0].mxu0
  %6087 = vmatprep.mubr.bf16.mxu0 0
  %6088 = vmatmul.mubr.bf16.gmra.mrb[0].mxu0 %v5907
  %v6089 = vpop.f32.mrb[0].mxu0
  %v6090 = vadd.f32 %v5933, %v6089
  %v6091 = vpop.f32.mrb[0].mxu0
  %v6092 = vpop.f32.mrb[0].mxu0
  %v6093 = vadd.f32 %v5933, %v6092
  %v6094 = vpop.f32.mrb[0].mxu0
  %6095 = vmatprep.mubr.bf16.mxu0 0
  %6096 = vmatmul.mubr.bf16.gmra.mrb[0].mxu0 %v5908
  %v6097 = vpop.f32.mrb[0].mxu0
  %v6098 = vadd.f32 %v5933, %v6097
  %v6099 = vpop.f32.mrb[0].mxu0
  %v6100 = vpop.f32.mrb[0].mxu0
  %v6101 = vadd.f32 %v5933, %v6100
  %v6102 = vpop.f32.mrb[0].mxu0
  %6103 = vmatprep.mubr.bf16.mxu0 0
  %6104 = vmatmul.mubr.bf16.gmra.mrb[0].mxu0 %v5909
  %v6105 = vpop.f32.mrb[0].mxu0
  %v6106 = vadd.f32 %v5933, %v6105
  %v6107 = vpop.f32.mrb[0].mxu0
  %v6108 = vpop.f32.mrb[0].mxu0
  %v6109 = vadd.f32 %v5933, %v6108
  %v6110 = vpop.f32.mrb[0].mxu0
  %6111 = vmatprep.mubr.bf16.mxu0 0
  %6112 = vmatmul.mubr.bf16.gmra.mrb[0].mxu0 %v5910
  %v6113 = vpop.f32.mrb[0].mxu0
  %v6114 = vadd.f32 %v5933, %v6113
  %v6115 = vpop.f32.mrb[0].mxu0
  %v6116 = vpop.f32.mrb[0].mxu0
  %v6117 = vadd.f32 %v5933, %v6116
  %v6118 = vpop.f32.mrb[0].mxu0
  %6119 = vmatprep.mubr.bf16.mxu0 0
  %6120 = vmatmul.mubr.bf16.gmra.mrb[0].mxu0 %v5911
  %v6121 = vpop.f32.mrb[0].mxu0
  %v6122 = vadd.f32 %v5933, %v6121
  %v6123 = vpop.f32.mrb[0].mxu0
  %v6124 = vpop.f32.mrb[0].mxu0
  %v6125 = vadd.f32 %v5933, %v6124
  %v6126 = vpop.f32.mrb[0].mxu0
  %6127 = vdwg.mxu0
  %v6128 = vld [vmem:[%s19] sm:$0xf]
  %v6129 = vld [vmem:[%s19 + $0x4] sm:$0xf]
  %v6130 = vld [vmem:[%s19 + $0x8] sm:$0xf]
  %v6131 = vld [vmem:[%s19 + $0xc] sm:$0xf]
  %v6132 = vld [vmem:[%s19 + $0x10] sm:$0xf]
  %v6133 = vld [vmem:[%s19 + $0x14] sm:$0xf]
  %v6134 = vld [vmem:[%s19 + $0x18] sm:$0xf]
  %v6135 = vld [vmem:[%s19 + $0x1c] sm:$0xf]
  %v6144 = vunpack.c.l.b16 %v6128
  %v6145 = vunpack.c.l.b16 %v6129
  %v6146 = vunpack.c.l.b16 %v6130
  %v6147 = vunpack.c.l.b16 %v6131
  %v6148 = vunpack.c.l.b16 %v6132
  %v6149 = vunpack.c.l.b16 %v6133
  %v6150 = vunpack.c.l.b16 %v6134
  %v6151 = vunpack.c.l.b16 %v6135
  %v6152 = vpack.c.b16 %v6145, %v6144
  %v6153 = vpack.c.b16 %v6147, %v6146
  %v6154 = vpack.c.b16 %v6149, %v6148
  %v6155 = vpack.c.b16 %v6151, %v6150
  %6160 = vmatprep.subr.bf16.mxu0 0
  %6161 = vmatpush1.bf16.msra.mxu0 %v6152
  %6162 = vmatprep.subr.bf16.mxu0 0
  %6163 = vmatpush1.bf16.msra.mxu0 %v6153
  %6164 = vmatprep.subr.bf16.mxu0 0
  %6165 = vmatpush1.bf16.msra.mxu0 %v6154
  %6166 = vmatprep.subr.bf16.mxu0 0
  %6167 = vmatpush1.bf16.msra.mxu0 %v6155
  %6168 = vmatprep.subr.bf16.mxu0 0
  %6169 = vmatpush1.bf16.msra.mxu0 0
  %6170 = vmatprep.subr.bf16.mxu0 0
  %6171 = vmatpush1.bf16.msra.mxu0 0
  %6172 = vmatprep.subr.bf16.mxu0 0
  %6173 = vmatpush1.bf16.msra.mxu0 0
  %6174 = vmatprep.subr.bf16.mxu0 0
  %6175 = vmatpush1.bf16.msra.mxu0 0
  %6176 = vmatprep.subr.bf16.mxu0 0
  %6177 = vmatpush1.bf16.msra.mxu0 0
  %6178 = vmatprep.subr.bf16.mxu0 0
  %6179 = vmatpush1.bf16.msra.mxu0 0
  %6180 = vmatprep.subr.bf16.mxu0 0
  %6181 = vmatpush1.bf16.msra.mxu0 0
  %6182 = vmatprep.subr.bf16.mxu0 0
  %6183 = vmatpush1.bf16.msra.mxu0 0
  %6184 = vmatprep.subr.bf16.mxu0 0
  %6185 = vmatpush1.bf16.msra.mxu0 0
  %6186 = vmatprep.subr.bf16.mxu0 0
  %6187 = vmatpush1.bf16.msra.mxu0 0
  %6188 = vmatprep.subr.bf16.mxu0 0
  %6189 = vmatpush1.bf16.msra.mxu0 0
  %6190 = vmatprep.subr.bf16.mxu0 0
  %6191 = vmatpush1.bf16.msra.mxu0 0
  %6192 = vmatprep.mubr.bf16.mxu0 0
  %6193 = vmatmul.mubr.bf16.gmra.mrb[0].mxu0 %v4212
  %v6194 = vpop.f32.mrb[0].mxu0
  %v6195 = vadd.f32 0.0, %v6194
  %v6196 = vpop.f32.mrb[0].mxu0
  %v6197 = vpop.f32.mrb[0].mxu0
  %v6198 = vadd.f32 0.0, %v6197
  %v6199 = vpop.f32.mrb[0].mxu0
  %6200 = vmatprep.mubr.bf16.mxu0 0
  %6201 = vmatmul.mubr.bf16.gmra.mrb[0].mxu0 %v4215
  %v6202 = vpop.f32.mrb[0].mxu0
  %v6203 = vadd.f32 0.0, %v6202
  %v6204 = vpop.f32.mrb[0].mxu0
  %v6205 = vpop.f32.mrb[0].mxu0
  %v6206 = vadd.f32 0.0, %v6205
  %v6207 = vpop.f32.mrb[0].mxu0
  %6208 = vmatprep.mubr.bf16.mxu0 0
  %6209 = vmatmul.mubr.bf16.gmra.mrb[0].mxu0 %v4218
  %v6210 = vpop.f32.mrb[0].mxu0
  %v6211 = vadd.f32 0.0, %v6210
  %v6212 = vpop.f32.mrb[0].mxu0
  %v6213 = vpop.f32.mrb[0].mxu0
  %v6214 = vadd.f32 0.0, %v6213
  %v6215 = vpop.f32.mrb[0].mxu0
  %6216 = vmatprep.mubr.bf16.mxu0 0
  %6217 = vmatmul.mubr.bf16.gmra.mrb[0].mxu0 %v4221
  %v6218 = vpop.f32.mrb[0].mxu0
  %v6219 = vadd.f32 0.0, %v6218
  %v6220 = vpop.f32.mrb[0].mxu0
  %v6221 = vpop.f32.mrb[0].mxu0
  %v6222 = vadd.f32 0.0, %v6221
  %v6223 = vpop.f32.mrb[0].mxu0
  %6224 = vmatprep.mubr.bf16.mxu0 0
  %6225 = vmatmul.mubr.bf16.gmra.mrb[0].mxu0 %v4224
  %v6226 = vpop.f32.mrb[0].mxu0
  %v6227 = vadd.f32 0.0, %v6226
  %v6228 = vpop.f32.mrb[0].mxu0
  %v6229 = vpop.f32.mrb[0].mxu0
  %v6230 = vadd.f32 0.0, %v6229
  %v6231 = vpop.f32.mrb[0].mxu0
  %6232 = vmatprep.mubr.bf16.mxu0 0
  %6233 = vmatmul.mubr.bf16.gmra.mrb[0].mxu0 %v4227
  %v6234 = vpop.f32.mrb[0].mxu0
  %v6235 = vadd.f32 0.0, %v6234
  %v6236 = vpop.f32.mrb[0].mxu0
  %v6237 = vpop.f32.mrb[0].mxu0
  %v6238 = vadd.f32 0.0, %v6237
  %v6239 = vpop.f32.mrb[0].mxu0
  %6240 = vmatprep.mubr.bf16.mxu0 0
  %6241 = vmatmul.mubr.bf16.gmra.mrb[0].mxu0 %v4230
  %v6242 = vpop.f32.mrb[0].mxu0
  %v6243 = vadd.f32 0.0, %v6242
  %v6244 = vpop.f32.mrb[0].mxu0
  %v6245 = vpop.f32.mrb[0].mxu0
  %v6246 = vadd.f32 0.0, %v6245
  %v6247 = vpop.f32.mrb[0].mxu0
  %6248 = vmatprep.mubr.bf16.mxu0 0
  %6249 = vmatmul.mubr.bf16.gmra.mrb[0].mxu0 %v4233
  %v6250 = vpop.f32.mrb[0].mxu0
  %v6251 = vadd.f32 0.0, %v6250
  %v6252 = vpop.f32.mrb[0].mxu0
  %v6253 = vpop.f32.mrb[0].mxu0
  %v6254 = vadd.f32 0.0, %v6253
  %v6255 = vpop.f32.mrb[0].mxu0
  %6256 = vmatprep.mubr.bf16.mxu0 0
  %6257 = vmatmul.mubr.bf16.gmra.mrb[0].mxu0 %v4236
  %v6258 = vpop.f32.mrb[0].mxu0
  %v6259 = vadd.f32 0.0, %v6258
  %v6260 = vpop.f32.mrb[0].mxu0
  %v6261 = vpop.f32.mrb[0].mxu0
  %v6262 = vadd.f32 0.0, %v6261
  %v6263 = vpop.f32.mrb[0].mxu0
  %6264 = vmatprep.mubr.bf16.mxu0 0
  %6265 = vmatmul.mubr.bf16.gmra.mrb[0].mxu0 %v4239
  %v6266 = vpop.f32.mrb[0].mxu0
  %v6267 = vadd.f32 0.0, %v6266
  %v6268 = vpop.f32.mrb[0].mxu0
  %v6269 = vpop.f32.mrb[0].mxu0
  %v6270 = vadd.f32 0.0, %v6269
  %v6271 = vpop.f32.mrb[0].mxu0
  %6272 = vmatprep.mubr.bf16.mxu0 0
  %6273 = vmatmul.mubr.bf16.gmra.mrb[0].mxu0 %v4242
  %v6274 = vpop.f32.mrb[0].mxu0
  %v6275 = vadd.f32 0.0, %v6274
  %v6276 = vpop.f32.mrb[0].mxu0
  %v6277 = vpop.f32.mrb[0].mxu0
  %v6278 = vadd.f32 0.0, %v6277
  %v6279 = vpop.f32.mrb[0].mxu0
  %6280 = vmatprep.mubr.bf16.mxu0 0
  %6281 = vmatmul.mubr.bf16.gmra.mrb[0].mxu0 %v4245
  %v6282 = vpop.f32.mrb[0].mxu0
  %v6283 = vadd.f32 0.0, %v6282
  %v6284 = vpop.f32.mrb[0].mxu0
  %v6285 = vpop.f32.mrb[0].mxu0
  %v6286 = vadd.f32 0.0, %v6285
  %v6287 = vpop.f32.mrb[0].mxu0
  %6288 = vmatprep.mubr.bf16.mxu0 0
  %6289 = vmatmul.mubr.bf16.gmra.mrb[0].mxu0 %v4248
  %v6290 = vpop.f32.mrb[0].mxu0
  %v6291 = vadd.f32 0.0, %v6290
  %v6292 = vpop.f32.mrb[0].mxu0
  %v6293 = vpop.f32.mrb[0].mxu0
  %v6294 = vadd.f32 0.0, %v6293
  %v6295 = vpop.f32.mrb[0].mxu0
  %6296 = vmatprep.mubr.bf16.mxu0 0
  %6297 = vmatmul.mubr.bf16.gmra.mrb[0].mxu0 %v4251
  %v6298 = vpop.f32.mrb[0].mxu0
  %v6299 = vadd.f32 0.0, %v6298
  %v6300 = vpop.f32.mrb[0].mxu0
  %v6301 = vpop.f32.mrb[0].mxu0
  %v6302 = vadd.f32 0.0, %v6301
  %v6303 = vpop.f32.mrb[0].mxu0
  %6304 = vdwg.mxu0
  %v6305 = vadd.f32 %v6018, %v6195
  %v6306 = vadd.f32 %v6021, %v6198
  %v6307 = vadd.f32 %v6026, %v6203
  %v6308 = vadd.f32 %v6029, %v6206
  %v6309 = vadd.f32 %v6034, %v6211
  %v6310 = vadd.f32 %v6037, %v6214
  %v6311 = vadd.f32 %v6042, %v6219
  %v6312 = vadd.f32 %v6045, %v6222
  %v6313 = vadd.f32 %v6050, %v6227
  %v6314 = vadd.f32 %v6053, %v6230
  %v6315 = vadd.f32 %v6058, %v6235
  %v6316 = vadd.f32 %v6061, %v6238
  %v6317 = vadd.f32 %v6066, %v6243
  %v6318 = vadd.f32 %v6069, %v6246
  %v6319 = vadd.f32 %v6074, %v6251
  %v6320 = vadd.f32 %v6077, %v6254
  %v6321 = vadd.f32 %v6082, %v6259
  %v6322 = vadd.f32 %v6085, %v6262
  %v6323 = vadd.f32 %v6090, %v6267
  %v6324 = vadd.f32 %v6093, %v6270
  %v6325 = vadd.f32 %v6098, %v6275
  %v6326 = vadd.f32 %v6101, %v6278
  %v6327 = vadd.f32 %v6106, %v6283
  %v6328 = vadd.f32 %v6109, %v6286
  %v6329 = vadd.f32 %v6114, %v6291
  %v6330 = vadd.f32 %v6117, %v6294
  %v6331 = vadd.f32 %v6122, %v6299
  %v6332 = vadd.f32 %v6125, %v6302
  %v6333 = vld [vmem:[%s20] sm:$0x1]
  %v6335 = vlaneseq
  %v6336 = vshrl.u32 %v6335, 7
  %v6337 = vsub.s32 0, %v6336
  %v6338 = vrot.slane %v6333, %v6337
  %v6340 = vadd.f32 %v6305, %v6338
  %v6341 = vadd.f32 %v6306, %v6338
  %v6342 = vadd.f32 %v6307, %v6338
  %v6343 = vadd.f32 %v6308, %v6338
  %v6344 = vadd.f32 %v6309, %v6338
  %v6345 = vadd.f32 %v6310, %v6338
  %v6346 = vadd.f32 %v6311, %v6338
  %v6347 = vadd.f32 %v6312, %v6338
  %v6348 = vadd.f32 %v6313, %v6338
  %v6349 = vadd.f32 %v6314, %v6338
  %v6350 = vadd.f32 %v6315, %v6338
  %v6351 = vadd.f32 %v6316, %v6338
  %v6352 = vadd.f32 %v6317, %v6338
  %v6353 = vadd.f32 %v6318, %v6338
  %v6354 = vadd.f32 %v6319, %v6338
  %v6355 = vadd.f32 %v6320, %v6338
  %v6356 = vadd.f32 %v6321, %v6338
  %v6357 = vadd.f32 %v6322, %v6338
  %v6358 = vadd.f32 %v6323, %v6338
  %v6359 = vadd.f32 %v6324, %v6338
  %v6360 = vadd.f32 %v6325, %v6338
  %v6361 = vadd.f32 %v6326, %v6338
  %v6362 = vadd.f32 %v6327, %v6338
  %v6363 = vadd.f32 %v6328, %v6338
  %v6364 = vadd.f32 %v6329, %v6338
  %v6365 = vadd.f32 %v6330, %v6338
  %v6366 = vadd.f32 %v6331, %v6338
  %v6367 = vadd.f32 %v6332, %v6338
  %v6368 = vmax.f32 %v6340, 0.0
  %v6369 = vmax.f32 %v6341, 0.0
  %v6370 = vmax.f32 %v6342, 0.0
  %v6371 = vmax.f32 %v6343, 0.0
  %v6372 = vmax.f32 %v6344, 0.0
  %v6373 = vmax.f32 %v6345, 0.0
  %v6374 = vmax.f32 %v6346, 0.0
  %v6375 = vmax.f32 %v6347, 0.0
  %v6376 = vmax.f32 %v6348, 0.0
  %v6377 = vmax.f32 %v6349, 0.0
  %v6378 = vmax.f32 %v6350, 0.0
  %v6379 = vmax.f32 %v6351, 0.0
  %v6380 = vmax.f32 %v6352, 0.0
  %v6381 = vmax.f32 %v6353, 0.0
  %v6382 = vmax.f32 %v6354, 0.0
  %v6383 = vmax.f32 %v6355, 0.0
  %v6384 = vmax.f32 %v6356, 0.0
  %v6385 = vmax.f32 %v6357, 0.0
  %v6386 = vmax.f32 %v6358, 0.0
  %v6387 = vmax.f32 %v6359, 0.0
  %v6388 = vmax.f32 %v6360, 0.0
  %v6389 = vmax.f32 %v6361, 0.0
  %v6390 = vmax.f32 %v6362, 0.0
  %v6391 = vmax.f32 %v6363, 0.0
  %v6392 = vmax.f32 %v6364, 0.0
  %v6393 = vmax.f32 %v6365, 0.0
  %v6394 = vmax.f32 %v6366, 0.0
  %v6395 = vmax.f32 %v6367, 0.0
  %v6396 = vld [vmem:[%s21] sm:$0xff]
  %v6397 = vld [vmem:[%s21 + $0x8] sm:$0xff]
  %v6398 = vld [vmem:[%s21 + $0x10] sm:$0xff]
  %v6399 = vld [vmem:[%s21 + $0x18] sm:$0x33]
  %v6400 = vpack.c.bf16 %v6369, %v6368
  %v6401 = vpack.c.bf16 %v6371, %v6370
  %v6402 = vpack.c.bf16 %v6373, %v6372
  %v6403 = vpack.c.bf16 %v6375, %v6374
  %v6404 = vpack.c.bf16 %v6377, %v6376
  %v6405 = vpack.c.bf16 %v6379, %v6378
  %v6406 = vpack.c.bf16 %v6381, %v6380
  %v6407 = vpack.c.bf16 %v6383, %v6382
  %v6408 = vpack.c.bf16 %v6385, %v6384
  %v6409 = vpack.c.bf16 %v6387, %v6386
  %v6410 = vpack.c.bf16 %v6389, %v6388
  %v6411 = vpack.c.bf16 %v6391, %v6390
  %v6412 = vpack.c.bf16 %v6393, %v6392
  %v6413 = vpack.c.bf16 %v6395, %v6394
  %v6418 = vunpack.c.l.b16 %v6396
  %v6419 = vunpack.c.h.b16 %v6396
  %v6420 = vunpack.c.l.b16 %v6397
  %v6421 = vunpack.c.h.b16 %v6397
  %v6422 = vunpack.c.l.b16 %v6398
  %v6423 = vunpack.c.h.b16 %v6398
  %v6424 = vunpack.c.l.b16 %v6399
  %v6425 = vunpack.c.h.b16 %v6399
  %v6426 = vpack.c.b16 %v6420, %v6418
  %v6427 = vpack.c.b16 %v6421, %v6419
  %v6428 = vpack.c.b16 %v6424, %v6422
  %v6429 = vpack.c.b16 %v6425, %v6423
  %vm6432 = vcmask 785408
  %v6434 = vsel %vm6432, %v6427, 0
  %v6437 = vsel %vm6432, %v6429, 0
  %6439 = vmatprep.subr.bf16.mxu0 0
  %6440 = vmatpush1.bf16.msra.mxu0 %v6400
  %6441 = vmatprep.subr.bf16.mxu0 0
  %6442 = vmatpush1.bf16.msra.mxu0 %v6401
  %6443 = vmatprep.subr.bf16.mxu0 0
  %6444 = vmatpush1.bf16.msra.mxu0 %v6402
  %6445 = vmatprep.subr.bf16.mxu0 0
  %6446 = vmatpush1.bf16.msra.mxu0 %v6403
  %6447 = vmatprep.subr.bf16.mxu0 0
  %6448 = vmatpush1.bf16.msra.mxu0 %v6404
  %6449 = vmatprep.subr.bf16.mxu0 0
  %6450 = vmatpush1.bf16.msra.mxu0 %v6405
  %6451 = vmatprep.subr.bf16.mxu0 0
  %6452 = vmatpush1.bf16.msra.mxu0 %v6406
  %6453 = vmatprep.subr.bf16.mxu0 0
  %6454 = vmatpush1.bf16.msra.mxu0 %v6407
  %6455 = vmatprep.subr.bf16.mxu0 0
  %6456 = vmatpush1.bf16.msra.mxu0 %v6408
  %6457 = vmatprep.subr.bf16.mxu0 0
  %6458 = vmatpush1.bf16.msra.mxu0 %v6409
  %6459 = vmatprep.subr.bf16.mxu0 0
  %6460 = vmatpush1.bf16.msra.mxu0 %v6410
  %6461 = vmatprep.subr.bf16.mxu0 0
  %6462 = vmatpush1.bf16.msra.mxu0 %v6411
  %6463 = vmatprep.subr.bf16.mxu0 0
  %6464 = vmatpush1.bf16.msra.mxu0 %v6412
  %6465 = vmatprep.subr.bf16.mxu0 0
  %6466 = vmatpush1.bf16.msra.mxu0 %v6413
  %6467 = vmatprep.subr.bf16.mxu0 0
  %6468 = vmatpush1.bf16.msra.mxu0 0
  %6469 = vmatprep.subr.bf16.mxu0 0
  %6470 = vmatpush1.bf16.msra.mxu0 0
  %6471 = vmatprep.mubr.bf16.mxu0 %v6434
  %6472 = vmatmul.mubr.bf16.gmra.mrb[0].mxu0 %v6426
  %v6473 = vpop.f32.mrb[0].mxu0
  %v6474 = vadd.f32 0.0, %v6473
  %v6475 = vpop.f32.mrb[0].mxu0
  %v6476 = vpop.f32.mrb[0].mxu0
  %v6477 = vadd.f32 0.0, %v6476
  %v6478 = vpop.f32.mrb[0].mxu0
  %6479 = vmatprep.mubr.bf16.mxu0 %v6437
  %6480 = vmatmul.mubr.bf16.gmra.mrb[0].mxu0 %v6428
  %v6481 = vpop.f32.mrb[0].mxu0
  %v6482 = vadd.f32 0.0, %v6481
  %v6483 = vpop.f32.mrb[0].mxu0
  %v6484 = vpop.f32.mrb[0].mxu0
  %v6485 = vadd.f32 0.0, %v6484
  %v6486 = vpop.f32.mrb[0].mxu0
  %6487 = vdwg.mxu0
  %v6488 = vpack.c.bf16 %v6477, %v6474
  %v6489 = vpack.c.bf16 %v6485, %v6482
  %v6490 = vld [vmem:[%s22] sm:$0xff]
  %v6491 = vld [vmem:[%s22 + $0x8] sm:$0xff]
  %v6492 = vld [vmem:[%s22 + $0x10] sm:$0xff]
  %v6493 = vld [vmem:[%s22 + $0x18] sm:$0xff]
  %v6494 = vld [vmem:[%s22 + $0x20] sm:$0xff]
  %v6495 = vld [vmem:[%s22 + $0x28] sm:$0xff]
  %v6496 = vld [vmem:[%s22 + $0x30] sm:$0xff]
  %v6497 = vld [vmem:[%s22 + $0x38] sm:$0xff]
  %v6498 = vld [vmem:[%s22 + $0x40] sm:$0xff]
  %v6499 = vld [vmem:[%s22 + $0x48] sm:$0xff]
  %v6500 = vld [vmem:[%s22 + $0x50] sm:$0xff]
  %v6501 = vld [vmem:[%s22 + $0x58] sm:$0xff]
  %v6502 = vld [vmem:[%s22 + $0x60] sm:$0xff]
  %v6503 = vld [vmem:[%s22 + $0x68] sm:$0xff]
  %v6504 = vld [vmem:[%s22 + $0x70] sm:$0xff]
  %v6505 = vld [vmem:[%s22 + $0x78] sm:$0xff]
  %v6506 = vld [vmem:[%s22 + $0x80] sm:$0xff]
  %v6507 = vld [vmem:[%s22 + $0x88] sm:$0xff]
  %v6508 = vld [vmem:[%s22 + $0x90] sm:$0xff]
  %v6509 = vld [vmem:[%s22 + $0x98] sm:$0xff]
  %v6510 = vld [vmem:[%s22 + $0xa0] sm:$0xff]
  %v6511 = vld [vmem:[%s22 + $0xa8] sm:$0xff]
  %v6512 = vld [vmem:[%s22 + $0xb0] sm:$0xff]
  %v6513 = vld [vmem:[%s22 + $0xb8] sm:$0xff]
  %v6514 = vld [vmem:[%s22 + $0xc0] sm:$0xff]
  %v6515 = vld [vmem:[%s22 + $0xc8] sm:$0xff]
  %v6516 = vld [vmem:[%s22 + $0xd0] sm:$0xff]
  %v6517 = vld [vmem:[%s22 + $0xd8] sm:$0xff]
  %v6518 = vld [vmem:[%s22 + $0xe0] sm:$0xff]
  %v6519 = vld [vmem:[%s22 + $0xe8] sm:$0xff]
  %v6520 = vld [vmem:[%s22 + $0xf0] sm:$0xff]
  %v6521 = vld [vmem:[%s22 + $0xf8] sm:$0xff]
  %v6554 = vunpack.c.l.b16 %v6490
  %v6555 = vunpack.c.h.b16 %v6490
  %v6556 = vunpack.c.l.b16 %v6491
  %v6557 = vunpack.c.h.b16 %v6491
  %v6558 = vunpack.c.l.b16 %v6492
  %v6559 = vunpack.c.h.b16 %v6492
  %v6560 = vunpack.c.l.b16 %v6493
  %v6561 = vunpack.c.h.b16 %v6493
  %v6562 = vunpack.c.l.b16 %v6494
  %v6563 = vunpack.c.h.b16 %v6494
  %v6564 = vunpack.c.l.b16 %v6495
  %v6565 = vunpack.c.h.b16 %v6495
  %v6566 = vunpack.c.l.b16 %v6496
  %v6567 = vunpack.c.h.b16 %v6496
  %v6568 = vunpack.c.l.b16 %v6497
  %v6569 = vunpack.c.h.b16 %v6497
  %v6570 = vunpack.c.l.b16 %v6498
  %v6571 = vunpack.c.h.b16 %v6498
  %v6572 = vunpack.c.l.b16 %v6499
  %v6573 = vunpack.c.h.b16 %v6499
  %v6574 = vunpack.c.l.b16 %v6500
  %v6575 = vunpack.c.h.b16 %v6500
  %v6576 = vunpack.c.l.b16 %v6501
  %v6577 = vunpack.c.h.b16 %v6501
  %v6578 = vunpack.c.l.b16 %v6502
  %v6579 = vunpack.c.h.b16 %v6502
  %v6580 = vunpack.c.l.b16 %v6503
  %v6581 = vunpack.c.h.b16 %v6503
  %v6582 = vunpack.c.l.b16 %v6504
  %v6583 = vunpack.c.h.b16 %v6504
  %v6584 = vunpack.c.l.b16 %v6505
  %v6585 = vunpack.c.h.b16 %v6505
  %v6586 = vunpack.c.l.b16 %v6506
  %v6587 = vunpack.c.h.b16 %v6506
  %v6588 = vunpack.c.l.b16 %v6507
  %v6589 = vunpack.c.h.b16 %v6507
  %v6590 = vunpack.c.l.b16 %v6508
  %v6591 = vunpack.c.h.b16 %v6508
  %v6592 = vunpack.c.l.b16 %v6509
  %v6593 = vunpack.c.h.b16 %v6509
  %v6594 = vunpack.c.l.b16 %v6510
  %v6595 = vunpack.c.h.b16 %v6510
  %v6596 = vunpack.c.l.b16 %v6511
  %v6597 = vunpack.c.h.b16 %v6511
  %v6598 = vunpack.c.l.b16 %v6512
  %v6599 = vunpack.c.h.b16 %v6512
  %v6600 = vunpack.c.l.b16 %v6513
  %v6601 = vunpack.c.h.b16 %v6513
  %v6602 = vunpack.c.l.b16 %v6514
  %v6603 = vunpack.c.h.b16 %v6514
  %v6604 = vunpack.c.l.b16 %v6515
  %v6605 = vunpack.c.h.b16 %v6515
  %v6606 = vunpack.c.l.b16 %v6516
  %v6607 = vunpack.c.h.b16 %v6516
  %v6608 = vunpack.c.l.b16 %v6517
  %v6609 = vunpack.c.h.b16 %v6517
  %v6610 = vunpack.c.l.b16 %v6518
  %v6611 = vunpack.c.h.b16 %v6518
  %v6612 = vunpack.c.l.b16 %v6519
  %v6613 = vunpack.c.h.b16 %v6519
  %v6614 = vunpack.c.l.b16 %v6520
  %v6615 = vunpack.c.h.b16 %v6520
  %v6616 = vunpack.c.l.b16 %v6521
  %v6617 = vunpack.c.h.b16 %v6521
  %v6618 = vpack.c.b16 %v6558, %v6554
  %v6619 = vpack.c.b16 %v6559, %v6555
  %v6620 = vpack.c.b16 %v6560, %v6556
  %v6621 = vpack.c.b16 %v6561, %v6557
  %v6622 = vpack.c.b16 %v6566, %v6562
  %v6623 = vpack.c.b16 %v6567, %v6563
  %v6624 = vpack.c.b16 %v6568, %v6564
  %v6625 = vpack.c.b16 %v6569, %v6565
  %v6626 = vpack.c.b16 %v6574, %v6570
  %v6627 = vpack.c.b16 %v6575, %v6571
  %v6628 = vpack.c.b16 %v6576, %v6572
  %v6629 = vpack.c.b16 %v6577, %v6573
  %v6630 = vpack.c.b16 %v6582, %v6578
  %v6631 = vpack.c.b16 %v6583, %v6579
  %v6632 = vpack.c.b16 %v6584, %v6580
  %v6633 = vpack.c.b16 %v6585, %v6581
  %v6634 = vpack.c.b16 %v6590, %v6586
  %v6635 = vpack.c.b16 %v6591, %v6587
  %v6636 = vpack.c.b16 %v6592, %v6588
  %v6637 = vpack.c.b16 %v6593, %v6589
  %v6638 = vpack.c.b16 %v6598, %v6594
  %v6639 = vpack.c.b16 %v6599, %v6595
  %v6640 = vpack.c.b16 %v6600, %v6596
  %v6641 = vpack.c.b16 %v6601, %v6597
  %v6642 = vpack.c.b16 %v6606, %v6602
  %v6643 = vpack.c.b16 %v6607, %v6603
  %v6644 = vpack.c.b16 %v6608, %v6604
  %v6645 = vpack.c.b16 %v6609, %v6605
  %v6646 = vpack.c.b16 %v6614, %v6610
  %v6647 = vpack.c.b16 %v6615, %v6611
  %v6648 = vpack.c.b16 %v6616, %v6612
  %v6649 = vpack.c.b16 %v6617, %v6613
  %6682 = vmatprep.subr.bf16.mxu0 %v6619
  %6683 = vmatpush1.bf16.msra.mxu0 %v6618
  %6684 = vmatprep.subr.bf16.mxu0 %v6623
  %6685 = vmatpush1.bf16.msra.mxu0 %v6622
  %6686 = vmatprep.subr.bf16.mxu0 %v6627
  %6687 = vmatpush1.bf16.msra.mxu0 %v6626
  %6688 = vmatprep.subr.bf16.mxu0 %v6631
  %6689 = vmatpush1.bf16.msra.mxu0 %v6630
  %6690 = vmatprep.subr.bf16.mxu0 %v6635
  %6691 = vmatpush1.bf16.msra.mxu0 %v6634
  %6692 = vmatprep.subr.bf16.mxu0 %v6639
  %6693 = vmatpush1.bf16.msra.mxu0 %v6638
  %6694 = vmatprep.subr.bf16.mxu0 %v6643
  %6695 = vmatpush1.bf16.msra.mxu0 %v6642
  %6696 = vmatprep.subr.bf16.mxu0 %v6647
  %6697 = vmatpush1.bf16.msra.mxu0 %v6646
  %6698 = vmatprep.subr.bf16.mxu0 0
  %6699 = vmatpush1.bf16.msra.mxu0 0
  %6700 = vmatprep.subr.bf16.mxu0 0
  %6701 = vmatpush1.bf16.msra.mxu0 0
  %6702 = vmatprep.subr.bf16.mxu0 0
  %6703 = vmatpush1.bf16.msra.mxu0 0
  %6704 = vmatprep.subr.bf16.mxu0 0
  %6705 = vmatpush1.bf16.msra.mxu0 0
  %6706 = vmatprep.subr.bf16.mxu0 0
  %6707 = vmatpush1.bf16.msra.mxu0 0
  %6708 = vmatprep.subr.bf16.mxu0 0
  %6709 = vmatpush1.bf16.msra.mxu0 0
  %6710 = vmatprep.subr.bf16.mxu0 0
  %6711 = vmatpush1.bf16.msra.mxu0 0
  %6712 = vmatprep.subr.bf16.mxu0 0
  %6713 = vmatpush1.bf16.msra.mxu0 0
  %6714 = vmatprep.mubr.bf16.mxu0 0
  %6715 = vmatmul.mubr.bf16.gmra.mrb[0].mxu0 %v6488
  %v6716 = vpop.f32.mrb[0].mxu0
  %v6717 = vadd.f32 0.0, %v6716
  %v6718 = vpop.f32.mrb[0].mxu0
  %v6719 = vpop.f32.mrb[0].mxu0
  %v6720 = vpop.f32.mrb[0].mxu0
  %v6721 = vadd.f32 0.0, %v6720
  %6722 = vmatprep.mubr.bf16.mxu0 0
  %6723 = vmatmul.mubr.bf16.gmra.mrb[0].mxu0 %v6489
  %v6724 = vpop.f32.mrb[0].mxu0
  %v6725 = vpop.f32.mrb[0].mxu0
  %v6726 = vpop.f32.mrb[0].mxu0
  %v6727 = vpop.f32.mrb[0].mxu0
  %6728 = vdwg.mxu0
  %6729 = vmatprep.subr.bf16.mxu0 %v6621
  %6730 = vmatpush1.bf16.msra.mxu0 %v6620
  %6731 = vmatprep.subr.bf16.mxu0 %v6625
  %6732 = vmatpush1.bf16.msra.mxu0 %v6624
  %6733 = vmatprep.subr.bf16.mxu0 %v6629
  %6734 = vmatpush1.bf16.msra.mxu0 %v6628
  %6735 = vmatprep.subr.bf16.mxu0 %v6633
  %6736 = vmatpush1.bf16.msra.mxu0 %v6632
  %6737 = vmatprep.subr.bf16.mxu0 %v6637
  %6738 = vmatpush1.bf16.msra.mxu0 %v6636
  %6739 = vmatprep.subr.bf16.mxu0 %v6641
  %6740 = vmatpush1.bf16.msra.mxu0 %v6640
  %6741 = vmatprep.subr.bf16.mxu0 %v6645
  %6742 = vmatpush1.bf16.msra.mxu0 %v6644
  %6743 = vmatprep.subr.bf16.mxu0 %v6649
  %6744 = vmatpush1.bf16.msra.mxu0 %v6648
  %6745 = vmatprep.subr.bf16.mxu0 0
  %6746 = vmatpush1.bf16.msra.mxu0 0
  %6747 = vmatprep.subr.bf16.mxu0 0
  %6748 = vmatpush1.bf16.msra.mxu0 0
  %6749 = vmatprep.subr.bf16.mxu0 0
  %6750 = vmatpush1.bf16.msra.mxu0 0
  %6751 = vmatprep.subr.bf16.mxu0 0
  %6752 = vmatpush1.bf16.msra.mxu0 0
  %6753 = vmatprep.subr.bf16.mxu0 0
  %6754 = vmatpush1.bf16.msra.mxu0 0
  %6755 = vmatprep.subr.bf16.mxu0 0
  %6756 = vmatpush1.bf16.msra.mxu0 0
  %6757 = vmatprep.subr.bf16.mxu0 0
  %6758 = vmatpush1.bf16.msra.mxu0 0
  %6759 = vmatprep.subr.bf16.mxu0 0
  %6760 = vmatpush1.bf16.msra.mxu0 0
  %6761 = vmatprep.mubr.bf16.mxu0 0
  %6762 = vmatmul.mubr.bf16.gmra.mrb[0].mxu0 %v6488
  %v6763 = vpop.f32.mrb[0].mxu0
  %v6764 = vpop.f32.mrb[0].mxu0
  %v6765 = vpop.f32.mrb[0].mxu0
  %v6766 = vpop.f32.mrb[0].mxu0
  %6767 = vmatprep.mubr.bf16.mxu0 0
  %6768 = vmatmul.mubr.bf16.gmra.mrb[0].mxu0 %v6489
  %v6769 = vpop.f32.mrb[0].mxu0
  %v6770 = vadd.f32 0.0, %v6769
  %v6771 = vpop.f32.mrb[0].mxu0
  %v6772 = vpop.f32.mrb[0].mxu0
  %v6773 = vpop.f32.mrb[0].mxu0
  %v6774 = vadd.f32 0.0, %v6773
  %6775 = vdwg.mxu0
  %v6777 = vrot.slane %v6717, 2
  %6778 = vrot.lane.b32.xlu0 %v6777, 96
  %v6779 = vpop.permute.xlu0 %6778
  %v6781 = vadd.f32 %v6717, %v6779
  %v6782 = vrot.slane %v6717, 4
  %6783 = vrot.lane.b32.xlu0 %v6782, 64
  %v6784 = vpop.permute.xlu0 %6783
  %v6786 = vadd.f32 %v6781, %v6784
  %v6787 = vrot.slane %v6717, 6
  %6788 = vrot.lane.b32.xlu0 %v6787, 32
  %v6789 = vpop.permute.xlu0 %6788
  %v6791 = vadd.f32 %v6786, %v6789
  %v6792 = vadd.f32 %v6791, %v6721
  %v6794 = vrot.slane %v6721, 2
  %6795 = vrot.lane.b32.xlu0 %v6794, 96
  %v6796 = vpop.permute.xlu0 %6795
  %v6798 = vadd.f32 %v6792, %v6796
  %v6799 = vrot.slane %v6721, 4
  %6800 = vrot.lane.b32.xlu0 %v6799, 64
  %v6801 = vpop.permute.xlu0 %6800
  %v6803 = vadd.f32 %v6798, %v6801
  %v6804 = vrot.slane %v6721, 6
  %6805 = vrot.lane.b32.xlu0 %v6804, 32
  %v6806 = vpop.permute.xlu0 %6805
  %v6808 = vadd.f32 %v6803, %v6806
  %v6809 = vadd.f32 %v6808, %v6770
  %v6811 = vrot.slane %v6770, 2
  %6812 = vrot.lane.b32.xlu0 %v6811, 96
  %v6813 = vpop.permute.xlu0 %6812
  %v6815 = vadd.f32 %v6809, %v6813
  %v6816 = vrot.slane %v6770, 4
  %6817 = vrot.lane.b32.xlu0 %v6816, 64
  %v6818 = vpop.permute.xlu0 %6817
  %v6820 = vadd.f32 %v6815, %v6818
  %v6821 = vrot.slane %v6770, 6
  %6822 = vrot.lane.b32.xlu0 %v6821, 32
  %v6823 = vpop.permute.xlu0 %6822
  %v6825 = vadd.f32 %v6820, %v6823
  %v6826 = vadd.f32 %v6825, %v6774
  %v6828 = vrot.slane %v6774, 2
  %6829 = vrot.lane.b32.xlu0 %v6828, 96
  %v6830 = vpop.permute.xlu0 %6829
  %v6832 = vadd.f32 %v6826, %v6830
  %v6833 = vld [vmem:[%s23] sm:$0x1]
  %v6835 = vlaneseq
  %v6836 = vshrl.u32 %v6835, 7
  %v6837 = vsub.s32 0, %v6836
  %v6838 = vrot.slane %v6833, %v6837
  %v6840 = vadd.f32 %v6832, %v6838
  %v6841 = vmax.f32 %v6840, 0.0
  %v6842 = vpack.c.bf16 %v6841, %v6841
  %v6843 = vld [vmem:[%s24] sm:$0xf]
  %v6844 = vld [vmem:[%s24 + $0x4] sm:$0xf]
  %v6845 = vld [vmem:[%s24 + $0x8] sm:$0xf]
  %v6846 = vld [vmem:[%s24 + $0xc] sm:$0xf]
  %v6847 = vld [vmem:[%s25] sm:$0x1]
  %v6849 = vlaneseq
  %v6850 = vshrl.u32 %v6849, 7
  %v6851 = vsub.s32 0, %v6850
  %v6852 = vrot.slane %v6847, %v6851
  %v6858 = vunpack.c.l.b16 %v6843
  %v6859 = vunpack.c.l.b16 %v6844
  %v6860 = vunpack.c.l.b16 %v6845
  %v6861 = vunpack.c.l.b16 %v6846
  %v6862 = vpack.c.b16 %v6859, %v6858
  %v6863 = vpack.c.b16 %v6861, %v6860
  %vm6866 = vcmask 261120
  %v6868 = vsel %vm6866, %v6842, 0
  %6870 = vmatprep.subr.bf16.mxu0 0
  %6871 = vmatpush1.bf16.msra.mxu0 %v6862
  %6872 = vmatprep.subr.bf16.mxu0 0
  %6873 = vmatpush1.bf16.msra.mxu0 %v6863
  %6874 = vmatprep.subr.bf16.mxu0 0
  %6875 = vmatpush1.bf16.msra.mxu0 0
  %6876 = vmatprep.subr.bf16.mxu0 0
  %6877 = vmatpush1.bf16.msra.mxu0 0
  %6878 = vmatprep.subr.bf16.mxu0 0
  %6879 = vmatpush1.bf16.msra.mxu0 0
  %6880 = vmatprep.subr.bf16.mxu0 0
  %6881 = vmatpush1.bf16.msra.mxu0 0
  %6882 = vmatprep.subr.bf16.mxu0 0
  %6883 = vmatpush1.bf16.msra.mxu0 0
  %6884 = vmatprep.subr.bf16.mxu0 0
  %6885 = vmatpush1.bf16.msra.mxu0 0
  %6886 = vmatprep.subr.bf16.mxu0 0
  %6887 = vmatpush1.bf16.msra.mxu0 0
  %6888 = vmatprep.subr.bf16.mxu0 0
  %6889 = vmatpush1.bf16.msra.mxu0 0
  %6890 = vmatprep.subr.bf16.mxu0 0
  %6891 = vmatpush1.bf16.msra.mxu0 0
  %6892 = vmatprep.subr.bf16.mxu0 0
  %6893 = vmatpush1.bf16.msra.mxu0 0
  %6894 = vmatprep.subr.bf16.mxu0 0
  %6895 = vmatpush1.bf16.msra.mxu0 0
  %6896 = vmatprep.subr.bf16.mxu0 0
  %6897 = vmatpush1.bf16.msra.mxu0 0
  %6898 = vmatprep.subr.bf16.mxu0 0
  %6899 = vmatpush1.bf16.msra.mxu0 0
  %6900 = vmatprep.subr.bf16.mxu0 0
  %6901 = vmatpush1.bf16.msra.mxu0 0
  %6902 = vmatprep.mubr.bf16.mxu0 0
  %6903 = vmatmul.mubr.bf16.gmra.mrb[0].mxu0 %v6868
  %v6904 = vpop.f32.mrb[0].mxu0
  %v6905 = vadd.f32 %v6852, %v6904
  %v6906 = vpop.f32.mrb[0].mxu0
  %v6907 = vpop.f32.mrb[0].mxu0
  %v6908 = vpop.f32.mrb[0].mxu0
  %6909 = vdwg.mxu0
  %vm6910 = vcmask 271360
  %6911 = vst.msk [vmem:[%s26] sm:$0x3] %vm6910, %v6905
  // Predicated region
  $region106: #{_forward_jit.1} parent=0 // pred_check
    _
  $region107: #{_forward_jit.1} parent=0 // pred_check_branch
    %6913 = sbr.rel (0) target = $region109
  $region108: #{_forward_jit.1} parent=0 // pred_region
    _
  $region109: #{_forward_jit.1} parent=0 // pred_fallthru
    _
  // Predicated region
  $region110: #{_forward_jit.1} parent=0 // pred_check
    _
  $region111: #{_forward_jit.1} parent=0 // pred_check_branch
    %6915 = sbr.rel (0) target = $region113
  $region112: #{_forward_jit.1} parent=0 // pred_region
    _
  $region113: #{_forward_jit.1} parent=0 // pred_fallthru
    _

</llo_original>
